<compile_context>
chip_gen: v5e
topology: v5e:2x2
jax: 0.10.0
libtpu: 0.0.40
codegen_flags: <defaults>
</compile_context>

<pallas_src>
import functools

import numpy as np

import jax
import jax.numpy as jnp
from jax.experimental import pallas as pl
from jax.experimental.pallas import tpu as pltpu

EPS = 1e-5  # PyTorch GroupNorm default


def _double_conv_kernel(x_ref, w1_ref, w2_ref, p1_ref, p2_ref, mask_ref,
                        gmap_ref, out_ref, *, S, offsets, nb, cout,
                        compute_dtype):
    """Processes `nb` batch elements per grid step, all in (C, S) layout.

    x_ref    : (nb, cp, S)     input, channels on sublanes, spatial on lanes
    w1_ref   : (27, cout, cp)  per-tap conv1 weights (input channels padded)
    w2_ref   : (27, cout, cp)  per-tap conv2 weights
    p1_ref   : (cout, 3)       columns = [conv bias, GN gamma, GN beta]
    p2_ref   : (cout, 3)
    mask_ref : (27, cp, S)     0/1 tap-validity masks, pre-broadcast over cp
    gmap_ref : (cout, cout)    group-average mixing matrix (1/cpg in group)
    out_ref  : (nb, cout, S)
    """
    inv_s = 1.0 / S

    def group_mix(v):
        # v: (cout, 1) f32 per-channel sums.  Group-mix via a tiny matmul on a
        # lane-broadcast operand (native (8,128) f32 tile -> robust lowering),
        # keep column 0.  S-independent cost, unlike gmap @ (cout, S).
        vb = jnp.broadcast_to(v, (cout, 128))
        return jnp.dot(gmap_ref[...], vb,
                       preferred_element_type=jnp.float32)[:, 0:1]

    def conv3x3(act, w_ref):
        # act: (cp, S) compute_dtype.  Tap (kd,kh,kw) == lane roll by -off
        # (off = (kd-1)*H*W + (kh-1)*W + (kw-1)) + boundary mask, then a
        # skinny accumulating matmul.  f32 accumulation throughout.
        y = None
        for k, off in enumerate(offsets):
            sh = (-off) % S
            shifted = act if sh == 0 else pltpu.roll(act, sh, axis=1)
            tap = shifted * mask_ref[k]
            part = jnp.dot(w_ref[k], tap, preferred_element_type=jnp.float32)
            y = part if y is None else y + part
        return y                                               # (cout, S) f32

    def gn_relu(y, p_ref):
        # y: (cout, S) f32.  Lane-reduce first, then group-mix the (cout, 1)
        # statistics; two-pass centered variance in f32.
        b = p_ref[:, 0:1]
        g = p_ref[:, 1:2]
        be = p_ref[:, 2:3]
        y = y + b                                              # conv bias
        gmean = group_mix(jnp.sum(y, axis=1, keepdims=True)) * inv_s
        yc = y - gmean
        gvar = group_mix(jnp.sum(yc * yc, axis=1, keepdims=True)) * inv_s
        inv = jax.lax.rsqrt(gvar + EPS)
        return jnp.maximum(yc * (inv * g) + be, 0.0)

    for n in range(nb):
        y1 = conv3x3(x_ref[n], w1_ref)                          # (cout, S) f32
        a1 = gn_relu(y1, p1_ref)                                # (cout, S) f32
        y2 = conv3x3(a1.astype(compute_dtype), w2_ref)
        out_ref[n] = gn_relu(y2, p2_ref).astype(out_ref.dtype)  # lane-dense


def double_conv_in(x_ncdhw, params, *, groups=4,
                   compute_dtype=jnp.bfloat16, out_dtype=jnp.float32):
    """Forward pass. x_ncdhw: (N, Cin, D, H, W); weights in PyTorch OIDHW.

    compute_dtype: bf16 on v6e/v7x (f32 accumulation + f32 GN stats kept),
                   f32 on v5e or when bit-tight accuracy is required.
    out_dtype:     set to bf16 on v6e/v7x to halve output writeback.
    """
    w1, b1, g1, be1, w2, b2, g2, be2 = params
    N, Cin, D, H, W = x_ncdhw.shape
    Cout = w1.shape[0]
    S = D * H * W
    HW = H * W
    assert Cout % 8 == 0, "out_ch must be a multiple of 8 for the sublane layout"
    assert Cout % groups == 0
    assert Cin <= Cout
    assert S % 128 == 0, "D*H*W must be a multiple of 128 for lane-dense tiles"
    cp = Cout  # padded channel count used on the sublane axis for both convs

    # ---- input: NCDHW -> (N, C, S) (free reshape), zero-pad channels to cp ----
    x = x_ncdhw.reshape(N, Cin, S)
    x = jnp.pad(x, ((0, 0), (0, cp - Cin), (0, 0))).astype(compute_dtype)

    # ---- per-tap weights: (27, Cout, cp), leading dim = tap index ----
    def to_wtaps(w, cin):
        wt = jnp.transpose(w.astype(jnp.float32), (2, 3, 4, 0, 1))  # kd,kh,kw,O,I
        wt = wt.reshape(27, Cout, cin)
        wt = jnp.pad(wt, ((0, 0), (0, 0), (0, cp - cin)))
        return wt.astype(compute_dtype)

    w1t = to_wtaps(w1, Cin)
    w2t = to_wtaps(w2, Cout)

    # ---- per-conv params as (Cout, 3) columns [bias, gamma, beta] (f32) ----
    p1 = jnp.stack([b1, g1, be1], axis=1).astype(jnp.float32)
    p2 = jnp.stack([b2, g2, be2], axis=1).astype(jnp.float32)

    # ---- group-average mixing matrix for GroupNorm (f32) ----
    cpg = Cout // groups
    gid = jnp.arange(Cout) // cpg
    gmap = (gid[:, None] == gid[None, :]).astype(jnp.float32) / cpg

    # ---- static tap offsets and boundary masks, pre-broadcast to (27, cp, S) ----
    offsets = tuple((kd - 1) * HW + (kh - 1) * W + (kw - 1)
                    for kd in range(3) for kh in range(3) for kw in range(3))
    s_idx = np.arange(S)
    d_i, h_i, w_i = s_idx // HW, (s_idx // W) % H, s_idx % W
    mask_rows = []
    for kd in range(3):
        for kh in range(3):
            for kw in range(3):
                m = ((d_i + kd - 1 >= 0) & (d_i + kd - 1 < D) &
                     (h_i + kh - 1 >= 0) & (h_i + kh - 1 < H) &
                     (w_i + kw - 1 >= 0) & (w_i + kw - 1 < W))
                mask_rows.append(m)
    masks_np = np.repeat(np.stack(mask_rows).astype(np.float32)[:, None, :],
                         cp, axis=1)                             # (27, cp, S)
    masks = jnp.asarray(masks_np, dtype=compute_dtype)

    # ---- batch blocking: <=4 elements per step, but prefer >=2 grid steps so
    #      both v7x TensorCores get work via dimension_semantics=("parallel",).
    nb = 1
    for cand in range(min(N, 4), 0, -1):
        if N % cand == 0 and (N // cand >= 2 or cand == 1):
            nb = cand
            break

    kernel = functools.partial(_double_conv_kernel, S=S, offsets=offsets,
                               nb=nb, cout=Cout, compute_dtype=compute_dtype)

    out = pl.pallas_call(
        kernel,
        out_shape=jax.ShapeDtypeStruct((N, Cout, S), out_dtype),
        grid_spec=pltpu.PrefetchScalarGridSpec(
            num_scalar_prefetch=0,
            grid=(N // nb,),
            in_specs=[
                pl.BlockSpec((nb, cp, S), lambda i: (i, 0, 0)),      # x
                pl.BlockSpec((27, Cout, cp), lambda i: (0, 0, 0)),   # w1 taps
                pl.BlockSpec((27, Cout, cp), lambda i: (0, 0, 0)),   # w2 taps
                pl.BlockSpec((Cout, 3), lambda i: (0, 0)),           # p1
                pl.BlockSpec((Cout, 3), lambda i: (0, 0)),           # p2
                pl.BlockSpec((27, cp, S), lambda i: (0, 0, 0)),      # masks
                pl.BlockSpec((Cout, Cout), lambda i: (0, 0)),        # gmap
            ],
            out_specs=pl.BlockSpec((nb, Cout, S), lambda i: (i, 0, 0)),
        ),
        compiler_params=pltpu.CompilerParams(
            dimension_semantics=("parallel",)),
    )(x, w1t, w2t, p1, p2, masks, gmap)

    return out.reshape(N, Cout, D, H, W)   # (N, C, S) is NCDHW flattened


# ---------------- pure-JAX reference (for correctness check) ----------------
def _ref_forward(x, params, *, groups=4, compute_dtype=jnp.float32):
    """Reference with the same operand precision as the kernel
    (compute_dtype conv operands, f32 accumulation, f32 GroupNorm)."""
    w1, b1, g1, be1, w2, b2, g2, be2 = params

    def conv(x, w, b):
        y = jax.lax.conv_general_dilated(
            x.astype(compute_dtype), w.astype(compute_dtype),
            window_strides=(1, 1, 1),
            padding=((1, 1), (1, 1), (1, 1)),
            dimension_numbers=("NCDHW", "OIDHW", "NCDHW"),
            preferred_element_type=jnp.float32)
        return y + b[None, :, None, None, None]

    def gn(y, g, be):
        n, c, d, h, w = y.shape
        yg = y.reshape(n, groups, c // groups, d, h, w)
        m = yg.mean(axis=(2, 3, 4, 5), keepdims=True)
        v = ((yg - m) ** 2).mean(axis=(2, 3, 4, 5), keepdims=True)
        yn = ((yg - m) * jax.lax.rsqrt(v + EPS)).reshape(n, c, d, h, w)
        return yn * g[None, :, None, None, None] + be[None, :, None, None, None]

    y = jnp.maximum(gn(conv(x.astype(jnp.float32), w1, b1), g1, be1), 0.0)
    y = jnp.maximum(gn(conv(y, w2, b2), g2, be2), 0.0)
    return y


if __name__ == "__main__":
    # small shapes consistent with the module: N=2, in_ch=4, out_ch=8, 8^3 volume
    N, Cin, Cout = 2, 4, 8
    D = H = W = 8

    key = jax.random.PRNGKey(0)
    ks = jax.random.split(key, 9)
    x = jax.random.normal(ks[0], (N, Cin, D, H, W), jnp.float32)

    # deterministic synthetic parameters in PyTorch layout (OIDHW weights)
    w1 = 0.1 * jax.random.normal(ks[1], (Cout, Cin, 3, 3, 3), jnp.float32)
    b1 = 0.1 * jax.random.normal(ks[2], (Cout,), jnp.float32)
    g1 = 1.0 + 0.1 * jax.random.normal(ks[3], (Cout,), jnp.float32)
    be1 = 0.1 * jax.random.normal(ks[4], (Cout,), jnp.float32)
    w2 = 0.1 * jax.random.normal(ks[5], (Cout, Cout, 3, 3, 3), jnp.float32)
    b2 = 0.1 * jax.random.normal(ks[6], (Cout,), jnp.float32)
    g2 = 1.0 + 0.1 * jax.random.normal(ks[7], (Cout,), jnp.float32)
    be2 = 0.1 * jax.random.normal(ks[8], (Cout,), jnp.float32)
    params = (w1, b1, g1, be1, w2, b2, g2, be2)

    # ---- exactness check: f32 compute path vs pure-JAX f32 reference ----
    out32 = jax.block_until_ready(
        double_conv_in(x, params, compute_dtype=jnp.float32))
    ref32 = jax.block_until_ready(_ref_forward(x, params,
                                               compute_dtype=jnp.float32))
    assert out32.shape == (N, Cout, D, H, W), out32.shape
    d32 = float(jnp.max(jnp.abs(out32 - ref32)))
    assert jnp.allclose(out32, ref32, rtol=2e-3, atol=2e-3), \
        f"f32 path max abs diff = {d32}"

    # ---- production path (v6e/v7x): bf16 operands, f32 acc / statistics ----
    out16 = jax.block_until_ready(
        double_conv_in(x, params, compute_dtype=jnp.bfloat16))
    ref16 = jax.block_until_ready(_ref_forward(x, params,
                                               compute_dtype=jnp.bfloat16))
    d16 = float(jnp.max(jnp.abs(out16 - ref16)))
    assert jnp.allclose(out16, ref16, rtol=1e-2, atol=1e-2), \
        f"bf16 path max abs diff = {d16}"

    print("KERNEL_OK")
</pallas_src>

<mosaic_0001>
module attributes {stable_mosaic.version = 11 : i64} {
  func.func @_double_conv_kernel(%arg0: i32, %arg1: memref<1x8x512xf32, #tpu.memory_space<vmem>>, %arg2: memref<27x8x8xf32, #tpu.memory_space<vmem>>, %arg3: memref<27x8x8xf32, #tpu.memory_space<vmem>>, %arg4: memref<8x3xf32, #tpu.memory_space<vmem>>, %arg5: memref<8x3xf32, #tpu.memory_space<vmem>>, %arg6: memref<27x8x512xf32, #tpu.memory_space<vmem>>, %arg7: memref<8x8xf32, #tpu.memory_space<vmem>>, %arg8: memref<1x8x512xf32, #tpu.memory_space<vmem>>) attributes {dimension_semantics = [#tpu.dimension_semantics<parallel>], iteration_bounds = array<i64: 2>, scalar_prefetch = 0 : i64, scratch_operands = 0 : i64, tpu.core_type = #tpu.core_type<tc>, window_params = [{transform_indices = @transform_0, window_bounds = array<i64: 1, 8, 512>}, {pipeline_mode = #tpu.pipeline_mode<synchronous>, transform_indices = @transform_1, window_bounds = array<i64: 27, 8, 8>}, {pipeline_mode = #tpu.pipeline_mode<synchronous>, transform_indices = @transform_2, window_bounds = array<i64: 27, 8, 8>}, {pipeline_mode = #tpu.pipeline_mode<synchronous>, transform_indices = @transform_3, window_bounds = array<i64: 8, 3>}, {pipeline_mode = #tpu.pipeline_mode<synchronous>, transform_indices = @transform_4, window_bounds = array<i64: 8, 3>}, {pipeline_mode = #tpu.pipeline_mode<synchronous>, transform_indices = @transform_5, window_bounds = array<i64: 27, 8, 512>}, {pipeline_mode = #tpu.pipeline_mode<synchronous>, transform_indices = @transform_6, window_bounds = array<i64: 8, 8>}, {transform_indices = @transform_7, window_bounds = array<i64: 1, 8, 512>}]} {
    %c0 = arith.constant 0 : index
    %c0_0 = arith.constant 0 : index
    %c0_1 = arith.constant 0 : index
    %0 = vector.load %arg1[%c0, %c0_0, %c0_1] : memref<1x8x512xf32, #tpu.memory_space<vmem>>, vector<1x8x512xf32>
    %1 = vector.shape_cast %0 : vector<1x8x512xf32> to vector<8x512xf32>
    %c73_i32 = arith.constant 73 : i32
    %2 = tpu.dynamic_rotate %1 by %c73_i32 dim 1 : vector<8x512xf32>, i32 -> vector<8x512xf32>
    %c0_2 = arith.constant 0 : index
    %c0_3 = arith.constant 0 : index
    %c0_4 = arith.constant 0 : index
    %3 = vector.load %arg6[%c0_2, %c0_3, %c0_4] : memref<27x8x512xf32, #tpu.memory_space<vmem>>, vector<1x8x512xf32>
    %4 = vector.shape_cast %3 : vector<1x8x512xf32> to vector<8x512xf32>
    %5 = arith.mulf %2, %4 : vector<8x512xf32>
    %c0_5 = arith.constant 0 : index
    %c0_6 = arith.constant 0 : index
    %c0_7 = arith.constant 0 : index
    %6 = vector.load %arg2[%c0_5, %c0_6, %c0_7] : memref<27x8x8xf32, #tpu.memory_space<vmem>>, vector<1x8x8xf32>
    %7 = vector.shape_cast %6 : vector<1x8x8xf32> to vector<8x8xf32>
    %cst = arith.constant dense<0.000000e+00> : vector<8x512xf32>
    %8 = tpu.matmul %7, %5, %cst {dimension_numbers = #tpu.dot_dimension_numbers<[1], [0], [0], [1], [0, 0, 1, 1], [], []>} : vector<8x8xf32>, vector<8x512xf32>, vector<8x512xf32> -> vector<8x512xf32>
    %c72_i32 = arith.constant 72 : i32
    %9 = tpu.dynamic_rotate %1 by %c72_i32 dim 1 : vector<8x512xf32>, i32 -> vector<8x512xf32>
    %c1 = arith.constant 1 : index
    %c0_8 = arith.constant 0 : index
    %c0_9 = arith.constant 0 : index
    %10 = vector.load %arg6[%c1, %c0_8, %c0_9] : memref<27x8x512xf32, #tpu.memory_space<vmem>>, vector<1x8x512xf32>
    %11 = vector.shape_cast %10 : vector<1x8x512xf32> to vector<8x512xf32>
    %12 = arith.mulf %9, %11 : vector<8x512xf32>
    %c1_10 = arith.constant 1 : index
    %c0_11 = arith.constant 0 : index
    %c0_12 = arith.constant 0 : index
    %13 = vector.load %arg2[%c1_10, %c0_11, %c0_12] : memref<27x8x8xf32, #tpu.memory_space<vmem>>, vector<1x8x8xf32>
    %14 = vector.shape_cast %13 : vector<1x8x8xf32> to vector<8x8xf32>
    %cst_13 = arith.constant dense<0.000000e+00> : vector<8x512xf32>
    %15 = tpu.matmul %14, %12, %cst_13 {dimension_numbers = #tpu.dot_dimension_numbers<[1], [0], [0], [1], [0, 0, 1, 1], [], []>} : vector<8x8xf32>, vector<8x512xf32>, vector<8x512xf32> -> vector<8x512xf32>
    %16 = arith.addf %8, %15 : vector<8x512xf32>
    %c71_i32 = arith.constant 71 : i32
    %17 = tpu.dynamic_rotate %1 by %c71_i32 dim 1 : vector<8x512xf32>, i32 -> vector<8x512xf32>
    %c2 = arith.constant 2 : index
    %c0_14 = arith.constant 0 : index
    %c0_15 = arith.constant 0 : index
    %18 = vector.load %arg6[%c2, %c0_14, %c0_15] : memref<27x8x512xf32, #tpu.memory_space<vmem>>, vector<1x8x512xf32>
    %19 = vector.shape_cast %18 : vector<1x8x512xf32> to vector<8x512xf32>
    %20 = arith.mulf %17, %19 : vector<8x512xf32>
    %c2_16 = arith.constant 2 : index
    %c0_17 = arith.constant 0 : index
    %c0_18 = arith.constant 0 : index
    %21 = vector.load %arg2[%c2_16, %c0_17, %c0_18] : memref<27x8x8xf32, #tpu.memory_space<vmem>>, vector<1x8x8xf32>
    %22 = vector.shape_cast %21 : vector<1x8x8xf32> to vector<8x8xf32>
    %cst_19 = arith.constant dense<0.000000e+00> : vector<8x512xf32>
    %23 = tpu.matmul %22, %20, %cst_19 {dimension_numbers = #tpu.dot_dimension_numbers<[1], [0], [0], [1], [0, 0, 1, 1], [], []>} : vector<8x8xf32>, vector<8x512xf32>, vector<8x512xf32> -> vector<8x512xf32>
    %24 = arith.addf %16, %23 : vector<8x512xf32>
    %c65_i32 = arith.constant 65 : i32
    %25 = tpu.dynamic_rotate %1 by %c65_i32 dim 1 : vector<8x512xf32>, i32 -> vector<8x512xf32>
    %c3 = arith.constant 3 : index
    %c0_20 = arith.constant 0 : index
    %c0_21 = arith.constant 0 : index
    %26 = vector.load %arg6[%c3, %c0_20, %c0_21] : memref<27x8x512xf32, #tpu.memory_space<vmem>>, vector<1x8x512xf32>
    %27 = vector.shape_cast %26 : vector<1x8x512xf32> to vector<8x512xf32>
    %28 = arith.mulf %25, %27 : vector<8x512xf32>
    %c3_22 = arith.constant 3 : index
    %c0_23 = arith.constant 0 : index
    %c0_24 = arith.constant 0 : index
    %29 = vector.load %arg2[%c3_22, %c0_23, %c0_24] : memref<27x8x8xf32, #tpu.memory_space<vmem>>, vector<1x8x8xf32>
    %30 = vector.shape_cast %29 : vector<1x8x8xf32> to vector<8x8xf32>
    %cst_25 = arith.constant dense<0.000000e+00> : vector<8x512xf32>
    %31 = tpu.matmul %30, %28, %cst_25 {dimension_numbers = #tpu.dot_dimension_numbers<[1], [0], [0], [1], [0, 0, 1, 1], [], []>} : vector<8x8xf32>, vector<8x512xf32>, vector<8x512xf32> -> vector<8x512xf32>
    %32 = arith.addf %24, %31 : vector<8x512xf32>
    %c64_i32 = arith.constant 64 : i32
    %33 = tpu.dynamic_rotate %1 by %c64_i32 dim 1 : vector<8x512xf32>, i32 -> vector<8x512xf32>
    %c4 = arith.constant 4 : index
    %c0_26 = arith.constant 0 : index
    %c0_27 = arith.constant 0 : index
    %34 = vector.load %arg6[%c4, %c0_26, %c0_27] : memref<27x8x512xf32, #tpu.memory_space<vmem>>, vector<1x8x512xf32>
    %35 = vector.shape_cast %34 : vector<1x8x512xf32> to vector<8x512xf32>
    %36 = arith.mulf %33, %35 : vector<8x512xf32>
    %c4_28 = arith.constant 4 : index
    %c0_29 = arith.constant 0 : index
    %c0_30 = arith.constant 0 : index
    %37 = vector.load %arg2[%c4_28, %c0_29, %c0_30] : memref<27x8x8xf32, #tpu.memory_space<vmem>>, vector<1x8x8xf32>
    %38 = vector.shape_cast %37 : vector<1x8x8xf32> to vector<8x8xf32>
    %cst_31 = arith.constant dense<0.000000e+00> : vector<8x512xf32>
    %39 = tpu.matmul %38, %36, %cst_31 {dimension_numbers = #tpu.dot_dimension_numbers<[1], [0], [0], [1], [0, 0, 1, 1], [], []>} : vector<8x8xf32>, vector<8x512xf32>, vector<8x512xf32> -> vector<8x512xf32>
    %40 = arith.addf %32, %39 : vector<8x512xf32>
    %c63_i32 = arith.constant 63 : i32
    %41 = tpu.dynamic_rotate %1 by %c63_i32 dim 1 : vector<8x512xf32>, i32 -> vector<8x512xf32>
    %c5 = arith.constant 5 : index
    %c0_32 = arith.constant 0 : index
    %c0_33 = arith.constant 0 : index
    %42 = vector.load %arg6[%c5, %c0_32, %c0_33] : memref<27x8x512xf32, #tpu.memory_space<vmem>>, vector<1x8x512xf32>
    %43 = vector.shape_cast %42 : vector<1x8x512xf32> to vector<8x512xf32>
    %44 = arith.mulf %41, %43 : vector<8x512xf32>
    %c5_34 = arith.constant 5 : index
    %c0_35 = arith.constant 0 : index
    %c0_36 = arith.constant 0 : index
    %45 = vector.load %arg2[%c5_34, %c0_35, %c0_36] : memref<27x8x8xf32, #tpu.memory_space<vmem>>, vector<1x8x8xf32>
    %46 = vector.shape_cast %45 : vector<1x8x8xf32> to vector<8x8xf32>
    %cst_37 = arith.constant dense<0.000000e+00> : vector<8x512xf32>
    %47 = tpu.matmul %46, %44, %cst_37 {dimension_numbers = #tpu.dot_dimension_numbers<[1], [0], [0], [1], [0, 0, 1, 1], [], []>} : vector<8x8xf32>, vector<8x512xf32>, vector<8x512xf32> -> vector<8x512xf32>
    %48 = arith.addf %40, %47 : vector<8x512xf32>
    %c57_i32 = arith.constant 57 : i32
    %49 = tpu.dynamic_rotate %1 by %c57_i32 dim 1 : vector<8x512xf32>, i32 -> vector<8x512xf32>
    %c6 = arith.constant 6 : index
    %c0_38 = arith.constant 0 : index
    %c0_39 = arith.constant 0 : index
    %50 = vector.load %arg6[%c6, %c0_38, %c0_39] : memref<27x8x512xf32, #tpu.memory_space<vmem>>, vector<1x8x512xf32>
    %51 = vector.shape_cast %50 : vector<1x8x512xf32> to vector<8x512xf32>
    %52 = arith.mulf %49, %51 : vector<8x512xf32>
    %c6_40 = arith.constant 6 : index
    %c0_41 = arith.constant 0 : index
    %c0_42 = arith.constant 0 : index
    %53 = vector.load %arg2[%c6_40, %c0_41, %c0_42] : memref<27x8x8xf32, #tpu.memory_space<vmem>>, vector<1x8x8xf32>
    %54 = vector.shape_cast %53 : vector<1x8x8xf32> to vector<8x8xf32>
    %cst_43 = arith.constant dense<0.000000e+00> : vector<8x512xf32>
    %55 = tpu.matmul %54, %52, %cst_43 {dimension_numbers = #tpu.dot_dimension_numbers<[1], [0], [0], [1], [0, 0, 1, 1], [], []>} : vector<8x8xf32>, vector<8x512xf32>, vector<8x512xf32> -> vector<8x512xf32>
    %56 = arith.addf %48, %55 : vector<8x512xf32>
    %c56_i32 = arith.constant 56 : i32
    %57 = tpu.dynamic_rotate %1 by %c56_i32 dim 1 : vector<8x512xf32>, i32 -> vector<8x512xf32>
    %c7 = arith.constant 7 : index
    %c0_44 = arith.constant 0 : index
    %c0_45 = arith.constant 0 : index
    %58 = vector.load %arg6[%c7, %c0_44, %c0_45] : memref<27x8x512xf32, #tpu.memory_space<vmem>>, vector<1x8x512xf32>
    %59 = vector.shape_cast %58 : vector<1x8x512xf32> to vector<8x512xf32>
    %60 = arith.mulf %57, %59 : vector<8x512xf32>
    %c7_46 = arith.constant 7 : index
    %c0_47 = arith.constant 0 : index
    %c0_48 = arith.constant 0 : index
    %61 = vector.load %arg2[%c7_46, %c0_47, %c0_48] : memref<27x8x8xf32, #tpu.memory_space<vmem>>, vector<1x8x8xf32>
    %62 = vector.shape_cast %61 : vector<1x8x8xf32> to vector<8x8xf32>
    %cst_49 = arith.constant dense<0.000000e+00> : vector<8x512xf32>
    %63 = tpu.matmul %62, %60, %cst_49 {dimension_numbers = #tpu.dot_dimension_numbers<[1], [0], [0], [1], [0, 0, 1, 1], [], []>} : vector<8x8xf32>, vector<8x512xf32>, vector<8x512xf32> -> vector<8x512xf32>
    %64 = arith.addf %56, %63 : vector<8x512xf32>
    %c55_i32 = arith.constant 55 : i32
    %65 = tpu.dynamic_rotate %1 by %c55_i32 dim 1 : vector<8x512xf32>, i32 -> vector<8x512xf32>
    %c8 = arith.constant 8 : index
    %c0_50 = arith.constant 0 : index
    %c0_51 = arith.constant 0 : index
    %66 = vector.load %arg6[%c8, %c0_50, %c0_51] : memref<27x8x512xf32, #tpu.memory_space<vmem>>, vector<1x8x512xf32>
    %67 = vector.shape_cast %66 : vector<1x8x512xf32> to vector<8x512xf32>
    %68 = arith.mulf %65, %67 : vector<8x512xf32>
    %c8_52 = arith.constant 8 : index
    %c0_53 = arith.constant 0 : index
    %c0_54 = arith.constant 0 : index
    %69 = vector.load %arg2[%c8_52, %c0_53, %c0_54] : memref<27x8x8xf32, #tpu.memory_space<vmem>>, vector<1x8x8xf32>
    %70 = vector.shape_cast %69 : vector<1x8x8xf32> to vector<8x8xf32>
    %cst_55 = arith.constant dense<0.000000e+00> : vector<8x512xf32>
    %71 = tpu.matmul %70, %68, %cst_55 {dimension_numbers = #tpu.dot_dimension_numbers<[1], [0], [0], [1], [0, 0, 1, 1], [], []>} : vector<8x8xf32>, vector<8x512xf32>, vector<8x512xf32> -> vector<8x512xf32>
    %72 = arith.addf %64, %71 : vector<8x512xf32>
    %c9_i32 = arith.constant 9 : i32
    %73 = tpu.dynamic_rotate %1 by %c9_i32 dim 1 : vector<8x512xf32>, i32 -> vector<8x512xf32>
    %c9 = arith.constant 9 : index
    %c0_56 = arith.constant 0 : index
    %c0_57 = arith.constant 0 : index
    %74 = vector.load %arg6[%c9, %c0_56, %c0_57] : memref<27x8x512xf32, #tpu.memory_space<vmem>>, vector<1x8x512xf32>
    %75 = vector.shape_cast %74 : vector<1x8x512xf32> to vector<8x512xf32>
    %76 = arith.mulf %73, %75 : vector<8x512xf32>
    %c9_58 = arith.constant 9 : index
    %c0_59 = arith.constant 0 : index
    %c0_60 = arith.constant 0 : index
    %77 = vector.load %arg2[%c9_58, %c0_59, %c0_60] : memref<27x8x8xf32, #tpu.memory_space<vmem>>, vector<1x8x8xf32>
    %78 = vector.shape_cast %77 : vector<1x8x8xf32> to vector<8x8xf32>
    %cst_61 = arith.constant dense<0.000000e+00> : vector<8x512xf32>
    %79 = tpu.matmul %78, %76, %cst_61 {dimension_numbers = #tpu.dot_dimension_numbers<[1], [0], [0], [1], [0, 0, 1, 1], [], []>} : vector<8x8xf32>, vector<8x512xf32>, vector<8x512xf32> -> vector<8x512xf32>
    %80 = arith.addf %72, %79 : vector<8x512xf32>
    %c8_i32 = arith.constant 8 : i32
    %81 = tpu.dynamic_rotate %1 by %c8_i32 dim 1 : vector<8x512xf32>, i32 -> vector<8x512xf32>
    %c10 = arith.constant 10 : index
    %c0_62 = arith.constant 0 : index
    %c0_63 = arith.constant 0 : index
    %82 = vector.load %arg6[%c10, %c0_62, %c0_63] : memref<27x8x512xf32, #tpu.memory_space<vmem>>, vector<1x8x512xf32>
    %83 = vector.shape_cast %82 : vector<1x8x512xf32> to vector<8x512xf32>
    %84 = arith.mulf %81, %83 : vector<8x512xf32>
    %c10_64 = arith.constant 10 : index
    %c0_65 = arith.constant 0 : index
    %c0_66 = arith.constant 0 : index
    %85 = vector.load %arg2[%c10_64, %c0_65, %c0_66] : memref<27x8x8xf32, #tpu.memory_space<vmem>>, vector<1x8x8xf32>
    %86 = vector.shape_cast %85 : vector<1x8x8xf32> to vector<8x8xf32>
    %cst_67 = arith.constant dense<0.000000e+00> : vector<8x512xf32>
    %87 = tpu.matmul %86, %84, %cst_67 {dimension_numbers = #tpu.dot_dimension_numbers<[1], [0], [0], [1], [0, 0, 1, 1], [], []>} : vector<8x8xf32>, vector<8x512xf32>, vector<8x512xf32> -> vector<8x512xf32>
    %88 = arith.addf %80, %87 : vector<8x512xf32>
    %c7_i32 = arith.constant 7 : i32
    %89 = tpu.dynamic_rotate %1 by %c7_i32 dim 1 : vector<8x512xf32>, i32 -> vector<8x512xf32>
    %c11 = arith.constant 11 : index
    %c0_68 = arith.constant 0 : index
    %c0_69 = arith.constant 0 : index
    %90 = vector.load %arg6[%c11, %c0_68, %c0_69] : memref<27x8x512xf32, #tpu.memory_space<vmem>>, vector<1x8x512xf32>
    %91 = vector.shape_cast %90 : vector<1x8x512xf32> to vector<8x512xf32>
    %92 = arith.mulf %89, %91 : vector<8x512xf32>
    %c11_70 = arith.constant 11 : index
    %c0_71 = arith.constant 0 : index
    %c0_72 = arith.constant 0 : index
    %93 = vector.load %arg2[%c11_70, %c0_71, %c0_72] : memref<27x8x8xf32, #tpu.memory_space<vmem>>, vector<1x8x8xf32>
    %94 = vector.shape_cast %93 : vector<1x8x8xf32> to vector<8x8xf32>
    %cst_73 = arith.constant dense<0.000000e+00> : vector<8x512xf32>
    %95 = tpu.matmul %94, %92, %cst_73 {dimension_numbers = #tpu.dot_dimension_numbers<[1], [0], [0], [1], [0, 0, 1, 1], [], []>} : vector<8x8xf32>, vector<8x512xf32>, vector<8x512xf32> -> vector<8x512xf32>
    %96 = arith.addf %88, %95 : vector<8x512xf32>
    %c1_i32 = arith.constant 1 : i32
    %97 = tpu.dynamic_rotate %1 by %c1_i32 dim 1 : vector<8x512xf32>, i32 -> vector<8x512xf32>
    %c12 = arith.constant 12 : index
    %c0_74 = arith.constant 0 : index
    %c0_75 = arith.constant 0 : index
    %98 = vector.load %arg6[%c12, %c0_74, %c0_75] : memref<27x8x512xf32, #tpu.memory_space<vmem>>, vector<1x8x512xf32>
    %99 = vector.shape_cast %98 : vector<1x8x512xf32> to vector<8x512xf32>
    %100 = arith.mulf %97, %99 : vector<8x512xf32>
    %c12_76 = arith.constant 12 : index
    %c0_77 = arith.constant 0 : index
    %c0_78 = arith.constant 0 : index
    %101 = vector.load %arg2[%c12_76, %c0_77, %c0_78] : memref<27x8x8xf32, #tpu.memory_space<vmem>>, vector<1x8x8xf32>
    %102 = vector.shape_cast %101 : vector<1x8x8xf32> to vector<8x8xf32>
    %cst_79 = arith.constant dense<0.000000e+00> : vector<8x512xf32>
    %103 = tpu.matmul %102, %100, %cst_79 {dimension_numbers = #tpu.dot_dimension_numbers<[1], [0], [0], [1], [0, 0, 1, 1], [], []>} : vector<8x8xf32>, vector<8x512xf32>, vector<8x512xf32> -> vector<8x512xf32>
    %104 = arith.addf %96, %103 : vector<8x512xf32>
    %c13 = arith.constant 13 : index
    %c0_80 = arith.constant 0 : index
    %c0_81 = arith.constant 0 : index
    %105 = vector.load %arg6[%c13, %c0_80, %c0_81] : memref<27x8x512xf32, #tpu.memory_space<vmem>>, vector<1x8x512xf32>
    %106 = vector.shape_cast %105 : vector<1x8x512xf32> to vector<8x512xf32>
    %107 = arith.mulf %1, %106 : vector<8x512xf32>
    %c13_82 = arith.constant 13 : index
    %c0_83 = arith.constant 0 : index
    %c0_84 = arith.constant 0 : index
    %108 = vector.load %arg2[%c13_82, %c0_83, %c0_84] : memref<27x8x8xf32, #tpu.memory_space<vmem>>, vector<1x8x8xf32>
    %109 = vector.shape_cast %108 : vector<1x8x8xf32> to vector<8x8xf32>
    %cst_85 = arith.constant dense<0.000000e+00> : vector<8x512xf32>
    %110 = tpu.matmul %109, %107, %cst_85 {dimension_numbers = #tpu.dot_dimension_numbers<[1], [0], [0], [1], [0, 0, 1, 1], [], []>} : vector<8x8xf32>, vector<8x512xf32>, vector<8x512xf32> -> vector<8x512xf32>
    %111 = arith.addf %104, %110 : vector<8x512xf32>
    %c511_i32 = arith.constant 511 : i32
    %112 = tpu.dynamic_rotate %1 by %c511_i32 dim 1 : vector<8x512xf32>, i32 -> vector<8x512xf32>
    %c14 = arith.constant 14 : index
    %c0_86 = arith.constant 0 : index
    %c0_87 = arith.constant 0 : index
    %113 = vector.load %arg6[%c14, %c0_86, %c0_87] : memref<27x8x512xf32, #tpu.memory_space<vmem>>, vector<1x8x512xf32>
    %114 = vector.shape_cast %113 : vector<1x8x512xf32> to vector<8x512xf32>
    %115 = arith.mulf %112, %114 : vector<8x512xf32>
    %c14_88 = arith.constant 14 : index
    %c0_89 = arith.constant 0 : index
    %c0_90 = arith.constant 0 : index
    %116 = vector.load %arg2[%c14_88, %c0_89, %c0_90] : memref<27x8x8xf32, #tpu.memory_space<vmem>>, vector<1x8x8xf32>
    %117 = vector.shape_cast %116 : vector<1x8x8xf32> to vector<8x8xf32>
    %cst_91 = arith.constant dense<0.000000e+00> : vector<8x512xf32>
    %118 = tpu.matmul %117, %115, %cst_91 {dimension_numbers = #tpu.dot_dimension_numbers<[1], [0], [0], [1], [0, 0, 1, 1], [], []>} : vector<8x8xf32>, vector<8x512xf32>, vector<8x512xf32> -> vector<8x512xf32>
    %119 = arith.addf %111, %118 : vector<8x512xf32>
    %c505_i32 = arith.constant 505 : i32
    %120 = tpu.dynamic_rotate %1 by %c505_i32 dim 1 : vector<8x512xf32>, i32 -> vector<8x512xf32>
    %c15 = arith.constant 15 : index
    %c0_92 = arith.constant 0 : index
    %c0_93 = arith.constant 0 : index
    %121 = vector.load %arg6[%c15, %c0_92, %c0_93] : memref<27x8x512xf32, #tpu.memory_space<vmem>>, vector<1x8x512xf32>
    %122 = vector.shape_cast %121 : vector<1x8x512xf32> to vector<8x512xf32>
    %123 = arith.mulf %120, %122 : vector<8x512xf32>
    %c15_94 = arith.constant 15 : index
    %c0_95 = arith.constant 0 : index
    %c0_96 = arith.constant 0 : index
    %124 = vector.load %arg2[%c15_94, %c0_95, %c0_96] : memref<27x8x8xf32, #tpu.memory_space<vmem>>, vector<1x8x8xf32>
    %125 = vector.shape_cast %124 : vector<1x8x8xf32> to vector<8x8xf32>
    %cst_97 = arith.constant dense<0.000000e+00> : vector<8x512xf32>
    %126 = tpu.matmul %125, %123, %cst_97 {dimension_numbers = #tpu.dot_dimension_numbers<[1], [0], [0], [1], [0, 0, 1, 1], [], []>} : vector<8x8xf32>, vector<8x512xf32>, vector<8x512xf32> -> vector<8x512xf32>
    %127 = arith.addf %119, %126 : vector<8x512xf32>
    %c504_i32 = arith.constant 504 : i32
    %128 = tpu.dynamic_rotate %1 by %c504_i32 dim 1 : vector<8x512xf32>, i32 -> vector<8x512xf32>
    %c16 = arith.constant 16 : index
    %c0_98 = arith.constant 0 : index
    %c0_99 = arith.constant 0 : index
    %129 = vector.load %arg6[%c16, %c0_98, %c0_99] : memref<27x8x512xf32, #tpu.memory_space<vmem>>, vector<1x8x512xf32>
    %130 = vector.shape_cast %129 : vector<1x8x512xf32> to vector<8x512xf32>
    %131 = arith.mulf %128, %130 : vector<8x512xf32>
    %c16_100 = arith.constant 16 : index
    %c0_101 = arith.constant 0 : index
    %c0_102 = arith.constant 0 : index
    %132 = vector.load %arg2[%c16_100, %c0_101, %c0_102] : memref<27x8x8xf32, #tpu.memory_space<vmem>>, vector<1x8x8xf32>
    %133 = vector.shape_cast %132 : vector<1x8x8xf32> to vector<8x8xf32>
    %cst_103 = arith.constant dense<0.000000e+00> : vector<8x512xf32>
    %134 = tpu.matmul %133, %131, %cst_103 {dimension_numbers = #tpu.dot_dimension_numbers<[1], [0], [0], [1], [0, 0, 1, 1], [], []>} : vector<8x8xf32>, vector<8x512xf32>, vector<8x512xf32> -> vector<8x512xf32>
    %135 = arith.addf %127, %134 : vector<8x512xf32>
    %c503_i32 = arith.constant 503 : i32
    %136 = tpu.dynamic_rotate %1 by %c503_i32 dim 1 : vector<8x512xf32>, i32 -> vector<8x512xf32>
    %c17 = arith.constant 17 : index
    %c0_104 = arith.constant 0 : index
    %c0_105 = arith.constant 0 : index
    %137 = vector.load %arg6[%c17, %c0_104, %c0_105] : memref<27x8x512xf32, #tpu.memory_space<vmem>>, vector<1x8x512xf32>
    %138 = vector.shape_cast %137 : vector<1x8x512xf32> to vector<8x512xf32>
    %139 = arith.mulf %136, %138 : vector<8x512xf32>
    %c17_106 = arith.constant 17 : index
    %c0_107 = arith.constant 0 : index
    %c0_108 = arith.constant 0 : index
    %140 = vector.load %arg2[%c17_106, %c0_107, %c0_108] : memref<27x8x8xf32, #tpu.memory_space<vmem>>, vector<1x8x8xf32>
    %141 = vector.shape_cast %140 : vector<1x8x8xf32> to vector<8x8xf32>
    %cst_109 = arith.constant dense<0.000000e+00> : vector<8x512xf32>
    %142 = tpu.matmul %141, %139, %cst_109 {dimension_numbers = #tpu.dot_dimension_numbers<[1], [0], [0], [1], [0, 0, 1, 1], [], []>} : vector<8x8xf32>, vector<8x512xf32>, vector<8x512xf32> -> vector<8x512xf32>
    %143 = arith.addf %135, %142 : vector<8x512xf32>
    %c457_i32 = arith.constant 457 : i32
    %144 = tpu.dynamic_rotate %1 by %c457_i32 dim 1 : vector<8x512xf32>, i32 -> vector<8x512xf32>
    %c18 = arith.constant 18 : index
    %c0_110 = arith.constant 0 : index
    %c0_111 = arith.constant 0 : index
    %145 = vector.load %arg6[%c18, %c0_110, %c0_111] : memref<27x8x512xf32, #tpu.memory_space<vmem>>, vector<1x8x512xf32>
    %146 = vector.shape_cast %145 : vector<1x8x512xf32> to vector<8x512xf32>
    %147 = arith.mulf %144, %146 : vector<8x512xf32>
    %c18_112 = arith.constant 18 : index
    %c0_113 = arith.constant 0 : index
    %c0_114 = arith.constant 0 : index
    %148 = vector.load %arg2[%c18_112, %c0_113, %c0_114] : memref<27x8x8xf32, #tpu.memory_space<vmem>>, vector<1x8x8xf32>
    %149 = vector.shape_cast %148 : vector<1x8x8xf32> to vector<8x8xf32>
    %cst_115 = arith.constant dense<0.000000e+00> : vector<8x512xf32>
    %150 = tpu.matmul %149, %147, %cst_115 {dimension_numbers = #tpu.dot_dimension_numbers<[1], [0], [0], [1], [0, 0, 1, 1], [], []>} : vector<8x8xf32>, vector<8x512xf32>, vector<8x512xf32> -> vector<8x512xf32>
    %151 = arith.addf %143, %150 : vector<8x512xf32>
    %c456_i32 = arith.constant 456 : i32
    %152 = tpu.dynamic_rotate %1 by %c456_i32 dim 1 : vector<8x512xf32>, i32 -> vector<8x512xf32>
    %c19 = arith.constant 19 : index
    %c0_116 = arith.constant 0 : index
    %c0_117 = arith.constant 0 : index
    %153 = vector.load %arg6[%c19, %c0_116, %c0_117] : memref<27x8x512xf32, #tpu.memory_space<vmem>>, vector<1x8x512xf32>
    %154 = vector.shape_cast %153 : vector<1x8x512xf32> to vector<8x512xf32>
    %155 = arith.mulf %152, %154 : vector<8x512xf32>
    %c19_118 = arith.constant 19 : index
    %c0_119 = arith.constant 0 : index
    %c0_120 = arith.constant 0 : index
    %156 = vector.load %arg2[%c19_118, %c0_119, %c0_120] : memref<27x8x8xf32, #tpu.memory_space<vmem>>, vector<1x8x8xf32>
    %157 = vector.shape_cast %156 : vector<1x8x8xf32> to vector<8x8xf32>
    %cst_121 = arith.constant dense<0.000000e+00> : vector<8x512xf32>
    %158 = tpu.matmul %157, %155, %cst_121 {dimension_numbers = #tpu.dot_dimension_numbers<[1], [0], [0], [1], [0, 0, 1, 1], [], []>} : vector<8x8xf32>, vector<8x512xf32>, vector<8x512xf32> -> vector<8x512xf32>
    %159 = arith.addf %151, %158 : vector<8x512xf32>
    %c455_i32 = arith.constant 455 : i32
    %160 = tpu.dynamic_rotate %1 by %c455_i32 dim 1 : vector<8x512xf32>, i32 -> vector<8x512xf32>
    %c20 = arith.constant 20 : index
    %c0_122 = arith.constant 0 : index
    %c0_123 = arith.constant 0 : index
    %161 = vector.load %arg6[%c20, %c0_122, %c0_123] : memref<27x8x512xf32, #tpu.memory_space<vmem>>, vector<1x8x512xf32>
    %162 = vector.shape_cast %161 : vector<1x8x512xf32> to vector<8x512xf32>
    %163 = arith.mulf %160, %162 : vector<8x512xf32>
    %c20_124 = arith.constant 20 : index
    %c0_125 = arith.constant 0 : index
    %c0_126 = arith.constant 0 : index
    %164 = vector.load %arg2[%c20_124, %c0_125, %c0_126] : memref<27x8x8xf32, #tpu.memory_space<vmem>>, vector<1x8x8xf32>
    %165 = vector.shape_cast %164 : vector<1x8x8xf32> to vector<8x8xf32>
    %cst_127 = arith.constant dense<0.000000e+00> : vector<8x512xf32>
    %166 = tpu.matmul %165, %163, %cst_127 {dimension_numbers = #tpu.dot_dimension_numbers<[1], [0], [0], [1], [0, 0, 1, 1], [], []>} : vector<8x8xf32>, vector<8x512xf32>, vector<8x512xf32> -> vector<8x512xf32>
    %167 = arith.addf %159, %166 : vector<8x512xf32>
    %c449_i32 = arith.constant 449 : i32
    %168 = tpu.dynamic_rotate %1 by %c449_i32 dim 1 : vector<8x512xf32>, i32 -> vector<8x512xf32>
    %c21 = arith.constant 21 : index
    %c0_128 = arith.constant 0 : index
    %c0_129 = arith.constant 0 : index
    %169 = vector.load %arg6[%c21, %c0_128, %c0_129] : memref<27x8x512xf32, #tpu.memory_space<vmem>>, vector<1x8x512xf32>
    %170 = vector.shape_cast %169 : vector<1x8x512xf32> to vector<8x512xf32>
    %171 = arith.mulf %168, %170 : vector<8x512xf32>
    %c21_130 = arith.constant 21 : index
    %c0_131 = arith.constant 0 : index
    %c0_132 = arith.constant 0 : index
    %172 = vector.load %arg2[%c21_130, %c0_131, %c0_132] : memref<27x8x8xf32, #tpu.memory_space<vmem>>, vector<1x8x8xf32>
    %173 = vector.shape_cast %172 : vector<1x8x8xf32> to vector<8x8xf32>
    %cst_133 = arith.constant dense<0.000000e+00> : vector<8x512xf32>
    %174 = tpu.matmul %173, %171, %cst_133 {dimension_numbers = #tpu.dot_dimension_numbers<[1], [0], [0], [1], [0, 0, 1, 1], [], []>} : vector<8x8xf32>, vector<8x512xf32>, vector<8x512xf32> -> vector<8x512xf32>
    %175 = arith.addf %167, %174 : vector<8x512xf32>
    %c448_i32 = arith.constant 448 : i32
    %176 = tpu.dynamic_rotate %1 by %c448_i32 dim 1 : vector<8x512xf32>, i32 -> vector<8x512xf32>
    %c22 = arith.constant 22 : index
    %c0_134 = arith.constant 0 : index
    %c0_135 = arith.constant 0 : index
    %177 = vector.load %arg6[%c22, %c0_134, %c0_135] : memref<27x8x512xf32, #tpu.memory_space<vmem>>, vector<1x8x512xf32>
    %178 = vector.shape_cast %177 : vector<1x8x512xf32> to vector<8x512xf32>
    %179 = arith.mulf %176, %178 : vector<8x512xf32>
    %c22_136 = arith.constant 22 : index
    %c0_137 = arith.constant 0 : index
    %c0_138 = arith.constant 0 : index
    %180 = vector.load %arg2[%c22_136, %c0_137, %c0_138] : memref<27x8x8xf32, #tpu.memory_space<vmem>>, vector<1x8x8xf32>
    %181 = vector.shape_cast %180 : vector<1x8x8xf32> to vector<8x8xf32>
    %cst_139 = arith.constant dense<0.000000e+00> : vector<8x512xf32>
    %182 = tpu.matmul %181, %179, %cst_139 {dimension_numbers = #tpu.dot_dimension_numbers<[1], [0], [0], [1], [0, 0, 1, 1], [], []>} : vector<8x8xf32>, vector<8x512xf32>, vector<8x512xf32> -> vector<8x512xf32>
    %183 = arith.addf %175, %182 : vector<8x512xf32>
    %c447_i32 = arith.constant 447 : i32
    %184 = tpu.dynamic_rotate %1 by %c447_i32 dim 1 : vector<8x512xf32>, i32 -> vector<8x512xf32>
    %c23 = arith.constant 23 : index
    %c0_140 = arith.constant 0 : index
    %c0_141 = arith.constant 0 : index
    %185 = vector.load %arg6[%c23, %c0_140, %c0_141] : memref<27x8x512xf32, #tpu.memory_space<vmem>>, vector<1x8x512xf32>
    %186 = vector.shape_cast %185 : vector<1x8x512xf32> to vector<8x512xf32>
    %187 = arith.mulf %184, %186 : vector<8x512xf32>
    %c23_142 = arith.constant 23 : index
    %c0_143 = arith.constant 0 : index
    %c0_144 = arith.constant 0 : index
    %188 = vector.load %arg2[%c23_142, %c0_143, %c0_144] : memref<27x8x8xf32, #tpu.memory_space<vmem>>, vector<1x8x8xf32>
    %189 = vector.shape_cast %188 : vector<1x8x8xf32> to vector<8x8xf32>
    %cst_145 = arith.constant dense<0.000000e+00> : vector<8x512xf32>
    %190 = tpu.matmul %189, %187, %cst_145 {dimension_numbers = #tpu.dot_dimension_numbers<[1], [0], [0], [1], [0, 0, 1, 1], [], []>} : vector<8x8xf32>, vector<8x512xf32>, vector<8x512xf32> -> vector<8x512xf32>
    %191 = arith.addf %183, %190 : vector<8x512xf32>
    %c441_i32 = arith.constant 441 : i32
    %192 = tpu.dynamic_rotate %1 by %c441_i32 dim 1 : vector<8x512xf32>, i32 -> vector<8x512xf32>
    %c24 = arith.constant 24 : index
    %c0_146 = arith.constant 0 : index
    %c0_147 = arith.constant 0 : index
    %193 = vector.load %arg6[%c24, %c0_146, %c0_147] : memref<27x8x512xf32, #tpu.memory_space<vmem>>, vector<1x8x512xf32>
    %194 = vector.shape_cast %193 : vector<1x8x512xf32> to vector<8x512xf32>
    %195 = arith.mulf %192, %194 : vector<8x512xf32>
    %c24_148 = arith.constant 24 : index
    %c0_149 = arith.constant 0 : index
    %c0_150 = arith.constant 0 : index
    %196 = vector.load %arg2[%c24_148, %c0_149, %c0_150] : memref<27x8x8xf32, #tpu.memory_space<vmem>>, vector<1x8x8xf32>
    %197 = vector.shape_cast %196 : vector<1x8x8xf32> to vector<8x8xf32>
    %cst_151 = arith.constant dense<0.000000e+00> : vector<8x512xf32>
    %198 = tpu.matmul %197, %195, %cst_151 {dimension_numbers = #tpu.dot_dimension_numbers<[1], [0], [0], [1], [0, 0, 1, 1], [], []>} : vector<8x8xf32>, vector<8x512xf32>, vector<8x512xf32> -> vector<8x512xf32>
    %199 = arith.addf %191, %198 : vector<8x512xf32>
    %c440_i32 = arith.constant 440 : i32
    %200 = tpu.dynamic_rotate %1 by %c440_i32 dim 1 : vector<8x512xf32>, i32 -> vector<8x512xf32>
    %c25 = arith.constant 25 : index
    %c0_152 = arith.constant 0 : index
    %c0_153 = arith.constant 0 : index
    %201 = vector.load %arg6[%c25, %c0_152, %c0_153] : memref<27x8x512xf32, #tpu.memory_space<vmem>>, vector<1x8x512xf32>
    %202 = vector.shape_cast %201 : vector<1x8x512xf32> to vector<8x512xf32>
    %203 = arith.mulf %200, %202 : vector<8x512xf32>
    %c25_154 = arith.constant 25 : index
    %c0_155 = arith.constant 0 : index
    %c0_156 = arith.constant 0 : index
    %204 = vector.load %arg2[%c25_154, %c0_155, %c0_156] : memref<27x8x8xf32, #tpu.memory_space<vmem>>, vector<1x8x8xf32>
    %205 = vector.shape_cast %204 : vector<1x8x8xf32> to vector<8x8xf32>
    %cst_157 = arith.constant dense<0.000000e+00> : vector<8x512xf32>
    %206 = tpu.matmul %205, %203, %cst_157 {dimension_numbers = #tpu.dot_dimension_numbers<[1], [0], [0], [1], [0, 0, 1, 1], [], []>} : vector<8x8xf32>, vector<8x512xf32>, vector<8x512xf32> -> vector<8x512xf32>
    %207 = arith.addf %199, %206 : vector<8x512xf32>
    %c439_i32 = arith.constant 439 : i32
    %208 = tpu.dynamic_rotate %1 by %c439_i32 dim 1 : vector<8x512xf32>, i32 -> vector<8x512xf32>
    %c26 = arith.constant 26 : index
    %c0_158 = arith.constant 0 : index
    %c0_159 = arith.constant 0 : index
    %209 = vector.load %arg6[%c26, %c0_158, %c0_159] : memref<27x8x512xf32, #tpu.memory_space<vmem>>, vector<1x8x512xf32>
    %210 = vector.shape_cast %209 : vector<1x8x512xf32> to vector<8x512xf32>
    %211 = arith.mulf %208, %210 : vector<8x512xf32>
    %c26_160 = arith.constant 26 : index
    %c0_161 = arith.constant 0 : index
    %c0_162 = arith.constant 0 : index
    %212 = vector.load %arg2[%c26_160, %c0_161, %c0_162] : memref<27x8x8xf32, #tpu.memory_space<vmem>>, vector<1x8x8xf32>
    %213 = vector.shape_cast %212 : vector<1x8x8xf32> to vector<8x8xf32>
    %cst_163 = arith.constant dense<0.000000e+00> : vector<8x512xf32>
    %214 = tpu.matmul %213, %211, %cst_163 {dimension_numbers = #tpu.dot_dimension_numbers<[1], [0], [0], [1], [0, 0, 1, 1], [], []>} : vector<8x8xf32>, vector<8x512xf32>, vector<8x512xf32> -> vector<8x512xf32>
    %215 = arith.addf %207, %214 : vector<8x512xf32>
    %c0_164 = arith.constant 0 : index
    %c0_165 = arith.constant 0 : index
    %216 = vector.load %arg4[%c0_164, %c0_165] : memref<8x3xf32, #tpu.memory_space<vmem>>, vector<8x1xf32>
    %c0_166 = arith.constant 0 : index
    %c1_167 = arith.constant 1 : index
    %217 = vector.load %arg4[%c0_166, %c1_167] : memref<8x3xf32, #tpu.memory_space<vmem>>, vector<8x1xf32>
    %c0_168 = arith.constant 0 : index
    %c2_169 = arith.constant 2 : index
    %218 = vector.load %arg4[%c0_168, %c2_169] : memref<8x3xf32, #tpu.memory_space<vmem>>, vector<8x1xf32>
    %219 = vector.broadcast %216 : vector<8x1xf32> to vector<8x512xf32>
    %220 = arith.addf %215, %219 : vector<8x512xf32>
    %cst_170 = arith.constant dense<0.000000e+00> : vector<8xf32>
    %221 = vector.multi_reduction <add>, %220, %cst_170 [1] : vector<8x512xf32> to vector<8xf32>
    %222 = vector.shape_cast %221 : vector<8xf32> to vector<8x1xf32>
    %223 = vector.shape_cast %222 : vector<8x1xf32> to vector<8x1xf32>
    %224 = vector.broadcast %223 : vector<8x1xf32> to vector<8x128xf32>
    %c0_171 = arith.constant 0 : index
    %c0_172 = arith.constant 0 : index
    %225 = vector.load %arg7[%c0_171, %c0_172] : memref<8x8xf32, #tpu.memory_space<vmem>>, vector<8x8xf32>
    %cst_173 = arith.constant dense<0.000000e+00> : vector<8x128xf32>
    %226 = tpu.matmul %225, %224, %cst_173 {dimension_numbers = #tpu.dot_dimension_numbers<[1], [0], [0], [1], [0, 0, 1, 1], [], []>} : vector<8x8xf32>, vector<8x128xf32>, vector<8x128xf32> -> vector<8x128xf32>
    %227 = vector.extract_strided_slice %226 {offsets = [0, 0], sizes = [8, 1], strides = [1, 1]} : vector<8x128xf32> to vector<8x1xf32>
    %cst_174 = arith.constant 0.001953125 : f32
    %228 = vector.broadcast %cst_174 : f32 to vector<8x1xf32>
    %229 = arith.mulf %227, %228 : vector<8x1xf32>
    %230 = vector.broadcast %229 : vector<8x1xf32> to vector<8x512xf32>
    %231 = arith.subf %220, %230 : vector<8x512xf32>
    %232 = arith.mulf %231, %231 : vector<8x512xf32>
    %cst_175 = arith.constant dense<0.000000e+00> : vector<8xf32>
    %233 = vector.multi_reduction <add>, %232, %cst_175 [1] : vector<8x512xf32> to vector<8xf32>
    %234 = vector.shape_cast %233 : vector<8xf32> to vector<8x1xf32>
    %235 = vector.shape_cast %234 : vector<8x1xf32> to vector<8x1xf32>
    %236 = vector.broadcast %235 : vector<8x1xf32> to vector<8x128xf32>
    %c0_176 = arith.constant 0 : index
    %c0_177 = arith.constant 0 : index
    %237 = vector.load %arg7[%c0_176, %c0_177] : memref<8x8xf32, #tpu.memory_space<vmem>>, vector<8x8xf32>
    %cst_178 = arith.constant dense<0.000000e+00> : vector<8x128xf32>
    %238 = tpu.matmul %237, %236, %cst_178 {dimension_numbers = #tpu.dot_dimension_numbers<[1], [0], [0], [1], [0, 0, 1, 1], [], []>} : vector<8x8xf32>, vector<8x128xf32>, vector<8x128xf32> -> vector<8x128xf32>
    %239 = vector.extract_strided_slice %238 {offsets = [0, 0], sizes = [8, 1], strides = [1, 1]} : vector<8x128xf32> to vector<8x1xf32>
    %cst_179 = arith.constant 0.001953125 : f32
    %240 = vector.broadcast %cst_179 : f32 to vector<8x1xf32>
    %241 = arith.mulf %239, %240 : vector<8x1xf32>
    %cst_180 = arith.constant 9.99999974E-6 : f32
    %242 = vector.broadcast %cst_180 : f32 to vector<8x1xf32>
    %243 = arith.addf %241, %242 : vector<8x1xf32>
    %244 = math.rsqrt %243 : vector<8x1xf32>
    %245 = arith.mulf %244, %217 : vector<8x1xf32>
    %246 = vector.broadcast %245 : vector<8x1xf32> to vector<8x512xf32>
    %247 = arith.mulf %231, %246 : vector<8x512xf32>
    %248 = vector.broadcast %218 : vector<8x1xf32> to vector<8x512xf32>
    %249 = arith.addf %247, %248 : vector<8x512xf32>
    %cst_181 = arith.constant 0.000000e+00 : f32
    %250 = vector.broadcast %cst_181 : f32 to vector<8x512xf32>
    %251 = arith.maximumf %249, %250 : vector<8x512xf32>
    %c73_i32_182 = arith.constant 73 : i32
    %252 = tpu.dynamic_rotate %251 by %c73_i32_182 dim 1 : vector<8x512xf32>, i32 -> vector<8x512xf32>
    %c0_183 = arith.constant 0 : index
    %c0_184 = arith.constant 0 : index
    %c0_185 = arith.constant 0 : index
    %253 = vector.load %arg6[%c0_183, %c0_184, %c0_185] : memref<27x8x512xf32, #tpu.memory_space<vmem>>, vector<1x8x512xf32>
    %254 = vector.shape_cast %253 : vector<1x8x512xf32> to vector<8x512xf32>
    %255 = arith.mulf %252, %254 : vector<8x512xf32>
    %c0_186 = arith.constant 0 : index
    %c0_187 = arith.constant 0 : index
    %c0_188 = arith.constant 0 : index
    %256 = vector.load %arg3[%c0_186, %c0_187, %c0_188] : memref<27x8x8xf32, #tpu.memory_space<vmem>>, vector<1x8x8xf32>
    %257 = vector.shape_cast %256 : vector<1x8x8xf32> to vector<8x8xf32>
    %cst_189 = arith.constant dense<0.000000e+00> : vector<8x512xf32>
    %258 = tpu.matmul %257, %255, %cst_189 {dimension_numbers = #tpu.dot_dimension_numbers<[1], [0], [0], [1], [0, 0, 1, 1], [], []>} : vector<8x8xf32>, vector<8x512xf32>, vector<8x512xf32> -> vector<8x512xf32>
    %c72_i32_190 = arith.constant 72 : i32
    %259 = tpu.dynamic_rotate %251 by %c72_i32_190 dim 1 : vector<8x512xf32>, i32 -> vector<8x512xf32>
    %c1_191 = arith.constant 1 : index
    %c0_192 = arith.constant 0 : index
    %c0_193 = arith.constant 0 : index
    %260 = vector.load %arg6[%c1_191, %c0_192, %c0_193] : memref<27x8x512xf32, #tpu.memory_space<vmem>>, vector<1x8x512xf32>
    %261 = vector.shape_cast %260 : vector<1x8x512xf32> to vector<8x512xf32>
    %262 = arith.mulf %259, %261 : vector<8x512xf32>
    %c1_194 = arith.constant 1 : index
    %c0_195 = arith.constant 0 : index
    %c0_196 = arith.constant 0 : index
    %263 = vector.load %arg3[%c1_194, %c0_195, %c0_196] : memref<27x8x8xf32, #tpu.memory_space<vmem>>, vector<1x8x8xf32>
    %264 = vector.shape_cast %263 : vector<1x8x8xf32> to vector<8x8xf32>
    %cst_197 = arith.constant dense<0.000000e+00> : vector<8x512xf32>
    %265 = tpu.matmul %264, %262, %cst_197 {dimension_numbers = #tpu.dot_dimension_numbers<[1], [0], [0], [1], [0, 0, 1, 1], [], []>} : vector<8x8xf32>, vector<8x512xf32>, vector<8x512xf32> -> vector<8x512xf32>
    %266 = arith.addf %258, %265 : vector<8x512xf32>
    %c71_i32_198 = arith.constant 71 : i32
    %267 = tpu.dynamic_rotate %251 by %c71_i32_198 dim 1 : vector<8x512xf32>, i32 -> vector<8x512xf32>
    %c2_199 = arith.constant 2 : index
    %c0_200 = arith.constant 0 : index
    %c0_201 = arith.constant 0 : index
    %268 = vector.load %arg6[%c2_199, %c0_200, %c0_201] : memref<27x8x512xf32, #tpu.memory_space<vmem>>, vector<1x8x512xf32>
    %269 = vector.shape_cast %268 : vector<1x8x512xf32> to vector<8x512xf32>
    %270 = arith.mulf %267, %269 : vector<8x512xf32>
    %c2_202 = arith.constant 2 : index
    %c0_203 = arith.constant 0 : index
    %c0_204 = arith.constant 0 : index
    %271 = vector.load %arg3[%c2_202, %c0_203, %c0_204] : memref<27x8x8xf32, #tpu.memory_space<vmem>>, vector<1x8x8xf32>
    %272 = vector.shape_cast %271 : vector<1x8x8xf32> to vector<8x8xf32>
    %cst_205 = arith.constant dense<0.000000e+00> : vector<8x512xf32>
    %273 = tpu.matmul %272, %270, %cst_205 {dimension_numbers = #tpu.dot_dimension_numbers<[1], [0], [0], [1], [0, 0, 1, 1], [], []>} : vector<8x8xf32>, vector<8x512xf32>, vector<8x512xf32> -> vector<8x512xf32>
    %274 = arith.addf %266, %273 : vector<8x512xf32>
    %c65_i32_206 = arith.constant 65 : i32
    %275 = tpu.dynamic_rotate %251 by %c65_i32_206 dim 1 : vector<8x512xf32>, i32 -> vector<8x512xf32>
    %c3_207 = arith.constant 3 : index
    %c0_208 = arith.constant 0 : index
    %c0_209 = arith.constant 0 : index
    %276 = vector.load %arg6[%c3_207, %c0_208, %c0_209] : memref<27x8x512xf32, #tpu.memory_space<vmem>>, vector<1x8x512xf32>
    %277 = vector.shape_cast %276 : vector<1x8x512xf32> to vector<8x512xf32>
    %278 = arith.mulf %275, %277 : vector<8x512xf32>
    %c3_210 = arith.constant 3 : index
    %c0_211 = arith.constant 0 : index
    %c0_212 = arith.constant 0 : index
    %279 = vector.load %arg3[%c3_210, %c0_211, %c0_212] : memref<27x8x8xf32, #tpu.memory_space<vmem>>, vector<1x8x8xf32>
    %280 = vector.shape_cast %279 : vector<1x8x8xf32> to vector<8x8xf32>
    %cst_213 = arith.constant dense<0.000000e+00> : vector<8x512xf32>
    %281 = tpu.matmul %280, %278, %cst_213 {dimension_numbers = #tpu.dot_dimension_numbers<[1], [0], [0], [1], [0, 0, 1, 1], [], []>} : vector<8x8xf32>, vector<8x512xf32>, vector<8x512xf32> -> vector<8x512xf32>
    %282 = arith.addf %274, %281 : vector<8x512xf32>
    %c64_i32_214 = arith.constant 64 : i32
    %283 = tpu.dynamic_rotate %251 by %c64_i32_214 dim 1 : vector<8x512xf32>, i32 -> vector<8x512xf32>
    %c4_215 = arith.constant 4 : index
    %c0_216 = arith.constant 0 : index
    %c0_217 = arith.constant 0 : index
    %284 = vector.load %arg6[%c4_215, %c0_216, %c0_217] : memref<27x8x512xf32, #tpu.memory_space<vmem>>, vector<1x8x512xf32>
    %285 = vector.shape_cast %284 : vector<1x8x512xf32> to vector<8x512xf32>
    %286 = arith.mulf %283, %285 : vector<8x512xf32>
    %c4_218 = arith.constant 4 : index
    %c0_219 = arith.constant 0 : index
    %c0_220 = arith.constant 0 : index
    %287 = vector.load %arg3[%c4_218, %c0_219, %c0_220] : memref<27x8x8xf32, #tpu.memory_space<vmem>>, vector<1x8x8xf32>
    %288 = vector.shape_cast %287 : vector<1x8x8xf32> to vector<8x8xf32>
    %cst_221 = arith.constant dense<0.000000e+00> : vector<8x512xf32>
    %289 = tpu.matmul %288, %286, %cst_221 {dimension_numbers = #tpu.dot_dimension_numbers<[1], [0], [0], [1], [0, 0, 1, 1], [], []>} : vector<8x8xf32>, vector<8x512xf32>, vector<8x512xf32> -> vector<8x512xf32>
    %290 = arith.addf %282, %289 : vector<8x512xf32>
    %c63_i32_222 = arith.constant 63 : i32
    %291 = tpu.dynamic_rotate %251 by %c63_i32_222 dim 1 : vector<8x512xf32>, i32 -> vector<8x512xf32>
    %c5_223 = arith.constant 5 : index
    %c0_224 = arith.constant 0 : index
    %c0_225 = arith.constant 0 : index
    %292 = vector.load %arg6[%c5_223, %c0_224, %c0_225] : memref<27x8x512xf32, #tpu.memory_space<vmem>>, vector<1x8x512xf32>
    %293 = vector.shape_cast %292 : vector<1x8x512xf32> to vector<8x512xf32>
    %294 = arith.mulf %291, %293 : vector<8x512xf32>
    %c5_226 = arith.constant 5 : index
    %c0_227 = arith.constant 0 : index
    %c0_228 = arith.constant 0 : index
    %295 = vector.load %arg3[%c5_226, %c0_227, %c0_228] : memref<27x8x8xf32, #tpu.memory_space<vmem>>, vector<1x8x8xf32>
    %296 = vector.shape_cast %295 : vector<1x8x8xf32> to vector<8x8xf32>
    %cst_229 = arith.constant dense<0.000000e+00> : vector<8x512xf32>
    %297 = tpu.matmul %296, %294, %cst_229 {dimension_numbers = #tpu.dot_dimension_numbers<[1], [0], [0], [1], [0, 0, 1, 1], [], []>} : vector<8x8xf32>, vector<8x512xf32>, vector<8x512xf32> -> vector<8x512xf32>
    %298 = arith.addf %290, %297 : vector<8x512xf32>
    %c57_i32_230 = arith.constant 57 : i32
    %299 = tpu.dynamic_rotate %251 by %c57_i32_230 dim 1 : vector<8x512xf32>, i32 -> vector<8x512xf32>
    %c6_231 = arith.constant 6 : index
    %c0_232 = arith.constant 0 : index
    %c0_233 = arith.constant 0 : index
    %300 = vector.load %arg6[%c6_231, %c0_232, %c0_233] : memref<27x8x512xf32, #tpu.memory_space<vmem>>, vector<1x8x512xf32>
    %301 = vector.shape_cast %300 : vector<1x8x512xf32> to vector<8x512xf32>
    %302 = arith.mulf %299, %301 : vector<8x512xf32>
    %c6_234 = arith.constant 6 : index
    %c0_235 = arith.constant 0 : index
    %c0_236 = arith.constant 0 : index
    %303 = vector.load %arg3[%c6_234, %c0_235, %c0_236] : memref<27x8x8xf32, #tpu.memory_space<vmem>>, vector<1x8x8xf32>
    %304 = vector.shape_cast %303 : vector<1x8x8xf32> to vector<8x8xf32>
    %cst_237 = arith.constant dense<0.000000e+00> : vector<8x512xf32>
    %305 = tpu.matmul %304, %302, %cst_237 {dimension_numbers = #tpu.dot_dimension_numbers<[1], [0], [0], [1], [0, 0, 1, 1], [], []>} : vector<8x8xf32>, vector<8x512xf32>, vector<8x512xf32> -> vector<8x512xf32>
    %306 = arith.addf %298, %305 : vector<8x512xf32>
    %c56_i32_238 = arith.constant 56 : i32
    %307 = tpu.dynamic_rotate %251 by %c56_i32_238 dim 1 : vector<8x512xf32>, i32 -> vector<8x512xf32>
    %c7_239 = arith.constant 7 : index
    %c0_240 = arith.constant 0 : index
    %c0_241 = arith.constant 0 : index
    %308 = vector.load %arg6[%c7_239, %c0_240, %c0_241] : memref<27x8x512xf32, #tpu.memory_space<vmem>>, vector<1x8x512xf32>
    %309 = vector.shape_cast %308 : vector<1x8x512xf32> to vector<8x512xf32>
    %310 = arith.mulf %307, %309 : vector<8x512xf32>
    %c7_242 = arith.constant 7 : index
    %c0_243 = arith.constant 0 : index
    %c0_244 = arith.constant 0 : index
    %311 = vector.load %arg3[%c7_242, %c0_243, %c0_244] : memref<27x8x8xf32, #tpu.memory_space<vmem>>, vector<1x8x8xf32>
    %312 = vector.shape_cast %311 : vector<1x8x8xf32> to vector<8x8xf32>
    %cst_245 = arith.constant dense<0.000000e+00> : vector<8x512xf32>
    %313 = tpu.matmul %312, %310, %cst_245 {dimension_numbers = #tpu.dot_dimension_numbers<[1], [0], [0], [1], [0, 0, 1, 1], [], []>} : vector<8x8xf32>, vector<8x512xf32>, vector<8x512xf32> -> vector<8x512xf32>
    %314 = arith.addf %306, %313 : vector<8x512xf32>
    %c55_i32_246 = arith.constant 55 : i32
    %315 = tpu.dynamic_rotate %251 by %c55_i32_246 dim 1 : vector<8x512xf32>, i32 -> vector<8x512xf32>
    %c8_247 = arith.constant 8 : index
    %c0_248 = arith.constant 0 : index
    %c0_249 = arith.constant 0 : index
    %316 = vector.load %arg6[%c8_247, %c0_248, %c0_249] : memref<27x8x512xf32, #tpu.memory_space<vmem>>, vector<1x8x512xf32>
    %317 = vector.shape_cast %316 : vector<1x8x512xf32> to vector<8x512xf32>
    %318 = arith.mulf %315, %317 : vector<8x512xf32>
    %c8_250 = arith.constant 8 : index
    %c0_251 = arith.constant 0 : index
    %c0_252 = arith.constant 0 : index
    %319 = vector.load %arg3[%c8_250, %c0_251, %c0_252] : memref<27x8x8xf32, #tpu.memory_space<vmem>>, vector<1x8x8xf32>
    %320 = vector.shape_cast %319 : vector<1x8x8xf32> to vector<8x8xf32>
    %cst_253 = arith.constant dense<0.000000e+00> : vector<8x512xf32>
    %321 = tpu.matmul %320, %318, %cst_253 {dimension_numbers = #tpu.dot_dimension_numbers<[1], [0], [0], [1], [0, 0, 1, 1], [], []>} : vector<8x8xf32>, vector<8x512xf32>, vector<8x512xf32> -> vector<8x512xf32>
    %322 = arith.addf %314, %321 : vector<8x512xf32>
    %c9_i32_254 = arith.constant 9 : i32
    %323 = tpu.dynamic_rotate %251 by %c9_i32_254 dim 1 : vector<8x512xf32>, i32 -> vector<8x512xf32>
    %c9_255 = arith.constant 9 : index
    %c0_256 = arith.constant 0 : index
    %c0_257 = arith.constant 0 : index
    %324 = vector.load %arg6[%c9_255, %c0_256, %c0_257] : memref<27x8x512xf32, #tpu.memory_space<vmem>>, vector<1x8x512xf32>
    %325 = vector.shape_cast %324 : vector<1x8x512xf32> to vector<8x512xf32>
    %326 = arith.mulf %323, %325 : vector<8x512xf32>
    %c9_258 = arith.constant 9 : index
    %c0_259 = arith.constant 0 : index
    %c0_260 = arith.constant 0 : index
    %327 = vector.load %arg3[%c9_258, %c0_259, %c0_260] : memref<27x8x8xf32, #tpu.memory_space<vmem>>, vector<1x8x8xf32>
    %328 = vector.shape_cast %327 : vector<1x8x8xf32> to vector<8x8xf32>
    %cst_261 = arith.constant dense<0.000000e+00> : vector<8x512xf32>
    %329 = tpu.matmul %328, %326, %cst_261 {dimension_numbers = #tpu.dot_dimension_numbers<[1], [0], [0], [1], [0, 0, 1, 1], [], []>} : vector<8x8xf32>, vector<8x512xf32>, vector<8x512xf32> -> vector<8x512xf32>
    %330 = arith.addf %322, %329 : vector<8x512xf32>
    %c8_i32_262 = arith.constant 8 : i32
    %331 = tpu.dynamic_rotate %251 by %c8_i32_262 dim 1 : vector<8x512xf32>, i32 -> vector<8x512xf32>
    %c10_263 = arith.constant 10 : index
    %c0_264 = arith.constant 0 : index
    %c0_265 = arith.constant 0 : index
    %332 = vector.load %arg6[%c10_263, %c0_264, %c0_265] : memref<27x8x512xf32, #tpu.memory_space<vmem>>, vector<1x8x512xf32>
    %333 = vector.shape_cast %332 : vector<1x8x512xf32> to vector<8x512xf32>
    %334 = arith.mulf %331, %333 : vector<8x512xf32>
    %c10_266 = arith.constant 10 : index
    %c0_267 = arith.constant 0 : index
    %c0_268 = arith.constant 0 : index
    %335 = vector.load %arg3[%c10_266, %c0_267, %c0_268] : memref<27x8x8xf32, #tpu.memory_space<vmem>>, vector<1x8x8xf32>
    %336 = vector.shape_cast %335 : vector<1x8x8xf32> to vector<8x8xf32>
    %cst_269 = arith.constant dense<0.000000e+00> : vector<8x512xf32>
    %337 = tpu.matmul %336, %334, %cst_269 {dimension_numbers = #tpu.dot_dimension_numbers<[1], [0], [0], [1], [0, 0, 1, 1], [], []>} : vector<8x8xf32>, vector<8x512xf32>, vector<8x512xf32> -> vector<8x512xf32>
    %338 = arith.addf %330, %337 : vector<8x512xf32>
    %c7_i32_270 = arith.constant 7 : i32
    %339 = tpu.dynamic_rotate %251 by %c7_i32_270 dim 1 : vector<8x512xf32>, i32 -> vector<8x512xf32>
    %c11_271 = arith.constant 11 : index
    %c0_272 = arith.constant 0 : index
    %c0_273 = arith.constant 0 : index
    %340 = vector.load %arg6[%c11_271, %c0_272, %c0_273] : memref<27x8x512xf32, #tpu.memory_space<vmem>>, vector<1x8x512xf32>
    %341 = vector.shape_cast %340 : vector<1x8x512xf32> to vector<8x512xf32>
    %342 = arith.mulf %339, %341 : vector<8x512xf32>
    %c11_274 = arith.constant 11 : index
    %c0_275 = arith.constant 0 : index
    %c0_276 = arith.constant 0 : index
    %343 = vector.load %arg3[%c11_274, %c0_275, %c0_276] : memref<27x8x8xf32, #tpu.memory_space<vmem>>, vector<1x8x8xf32>
    %344 = vector.shape_cast %343 : vector<1x8x8xf32> to vector<8x8xf32>
    %cst_277 = arith.constant dense<0.000000e+00> : vector<8x512xf32>
    %345 = tpu.matmul %344, %342, %cst_277 {dimension_numbers = #tpu.dot_dimension_numbers<[1], [0], [0], [1], [0, 0, 1, 1], [], []>} : vector<8x8xf32>, vector<8x512xf32>, vector<8x512xf32> -> vector<8x512xf32>
    %346 = arith.addf %338, %345 : vector<8x512xf32>
    %c1_i32_278 = arith.constant 1 : i32
    %347 = tpu.dynamic_rotate %251 by %c1_i32_278 dim 1 : vector<8x512xf32>, i32 -> vector<8x512xf32>
    %c12_279 = arith.constant 12 : index
    %c0_280 = arith.constant 0 : index
    %c0_281 = arith.constant 0 : index
    %348 = vector.load %arg6[%c12_279, %c0_280, %c0_281] : memref<27x8x512xf32, #tpu.memory_space<vmem>>, vector<1x8x512xf32>
    %349 = vector.shape_cast %348 : vector<1x8x512xf32> to vector<8x512xf32>
    %350 = arith.mulf %347, %349 : vector<8x512xf32>
    %c12_282 = arith.constant 12 : index
    %c0_283 = arith.constant 0 : index
    %c0_284 = arith.constant 0 : index
    %351 = vector.load %arg3[%c12_282, %c0_283, %c0_284] : memref<27x8x8xf32, #tpu.memory_space<vmem>>, vector<1x8x8xf32>
    %352 = vector.shape_cast %351 : vector<1x8x8xf32> to vector<8x8xf32>
    %cst_285 = arith.constant dense<0.000000e+00> : vector<8x512xf32>
    %353 = tpu.matmul %352, %350, %cst_285 {dimension_numbers = #tpu.dot_dimension_numbers<[1], [0], [0], [1], [0, 0, 1, 1], [], []>} : vector<8x8xf32>, vector<8x512xf32>, vector<8x512xf32> -> vector<8x512xf32>
    %354 = arith.addf %346, %353 : vector<8x512xf32>
    %c13_286 = arith.constant 13 : index
    %c0_287 = arith.constant 0 : index
    %c0_288 = arith.constant 0 : index
    %355 = vector.load %arg6[%c13_286, %c0_287, %c0_288] : memref<27x8x512xf32, #tpu.memory_space<vmem>>, vector<1x8x512xf32>
    %356 = vector.shape_cast %355 : vector<1x8x512xf32> to vector<8x512xf32>
    %357 = arith.mulf %251, %356 : vector<8x512xf32>
    %c13_289 = arith.constant 13 : index
    %c0_290 = arith.constant 0 : index
    %c0_291 = arith.constant 0 : index
    %358 = vector.load %arg3[%c13_289, %c0_290, %c0_291] : memref<27x8x8xf32, #tpu.memory_space<vmem>>, vector<1x8x8xf32>
    %359 = vector.shape_cast %358 : vector<1x8x8xf32> to vector<8x8xf32>
    %cst_292 = arith.constant dense<0.000000e+00> : vector<8x512xf32>
    %360 = tpu.matmul %359, %357, %cst_292 {dimension_numbers = #tpu.dot_dimension_numbers<[1], [0], [0], [1], [0, 0, 1, 1], [], []>} : vector<8x8xf32>, vector<8x512xf32>, vector<8x512xf32> -> vector<8x512xf32>
    %361 = arith.addf %354, %360 : vector<8x512xf32>
    %c511_i32_293 = arith.constant 511 : i32
    %362 = tpu.dynamic_rotate %251 by %c511_i32_293 dim 1 : vector<8x512xf32>, i32 -> vector<8x512xf32>
    %c14_294 = arith.constant 14 : index
    %c0_295 = arith.constant 0 : index
    %c0_296 = arith.constant 0 : index
    %363 = vector.load %arg6[%c14_294, %c0_295, %c0_296] : memref<27x8x512xf32, #tpu.memory_space<vmem>>, vector<1x8x512xf32>
    %364 = vector.shape_cast %363 : vector<1x8x512xf32> to vector<8x512xf32>
    %365 = arith.mulf %362, %364 : vector<8x512xf32>
    %c14_297 = arith.constant 14 : index
    %c0_298 = arith.constant 0 : index
    %c0_299 = arith.constant 0 : index
    %366 = vector.load %arg3[%c14_297, %c0_298, %c0_299] : memref<27x8x8xf32, #tpu.memory_space<vmem>>, vector<1x8x8xf32>
    %367 = vector.shape_cast %366 : vector<1x8x8xf32> to vector<8x8xf32>
    %cst_300 = arith.constant dense<0.000000e+00> : vector<8x512xf32>
    %368 = tpu.matmul %367, %365, %cst_300 {dimension_numbers = #tpu.dot_dimension_numbers<[1], [0], [0], [1], [0, 0, 1, 1], [], []>} : vector<8x8xf32>, vector<8x512xf32>, vector<8x512xf32> -> vector<8x512xf32>
    %369 = arith.addf %361, %368 : vector<8x512xf32>
    %c505_i32_301 = arith.constant 505 : i32
    %370 = tpu.dynamic_rotate %251 by %c505_i32_301 dim 1 : vector<8x512xf32>, i32 -> vector<8x512xf32>
    %c15_302 = arith.constant 15 : index
    %c0_303 = arith.constant 0 : index
    %c0_304 = arith.constant 0 : index
    %371 = vector.load %arg6[%c15_302, %c0_303, %c0_304] : memref<27x8x512xf32, #tpu.memory_space<vmem>>, vector<1x8x512xf32>
    %372 = vector.shape_cast %371 : vector<1x8x512xf32> to vector<8x512xf32>
    %373 = arith.mulf %370, %372 : vector<8x512xf32>
    %c15_305 = arith.constant 15 : index
    %c0_306 = arith.constant 0 : index
    %c0_307 = arith.constant 0 : index
    %374 = vector.load %arg3[%c15_305, %c0_306, %c0_307] : memref<27x8x8xf32, #tpu.memory_space<vmem>>, vector<1x8x8xf32>
    %375 = vector.shape_cast %374 : vector<1x8x8xf32> to vector<8x8xf32>
    %cst_308 = arith.constant dense<0.000000e+00> : vector<8x512xf32>
    %376 = tpu.matmul %375, %373, %cst_308 {dimension_numbers = #tpu.dot_dimension_numbers<[1], [0], [0], [1], [0, 0, 1, 1], [], []>} : vector<8x8xf32>, vector<8x512xf32>, vector<8x512xf32> -> vector<8x512xf32>
    %377 = arith.addf %369, %376 : vector<8x512xf32>
    %c504_i32_309 = arith.constant 504 : i32
    %378 = tpu.dynamic_rotate %251 by %c504_i32_309 dim 1 : vector<8x512xf32>, i32 -> vector<8x512xf32>
    %c16_310 = arith.constant 16 : index
    %c0_311 = arith.constant 0 : index
    %c0_312 = arith.constant 0 : index
    %379 = vector.load %arg6[%c16_310, %c0_311, %c0_312] : memref<27x8x512xf32, #tpu.memory_space<vmem>>, vector<1x8x512xf32>
    %380 = vector.shape_cast %379 : vector<1x8x512xf32> to vector<8x512xf32>
    %381 = arith.mulf %378, %380 : vector<8x512xf32>
    %c16_313 = arith.constant 16 : index
    %c0_314 = arith.constant 0 : index
    %c0_315 = arith.constant 0 : index
    %382 = vector.load %arg3[%c16_313, %c0_314, %c0_315] : memref<27x8x8xf32, #tpu.memory_space<vmem>>, vector<1x8x8xf32>
    %383 = vector.shape_cast %382 : vector<1x8x8xf32> to vector<8x8xf32>
    %cst_316 = arith.constant dense<0.000000e+00> : vector<8x512xf32>
    %384 = tpu.matmul %383, %381, %cst_316 {dimension_numbers = #tpu.dot_dimension_numbers<[1], [0], [0], [1], [0, 0, 1, 1], [], []>} : vector<8x8xf32>, vector<8x512xf32>, vector<8x512xf32> -> vector<8x512xf32>
    %385 = arith.addf %377, %384 : vector<8x512xf32>
    %c503_i32_317 = arith.constant 503 : i32
    %386 = tpu.dynamic_rotate %251 by %c503_i32_317 dim 1 : vector<8x512xf32>, i32 -> vector<8x512xf32>
    %c17_318 = arith.constant 17 : index
    %c0_319 = arith.constant 0 : index
    %c0_320 = arith.constant 0 : index
    %387 = vector.load %arg6[%c17_318, %c0_319, %c0_320] : memref<27x8x512xf32, #tpu.memory_space<vmem>>, vector<1x8x512xf32>
    %388 = vector.shape_cast %387 : vector<1x8x512xf32> to vector<8x512xf32>
    %389 = arith.mulf %386, %388 : vector<8x512xf32>
    %c17_321 = arith.constant 17 : index
    %c0_322 = arith.constant 0 : index
    %c0_323 = arith.constant 0 : index
    %390 = vector.load %arg3[%c17_321, %c0_322, %c0_323] : memref<27x8x8xf32, #tpu.memory_space<vmem>>, vector<1x8x8xf32>
    %391 = vector.shape_cast %390 : vector<1x8x8xf32> to vector<8x8xf32>
    %cst_324 = arith.constant dense<0.000000e+00> : vector<8x512xf32>
    %392 = tpu.matmul %391, %389, %cst_324 {dimension_numbers = #tpu.dot_dimension_numbers<[1], [0], [0], [1], [0, 0, 1, 1], [], []>} : vector<8x8xf32>, vector<8x512xf32>, vector<8x512xf32> -> vector<8x512xf32>
    %393 = arith.addf %385, %392 : vector<8x512xf32>
    %c457_i32_325 = arith.constant 457 : i32
    %394 = tpu.dynamic_rotate %251 by %c457_i32_325 dim 1 : vector<8x512xf32>, i32 -> vector<8x512xf32>
    %c18_326 = arith.constant 18 : index
    %c0_327 = arith.constant 0 : index
    %c0_328 = arith.constant 0 : index
    %395 = vector.load %arg6[%c18_326, %c0_327, %c0_328] : memref<27x8x512xf32, #tpu.memory_space<vmem>>, vector<1x8x512xf32>
    %396 = vector.shape_cast %395 : vector<1x8x512xf32> to vector<8x512xf32>
    %397 = arith.mulf %394, %396 : vector<8x512xf32>
    %c18_329 = arith.constant 18 : index
    %c0_330 = arith.constant 0 : index
    %c0_331 = arith.constant 0 : index
    %398 = vector.load %arg3[%c18_329, %c0_330, %c0_331] : memref<27x8x8xf32, #tpu.memory_space<vmem>>, vector<1x8x8xf32>
    %399 = vector.shape_cast %398 : vector<1x8x8xf32> to vector<8x8xf32>
    %cst_332 = arith.constant dense<0.000000e+00> : vector<8x512xf32>
    %400 = tpu.matmul %399, %397, %cst_332 {dimension_numbers = #tpu.dot_dimension_numbers<[1], [0], [0], [1], [0, 0, 1, 1], [], []>} : vector<8x8xf32>, vector<8x512xf32>, vector<8x512xf32> -> vector<8x512xf32>
    %401 = arith.addf %393, %400 : vector<8x512xf32>
    %c456_i32_333 = arith.constant 456 : i32
    %402 = tpu.dynamic_rotate %251 by %c456_i32_333 dim 1 : vector<8x512xf32>, i32 -> vector<8x512xf32>
    %c19_334 = arith.constant 19 : index
    %c0_335 = arith.constant 0 : index
    %c0_336 = arith.constant 0 : index
    %403 = vector.load %arg6[%c19_334, %c0_335, %c0_336] : memref<27x8x512xf32, #tpu.memory_space<vmem>>, vector<1x8x512xf32>
    %404 = vector.shape_cast %403 : vector<1x8x512xf32> to vector<8x512xf32>
    %405 = arith.mulf %402, %404 : vector<8x512xf32>
    %c19_337 = arith.constant 19 : index
    %c0_338 = arith.constant 0 : index
    %c0_339 = arith.constant 0 : index
    %406 = vector.load %arg3[%c19_337, %c0_338, %c0_339] : memref<27x8x8xf32, #tpu.memory_space<vmem>>, vector<1x8x8xf32>
    %407 = vector.shape_cast %406 : vector<1x8x8xf32> to vector<8x8xf32>
    %cst_340 = arith.constant dense<0.000000e+00> : vector<8x512xf32>
    %408 = tpu.matmul %407, %405, %cst_340 {dimension_numbers = #tpu.dot_dimension_numbers<[1], [0], [0], [1], [0, 0, 1, 1], [], []>} : vector<8x8xf32>, vector<8x512xf32>, vector<8x512xf32> -> vector<8x512xf32>
    %409 = arith.addf %401, %408 : vector<8x512xf32>
    %c455_i32_341 = arith.constant 455 : i32
    %410 = tpu.dynamic_rotate %251 by %c455_i32_341 dim 1 : vector<8x512xf32>, i32 -> vector<8x512xf32>
    %c20_342 = arith.constant 20 : index
    %c0_343 = arith.constant 0 : index
    %c0_344 = arith.constant 0 : index
    %411 = vector.load %arg6[%c20_342, %c0_343, %c0_344] : memref<27x8x512xf32, #tpu.memory_space<vmem>>, vector<1x8x512xf32>
    %412 = vector.shape_cast %411 : vector<1x8x512xf32> to vector<8x512xf32>
    %413 = arith.mulf %410, %412 : vector<8x512xf32>
    %c20_345 = arith.constant 20 : index
    %c0_346 = arith.constant 0 : index
    %c0_347 = arith.constant 0 : index
    %414 = vector.load %arg3[%c20_345, %c0_346, %c0_347] : memref<27x8x8xf32, #tpu.memory_space<vmem>>, vector<1x8x8xf32>
    %415 = vector.shape_cast %414 : vector<1x8x8xf32> to vector<8x8xf32>
    %cst_348 = arith.constant dense<0.000000e+00> : vector<8x512xf32>
    %416 = tpu.matmul %415, %413, %cst_348 {dimension_numbers = #tpu.dot_dimension_numbers<[1], [0], [0], [1], [0, 0, 1, 1], [], []>} : vector<8x8xf32>, vector<8x512xf32>, vector<8x512xf32> -> vector<8x512xf32>
    %417 = arith.addf %409, %416 : vector<8x512xf32>
    %c449_i32_349 = arith.constant 449 : i32
    %418 = tpu.dynamic_rotate %251 by %c449_i32_349 dim 1 : vector<8x512xf32>, i32 -> vector<8x512xf32>
    %c21_350 = arith.constant 21 : index
    %c0_351 = arith.constant 0 : index
    %c0_352 = arith.constant 0 : index
    %419 = vector.load %arg6[%c21_350, %c0_351, %c0_352] : memref<27x8x512xf32, #tpu.memory_space<vmem>>, vector<1x8x512xf32>
    %420 = vector.shape_cast %419 : vector<1x8x512xf32> to vector<8x512xf32>
    %421 = arith.mulf %418, %420 : vector<8x512xf32>
    %c21_353 = arith.constant 21 : index
    %c0_354 = arith.constant 0 : index
    %c0_355 = arith.constant 0 : index
    %422 = vector.load %arg3[%c21_353, %c0_354, %c0_355] : memref<27x8x8xf32, #tpu.memory_space<vmem>>, vector<1x8x8xf32>
    %423 = vector.shape_cast %422 : vector<1x8x8xf32> to vector<8x8xf32>
    %cst_356 = arith.constant dense<0.000000e+00> : vector<8x512xf32>
    %424 = tpu.matmul %423, %421, %cst_356 {dimension_numbers = #tpu.dot_dimension_numbers<[1], [0], [0], [1], [0, 0, 1, 1], [], []>} : vector<8x8xf32>, vector<8x512xf32>, vector<8x512xf32> -> vector<8x512xf32>
    %425 = arith.addf %417, %424 : vector<8x512xf32>
    %c448_i32_357 = arith.constant 448 : i32
    %426 = tpu.dynamic_rotate %251 by %c448_i32_357 dim 1 : vector<8x512xf32>, i32 -> vector<8x512xf32>
    %c22_358 = arith.constant 22 : index
    %c0_359 = arith.constant 0 : index
    %c0_360 = arith.constant 0 : index
    %427 = vector.load %arg6[%c22_358, %c0_359, %c0_360] : memref<27x8x512xf32, #tpu.memory_space<vmem>>, vector<1x8x512xf32>
    %428 = vector.shape_cast %427 : vector<1x8x512xf32> to vector<8x512xf32>
    %429 = arith.mulf %426, %428 : vector<8x512xf32>
    %c22_361 = arith.constant 22 : index
    %c0_362 = arith.constant 0 : index
    %c0_363 = arith.constant 0 : index
    %430 = vector.load %arg3[%c22_361, %c0_362, %c0_363] : memref<27x8x8xf32, #tpu.memory_space<vmem>>, vector<1x8x8xf32>
    %431 = vector.shape_cast %430 : vector<1x8x8xf32> to vector<8x8xf32>
    %cst_364 = arith.constant dense<0.000000e+00> : vector<8x512xf32>
    %432 = tpu.matmul %431, %429, %cst_364 {dimension_numbers = #tpu.dot_dimension_numbers<[1], [0], [0], [1], [0, 0, 1, 1], [], []>} : vector<8x8xf32>, vector<8x512xf32>, vector<8x512xf32> -> vector<8x512xf32>
    %433 = arith.addf %425, %432 : vector<8x512xf32>
    %c447_i32_365 = arith.constant 447 : i32
    %434 = tpu.dynamic_rotate %251 by %c447_i32_365 dim 1 : vector<8x512xf32>, i32 -> vector<8x512xf32>
    %c23_366 = arith.constant 23 : index
    %c0_367 = arith.constant 0 : index
    %c0_368 = arith.constant 0 : index
    %435 = vector.load %arg6[%c23_366, %c0_367, %c0_368] : memref<27x8x512xf32, #tpu.memory_space<vmem>>, vector<1x8x512xf32>
    %436 = vector.shape_cast %435 : vector<1x8x512xf32> to vector<8x512xf32>
    %437 = arith.mulf %434, %436 : vector<8x512xf32>
    %c23_369 = arith.constant 23 : index
    %c0_370 = arith.constant 0 : index
    %c0_371 = arith.constant 0 : index
    %438 = vector.load %arg3[%c23_369, %c0_370, %c0_371] : memref<27x8x8xf32, #tpu.memory_space<vmem>>, vector<1x8x8xf32>
    %439 = vector.shape_cast %438 : vector<1x8x8xf32> to vector<8x8xf32>
    %cst_372 = arith.constant dense<0.000000e+00> : vector<8x512xf32>
    %440 = tpu.matmul %439, %437, %cst_372 {dimension_numbers = #tpu.dot_dimension_numbers<[1], [0], [0], [1], [0, 0, 1, 1], [], []>} : vector<8x8xf32>, vector<8x512xf32>, vector<8x512xf32> -> vector<8x512xf32>
    %441 = arith.addf %433, %440 : vector<8x512xf32>
    %c441_i32_373 = arith.constant 441 : i32
    %442 = tpu.dynamic_rotate %251 by %c441_i32_373 dim 1 : vector<8x512xf32>, i32 -> vector<8x512xf32>
    %c24_374 = arith.constant 24 : index
    %c0_375 = arith.constant 0 : index
    %c0_376 = arith.constant 0 : index
    %443 = vector.load %arg6[%c24_374, %c0_375, %c0_376] : memref<27x8x512xf32, #tpu.memory_space<vmem>>, vector<1x8x512xf32>
    %444 = vector.shape_cast %443 : vector<1x8x512xf32> to vector<8x512xf32>
    %445 = arith.mulf %442, %444 : vector<8x512xf32>
    %c24_377 = arith.constant 24 : index
    %c0_378 = arith.constant 0 : index
    %c0_379 = arith.constant 0 : index
    %446 = vector.load %arg3[%c24_377, %c0_378, %c0_379] : memref<27x8x8xf32, #tpu.memory_space<vmem>>, vector<1x8x8xf32>
    %447 = vector.shape_cast %446 : vector<1x8x8xf32> to vector<8x8xf32>
    %cst_380 = arith.constant dense<0.000000e+00> : vector<8x512xf32>
    %448 = tpu.matmul %447, %445, %cst_380 {dimension_numbers = #tpu.dot_dimension_numbers<[1], [0], [0], [1], [0, 0, 1, 1], [], []>} : vector<8x8xf32>, vector<8x512xf32>, vector<8x512xf32> -> vector<8x512xf32>
    %449 = arith.addf %441, %448 : vector<8x512xf32>
    %c440_i32_381 = arith.constant 440 : i32
    %450 = tpu.dynamic_rotate %251 by %c440_i32_381 dim 1 : vector<8x512xf32>, i32 -> vector<8x512xf32>
    %c25_382 = arith.constant 25 : index
    %c0_383 = arith.constant 0 : index
    %c0_384 = arith.constant 0 : index
    %451 = vector.load %arg6[%c25_382, %c0_383, %c0_384] : memref<27x8x512xf32, #tpu.memory_space<vmem>>, vector<1x8x512xf32>
    %452 = vector.shape_cast %451 : vector<1x8x512xf32> to vector<8x512xf32>
    %453 = arith.mulf %450, %452 : vector<8x512xf32>
    %c25_385 = arith.constant 25 : index
    %c0_386 = arith.constant 0 : index
    %c0_387 = arith.constant 0 : index
    %454 = vector.load %arg3[%c25_385, %c0_386, %c0_387] : memref<27x8x8xf32, #tpu.memory_space<vmem>>, vector<1x8x8xf32>
    %455 = vector.shape_cast %454 : vector<1x8x8xf32> to vector<8x8xf32>
    %cst_388 = arith.constant dense<0.000000e+00> : vector<8x512xf32>
    %456 = tpu.matmul %455, %453, %cst_388 {dimension_numbers = #tpu.dot_dimension_numbers<[1], [0], [0], [1], [0, 0, 1, 1], [], []>} : vector<8x8xf32>, vector<8x512xf32>, vector<8x512xf32> -> vector<8x512xf32>
    %457 = arith.addf %449, %456 : vector<8x512xf32>
    %c439_i32_389 = arith.constant 439 : i32
    %458 = tpu.dynamic_rotate %251 by %c439_i32_389 dim 1 : vector<8x512xf32>, i32 -> vector<8x512xf32>
    %c26_390 = arith.constant 26 : index
    %c0_391 = arith.constant 0 : index
    %c0_392 = arith.constant 0 : index
    %459 = vector.load %arg6[%c26_390, %c0_391, %c0_392] : memref<27x8x512xf32, #tpu.memory_space<vmem>>, vector<1x8x512xf32>
    %460 = vector.shape_cast %459 : vector<1x8x512xf32> to vector<8x512xf32>
    %461 = arith.mulf %458, %460 : vector<8x512xf32>
    %c26_393 = arith.constant 26 : index
    %c0_394 = arith.constant 0 : index
    %c0_395 = arith.constant 0 : index
    %462 = vector.load %arg3[%c26_393, %c0_394, %c0_395] : memref<27x8x8xf32, #tpu.memory_space<vmem>>, vector<1x8x8xf32>
    %463 = vector.shape_cast %462 : vector<1x8x8xf32> to vector<8x8xf32>
    %cst_396 = arith.constant dense<0.000000e+00> : vector<8x512xf32>
    %464 = tpu.matmul %463, %461, %cst_396 {dimension_numbers = #tpu.dot_dimension_numbers<[1], [0], [0], [1], [0, 0, 1, 1], [], []>} : vector<8x8xf32>, vector<8x512xf32>, vector<8x512xf32> -> vector<8x512xf32>
    %465 = arith.addf %457, %464 : vector<8x512xf32>
    %c0_397 = arith.constant 0 : index
    %c0_398 = arith.constant 0 : index
    %466 = vector.load %arg5[%c0_397, %c0_398] : memref<8x3xf32, #tpu.memory_space<vmem>>, vector<8x1xf32>
    %c0_399 = arith.constant 0 : index
    %c1_400 = arith.constant 1 : index
    %467 = vector.load %arg5[%c0_399, %c1_400] : memref<8x3xf32, #tpu.memory_space<vmem>>, vector<8x1xf32>
    %c0_401 = arith.constant 0 : index
    %c2_402 = arith.constant 2 : index
    %468 = vector.load %arg5[%c0_401, %c2_402] : memref<8x3xf32, #tpu.memory_space<vmem>>, vector<8x1xf32>
    %469 = vector.broadcast %466 : vector<8x1xf32> to vector<8x512xf32>
    %470 = arith.addf %465, %469 : vector<8x512xf32>
    %cst_403 = arith.constant dense<0.000000e+00> : vector<8xf32>
    %471 = vector.multi_reduction <add>, %470, %cst_403 [1] : vector<8x512xf32> to vector<8xf32>
    %472 = vector.shape_cast %471 : vector<8xf32> to vector<8x1xf32>
    %473 = vector.shape_cast %472 : vector<8x1xf32> to vector<8x1xf32>
    %474 = vector.broadcast %473 : vector<8x1xf32> to vector<8x128xf32>
    %c0_404 = arith.constant 0 : index
    %c0_405 = arith.constant 0 : index
    %475 = vector.load %arg7[%c0_404, %c0_405] : memref<8x8xf32, #tpu.memory_space<vmem>>, vector<8x8xf32>
    %cst_406 = arith.constant dense<0.000000e+00> : vector<8x128xf32>
    %476 = tpu.matmul %475, %474, %cst_406 {dimension_numbers = #tpu.dot_dimension_numbers<[1], [0], [0], [1], [0, 0, 1, 1], [], []>} : vector<8x8xf32>, vector<8x128xf32>, vector<8x128xf32> -> vector<8x128xf32>
    %477 = vector.extract_strided_slice %476 {offsets = [0, 0], sizes = [8, 1], strides = [1, 1]} : vector<8x128xf32> to vector<8x1xf32>
    %cst_407 = arith.constant 0.001953125 : f32
    %478 = vector.broadcast %cst_407 : f32 to vector<8x1xf32>
    %479 = arith.mulf %477, %478 : vector<8x1xf32>
    %480 = vector.broadcast %479 : vector<8x1xf32> to vector<8x512xf32>
    %481 = arith.subf %470, %480 : vector<8x512xf32>
    %482 = arith.mulf %481, %481 : vector<8x512xf32>
    %cst_408 = arith.constant dense<0.000000e+00> : vector<8xf32>
    %483 = vector.multi_reduction <add>, %482, %cst_408 [1] : vector<8x512xf32> to vector<8xf32>
    %484 = vector.shape_cast %483 : vector<8xf32> to vector<8x1xf32>
    %485 = vector.shape_cast %484 : vector<8x1xf32> to vector<8x1xf32>
    %486 = vector.broadcast %485 : vector<8x1xf32> to vector<8x128xf32>
    %c0_409 = arith.constant 0 : index
    %c0_410 = arith.constant 0 : index
    %487 = vector.load %arg7[%c0_409, %c0_410] : memref<8x8xf32, #tpu.memory_space<vmem>>, vector<8x8xf32>
    %cst_411 = arith.constant dense<0.000000e+00> : vector<8x128xf32>
    %488 = tpu.matmul %487, %486, %cst_411 {dimension_numbers = #tpu.dot_dimension_numbers<[1], [0], [0], [1], [0, 0, 1, 1], [], []>} : vector<8x8xf32>, vector<8x128xf32>, vector<8x128xf32> -> vector<8x128xf32>
    %489 = vector.extract_strided_slice %488 {offsets = [0, 0], sizes = [8, 1], strides = [1, 1]} : vector<8x128xf32> to vector<8x1xf32>
    %cst_412 = arith.constant 0.001953125 : f32
    %490 = vector.broadcast %cst_412 : f32 to vector<8x1xf32>
    %491 = arith.mulf %489, %490 : vector<8x1xf32>
    %cst_413 = arith.constant 9.99999974E-6 : f32
    %492 = vector.broadcast %cst_413 : f32 to vector<8x1xf32>
    %493 = arith.addf %491, %492 : vector<8x1xf32>
    %494 = math.rsqrt %493 : vector<8x1xf32>
    %495 = arith.mulf %494, %467 : vector<8x1xf32>
    %496 = vector.broadcast %495 : vector<8x1xf32> to vector<8x512xf32>
    %497 = arith.mulf %481, %496 : vector<8x512xf32>
    %498 = vector.broadcast %468 : vector<8x1xf32> to vector<8x512xf32>
    %499 = arith.addf %497, %498 : vector<8x512xf32>
    %cst_414 = arith.constant 0.000000e+00 : f32
    %500 = vector.broadcast %cst_414 : f32 to vector<8x512xf32>
    %501 = arith.maximumf %499, %500 : vector<8x512xf32>
    %c0_415 = arith.constant 0 : index
    %c0_416 = arith.constant 0 : index
    %c0_417 = arith.constant 0 : index
    %502 = vector.load %arg8[%c0_415, %c0_416, %c0_417] : memref<1x8x512xf32, #tpu.memory_space<vmem>>, vector<1x8x512xf32>
    %503 = vector.shape_cast %502 : vector<1x8x512xf32> to vector<8x512xf32>
    %504 = vector.shape_cast %501 : vector<8x512xf32> to vector<1x8x512xf32>
    tpu.vector_store %arg8[%c0_415, %c0_416, %c0_417], %504 {strides = array<i32>} : memref<1x8x512xf32, #tpu.memory_space<vmem>>, vector<1x8x512xf32>,
    return
  }
  func.func @transform_0(%arg0: i32) -> (i32, i32, i32) {
    %c0_i32 = arith.constant 0 : i32
    %c0_i32_0 = arith.constant 0 : i32
    %c0_i32_1 = arith.constant 0 : i32
    return %arg0, %c0_i32, %c0_i32_0 : i32, i32, i32
  }
  func.func @transform_1(%arg0: i32) -> (i32, i32, i32) {
    %c0_i32 = arith.constant 0 : i32
    %c0_i32_0 = arith.constant 0 : i32
    %c0_i32_1 = arith.constant 0 : i32
    %c0_i32_2 = arith.constant 0 : i32
    return %c0_i32, %c0_i32_0, %c0_i32_1 : i32, i32, i32
  }
  func.func @transform_2(%arg0: i32) -> (i32, i32, i32) {
    %c0_i32 = arith.constant 0 : i32
    %c0_i32_0 = arith.constant 0 : i32
    %c0_i32_1 = arith.constant 0 : i32
    %c0_i32_2 = arith.constant 0 : i32
    return %c0_i32, %c0_i32_0, %c0_i32_1 : i32, i32, i32
  }
  func.func @transform_3(%arg0: i32) -> (i32, i32) {
    %c0_i32 = arith.constant 0 : i32
    %c0_i32_0 = arith.constant 0 : i32
    %c0_i32_1 = arith.constant 0 : i32
    return %c0_i32, %c0_i32_0 : i32, i32
  }
  func.func @transform_4(%arg0: i32) -> (i32, i32) {
    %c0_i32 = arith.constant 0 : i32
    %c0_i32_0 = arith.constant 0 : i32
    %c0_i32_1 = arith.constant 0 : i32
    return %c0_i32, %c0_i32_0 : i32, i32
  }
  func.func @transform_5(%arg0: i32) -> (i32, i32, i32) {
    %c0_i32 = arith.constant 0 : i32
    %c0_i32_0 = arith.constant 0 : i32
    %c0_i32_1 = arith.constant 0 : i32
    %c0_i32_2 = arith.constant 0 : i32
    return %c0_i32, %c0_i32_0, %c0_i32_1 : i32, i32, i32
  }
  func.func @transform_6(%arg0: i32) -> (i32, i32) {
    %c0_i32 = arith.constant 0 : i32
    %c0_i32_0 = arith.constant 0 : i32
    %c0_i32_1 = arith.constant 0 : i32
    return %c0_i32, %c0_i32_0 : i32, i32
  }
  func.func @transform_7(%arg0: i32) -> (i32, i32, i32) {
    %c0_i32 = arith.constant 0 : i32
    %c0_i32_0 = arith.constant 0 : i32
    %c0_i32_1 = arith.constant 0 : i32
    return %arg0, %c0_i32, %c0_i32_0 : i32, i32, i32
  }
}

</mosaic_0001>

<llo_original>
// kernel: tpu_custom_call.1
$region0: #{tpu_custom_call.1}
  #allocation0 [shape = 'u32[]', space=smem, size = 0x4, offset = 0x4, fixed_abs, tag = 'smem constant byte address 0x4 - core index']
  #allocation1 [shape = 'u32[72,128]{1,0:T(1,128)}', space=vmem, size = 0x9000, scoped, tag = 'internal scratch']
  %s0 = inlined_call_operand.vmem [shape: f32[2,8,512], index: 0, kind: input, shape index: {}]
  %s1 = inlined_call_operand.vmem [shape: f32[27,8,8], index: 1, kind: input, shape index: {}]
  %s2 = inlined_call_operand.vmem [shape: f32[27,8,8], index: 2, kind: input, shape index: {}]
  %s3 = inlined_call_operand.vmem [shape: f32[8,3], index: 3, kind: input, shape index: {}]
  %s4 = inlined_call_operand.vmem [shape: f32[8,3], index: 4, kind: input, shape index: {}]
  %s5 = inlined_call_operand.hbm [shape: f32[27,8,512], index: 5, kind: input, shape index: {}]
  %s6 = inlined_call_operand.vmem [shape: f32[8,8], index: 6, kind: input, shape index: {}]
  %s7 = inlined_call_operand.hbm [shape: f32[2,8,512], index: 7, kind: output, shape index: {}]
  %s8 = sld [smem:[#allocation0]]
  $region65: #{tpu_custom_call.1} parent=0
    _
  %s10 = ssub.s32 1, %s8
  %s11 = scalar_select 0, %s10, %s8
  $region1: #{tpu_custom_call.1} parent=0
    #allocation2 [shape = 'u8[442368]{0}', space=vmem, size = 0x6c000, scoped, tag = 'input window, operand 5, single buffered']
    #allocation3 [shape = 's32[2]{0}', space=sflag, size = 0x8, scoped, tag = 'scoped memory for tpu_custom_call.1']
    #allocation4 [shape = 's32[2]{0}', space=sflag, size = 0x8, scoped, tag = 'scoped memory for tpu_custom_call.1']
    #allocation5 [shape = 'u8[32768]{0}', space=vmem, size = 0x8000, scoped, tag = 'output window, operand 0']
    %12 = vsyncpa [#allocation3], 0
    %13 = vsyncpa [#allocation4], 0
    %s14 = scalar_lea.sflag [#allocation4], 1
    %15 = vsyncpa %s14, 0
    loop: start=0, step=1, limit=4
    $region2: #{tpu_custom_call.1} parent=1 // loop_pre_header
      _
    $region3: #{tpu_custom_call.1} parent=1 // loop_header
      %s17 = sphi 0, %s21
      %p18 = scmp.ge.s32.totalorder %s17, 4
      %s27 = sphi 0, %s29
      %s30 = sphi 0, %s27
      %s31 = sphi 0, %s30
      %s47 = sphi 0, %s31
      %s51 = sphi 0, %s51
      %s53 = sphi 0, %s51
      %s54 = sphi 0, %s53
      %s68 = sphi 0, %s54
      %s72 = sphi 0, %s72
      %s74 = sphi 0, %s72
      %s75 = sphi 0, %s74
      %s89 = sphi 0, %s75
      %s93 = sphi 0, %s93
      %s95 = sphi 0, %s93
      %s96 = sphi 0, %s95
      %s110 = sphi 0, %s96
      %s114 = sphi 0, %s114
      %s116 = sphi 0, %s114
      %s117 = sphi 0, %s116
      %s131 = sphi 0, %s117
      %s135 = sphi 0, %s135
      %s137 = sphi 0, %s135
      %s138 = sphi 0, %s137
      %s152 = sphi 0, %s138
      %s156 = sphi 0, %s156
      %s158 = sphi 0, %s156
      %s159 = sphi 0, %s158
      %s173 = sphi 0, %s159
      %s179 = sphi 0, %s181
      %s182 = sphi 0, %s179
      %s183 = sphi 0, %s182
      %s199 = sphi 0, %s183
    $region4: #{tpu_custom_call.1} parent=1 // loop_header_branch
      %20 = sbr.rel (%p18) target = $region8
    $region5: #{tpu_custom_call.1} parent=1 // loop_body
      %s22 = ssub.s32 %s17, 1
      %s23 = ssub.s32 %s17, 2
      %s24 = sadd.s32 %s17, 1
      %s25 = ssub.s32 %s17, %s24
      %p26 = scmp.eq.s32.totalorder %s25, 0
      %s28 = sadd.s32 %s27, 1
      %s29 = scalar_select %p26, %s27, %s28
      %p32 = pneg %p26
      %p33 = scmp.eq.s32.totalorder %s17, 1
      %p34 = por %p32, %p33
      %p35 = scmp.ne.s32.totalorder %s27, %s30
      %p36 = scmp.eq.s32.totalorder %s17, 0
      %p37 = por %p35, %p36
      %p38 = scmp.ne.s32.totalorder %s27, %s30
      %p39 = scmp.eq.s32.totalorder %s22, 1
      %p40 = por %p38, %p39
      %p41 = scmp.ne.s32.totalorder %s30, %s31
      %p42 = scmp.eq.s32.totalorder %s22, 0
      %p43 = por %p41, %p42
      %p44 = scmp.ne.s32.totalorder %s30, %s31
      %p45 = scmp.eq.s32.totalorder %s23, 1
      %p46 = por %p44, %p45
      %p48 = scmp.ne.s32.totalorder %s31, %s47
      %p49 = scmp.eq.s32.totalorder %s23, 0
      %p50 = por %p48, %p49
      %s52 = sadd.s32 %s51, 1
      %p55 = scmp.eq.s32.totalorder %s17, 1
      %p56 = scmp.ne.s32.totalorder %s51, %s53
      %p57 = scmp.eq.s32.totalorder %s17, 0
      %p58 = por %p56, %p57
      %p59 = scmp.ne.s32.totalorder %s51, %s53
      %p60 = scmp.eq.s32.totalorder %s22, 1
      %p61 = por %p59, %p60
      %p62 = scmp.ne.s32.totalorder %s53, %s54
      %p63 = scmp.eq.s32.totalorder %s22, 0
      %p64 = por %p62, %p63
      %p65 = scmp.ne.s32.totalorder %s53, %s54
      %p66 = scmp.eq.s32.totalorder %s23, 1
      %p67 = por %p65, %p66
      %p69 = scmp.ne.s32.totalorder %s54, %s68
      %p70 = scmp.eq.s32.totalorder %s23, 0
      %p71 = por %p69, %p70
      %s73 = sadd.s32 %s72, 1
      %p76 = scmp.eq.s32.totalorder %s17, 1
      %p77 = scmp.ne.s32.totalorder %s72, %s74
      %p78 = scmp.eq.s32.totalorder %s17, 0
      %p79 = por %p77, %p78
      %p80 = scmp.ne.s32.totalorder %s72, %s74
      %p81 = scmp.eq.s32.totalorder %s22, 1
      %p82 = por %p80, %p81
      %p83 = scmp.ne.s32.totalorder %s74, %s75
      %p84 = scmp.eq.s32.totalorder %s22, 0
      %p85 = por %p83, %p84
      %p86 = scmp.ne.s32.totalorder %s74, %s75
      %p87 = scmp.eq.s32.totalorder %s23, 1
      %p88 = por %p86, %p87
      %p90 = scmp.ne.s32.totalorder %s75, %s89
      %p91 = scmp.eq.s32.totalorder %s23, 0
      %p92 = por %p90, %p91
      %s94 = sadd.s32 %s93, 1
      %p97 = scmp.eq.s32.totalorder %s17, 1
      %p98 = scmp.ne.s32.totalorder %s93, %s95
      %p99 = scmp.eq.s32.totalorder %s17, 0
      %p100 = por %p98, %p99
      %p101 = scmp.ne.s32.totalorder %s93, %s95
      %p102 = scmp.eq.s32.totalorder %s22, 1
      %p103 = por %p101, %p102
      %p104 = scmp.ne.s32.totalorder %s95, %s96
      %p105 = scmp.eq.s32.totalorder %s22, 0
      %p106 = por %p104, %p105
      %p107 = scmp.ne.s32.totalorder %s95, %s96
      %p108 = scmp.eq.s32.totalorder %s23, 1
      %p109 = por %p107, %p108
      %p111 = scmp.ne.s32.totalorder %s96, %s110
      %p112 = scmp.eq.s32.totalorder %s23, 0
      %p113 = por %p111, %p112
      %s115 = sadd.s32 %s114, 1
      %p118 = scmp.eq.s32.totalorder %s17, 1
      %p119 = scmp.ne.s32.totalorder %s114, %s116
      %p120 = scmp.eq.s32.totalorder %s17, 0
      %p121 = por %p119, %p120
      %p122 = scmp.ne.s32.totalorder %s114, %s116
      %p123 = scmp.eq.s32.totalorder %s22, 1
      %p124 = por %p122, %p123
      %p125 = scmp.ne.s32.totalorder %s116, %s117
      %p126 = scmp.eq.s32.totalorder %s22, 0
      %p127 = por %p125, %p126
      %p128 = scmp.ne.s32.totalorder %s116, %s117
      %p129 = scmp.eq.s32.totalorder %s23, 1
      %p130 = por %p128, %p129
      %p132 = scmp.ne.s32.totalorder %s117, %s131
      %p133 = scmp.eq.s32.totalorder %s23, 0
      %p134 = por %p132, %p133
      %s136 = sadd.s32 %s135, 1
      %p139 = scmp.eq.s32.totalorder %s17, 1
      %p140 = scmp.ne.s32.totalorder %s135, %s137
      %p141 = scmp.eq.s32.totalorder %s17, 0
      %p142 = por %p140, %p141
      %p143 = scmp.ne.s32.totalorder %s135, %s137
      %p144 = scmp.eq.s32.totalorder %s22, 1
      %p145 = por %p143, %p144
      %p146 = scmp.ne.s32.totalorder %s137, %s138
      %p147 = scmp.eq.s32.totalorder %s22, 0
      %p148 = por %p146, %p147
      %p149 = scmp.ne.s32.totalorder %s137, %s138
      %p150 = scmp.eq.s32.totalorder %s23, 1
      %p151 = por %p149, %p150
      %p153 = scmp.ne.s32.totalorder %s138, %s152
      %p154 = scmp.eq.s32.totalorder %s23, 0
      %p155 = por %p153, %p154
      %s157 = sadd.s32 %s156, 1
      %p160 = scmp.eq.s32.totalorder %s17, 1
      %p161 = scmp.ne.s32.totalorder %s156, %s158
      %p162 = scmp.eq.s32.totalorder %s17, 0
      %p163 = por %p161, %p162
      %p164 = scmp.ne.s32.totalorder %s156, %s158
      %p165 = scmp.eq.s32.totalorder %s22, 1
      %p166 = por %p164, %p165
      %p167 = scmp.ne.s32.totalorder %s158, %s159
      %p168 = scmp.eq.s32.totalorder %s22, 0
      %p169 = por %p167, %p168
      %p170 = scmp.ne.s32.totalorder %s158, %s159
      %p171 = scmp.eq.s32.totalorder %s23, 1
      %p172 = por %p170, %p171
      %p174 = scmp.ne.s32.totalorder %s159, %s173
      %p175 = scmp.eq.s32.totalorder %s23, 0
      %p176 = por %p174, %p175
      %s177 = ssub.s32 %s17, %s24
      %p178 = scmp.eq.s32.totalorder %s177, 0
      %s180 = sadd.s32 %s179, 1
      %s181 = scalar_select %p178, %s179, %s180
      %p184 = pneg %p178
      %p185 = scmp.eq.s32.totalorder %s17, 1
      %p186 = por %p184, %p185
      %p187 = scmp.ne.s32.totalorder %s179, %s182
      %p188 = scmp.eq.s32.totalorder %s17, 0
      %p189 = por %p187, %p188
      %p190 = scmp.ne.s32.totalorder %s179, %s182
      %p191 = scmp.eq.s32.totalorder %s22, 1
      %p192 = por %p190, %p191
      %p193 = scmp.ne.s32.totalorder %s182, %s183
      %p194 = scmp.eq.s32.totalorder %s22, 0
      %p195 = por %p193, %p194
      %p196 = scmp.ne.s32.totalorder %s182, %s183
      %p197 = scmp.eq.s32.totalorder %s23, 1
      %p198 = por %p196, %p197
      %p200 = scmp.ne.s32.totalorder %s183, %s199
      %p201 = scmp.eq.s32.totalorder %s23, 0
      %p202 = por %p200, %p201
      %p203 = scmp.le.s32.totalorder 1, %s17
      %p204 = scmp.lt.s32.totalorder %s17, 3
      %p205 = pnand %p203, %p204
      %p206 = pneg %p205
      // Predicated region
      $region9: #{tpu_custom_call.1} parent=5 // pred_check
        _
      $region10: #{tpu_custom_call.1} parent=5 // pred_check_branch
        %208 = sbr.rel (%p205) target = $region12
      $region11: #{tpu_custom_call.1} parent=5 // pred_region
        %s209 = ssub.s32 %s17, 1
        // Predicated region
        $region13: #{tpu_custom_call.1} parent=11 // pred_check
          %p210 = pneg %p64
        $region14: #{tpu_custom_call.1} parent=11 // pred_check_branch
          %212 = sbr.rel (%p210) target = $region16
        $region15: #{tpu_custom_call.1} parent=11 // pred_region
          _
        $region16: #{tpu_custom_call.1} parent=11 // pred_fallthru
          _
        // Predicated region
        $region17: #{tpu_custom_call.1} parent=11 // pred_check
          %p213 = pneg %p85
        $region18: #{tpu_custom_call.1} parent=11 // pred_check_branch
          %215 = sbr.rel (%p213) target = $region20
        $region19: #{tpu_custom_call.1} parent=11 // pred_region
          _
        $region20: #{tpu_custom_call.1} parent=11 // pred_fallthru
          _
        // Predicated region
        $region21: #{tpu_custom_call.1} parent=11 // pred_check
          %p216 = pneg %p106
        $region22: #{tpu_custom_call.1} parent=11 // pred_check_branch
          %218 = sbr.rel (%p216) target = $region24
        $region23: #{tpu_custom_call.1} parent=11 // pred_region
          _
        $region24: #{tpu_custom_call.1} parent=11 // pred_fallthru
          _
        // Predicated region
        $region25: #{tpu_custom_call.1} parent=11 // pred_check
          %p219 = pneg %p127
        $region26: #{tpu_custom_call.1} parent=11 // pred_check_branch
          %221 = sbr.rel (%p219) target = $region28
        $region27: #{tpu_custom_call.1} parent=11 // pred_region
          _
        $region28: #{tpu_custom_call.1} parent=11 // pred_fallthru
          _
        // Predicated region
        $region29: #{tpu_custom_call.1} parent=11 // pred_check
          %p222 = pneg %p148
        $region30: #{tpu_custom_call.1} parent=11 // pred_check_branch
          %224 = sbr.rel (%p222) target = $region32
        $region31: #{tpu_custom_call.1} parent=11 // pred_region
          %226 = vsyncadd [#allocation3], 0
          %s227 = sshll.u32 %s5, 4
          %s228 = int_to_ptr.hbm [resolvable:$true] %s227
          %s229 = sshll.u32 [#allocation2], 4
          %s230 = int_to_ptr.vmem [resolvable:$true] %s229
          %235 = dma.hbm_to_vmem [thread:$0]  %s228, 13824, %s230, [#allocation3], 512, 512, 32
        $region32: #{tpu_custom_call.1} parent=11 // pred_fallthru
          _
        // Predicated region
        $region33: #{tpu_custom_call.1} parent=11 // pred_check
          %p236 = pneg %p169
        $region34: #{tpu_custom_call.1} parent=11 // pred_check_branch
          %238 = sbr.rel (%p236) target = $region36
        $region35: #{tpu_custom_call.1} parent=11 // pred_region
          _
        $region36: #{tpu_custom_call.1} parent=11 // pred_fallthru
          _
      $region12: #{tpu_custom_call.1} parent=5 // pred_fallthru
        _
      %p239 = scmp.lt.s32.totalorder %s17, 2
      // Predicated region
      $region37: #{tpu_custom_call.1} parent=5 // pred_check
        %p240 = pneg %p239
      $region38: #{tpu_custom_call.1} parent=5 // pred_check_branch
        %242 = sbr.rel (%p240) target = $region40
      $region39: #{tpu_custom_call.1} parent=5 // pred_region
        // Predicated region
        $region41: #{tpu_custom_call.1} parent=39 // pred_check
          %p243 = pneg %p37
        $region42: #{tpu_custom_call.1} parent=39 // pred_check_branch
          %245 = sbr.rel (%p243) target = $region44
        $region43: #{tpu_custom_call.1} parent=39 // pred_region
          %p246 = scmp.lt.s32.totalorder %s17, 1
          %s247 = scalar_select %p246, %s17, 1
          %s248 = smul.addr %s247, 4
          %s249 = smul.addr %s248, 8
          %s250 = scalar_lea.vmem %s0, %s249
        $region44: #{tpu_custom_call.1} parent=39 // pred_fallthru
          _
      $region40: #{tpu_custom_call.1} parent=5 // pred_fallthru
        _
      %p251 = scmp.le.s32.totalorder 1, %s17
      %p252 = scmp.lt.s32.totalorder %s17, 3
      %p253 = pnand %p251, %p252
      %p254 = pneg %p253
      // Predicated region
      $region45: #{tpu_custom_call.1} parent=5 // pred_check
        _
      $region46: #{tpu_custom_call.1} parent=5 // pred_check_branch
        %256 = sbr.rel (%p253) target = $region48
      $region47: #{tpu_custom_call.1} parent=5 // pred_region
        %s257 = ssub.s32 %s17, 1
        // Predicated region
        $region49: #{tpu_custom_call.1} parent=47 // pred_check
          %p258 = pneg %p148
        $region50: #{tpu_custom_call.1} parent=47 // pred_check_branch
          %260 = sbr.rel (%p258) target = $region52
        $region51: #{tpu_custom_call.1} parent=47 // pred_region
          %262 = dma.done [#allocation3], 13824
        $region52: #{tpu_custom_call.1} parent=47 // pred_fallthru
          _
        %p263 = scmp.lt.s32.totalorder %s22, 1
        %s264 = scalar_select %p263, %s22, 1
        %s265 = smul.addr %s264, 4
        %s266 = smul.addr %s265, 8
        %s267 = scalar_lea.vmem %s0, %s266
        %p268 = pneg %p43
        %p269 = pneg %p40
        %p270 = pneg %p64
        %p271 = pneg %p61
        %p272 = pneg %p85
        %p273 = pneg %p82
        %p274 = pneg %p106
        %p275 = pneg %p103
        %p276 = pneg %p127
        %p277 = pneg %p124
        %p278 = pneg %p148
        %p279 = pneg %p145
        %p280 = pneg %p169
        %p281 = pneg %p166
        %p282 = pneg %p195
        %p283 = pneg %p192
        %s284 = sand.u32 %s182, 1
        %s285 = scalar_lea.sflag [#allocation4], %s284
        %s286 = sand.u32 %s182, 1
        %s287 = smul.addr %s286, 32
        %s288 = scalar_lea.vmem [#allocation5], %s287
        %p289 = scmp.lt.s32.totalorder %s22, 1
        %s290 = scalar_select %p289, %s22, 1
        %s291 = smul.addr %s290, 4
        %s292 = smul.addr %s291, 8
        %s293 = scalar_lea.vmem %s0, %s292
        %v294 = vld [vmem:[%s293] sm:$0xff]
        %v295 = vld [vmem:[%s293 + $0x8] sm:$0xff]
        %v296 = vld [vmem:[%s293 + $0x10] sm:$0xff]
        %v297 = vld [vmem:[%s293 + $0x18] sm:$0xff]
        %298 = vrot.lane.b32.xlu0 %v294, 73
        %v299 = vpop.permute.xlu0 %298
        %300 = vrot.lane.b32.xlu0 %v295, 73
        %v301 = vpop.permute.xlu0 %300
        %302 = vrot.lane.b32.xlu0 %v296, 73
        %v303 = vpop.permute.xlu0 %302
        %304 = vrot.lane.b32.xlu0 %v297, 73
        %v305 = vpop.permute.xlu0 %304
        %v306 = vlaneseq
        %v307 = vand.u32 %v306, 127
        %vm308 = vcmp.lt.s32.totalorder %v307, 73
        %v309 = vsel %vm308, %v303, %v305
        %v310 = vsel %vm308, %v301, %v303
        %v311 = vsel %vm308, %v299, %v301
        %v312 = vsel %vm308, %v305, %v299
        %v313 = vld [vmem:[#allocation2] sm:$0xff]
        %v314 = vld [vmem:[#allocation2 + $0x8] sm:$0xff]
        %v315 = vld [vmem:[#allocation2 + $0x10] sm:$0xff]
        %v316 = vld [vmem:[#allocation2 + $0x18] sm:$0xff]
        %v317 = vmul.f32 %v312, %v313
        %v318 = vmul.f32 %v311, %v314
        %v319 = vmul.f32 %v310, %v315
        %v320 = vmul.f32 %v309, %v316
        %v321 = vld [vmem:[%s1] sm:$0xff]
        %322 = vrot.lane.b32.xlu0 %v294, 72
        %v323 = vpop.permute.xlu0 %322
        %324 = vrot.lane.b32.xlu0 %v295, 72
        %v325 = vpop.permute.xlu0 %324
        %326 = vrot.lane.b32.xlu0 %v296, 72
        %v327 = vpop.permute.xlu0 %326
        %328 = vrot.lane.b32.xlu0 %v297, 72
        %v329 = vpop.permute.xlu0 %328
        %vm330 = vcmp.lt.s32.totalorder %v307, 72
        %v331 = vsel %vm330, %v327, %v329
        %v332 = vsel %vm330, %v325, %v327
        %v333 = vsel %vm330, %v323, %v325
        %v334 = vsel %vm330, %v329, %v323
        %s335 = scalar_lea.vmem [#allocation2], 32
        %v336 = vld [vmem:[%s335] sm:$0xff]
        %v337 = vld [vmem:[%s335 + $0x8] sm:$0xff]
        %v338 = vld [vmem:[%s335 + $0x10] sm:$0xff]
        %v339 = vld [vmem:[%s335 + $0x18] sm:$0xff]
        %v340 = vmul.f32 %v334, %v336
        %v341 = vmul.f32 %v333, %v337
        %v342 = vmul.f32 %v332, %v338
        %v343 = vmul.f32 %v331, %v339
        %s344 = scalar_lea.vmem %s1, 8
        %v345 = vld [vmem:[%s344] sm:$0xff]
        %vm346 = vcmask 64512
        %v348 = vsel %vm346, %v345, 0
        %350 = vmatpush.msra.mxu0 0.0
        %351 = vmatpush.msra.mxu0 0.0
        %352 = vmatpush.msra.mxu0 0.0
        %353 = vmatpush.msra.mxu0 0.0
        %354 = vmatpush.msra.mxu0 0.0
        %355 = vmatpush.msra.mxu0 0.0
        %356 = vmatpush.msra.mxu0 0.0
        %357 = vmatpush.msra.mxu0 0.0
        %358 = vmatpush.msra.mxu0 0.0
        %359 = vmatpush.msra.mxu0 0.0
        %360 = vmatpush.msra.mxu0 0.0
        %361 = vmatpush.msra.mxu0 0.0
        %362 = vmatpush.msra.mxu0 0.0
        %363 = vmatpush.msra.mxu0 0.0
        %364 = vmatpush.msra.mxu0 0.0
        %365 = vmatpush.msra.mxu0 %v340
        %366 = vmatmul.f32.gmra.mxu0 %v348
        %v367 = vpop.f32.mrf.mxu0
        %v368 = vadd.f32 0.0, %v367
        %369 = vdwg.mxu0
        %370 = vmatpush.msra.mxu0 0.0
        %371 = vmatpush.msra.mxu0 0.0
        %372 = vmatpush.msra.mxu0 0.0
        %373 = vmatpush.msra.mxu0 0.0
        %374 = vmatpush.msra.mxu0 0.0
        %375 = vmatpush.msra.mxu0 0.0
        %376 = vmatpush.msra.mxu0 0.0
        %377 = vmatpush.msra.mxu0 0.0
        %378 = vmatpush.msra.mxu0 0.0
        %379 = vmatpush.msra.mxu0 0.0
        %380 = vmatpush.msra.mxu0 0.0
        %381 = vmatpush.msra.mxu0 0.0
        %382 = vmatpush.msra.mxu0 0.0
        %383 = vmatpush.msra.mxu0 0.0
        %384 = vmatpush.msra.mxu0 0.0
        %385 = vmatpush.msra.mxu0 %v341
        %386 = vmatmul.f32.gmra.mxu0 %v348
        %v387 = vpop.f32.mrf.mxu0
        %v388 = vadd.f32 0.0, %v387
        %389 = vdwg.mxu0
        %390 = vmatpush.msra.mxu0 0.0
        %391 = vmatpush.msra.mxu0 0.0
        %392 = vmatpush.msra.mxu0 0.0
        %393 = vmatpush.msra.mxu0 0.0
        %394 = vmatpush.msra.mxu0 0.0
        %395 = vmatpush.msra.mxu0 0.0
        %396 = vmatpush.msra.mxu0 0.0
        %397 = vmatpush.msra.mxu0 0.0
        %398 = vmatpush.msra.mxu0 0.0
        %399 = vmatpush.msra.mxu0 0.0
        %400 = vmatpush.msra.mxu0 0.0
        %401 = vmatpush.msra.mxu0 0.0
        %402 = vmatpush.msra.mxu0 0.0
        %403 = vmatpush.msra.mxu0 0.0
        %404 = vmatpush.msra.mxu0 0.0
        %405 = vmatpush.msra.mxu0 %v342
        %406 = vmatmul.f32.gmra.mxu0 %v348
        %v407 = vpop.f32.mrf.mxu0
        %v408 = vadd.f32 0.0, %v407
        %409 = vdwg.mxu0
        %410 = vmatpush.msra.mxu0 0.0
        %411 = vmatpush.msra.mxu0 0.0
        %412 = vmatpush.msra.mxu0 0.0
        %413 = vmatpush.msra.mxu0 0.0
        %414 = vmatpush.msra.mxu0 0.0
        %415 = vmatpush.msra.mxu0 0.0
        %416 = vmatpush.msra.mxu0 0.0
        %417 = vmatpush.msra.mxu0 0.0
        %418 = vmatpush.msra.mxu0 0.0
        %419 = vmatpush.msra.mxu0 0.0
        %420 = vmatpush.msra.mxu0 0.0
        %421 = vmatpush.msra.mxu0 0.0
        %422 = vmatpush.msra.mxu0 0.0
        %423 = vmatpush.msra.mxu0 0.0
        %424 = vmatpush.msra.mxu0 0.0
        %425 = vmatpush.msra.mxu0 %v343
        %426 = vmatmul.f32.gmra.mxu0 %v348
        %v427 = vpop.f32.mrf.mxu0
        %v428 = vadd.f32 0.0, %v427
        %429 = vdwg.mxu0
        %v431 = vsel %vm346, %v321, 0
        %433 = vmatpush.msra.mxu0 0.0
        %434 = vmatpush.msra.mxu0 0.0
        %435 = vmatpush.msra.mxu0 0.0
        %436 = vmatpush.msra.mxu0 0.0
        %437 = vmatpush.msra.mxu0 0.0
        %438 = vmatpush.msra.mxu0 0.0
        %439 = vmatpush.msra.mxu0 0.0
        %440 = vmatpush.msra.mxu0 0.0
        %441 = vmatpush.msra.mxu0 0.0
        %442 = vmatpush.msra.mxu0 0.0
        %443 = vmatpush.msra.mxu0 0.0
        %444 = vmatpush.msra.mxu0 0.0
        %445 = vmatpush.msra.mxu0 0.0
        %446 = vmatpush.msra.mxu0 0.0
        %447 = vmatpush.msra.mxu0 0.0
        %448 = vmatpush.msra.mxu0 %v317
        %449 = vmatmul.f32.gmra.mxu0 %v431
        %v450 = vpop.f32.mrf.mxu0
        %v451 = vadd.f32 %v368, %v450
        %452 = vdwg.mxu0
        %453 = vmatpush.msra.mxu0 0.0
        %454 = vmatpush.msra.mxu0 0.0
        %455 = vmatpush.msra.mxu0 0.0
        %456 = vmatpush.msra.mxu0 0.0
        %457 = vmatpush.msra.mxu0 0.0
        %458 = vmatpush.msra.mxu0 0.0
        %459 = vmatpush.msra.mxu0 0.0
        %460 = vmatpush.msra.mxu0 0.0
        %461 = vmatpush.msra.mxu0 0.0
        %462 = vmatpush.msra.mxu0 0.0
        %463 = vmatpush.msra.mxu0 0.0
        %464 = vmatpush.msra.mxu0 0.0
        %465 = vmatpush.msra.mxu0 0.0
        %466 = vmatpush.msra.mxu0 0.0
        %467 = vmatpush.msra.mxu0 0.0
        %468 = vmatpush.msra.mxu0 %v318
        %469 = vmatmul.f32.gmra.mxu0 %v431
        %v470 = vpop.f32.mrf.mxu0
        %v471 = vadd.f32 %v388, %v470
        %472 = vdwg.mxu0
        %473 = vmatpush.msra.mxu0 0.0
        %474 = vmatpush.msra.mxu0 0.0
        %475 = vmatpush.msra.mxu0 0.0
        %476 = vmatpush.msra.mxu0 0.0
        %477 = vmatpush.msra.mxu0 0.0
        %478 = vmatpush.msra.mxu0 0.0
        %479 = vmatpush.msra.mxu0 0.0
        %480 = vmatpush.msra.mxu0 0.0
        %481 = vmatpush.msra.mxu0 0.0
        %482 = vmatpush.msra.mxu0 0.0
        %483 = vmatpush.msra.mxu0 0.0
        %484 = vmatpush.msra.mxu0 0.0
        %485 = vmatpush.msra.mxu0 0.0
        %486 = vmatpush.msra.mxu0 0.0
        %487 = vmatpush.msra.mxu0 0.0
        %488 = vmatpush.msra.mxu0 %v319
        %489 = vmatmul.f32.gmra.mxu0 %v431
        %v490 = vpop.f32.mrf.mxu0
        %v491 = vadd.f32 %v408, %v490
        %492 = vdwg.mxu0
        %493 = vmatpush.msra.mxu0 0.0
        %494 = vmatpush.msra.mxu0 0.0
        %495 = vmatpush.msra.mxu0 0.0
        %496 = vmatpush.msra.mxu0 0.0
        %497 = vmatpush.msra.mxu0 0.0
        %498 = vmatpush.msra.mxu0 0.0
        %499 = vmatpush.msra.mxu0 0.0
        %500 = vmatpush.msra.mxu0 0.0
        %501 = vmatpush.msra.mxu0 0.0
        %502 = vmatpush.msra.mxu0 0.0
        %503 = vmatpush.msra.mxu0 0.0
        %504 = vmatpush.msra.mxu0 0.0
        %505 = vmatpush.msra.mxu0 0.0
        %506 = vmatpush.msra.mxu0 0.0
        %507 = vmatpush.msra.mxu0 0.0
        %508 = vmatpush.msra.mxu0 %v320
        %509 = vmatmul.f32.gmra.mxu0 %v431
        %v510 = vpop.f32.mrf.mxu0
        %v511 = vadd.f32 %v428, %v510
        %512 = vdwg.mxu0
        %513 = vrot.lane.b32.xlu0 %v294, 71
        %v514 = vpop.permute.xlu0 %513
        %515 = vrot.lane.b32.xlu0 %v295, 71
        %v516 = vpop.permute.xlu0 %515
        %517 = vrot.lane.b32.xlu0 %v296, 71
        %v518 = vpop.permute.xlu0 %517
        %519 = vrot.lane.b32.xlu0 %v297, 71
        %v520 = vpop.permute.xlu0 %519
        %vm521 = vcmp.lt.s32.totalorder %v307, 71
        %v522 = vsel %vm521, %v518, %v520
        %v523 = vsel %vm521, %v516, %v518
        %v524 = vsel %vm521, %v514, %v516
        %v525 = vsel %vm521, %v520, %v514
        %s526 = scalar_lea.vmem [#allocation2], 64
        %v527 = vld [vmem:[%s526] sm:$0xff]
        %v528 = vld [vmem:[%s526 + $0x8] sm:$0xff]
        %v529 = vld [vmem:[%s526 + $0x10] sm:$0xff]
        %v530 = vld [vmem:[%s526 + $0x18] sm:$0xff]
        %v531 = vmul.f32 %v525, %v527
        %v532 = vmul.f32 %v524, %v528
        %v533 = vmul.f32 %v523, %v529
        %v534 = vmul.f32 %v522, %v530
        %s535 = scalar_lea.vmem %s1, 16
        %v536 = vld [vmem:[%s535] sm:$0xff]
        %v538 = vsel %vm346, %v536, 0
        %540 = vmatpush.msra.mxu0 0.0
        %541 = vmatpush.msra.mxu0 0.0
        %542 = vmatpush.msra.mxu0 0.0
        %543 = vmatpush.msra.mxu0 0.0
        %544 = vmatpush.msra.mxu0 0.0
        %545 = vmatpush.msra.mxu0 0.0
        %546 = vmatpush.msra.mxu0 0.0
        %547 = vmatpush.msra.mxu0 0.0
        %548 = vmatpush.msra.mxu0 0.0
        %549 = vmatpush.msra.mxu0 0.0
        %550 = vmatpush.msra.mxu0 0.0
        %551 = vmatpush.msra.mxu0 0.0
        %552 = vmatpush.msra.mxu0 0.0
        %553 = vmatpush.msra.mxu0 0.0
        %554 = vmatpush.msra.mxu0 0.0
        %555 = vmatpush.msra.mxu0 %v531
        %556 = vmatmul.f32.gmra.mxu0 %v538
        %v557 = vpop.f32.mrf.mxu0
        %v558 = vadd.f32 0.0, %v557
        %559 = vdwg.mxu0
        %560 = vmatpush.msra.mxu0 0.0
        %561 = vmatpush.msra.mxu0 0.0
        %562 = vmatpush.msra.mxu0 0.0
        %563 = vmatpush.msra.mxu0 0.0
        %564 = vmatpush.msra.mxu0 0.0
        %565 = vmatpush.msra.mxu0 0.0
        %566 = vmatpush.msra.mxu0 0.0
        %567 = vmatpush.msra.mxu0 0.0
        %568 = vmatpush.msra.mxu0 0.0
        %569 = vmatpush.msra.mxu0 0.0
        %570 = vmatpush.msra.mxu0 0.0
        %571 = vmatpush.msra.mxu0 0.0
        %572 = vmatpush.msra.mxu0 0.0
        %573 = vmatpush.msra.mxu0 0.0
        %574 = vmatpush.msra.mxu0 0.0
        %575 = vmatpush.msra.mxu0 %v532
        %576 = vmatmul.f32.gmra.mxu0 %v538
        %v577 = vpop.f32.mrf.mxu0
        %v578 = vadd.f32 0.0, %v577
        %579 = vdwg.mxu0
        %580 = vmatpush.msra.mxu0 0.0
        %581 = vmatpush.msra.mxu0 0.0
        %582 = vmatpush.msra.mxu0 0.0
        %583 = vmatpush.msra.mxu0 0.0
        %584 = vmatpush.msra.mxu0 0.0
        %585 = vmatpush.msra.mxu0 0.0
        %586 = vmatpush.msra.mxu0 0.0
        %587 = vmatpush.msra.mxu0 0.0
        %588 = vmatpush.msra.mxu0 0.0
        %589 = vmatpush.msra.mxu0 0.0
        %590 = vmatpush.msra.mxu0 0.0
        %591 = vmatpush.msra.mxu0 0.0
        %592 = vmatpush.msra.mxu0 0.0
        %593 = vmatpush.msra.mxu0 0.0
        %594 = vmatpush.msra.mxu0 0.0
        %595 = vmatpush.msra.mxu0 %v533
        %596 = vmatmul.f32.gmra.mxu0 %v538
        %v597 = vpop.f32.mrf.mxu0
        %v598 = vadd.f32 0.0, %v597
        %599 = vdwg.mxu0
        %600 = vmatpush.msra.mxu0 0.0
        %601 = vmatpush.msra.mxu0 0.0
        %602 = vmatpush.msra.mxu0 0.0
        %603 = vmatpush.msra.mxu0 0.0
        %604 = vmatpush.msra.mxu0 0.0
        %605 = vmatpush.msra.mxu0 0.0
        %606 = vmatpush.msra.mxu0 0.0
        %607 = vmatpush.msra.mxu0 0.0
        %608 = vmatpush.msra.mxu0 0.0
        %609 = vmatpush.msra.mxu0 0.0
        %610 = vmatpush.msra.mxu0 0.0
        %611 = vmatpush.msra.mxu0 0.0
        %612 = vmatpush.msra.mxu0 0.0
        %613 = vmatpush.msra.mxu0 0.0
        %614 = vmatpush.msra.mxu0 0.0
        %615 = vmatpush.msra.mxu0 %v534
        %616 = vmatmul.f32.gmra.mxu0 %v538
        %v617 = vpop.f32.mrf.mxu0
        %v618 = vadd.f32 0.0, %v617
        %619 = vdwg.mxu0
        %v620 = vadd.f32 %v451, %v558
        %v621 = vadd.f32 %v471, %v578
        %v622 = vadd.f32 %v491, %v598
        %v623 = vadd.f32 %v511, %v618
        %624 = vrot.lane.b32.xlu0 %v294, 65
        %v625 = vpop.permute.xlu0 %624
        %626 = vrot.lane.b32.xlu0 %v295, 65
        %v627 = vpop.permute.xlu0 %626
        %628 = vrot.lane.b32.xlu0 %v296, 65
        %v629 = vpop.permute.xlu0 %628
        %630 = vrot.lane.b32.xlu0 %v297, 65
        %v631 = vpop.permute.xlu0 %630
        %vm632 = vcmp.lt.s32.totalorder %v307, 65
        %v633 = vsel %vm632, %v629, %v631
        %v634 = vsel %vm632, %v627, %v629
        %v635 = vsel %vm632, %v625, %v627
        %v636 = vsel %vm632, %v631, %v625
        %s637 = scalar_lea.vmem [#allocation2], 96
        %v638 = vld [vmem:[%s637] sm:$0xff]
        %v639 = vld [vmem:[%s637 + $0x8] sm:$0xff]
        %v640 = vld [vmem:[%s637 + $0x10] sm:$0xff]
        %v641 = vld [vmem:[%s637 + $0x18] sm:$0xff]
        %v642 = vmul.f32 %v636, %v638
        %v643 = vmul.f32 %v635, %v639
        %v644 = vmul.f32 %v634, %v640
        %v645 = vmul.f32 %v633, %v641
        %s646 = scalar_lea.vmem %s1, 24
        %v647 = vld [vmem:[%s646] sm:$0xff]
        %v649 = vsel %vm346, %v647, 0
        %651 = vmatpush.msra.mxu0 0.0
        %652 = vmatpush.msra.mxu0 0.0
        %653 = vmatpush.msra.mxu0 0.0
        %654 = vmatpush.msra.mxu0 0.0
        %655 = vmatpush.msra.mxu0 0.0
        %656 = vmatpush.msra.mxu0 0.0
        %657 = vmatpush.msra.mxu0 0.0
        %658 = vmatpush.msra.mxu0 0.0
        %659 = vmatpush.msra.mxu0 0.0
        %660 = vmatpush.msra.mxu0 0.0
        %661 = vmatpush.msra.mxu0 0.0
        %662 = vmatpush.msra.mxu0 0.0
        %663 = vmatpush.msra.mxu0 0.0
        %664 = vmatpush.msra.mxu0 0.0
        %665 = vmatpush.msra.mxu0 0.0
        %666 = vmatpush.msra.mxu0 %v642
        %667 = vmatmul.f32.gmra.mxu0 %v649
        %v668 = vpop.f32.mrf.mxu0
        %v669 = vadd.f32 0.0, %v668
        %670 = vdwg.mxu0
        %671 = vmatpush.msra.mxu0 0.0
        %672 = vmatpush.msra.mxu0 0.0
        %673 = vmatpush.msra.mxu0 0.0
        %674 = vmatpush.msra.mxu0 0.0
        %675 = vmatpush.msra.mxu0 0.0
        %676 = vmatpush.msra.mxu0 0.0
        %677 = vmatpush.msra.mxu0 0.0
        %678 = vmatpush.msra.mxu0 0.0
        %679 = vmatpush.msra.mxu0 0.0
        %680 = vmatpush.msra.mxu0 0.0
        %681 = vmatpush.msra.mxu0 0.0
        %682 = vmatpush.msra.mxu0 0.0
        %683 = vmatpush.msra.mxu0 0.0
        %684 = vmatpush.msra.mxu0 0.0
        %685 = vmatpush.msra.mxu0 0.0
        %686 = vmatpush.msra.mxu0 %v643
        %687 = vmatmul.f32.gmra.mxu0 %v649
        %v688 = vpop.f32.mrf.mxu0
        %v689 = vadd.f32 0.0, %v688
        %690 = vdwg.mxu0
        %691 = vmatpush.msra.mxu0 0.0
        %692 = vmatpush.msra.mxu0 0.0
        %693 = vmatpush.msra.mxu0 0.0
        %694 = vmatpush.msra.mxu0 0.0
        %695 = vmatpush.msra.mxu0 0.0
        %696 = vmatpush.msra.mxu0 0.0
        %697 = vmatpush.msra.mxu0 0.0
        %698 = vmatpush.msra.mxu0 0.0
        %699 = vmatpush.msra.mxu0 0.0
        %700 = vmatpush.msra.mxu0 0.0
        %701 = vmatpush.msra.mxu0 0.0
        %702 = vmatpush.msra.mxu0 0.0
        %703 = vmatpush.msra.mxu0 0.0
        %704 = vmatpush.msra.mxu0 0.0
        %705 = vmatpush.msra.mxu0 0.0
        %706 = vmatpush.msra.mxu0 %v644
        %707 = vmatmul.f32.gmra.mxu0 %v649
        %v708 = vpop.f32.mrf.mxu0
        %v709 = vadd.f32 0.0, %v708
        %710 = vdwg.mxu0
        %711 = vmatpush.msra.mxu0 0.0
        %712 = vmatpush.msra.mxu0 0.0
        %713 = vmatpush.msra.mxu0 0.0
        %714 = vmatpush.msra.mxu0 0.0
        %715 = vmatpush.msra.mxu0 0.0
        %716 = vmatpush.msra.mxu0 0.0
        %717 = vmatpush.msra.mxu0 0.0
        %718 = vmatpush.msra.mxu0 0.0
        %719 = vmatpush.msra.mxu0 0.0
        %720 = vmatpush.msra.mxu0 0.0
        %721 = vmatpush.msra.mxu0 0.0
        %722 = vmatpush.msra.mxu0 0.0
        %723 = vmatpush.msra.mxu0 0.0
        %724 = vmatpush.msra.mxu0 0.0
        %725 = vmatpush.msra.mxu0 0.0
        %726 = vmatpush.msra.mxu0 %v645
        %727 = vmatmul.f32.gmra.mxu0 %v649
        %v728 = vpop.f32.mrf.mxu0
        %v729 = vadd.f32 0.0, %v728
        %730 = vdwg.mxu0
        %v731 = vadd.f32 %v620, %v669
        %v732 = vadd.f32 %v621, %v689
        %v733 = vadd.f32 %v622, %v709
        %v734 = vadd.f32 %v623, %v729
        %735 = vrot.lane.b32.xlu0 %v294, 64
        %v736 = vpop.permute.xlu0 %735
        %737 = vrot.lane.b32.xlu0 %v295, 64
        %v738 = vpop.permute.xlu0 %737
        %739 = vrot.lane.b32.xlu0 %v296, 64
        %v740 = vpop.permute.xlu0 %739
        %741 = vrot.lane.b32.xlu0 %v297, 64
        %v742 = vpop.permute.xlu0 %741
        %vm743 = vcmp.lt.s32.totalorder %v307, 64
        %v744 = vsel %vm743, %v740, %v742
        %v745 = vsel %vm743, %v738, %v740
        %v746 = vsel %vm743, %v736, %v738
        %v747 = vsel %vm743, %v742, %v736
        %s748 = scalar_lea.vmem [#allocation2], 128
        %v749 = vld [vmem:[%s748] sm:$0xff]
        %v750 = vld [vmem:[%s748 + $0x8] sm:$0xff]
        %v751 = vld [vmem:[%s748 + $0x10] sm:$0xff]
        %v752 = vld [vmem:[%s748 + $0x18] sm:$0xff]
        %v753 = vmul.f32 %v747, %v749
        %v754 = vmul.f32 %v746, %v750
        %v755 = vmul.f32 %v745, %v751
        %v756 = vmul.f32 %v744, %v752
        %s757 = scalar_lea.vmem %s1, 32
        %v758 = vld [vmem:[%s757] sm:$0xff]
        %v760 = vsel %vm346, %v758, 0
        %762 = vmatpush.msra.mxu0 0.0
        %763 = vmatpush.msra.mxu0 0.0
        %764 = vmatpush.msra.mxu0 0.0
        %765 = vmatpush.msra.mxu0 0.0
        %766 = vmatpush.msra.mxu0 0.0
        %767 = vmatpush.msra.mxu0 0.0
        %768 = vmatpush.msra.mxu0 0.0
        %769 = vmatpush.msra.mxu0 0.0
        %770 = vmatpush.msra.mxu0 0.0
        %771 = vmatpush.msra.mxu0 0.0
        %772 = vmatpush.msra.mxu0 0.0
        %773 = vmatpush.msra.mxu0 0.0
        %774 = vmatpush.msra.mxu0 0.0
        %775 = vmatpush.msra.mxu0 0.0
        %776 = vmatpush.msra.mxu0 0.0
        %777 = vmatpush.msra.mxu0 %v753
        %778 = vmatmul.f32.gmra.mxu0 %v760
        %v779 = vpop.f32.mrf.mxu0
        %v780 = vadd.f32 0.0, %v779
        %781 = vdwg.mxu0
        %782 = vmatpush.msra.mxu0 0.0
        %783 = vmatpush.msra.mxu0 0.0
        %784 = vmatpush.msra.mxu0 0.0
        %785 = vmatpush.msra.mxu0 0.0
        %786 = vmatpush.msra.mxu0 0.0
        %787 = vmatpush.msra.mxu0 0.0
        %788 = vmatpush.msra.mxu0 0.0
        %789 = vmatpush.msra.mxu0 0.0
        %790 = vmatpush.msra.mxu0 0.0
        %791 = vmatpush.msra.mxu0 0.0
        %792 = vmatpush.msra.mxu0 0.0
        %793 = vmatpush.msra.mxu0 0.0
        %794 = vmatpush.msra.mxu0 0.0
        %795 = vmatpush.msra.mxu0 0.0
        %796 = vmatpush.msra.mxu0 0.0
        %797 = vmatpush.msra.mxu0 %v754
        %798 = vmatmul.f32.gmra.mxu0 %v760
        %v799 = vpop.f32.mrf.mxu0
        %v800 = vadd.f32 0.0, %v799
        %801 = vdwg.mxu0
        %802 = vmatpush.msra.mxu0 0.0
        %803 = vmatpush.msra.mxu0 0.0
        %804 = vmatpush.msra.mxu0 0.0
        %805 = vmatpush.msra.mxu0 0.0
        %806 = vmatpush.msra.mxu0 0.0
        %807 = vmatpush.msra.mxu0 0.0
        %808 = vmatpush.msra.mxu0 0.0
        %809 = vmatpush.msra.mxu0 0.0
        %810 = vmatpush.msra.mxu0 0.0
        %811 = vmatpush.msra.mxu0 0.0
        %812 = vmatpush.msra.mxu0 0.0
        %813 = vmatpush.msra.mxu0 0.0
        %814 = vmatpush.msra.mxu0 0.0
        %815 = vmatpush.msra.mxu0 0.0
        %816 = vmatpush.msra.mxu0 0.0
        %817 = vmatpush.msra.mxu0 %v755
        %818 = vmatmul.f32.gmra.mxu0 %v760
        %v819 = vpop.f32.mrf.mxu0
        %v820 = vadd.f32 0.0, %v819
        %821 = vdwg.mxu0
        %822 = vmatpush.msra.mxu0 0.0
        %823 = vmatpush.msra.mxu0 0.0
        %824 = vmatpush.msra.mxu0 0.0
        %825 = vmatpush.msra.mxu0 0.0
        %826 = vmatpush.msra.mxu0 0.0
        %827 = vmatpush.msra.mxu0 0.0
        %828 = vmatpush.msra.mxu0 0.0
        %829 = vmatpush.msra.mxu0 0.0
        %830 = vmatpush.msra.mxu0 0.0
        %831 = vmatpush.msra.mxu0 0.0
        %832 = vmatpush.msra.mxu0 0.0
        %833 = vmatpush.msra.mxu0 0.0
        %834 = vmatpush.msra.mxu0 0.0
        %835 = vmatpush.msra.mxu0 0.0
        %836 = vmatpush.msra.mxu0 0.0
        %837 = vmatpush.msra.mxu0 %v756
        %838 = vmatmul.f32.gmra.mxu0 %v760
        %v839 = vpop.f32.mrf.mxu0
        %v840 = vadd.f32 0.0, %v839
        %841 = vdwg.mxu0
        %v842 = vadd.f32 %v731, %v780
        %v843 = vadd.f32 %v732, %v800
        %v844 = vadd.f32 %v733, %v820
        %v845 = vadd.f32 %v734, %v840
        %846 = vrot.lane.b32.xlu0 %v294, 63
        %v847 = vpop.permute.xlu0 %846
        %848 = vrot.lane.b32.xlu0 %v295, 63
        %v849 = vpop.permute.xlu0 %848
        %850 = vrot.lane.b32.xlu0 %v296, 63
        %v851 = vpop.permute.xlu0 %850
        %852 = vrot.lane.b32.xlu0 %v297, 63
        %v853 = vpop.permute.xlu0 %852
        %vm854 = vcmp.lt.s32.totalorder %v307, 63
        %v855 = vsel %vm854, %v851, %v853
        %v856 = vsel %vm854, %v849, %v851
        %v857 = vsel %vm854, %v847, %v849
        %v858 = vsel %vm854, %v853, %v847
        %s859 = scalar_lea.vmem [#allocation2], 160
        %v860 = vld [vmem:[%s859] sm:$0xff]
        %v861 = vld [vmem:[%s859 + $0x8] sm:$0xff]
        %v862 = vld [vmem:[%s859 + $0x10] sm:$0xff]
        %v863 = vld [vmem:[%s859 + $0x18] sm:$0xff]
        %v864 = vmul.f32 %v858, %v860
        %v865 = vmul.f32 %v857, %v861
        %v866 = vmul.f32 %v856, %v862
        %v867 = vmul.f32 %v855, %v863
        %s868 = scalar_lea.vmem %s1, 40
        %v869 = vld [vmem:[%s868] sm:$0xff]
        %v871 = vsel %vm346, %v869, 0
        %873 = vmatpush.msra.mxu0 0.0
        %874 = vmatpush.msra.mxu0 0.0
        %875 = vmatpush.msra.mxu0 0.0
        %876 = vmatpush.msra.mxu0 0.0
        %877 = vmatpush.msra.mxu0 0.0
        %878 = vmatpush.msra.mxu0 0.0
        %879 = vmatpush.msra.mxu0 0.0
        %880 = vmatpush.msra.mxu0 0.0
        %881 = vmatpush.msra.mxu0 0.0
        %882 = vmatpush.msra.mxu0 0.0
        %883 = vmatpush.msra.mxu0 0.0
        %884 = vmatpush.msra.mxu0 0.0
        %885 = vmatpush.msra.mxu0 0.0
        %886 = vmatpush.msra.mxu0 0.0
        %887 = vmatpush.msra.mxu0 0.0
        %888 = vmatpush.msra.mxu0 %v864
        %889 = vmatmul.f32.gmra.mxu0 %v871
        %v890 = vpop.f32.mrf.mxu0
        %v891 = vadd.f32 0.0, %v890
        %892 = vdwg.mxu0
        %893 = vmatpush.msra.mxu0 0.0
        %894 = vmatpush.msra.mxu0 0.0
        %895 = vmatpush.msra.mxu0 0.0
        %896 = vmatpush.msra.mxu0 0.0
        %897 = vmatpush.msra.mxu0 0.0
        %898 = vmatpush.msra.mxu0 0.0
        %899 = vmatpush.msra.mxu0 0.0
        %900 = vmatpush.msra.mxu0 0.0
        %901 = vmatpush.msra.mxu0 0.0
        %902 = vmatpush.msra.mxu0 0.0
        %903 = vmatpush.msra.mxu0 0.0
        %904 = vmatpush.msra.mxu0 0.0
        %905 = vmatpush.msra.mxu0 0.0
        %906 = vmatpush.msra.mxu0 0.0
        %907 = vmatpush.msra.mxu0 0.0
        %908 = vmatpush.msra.mxu0 %v865
        %909 = vmatmul.f32.gmra.mxu0 %v871
        %v910 = vpop.f32.mrf.mxu0
        %v911 = vadd.f32 0.0, %v910
        %912 = vdwg.mxu0
        %913 = vmatpush.msra.mxu0 0.0
        %914 = vmatpush.msra.mxu0 0.0
        %915 = vmatpush.msra.mxu0 0.0
        %916 = vmatpush.msra.mxu0 0.0
        %917 = vmatpush.msra.mxu0 0.0
        %918 = vmatpush.msra.mxu0 0.0
        %919 = vmatpush.msra.mxu0 0.0
        %920 = vmatpush.msra.mxu0 0.0
        %921 = vmatpush.msra.mxu0 0.0
        %922 = vmatpush.msra.mxu0 0.0
        %923 = vmatpush.msra.mxu0 0.0
        %924 = vmatpush.msra.mxu0 0.0
        %925 = vmatpush.msra.mxu0 0.0
        %926 = vmatpush.msra.mxu0 0.0
        %927 = vmatpush.msra.mxu0 0.0
        %928 = vmatpush.msra.mxu0 %v866
        %929 = vmatmul.f32.gmra.mxu0 %v871
        %v930 = vpop.f32.mrf.mxu0
        %v931 = vadd.f32 0.0, %v930
        %932 = vdwg.mxu0
        %933 = vmatpush.msra.mxu0 0.0
        %934 = vmatpush.msra.mxu0 0.0
        %935 = vmatpush.msra.mxu0 0.0
        %936 = vmatpush.msra.mxu0 0.0
        %937 = vmatpush.msra.mxu0 0.0
        %938 = vmatpush.msra.mxu0 0.0
        %939 = vmatpush.msra.mxu0 0.0
        %940 = vmatpush.msra.mxu0 0.0
        %941 = vmatpush.msra.mxu0 0.0
        %942 = vmatpush.msra.mxu0 0.0
        %943 = vmatpush.msra.mxu0 0.0
        %944 = vmatpush.msra.mxu0 0.0
        %945 = vmatpush.msra.mxu0 0.0
        %946 = vmatpush.msra.mxu0 0.0
        %947 = vmatpush.msra.mxu0 0.0
        %948 = vmatpush.msra.mxu0 %v867
        %949 = vmatmul.f32.gmra.mxu0 %v871
        %v950 = vpop.f32.mrf.mxu0
        %v951 = vadd.f32 0.0, %v950
        %952 = vdwg.mxu0
        %v953 = vadd.f32 %v842, %v891
        %v954 = vadd.f32 %v843, %v911
        %v955 = vadd.f32 %v844, %v931
        %v956 = vadd.f32 %v845, %v951
        %957 = vrot.lane.b32.xlu0 %v294, 57
        %v958 = vpop.permute.xlu0 %957
        %959 = vrot.lane.b32.xlu0 %v295, 57
        %v960 = vpop.permute.xlu0 %959
        %961 = vrot.lane.b32.xlu0 %v296, 57
        %v962 = vpop.permute.xlu0 %961
        %963 = vrot.lane.b32.xlu0 %v297, 57
        %v964 = vpop.permute.xlu0 %963
        %vm965 = vcmp.lt.s32.totalorder %v307, 57
        %v966 = vsel %vm965, %v962, %v964
        %v967 = vsel %vm965, %v960, %v962
        %v968 = vsel %vm965, %v958, %v960
        %v969 = vsel %vm965, %v964, %v958
        %s970 = scalar_lea.vmem [#allocation2], 192
        %v971 = vld [vmem:[%s970] sm:$0xff]
        %v972 = vld [vmem:[%s970 + $0x8] sm:$0xff]
        %v973 = vld [vmem:[%s970 + $0x10] sm:$0xff]
        %v974 = vld [vmem:[%s970 + $0x18] sm:$0xff]
        %v975 = vmul.f32 %v969, %v971
        %v976 = vmul.f32 %v968, %v972
        %v977 = vmul.f32 %v967, %v973
        %v978 = vmul.f32 %v966, %v974
        %s979 = scalar_lea.vmem %s1, 48
        %v980 = vld [vmem:[%s979] sm:$0xff]
        %v982 = vsel %vm346, %v980, 0
        %984 = vmatpush.msra.mxu0 0.0
        %985 = vmatpush.msra.mxu0 0.0
        %986 = vmatpush.msra.mxu0 0.0
        %987 = vmatpush.msra.mxu0 0.0
        %988 = vmatpush.msra.mxu0 0.0
        %989 = vmatpush.msra.mxu0 0.0
        %990 = vmatpush.msra.mxu0 0.0
        %991 = vmatpush.msra.mxu0 0.0
        %992 = vmatpush.msra.mxu0 0.0
        %993 = vmatpush.msra.mxu0 0.0
        %994 = vmatpush.msra.mxu0 0.0
        %995 = vmatpush.msra.mxu0 0.0
        %996 = vmatpush.msra.mxu0 0.0
        %997 = vmatpush.msra.mxu0 0.0
        %998 = vmatpush.msra.mxu0 0.0
        %999 = vmatpush.msra.mxu0 %v975
        %1000 = vmatmul.f32.gmra.mxu0 %v982
        %v1001 = vpop.f32.mrf.mxu0
        %v1002 = vadd.f32 0.0, %v1001
        %1003 = vdwg.mxu0
        %1004 = vmatpush.msra.mxu0 0.0
        %1005 = vmatpush.msra.mxu0 0.0
        %1006 = vmatpush.msra.mxu0 0.0
        %1007 = vmatpush.msra.mxu0 0.0
        %1008 = vmatpush.msra.mxu0 0.0
        %1009 = vmatpush.msra.mxu0 0.0
        %1010 = vmatpush.msra.mxu0 0.0
        %1011 = vmatpush.msra.mxu0 0.0
        %1012 = vmatpush.msra.mxu0 0.0
        %1013 = vmatpush.msra.mxu0 0.0
        %1014 = vmatpush.msra.mxu0 0.0
        %1015 = vmatpush.msra.mxu0 0.0
        %1016 = vmatpush.msra.mxu0 0.0
        %1017 = vmatpush.msra.mxu0 0.0
        %1018 = vmatpush.msra.mxu0 0.0
        %1019 = vmatpush.msra.mxu0 %v976
        %1020 = vmatmul.f32.gmra.mxu0 %v982
        %v1021 = vpop.f32.mrf.mxu0
        %v1022 = vadd.f32 0.0, %v1021
        %1023 = vdwg.mxu0
        %1024 = vmatpush.msra.mxu0 0.0
        %1025 = vmatpush.msra.mxu0 0.0
        %1026 = vmatpush.msra.mxu0 0.0
        %1027 = vmatpush.msra.mxu0 0.0
        %1028 = vmatpush.msra.mxu0 0.0
        %1029 = vmatpush.msra.mxu0 0.0
        %1030 = vmatpush.msra.mxu0 0.0
        %1031 = vmatpush.msra.mxu0 0.0
        %1032 = vmatpush.msra.mxu0 0.0
        %1033 = vmatpush.msra.mxu0 0.0
        %1034 = vmatpush.msra.mxu0 0.0
        %1035 = vmatpush.msra.mxu0 0.0
        %1036 = vmatpush.msra.mxu0 0.0
        %1037 = vmatpush.msra.mxu0 0.0
        %1038 = vmatpush.msra.mxu0 0.0
        %1039 = vmatpush.msra.mxu0 %v977
        %1040 = vmatmul.f32.gmra.mxu0 %v982
        %v1041 = vpop.f32.mrf.mxu0
        %v1042 = vadd.f32 0.0, %v1041
        %1043 = vdwg.mxu0
        %1044 = vmatpush.msra.mxu0 0.0
        %1045 = vmatpush.msra.mxu0 0.0
        %1046 = vmatpush.msra.mxu0 0.0
        %1047 = vmatpush.msra.mxu0 0.0
        %1048 = vmatpush.msra.mxu0 0.0
        %1049 = vmatpush.msra.mxu0 0.0
        %1050 = vmatpush.msra.mxu0 0.0
        %1051 = vmatpush.msra.mxu0 0.0
        %1052 = vmatpush.msra.mxu0 0.0
        %1053 = vmatpush.msra.mxu0 0.0
        %1054 = vmatpush.msra.mxu0 0.0
        %1055 = vmatpush.msra.mxu0 0.0
        %1056 = vmatpush.msra.mxu0 0.0
        %1057 = vmatpush.msra.mxu0 0.0
        %1058 = vmatpush.msra.mxu0 0.0
        %1059 = vmatpush.msra.mxu0 %v978
        %1060 = vmatmul.f32.gmra.mxu0 %v982
        %v1061 = vpop.f32.mrf.mxu0
        %v1062 = vadd.f32 0.0, %v1061
        %1063 = vdwg.mxu0
        %v1064 = vadd.f32 %v953, %v1002
        %v1065 = vadd.f32 %v954, %v1022
        %v1066 = vadd.f32 %v955, %v1042
        %v1067 = vadd.f32 %v956, %v1062
        %1068 = vrot.lane.b32.xlu0 %v294, 56
        %v1069 = vpop.permute.xlu0 %1068
        %1070 = vrot.lane.b32.xlu0 %v295, 56
        %v1071 = vpop.permute.xlu0 %1070
        %1072 = vrot.lane.b32.xlu0 %v296, 56
        %v1073 = vpop.permute.xlu0 %1072
        %1074 = vrot.lane.b32.xlu0 %v297, 56
        %v1075 = vpop.permute.xlu0 %1074
        %vm1076 = vcmp.lt.s32.totalorder %v307, 56
        %v1077 = vsel %vm1076, %v1073, %v1075
        %v1078 = vsel %vm1076, %v1071, %v1073
        %v1079 = vsel %vm1076, %v1069, %v1071
        %v1080 = vsel %vm1076, %v1075, %v1069
        %s1081 = scalar_lea.vmem [#allocation2], 224
        %v1082 = vld [vmem:[%s1081] sm:$0xff]
        %v1083 = vld [vmem:[%s1081 + $0x8] sm:$0xff]
        %v1084 = vld [vmem:[%s1081 + $0x10] sm:$0xff]
        %v1085 = vld [vmem:[%s1081 + $0x18] sm:$0xff]
        %v1086 = vmul.f32 %v1080, %v1082
        %v1087 = vmul.f32 %v1079, %v1083
        %v1088 = vmul.f32 %v1078, %v1084
        %v1089 = vmul.f32 %v1077, %v1085
        %s1090 = scalar_lea.vmem %s1, 56
        %v1091 = vld [vmem:[%s1090] sm:$0xff]
        %v1093 = vsel %vm346, %v1091, 0
        %1095 = vmatpush.msra.mxu0 0.0
        %1096 = vmatpush.msra.mxu0 0.0
        %1097 = vmatpush.msra.mxu0 0.0
        %1098 = vmatpush.msra.mxu0 0.0
        %1099 = vmatpush.msra.mxu0 0.0
        %1100 = vmatpush.msra.mxu0 0.0
        %1101 = vmatpush.msra.mxu0 0.0
        %1102 = vmatpush.msra.mxu0 0.0
        %1103 = vmatpush.msra.mxu0 0.0
        %1104 = vmatpush.msra.mxu0 0.0
        %1105 = vmatpush.msra.mxu0 0.0
        %1106 = vmatpush.msra.mxu0 0.0
        %1107 = vmatpush.msra.mxu0 0.0
        %1108 = vmatpush.msra.mxu0 0.0
        %1109 = vmatpush.msra.mxu0 0.0
        %1110 = vmatpush.msra.mxu0 %v1086
        %1111 = vmatmul.f32.gmra.mxu0 %v1093
        %v1112 = vpop.f32.mrf.mxu0
        %v1113 = vadd.f32 0.0, %v1112
        %1114 = vdwg.mxu0
        %1115 = vmatpush.msra.mxu0 0.0
        %1116 = vmatpush.msra.mxu0 0.0
        %1117 = vmatpush.msra.mxu0 0.0
        %1118 = vmatpush.msra.mxu0 0.0
        %1119 = vmatpush.msra.mxu0 0.0
        %1120 = vmatpush.msra.mxu0 0.0
        %1121 = vmatpush.msra.mxu0 0.0
        %1122 = vmatpush.msra.mxu0 0.0
        %1123 = vmatpush.msra.mxu0 0.0
        %1124 = vmatpush.msra.mxu0 0.0
        %1125 = vmatpush.msra.mxu0 0.0
        %1126 = vmatpush.msra.mxu0 0.0
        %1127 = vmatpush.msra.mxu0 0.0
        %1128 = vmatpush.msra.mxu0 0.0
        %1129 = vmatpush.msra.mxu0 0.0
        %1130 = vmatpush.msra.mxu0 %v1087
        %1131 = vmatmul.f32.gmra.mxu0 %v1093
        %v1132 = vpop.f32.mrf.mxu0
        %v1133 = vadd.f32 0.0, %v1132
        %1134 = vdwg.mxu0
        %1135 = vmatpush.msra.mxu0 0.0
        %1136 = vmatpush.msra.mxu0 0.0
        %1137 = vmatpush.msra.mxu0 0.0
        %1138 = vmatpush.msra.mxu0 0.0
        %1139 = vmatpush.msra.mxu0 0.0
        %1140 = vmatpush.msra.mxu0 0.0
        %1141 = vmatpush.msra.mxu0 0.0
        %1142 = vmatpush.msra.mxu0 0.0
        %1143 = vmatpush.msra.mxu0 0.0
        %1144 = vmatpush.msra.mxu0 0.0
        %1145 = vmatpush.msra.mxu0 0.0
        %1146 = vmatpush.msra.mxu0 0.0
        %1147 = vmatpush.msra.mxu0 0.0
        %1148 = vmatpush.msra.mxu0 0.0
        %1149 = vmatpush.msra.mxu0 0.0
        %1150 = vmatpush.msra.mxu0 %v1088
        %1151 = vmatmul.f32.gmra.mxu0 %v1093
        %v1152 = vpop.f32.mrf.mxu0
        %v1153 = vadd.f32 0.0, %v1152
        %1154 = vdwg.mxu0
        %1155 = vmatpush.msra.mxu0 0.0
        %1156 = vmatpush.msra.mxu0 0.0
        %1157 = vmatpush.msra.mxu0 0.0
        %1158 = vmatpush.msra.mxu0 0.0
        %1159 = vmatpush.msra.mxu0 0.0
        %1160 = vmatpush.msra.mxu0 0.0
        %1161 = vmatpush.msra.mxu0 0.0
        %1162 = vmatpush.msra.mxu0 0.0
        %1163 = vmatpush.msra.mxu0 0.0
        %1164 = vmatpush.msra.mxu0 0.0
        %1165 = vmatpush.msra.mxu0 0.0
        %1166 = vmatpush.msra.mxu0 0.0
        %1167 = vmatpush.msra.mxu0 0.0
        %1168 = vmatpush.msra.mxu0 0.0
        %1169 = vmatpush.msra.mxu0 0.0
        %1170 = vmatpush.msra.mxu0 %v1089
        %1171 = vmatmul.f32.gmra.mxu0 %v1093
        %v1172 = vpop.f32.mrf.mxu0
        %v1173 = vadd.f32 0.0, %v1172
        %1174 = vdwg.mxu0
        %v1175 = vadd.f32 %v1064, %v1113
        %v1176 = vadd.f32 %v1065, %v1133
        %v1177 = vadd.f32 %v1066, %v1153
        %v1178 = vadd.f32 %v1067, %v1173
        %1179 = vrot.lane.b32.xlu0 %v294, 55
        %v1180 = vpop.permute.xlu0 %1179
        %1181 = vrot.lane.b32.xlu0 %v295, 55
        %v1182 = vpop.permute.xlu0 %1181
        %1183 = vrot.lane.b32.xlu0 %v296, 55
        %v1184 = vpop.permute.xlu0 %1183
        %1185 = vrot.lane.b32.xlu0 %v297, 55
        %v1186 = vpop.permute.xlu0 %1185
        %vm1187 = vcmp.lt.s32.totalorder %v307, 55
        %v1188 = vsel %vm1187, %v1184, %v1186
        %v1189 = vsel %vm1187, %v1182, %v1184
        %v1190 = vsel %vm1187, %v1180, %v1182
        %v1191 = vsel %vm1187, %v1186, %v1180
        %s1192 = scalar_lea.vmem [#allocation2], 256
        %v1193 = vld [vmem:[%s1192] sm:$0xff]
        %v1194 = vld [vmem:[%s1192 + $0x8] sm:$0xff]
        %v1195 = vld [vmem:[%s1192 + $0x10] sm:$0xff]
        %v1196 = vld [vmem:[%s1192 + $0x18] sm:$0xff]
        %v1197 = vmul.f32 %v1191, %v1193
        %v1198 = vmul.f32 %v1190, %v1194
        %v1199 = vmul.f32 %v1189, %v1195
        %v1200 = vmul.f32 %v1188, %v1196
        %s1201 = scalar_lea.vmem %s1, 64
        %v1202 = vld [vmem:[%s1201] sm:$0xff]
        %v1204 = vsel %vm346, %v1202, 0
        %1206 = vmatpush.msra.mxu0 0.0
        %1207 = vmatpush.msra.mxu0 0.0
        %1208 = vmatpush.msra.mxu0 0.0
        %1209 = vmatpush.msra.mxu0 0.0
        %1210 = vmatpush.msra.mxu0 0.0
        %1211 = vmatpush.msra.mxu0 0.0
        %1212 = vmatpush.msra.mxu0 0.0
        %1213 = vmatpush.msra.mxu0 0.0
        %1214 = vmatpush.msra.mxu0 0.0
        %1215 = vmatpush.msra.mxu0 0.0
        %1216 = vmatpush.msra.mxu0 0.0
        %1217 = vmatpush.msra.mxu0 0.0
        %1218 = vmatpush.msra.mxu0 0.0
        %1219 = vmatpush.msra.mxu0 0.0
        %1220 = vmatpush.msra.mxu0 0.0
        %1221 = vmatpush.msra.mxu0 %v1197
        %1222 = vmatmul.f32.gmra.mxu0 %v1204
        %v1223 = vpop.f32.mrf.mxu0
        %v1224 = vadd.f32 0.0, %v1223
        %1225 = vdwg.mxu0
        %1226 = vmatpush.msra.mxu0 0.0
        %1227 = vmatpush.msra.mxu0 0.0
        %1228 = vmatpush.msra.mxu0 0.0
        %1229 = vmatpush.msra.mxu0 0.0
        %1230 = vmatpush.msra.mxu0 0.0
        %1231 = vmatpush.msra.mxu0 0.0
        %1232 = vmatpush.msra.mxu0 0.0
        %1233 = vmatpush.msra.mxu0 0.0
        %1234 = vmatpush.msra.mxu0 0.0
        %1235 = vmatpush.msra.mxu0 0.0
        %1236 = vmatpush.msra.mxu0 0.0
        %1237 = vmatpush.msra.mxu0 0.0
        %1238 = vmatpush.msra.mxu0 0.0
        %1239 = vmatpush.msra.mxu0 0.0
        %1240 = vmatpush.msra.mxu0 0.0
        %1241 = vmatpush.msra.mxu0 %v1198
        %1242 = vmatmul.f32.gmra.mxu0 %v1204
        %v1243 = vpop.f32.mrf.mxu0
        %v1244 = vadd.f32 0.0, %v1243
        %1245 = vdwg.mxu0
        %1246 = vmatpush.msra.mxu0 0.0
        %1247 = vmatpush.msra.mxu0 0.0
        %1248 = vmatpush.msra.mxu0 0.0
        %1249 = vmatpush.msra.mxu0 0.0
        %1250 = vmatpush.msra.mxu0 0.0
        %1251 = vmatpush.msra.mxu0 0.0
        %1252 = vmatpush.msra.mxu0 0.0
        %1253 = vmatpush.msra.mxu0 0.0
        %1254 = vmatpush.msra.mxu0 0.0
        %1255 = vmatpush.msra.mxu0 0.0
        %1256 = vmatpush.msra.mxu0 0.0
        %1257 = vmatpush.msra.mxu0 0.0
        %1258 = vmatpush.msra.mxu0 0.0
        %1259 = vmatpush.msra.mxu0 0.0
        %1260 = vmatpush.msra.mxu0 0.0
        %1261 = vmatpush.msra.mxu0 %v1199
        %1262 = vmatmul.f32.gmra.mxu0 %v1204
        %v1263 = vpop.f32.mrf.mxu0
        %v1264 = vadd.f32 0.0, %v1263
        %1265 = vdwg.mxu0
        %1266 = vmatpush.msra.mxu0 0.0
        %1267 = vmatpush.msra.mxu0 0.0
        %1268 = vmatpush.msra.mxu0 0.0
        %1269 = vmatpush.msra.mxu0 0.0
        %1270 = vmatpush.msra.mxu0 0.0
        %1271 = vmatpush.msra.mxu0 0.0
        %1272 = vmatpush.msra.mxu0 0.0
        %1273 = vmatpush.msra.mxu0 0.0
        %1274 = vmatpush.msra.mxu0 0.0
        %1275 = vmatpush.msra.mxu0 0.0
        %1276 = vmatpush.msra.mxu0 0.0
        %1277 = vmatpush.msra.mxu0 0.0
        %1278 = vmatpush.msra.mxu0 0.0
        %1279 = vmatpush.msra.mxu0 0.0
        %1280 = vmatpush.msra.mxu0 0.0
        %1281 = vmatpush.msra.mxu0 %v1200
        %1282 = vmatmul.f32.gmra.mxu0 %v1204
        %v1283 = vpop.f32.mrf.mxu0
        %v1284 = vadd.f32 0.0, %v1283
        %1285 = vdwg.mxu0
        %v1286 = vadd.f32 %v1175, %v1224
        %v1287 = vadd.f32 %v1176, %v1244
        %v1288 = vadd.f32 %v1177, %v1264
        %v1289 = vadd.f32 %v1178, %v1284
        %1290 = vrot.lane.b32.xlu0 %v294, 9
        %v1291 = vpop.permute.xlu0 %1290
        %1292 = vrot.lane.b32.xlu0 %v295, 9
        %v1293 = vpop.permute.xlu0 %1292
        %1294 = vrot.lane.b32.xlu0 %v296, 9
        %v1295 = vpop.permute.xlu0 %1294
        %1296 = vrot.lane.b32.xlu0 %v297, 9
        %v1297 = vpop.permute.xlu0 %1296
        %vm1298 = vcmp.lt.s32.totalorder %v307, 9
        %v1299 = vsel %vm1298, %v1295, %v1297
        %v1300 = vsel %vm1298, %v1293, %v1295
        %v1301 = vsel %vm1298, %v1291, %v1293
        %v1302 = vsel %vm1298, %v1297, %v1291
        %s1303 = scalar_lea.vmem [#allocation2], 288
        %v1304 = vld [vmem:[%s1303] sm:$0xff]
        %v1305 = vld [vmem:[%s1303 + $0x8] sm:$0xff]
        %v1306 = vld [vmem:[%s1303 + $0x10] sm:$0xff]
        %v1307 = vld [vmem:[%s1303 + $0x18] sm:$0xff]
        %v1308 = vmul.f32 %v1302, %v1304
        %v1309 = vmul.f32 %v1301, %v1305
        %v1310 = vmul.f32 %v1300, %v1306
        %v1311 = vmul.f32 %v1299, %v1307
        %s1312 = scalar_lea.vmem %s1, 72
        %v1313 = vld [vmem:[%s1312] sm:$0xff]
        %v1315 = vsel %vm346, %v1313, 0
        %1317 = vmatpush.msra.mxu0 0.0
        %1318 = vmatpush.msra.mxu0 0.0
        %1319 = vmatpush.msra.mxu0 0.0
        %1320 = vmatpush.msra.mxu0 0.0
        %1321 = vmatpush.msra.mxu0 0.0
        %1322 = vmatpush.msra.mxu0 0.0
        %1323 = vmatpush.msra.mxu0 0.0
        %1324 = vmatpush.msra.mxu0 0.0
        %1325 = vmatpush.msra.mxu0 0.0
        %1326 = vmatpush.msra.mxu0 0.0
        %1327 = vmatpush.msra.mxu0 0.0
        %1328 = vmatpush.msra.mxu0 0.0
        %1329 = vmatpush.msra.mxu0 0.0
        %1330 = vmatpush.msra.mxu0 0.0
        %1331 = vmatpush.msra.mxu0 0.0
        %1332 = vmatpush.msra.mxu0 %v1308
        %1333 = vmatmul.f32.gmra.mxu0 %v1315
        %v1334 = vpop.f32.mrf.mxu0
        %v1335 = vadd.f32 0.0, %v1334
        %1336 = vdwg.mxu0
        %1337 = vmatpush.msra.mxu0 0.0
        %1338 = vmatpush.msra.mxu0 0.0
        %1339 = vmatpush.msra.mxu0 0.0
        %1340 = vmatpush.msra.mxu0 0.0
        %1341 = vmatpush.msra.mxu0 0.0
        %1342 = vmatpush.msra.mxu0 0.0
        %1343 = vmatpush.msra.mxu0 0.0
        %1344 = vmatpush.msra.mxu0 0.0
        %1345 = vmatpush.msra.mxu0 0.0
        %1346 = vmatpush.msra.mxu0 0.0
        %1347 = vmatpush.msra.mxu0 0.0
        %1348 = vmatpush.msra.mxu0 0.0
        %1349 = vmatpush.msra.mxu0 0.0
        %1350 = vmatpush.msra.mxu0 0.0
        %1351 = vmatpush.msra.mxu0 0.0
        %1352 = vmatpush.msra.mxu0 %v1309
        %1353 = vmatmul.f32.gmra.mxu0 %v1315
        %v1354 = vpop.f32.mrf.mxu0
        %v1355 = vadd.f32 0.0, %v1354
        %1356 = vdwg.mxu0
        %1357 = vmatpush.msra.mxu0 0.0
        %1358 = vmatpush.msra.mxu0 0.0
        %1359 = vmatpush.msra.mxu0 0.0
        %1360 = vmatpush.msra.mxu0 0.0
        %1361 = vmatpush.msra.mxu0 0.0
        %1362 = vmatpush.msra.mxu0 0.0
        %1363 = vmatpush.msra.mxu0 0.0
        %1364 = vmatpush.msra.mxu0 0.0
        %1365 = vmatpush.msra.mxu0 0.0
        %1366 = vmatpush.msra.mxu0 0.0
        %1367 = vmatpush.msra.mxu0 0.0
        %1368 = vmatpush.msra.mxu0 0.0
        %1369 = vmatpush.msra.mxu0 0.0
        %1370 = vmatpush.msra.mxu0 0.0
        %1371 = vmatpush.msra.mxu0 0.0
        %1372 = vmatpush.msra.mxu0 %v1310
        %1373 = vmatmul.f32.gmra.mxu0 %v1315
        %v1374 = vpop.f32.mrf.mxu0
        %v1375 = vadd.f32 0.0, %v1374
        %1376 = vdwg.mxu0
        %1377 = vmatpush.msra.mxu0 0.0
        %1378 = vmatpush.msra.mxu0 0.0
        %1379 = vmatpush.msra.mxu0 0.0
        %1380 = vmatpush.msra.mxu0 0.0
        %1381 = vmatpush.msra.mxu0 0.0
        %1382 = vmatpush.msra.mxu0 0.0
        %1383 = vmatpush.msra.mxu0 0.0
        %1384 = vmatpush.msra.mxu0 0.0
        %1385 = vmatpush.msra.mxu0 0.0
        %1386 = vmatpush.msra.mxu0 0.0
        %1387 = vmatpush.msra.mxu0 0.0
        %1388 = vmatpush.msra.mxu0 0.0
        %1389 = vmatpush.msra.mxu0 0.0
        %1390 = vmatpush.msra.mxu0 0.0
        %1391 = vmatpush.msra.mxu0 0.0
        %1392 = vmatpush.msra.mxu0 %v1311
        %1393 = vmatmul.f32.gmra.mxu0 %v1315
        %v1394 = vpop.f32.mrf.mxu0
        %v1395 = vadd.f32 0.0, %v1394
        %1396 = vdwg.mxu0
        %v1397 = vadd.f32 %v1286, %v1335
        %v1398 = vadd.f32 %v1287, %v1355
        %v1399 = vadd.f32 %v1288, %v1375
        %v1400 = vadd.f32 %v1289, %v1395
        %1401 = vrot.lane.b32.xlu0 %v294, 8
        %v1402 = vpop.permute.xlu0 %1401
        %1403 = vrot.lane.b32.xlu0 %v295, 8
        %v1404 = vpop.permute.xlu0 %1403
        %1405 = vrot.lane.b32.xlu0 %v296, 8
        %v1406 = vpop.permute.xlu0 %1405
        %1407 = vrot.lane.b32.xlu0 %v297, 8
        %v1408 = vpop.permute.xlu0 %1407
        %vm1409 = vcmp.lt.s32.totalorder %v307, 8
        %v1410 = vsel %vm1409, %v1406, %v1408
        %v1411 = vsel %vm1409, %v1404, %v1406
        %v1412 = vsel %vm1409, %v1402, %v1404
        %v1413 = vsel %vm1409, %v1408, %v1402
        %s1414 = scalar_lea.vmem [#allocation2], 320
        %v1415 = vld [vmem:[%s1414] sm:$0xff]
        %v1416 = vld [vmem:[%s1414 + $0x8] sm:$0xff]
        %v1417 = vld [vmem:[%s1414 + $0x10] sm:$0xff]
        %v1418 = vld [vmem:[%s1414 + $0x18] sm:$0xff]
        %v1419 = vmul.f32 %v1413, %v1415
        %v1420 = vmul.f32 %v1412, %v1416
        %v1421 = vmul.f32 %v1411, %v1417
        %v1422 = vmul.f32 %v1410, %v1418
        %s1423 = scalar_lea.vmem %s1, 80
        %v1424 = vld [vmem:[%s1423] sm:$0xff]
        %v1426 = vsel %vm346, %v1424, 0
        %1428 = vmatpush.msra.mxu0 0.0
        %1429 = vmatpush.msra.mxu0 0.0
        %1430 = vmatpush.msra.mxu0 0.0
        %1431 = vmatpush.msra.mxu0 0.0
        %1432 = vmatpush.msra.mxu0 0.0
        %1433 = vmatpush.msra.mxu0 0.0
        %1434 = vmatpush.msra.mxu0 0.0
        %1435 = vmatpush.msra.mxu0 0.0
        %1436 = vmatpush.msra.mxu0 0.0
        %1437 = vmatpush.msra.mxu0 0.0
        %1438 = vmatpush.msra.mxu0 0.0
        %1439 = vmatpush.msra.mxu0 0.0
        %1440 = vmatpush.msra.mxu0 0.0
        %1441 = vmatpush.msra.mxu0 0.0
        %1442 = vmatpush.msra.mxu0 0.0
        %1443 = vmatpush.msra.mxu0 %v1419
        %1444 = vmatmul.f32.gmra.mxu0 %v1426
        %v1445 = vpop.f32.mrf.mxu0
        %v1446 = vadd.f32 0.0, %v1445
        %1447 = vdwg.mxu0
        %1448 = vmatpush.msra.mxu0 0.0
        %1449 = vmatpush.msra.mxu0 0.0
        %1450 = vmatpush.msra.mxu0 0.0
        %1451 = vmatpush.msra.mxu0 0.0
        %1452 = vmatpush.msra.mxu0 0.0
        %1453 = vmatpush.msra.mxu0 0.0
        %1454 = vmatpush.msra.mxu0 0.0
        %1455 = vmatpush.msra.mxu0 0.0
        %1456 = vmatpush.msra.mxu0 0.0
        %1457 = vmatpush.msra.mxu0 0.0
        %1458 = vmatpush.msra.mxu0 0.0
        %1459 = vmatpush.msra.mxu0 0.0
        %1460 = vmatpush.msra.mxu0 0.0
        %1461 = vmatpush.msra.mxu0 0.0
        %1462 = vmatpush.msra.mxu0 0.0
        %1463 = vmatpush.msra.mxu0 %v1420
        %1464 = vmatmul.f32.gmra.mxu0 %v1426
        %v1465 = vpop.f32.mrf.mxu0
        %v1466 = vadd.f32 0.0, %v1465
        %1467 = vdwg.mxu0
        %1468 = vmatpush.msra.mxu0 0.0
        %1469 = vmatpush.msra.mxu0 0.0
        %1470 = vmatpush.msra.mxu0 0.0
        %1471 = vmatpush.msra.mxu0 0.0
        %1472 = vmatpush.msra.mxu0 0.0
        %1473 = vmatpush.msra.mxu0 0.0
        %1474 = vmatpush.msra.mxu0 0.0
        %1475 = vmatpush.msra.mxu0 0.0
        %1476 = vmatpush.msra.mxu0 0.0
        %1477 = vmatpush.msra.mxu0 0.0
        %1478 = vmatpush.msra.mxu0 0.0
        %1479 = vmatpush.msra.mxu0 0.0
        %1480 = vmatpush.msra.mxu0 0.0
        %1481 = vmatpush.msra.mxu0 0.0
        %1482 = vmatpush.msra.mxu0 0.0
        %1483 = vmatpush.msra.mxu0 %v1421
        %1484 = vmatmul.f32.gmra.mxu0 %v1426
        %v1485 = vpop.f32.mrf.mxu0
        %v1486 = vadd.f32 0.0, %v1485
        %1487 = vdwg.mxu0
        %1488 = vmatpush.msra.mxu0 0.0
        %1489 = vmatpush.msra.mxu0 0.0
        %1490 = vmatpush.msra.mxu0 0.0
        %1491 = vmatpush.msra.mxu0 0.0
        %1492 = vmatpush.msra.mxu0 0.0
        %1493 = vmatpush.msra.mxu0 0.0
        %1494 = vmatpush.msra.mxu0 0.0
        %1495 = vmatpush.msra.mxu0 0.0
        %1496 = vmatpush.msra.mxu0 0.0
        %1497 = vmatpush.msra.mxu0 0.0
        %1498 = vmatpush.msra.mxu0 0.0
        %1499 = vmatpush.msra.mxu0 0.0
        %1500 = vmatpush.msra.mxu0 0.0
        %1501 = vmatpush.msra.mxu0 0.0
        %1502 = vmatpush.msra.mxu0 0.0
        %1503 = vmatpush.msra.mxu0 %v1422
        %1504 = vmatmul.f32.gmra.mxu0 %v1426
        %v1505 = vpop.f32.mrf.mxu0
        %v1506 = vadd.f32 0.0, %v1505
        %1507 = vdwg.mxu0
        %v1508 = vadd.f32 %v1397, %v1446
        %v1509 = vadd.f32 %v1398, %v1466
        %v1510 = vadd.f32 %v1399, %v1486
        %v1511 = vadd.f32 %v1400, %v1506
        %1512 = vrot.lane.b32.xlu0 %v294, 7
        %v1513 = vpop.permute.xlu0 %1512
        %1514 = vrot.lane.b32.xlu0 %v295, 7
        %v1515 = vpop.permute.xlu0 %1514
        %1516 = vrot.lane.b32.xlu0 %v296, 7
        %v1517 = vpop.permute.xlu0 %1516
        %1518 = vrot.lane.b32.xlu0 %v297, 7
        %v1519 = vpop.permute.xlu0 %1518
        %vm1520 = vcmp.lt.s32.totalorder %v307, 7
        %v1521 = vsel %vm1520, %v1517, %v1519
        %v1522 = vsel %vm1520, %v1515, %v1517
        %v1523 = vsel %vm1520, %v1513, %v1515
        %v1524 = vsel %vm1520, %v1519, %v1513
        %s1525 = scalar_lea.vmem [#allocation2], 352
        %v1526 = vld [vmem:[%s1525] sm:$0xff]
        %v1527 = vld [vmem:[%s1525 + $0x8] sm:$0xff]
        %v1528 = vld [vmem:[%s1525 + $0x10] sm:$0xff]
        %v1529 = vld [vmem:[%s1525 + $0x18] sm:$0xff]
        %v1530 = vmul.f32 %v1524, %v1526
        %v1531 = vmul.f32 %v1523, %v1527
        %v1532 = vmul.f32 %v1522, %v1528
        %v1533 = vmul.f32 %v1521, %v1529
        %s1534 = scalar_lea.vmem %s1, 88
        %v1535 = vld [vmem:[%s1534] sm:$0xff]
        %v1537 = vsel %vm346, %v1535, 0
        %1539 = vmatpush.msra.mxu0 0.0
        %1540 = vmatpush.msra.mxu0 0.0
        %1541 = vmatpush.msra.mxu0 0.0
        %1542 = vmatpush.msra.mxu0 0.0
        %1543 = vmatpush.msra.mxu0 0.0
        %1544 = vmatpush.msra.mxu0 0.0
        %1545 = vmatpush.msra.mxu0 0.0
        %1546 = vmatpush.msra.mxu0 0.0
        %1547 = vmatpush.msra.mxu0 0.0
        %1548 = vmatpush.msra.mxu0 0.0
        %1549 = vmatpush.msra.mxu0 0.0
        %1550 = vmatpush.msra.mxu0 0.0
        %1551 = vmatpush.msra.mxu0 0.0
        %1552 = vmatpush.msra.mxu0 0.0
        %1553 = vmatpush.msra.mxu0 0.0
        %1554 = vmatpush.msra.mxu0 %v1530
        %1555 = vmatmul.f32.gmra.mxu0 %v1537
        %v1556 = vpop.f32.mrf.mxu0
        %v1557 = vadd.f32 0.0, %v1556
        %1558 = vdwg.mxu0
        %1559 = vmatpush.msra.mxu0 0.0
        %1560 = vmatpush.msra.mxu0 0.0
        %1561 = vmatpush.msra.mxu0 0.0
        %1562 = vmatpush.msra.mxu0 0.0
        %1563 = vmatpush.msra.mxu0 0.0
        %1564 = vmatpush.msra.mxu0 0.0
        %1565 = vmatpush.msra.mxu0 0.0
        %1566 = vmatpush.msra.mxu0 0.0
        %1567 = vmatpush.msra.mxu0 0.0
        %1568 = vmatpush.msra.mxu0 0.0
        %1569 = vmatpush.msra.mxu0 0.0
        %1570 = vmatpush.msra.mxu0 0.0
        %1571 = vmatpush.msra.mxu0 0.0
        %1572 = vmatpush.msra.mxu0 0.0
        %1573 = vmatpush.msra.mxu0 0.0
        %1574 = vmatpush.msra.mxu0 %v1531
        %1575 = vmatmul.f32.gmra.mxu0 %v1537
        %v1576 = vpop.f32.mrf.mxu0
        %v1577 = vadd.f32 0.0, %v1576
        %1578 = vdwg.mxu0
        %1579 = vmatpush.msra.mxu0 0.0
        %1580 = vmatpush.msra.mxu0 0.0
        %1581 = vmatpush.msra.mxu0 0.0
        %1582 = vmatpush.msra.mxu0 0.0
        %1583 = vmatpush.msra.mxu0 0.0
        %1584 = vmatpush.msra.mxu0 0.0
        %1585 = vmatpush.msra.mxu0 0.0
        %1586 = vmatpush.msra.mxu0 0.0
        %1587 = vmatpush.msra.mxu0 0.0
        %1588 = vmatpush.msra.mxu0 0.0
        %1589 = vmatpush.msra.mxu0 0.0
        %1590 = vmatpush.msra.mxu0 0.0
        %1591 = vmatpush.msra.mxu0 0.0
        %1592 = vmatpush.msra.mxu0 0.0
        %1593 = vmatpush.msra.mxu0 0.0
        %1594 = vmatpush.msra.mxu0 %v1532
        %1595 = vmatmul.f32.gmra.mxu0 %v1537
        %v1596 = vpop.f32.mrf.mxu0
        %v1597 = vadd.f32 0.0, %v1596
        %1598 = vdwg.mxu0
        %1599 = vmatpush.msra.mxu0 0.0
        %1600 = vmatpush.msra.mxu0 0.0
        %1601 = vmatpush.msra.mxu0 0.0
        %1602 = vmatpush.msra.mxu0 0.0
        %1603 = vmatpush.msra.mxu0 0.0
        %1604 = vmatpush.msra.mxu0 0.0
        %1605 = vmatpush.msra.mxu0 0.0
        %1606 = vmatpush.msra.mxu0 0.0
        %1607 = vmatpush.msra.mxu0 0.0
        %1608 = vmatpush.msra.mxu0 0.0
        %1609 = vmatpush.msra.mxu0 0.0
        %1610 = vmatpush.msra.mxu0 0.0
        %1611 = vmatpush.msra.mxu0 0.0
        %1612 = vmatpush.msra.mxu0 0.0
        %1613 = vmatpush.msra.mxu0 0.0
        %1614 = vmatpush.msra.mxu0 %v1533
        %1615 = vmatmul.f32.gmra.mxu0 %v1537
        %v1616 = vpop.f32.mrf.mxu0
        %v1617 = vadd.f32 0.0, %v1616
        %1618 = vdwg.mxu0
        %v1619 = vadd.f32 %v1508, %v1557
        %v1620 = vadd.f32 %v1509, %v1577
        %v1621 = vadd.f32 %v1510, %v1597
        %v1622 = vadd.f32 %v1511, %v1617
        %1623 = vrot.lane.b32.xlu0 %v294, 1
        %v1624 = vpop.permute.xlu0 %1623
        %1625 = vrot.lane.b32.xlu0 %v295, 1
        %v1626 = vpop.permute.xlu0 %1625
        %1627 = vrot.lane.b32.xlu0 %v296, 1
        %v1628 = vpop.permute.xlu0 %1627
        %1629 = vrot.lane.b32.xlu0 %v297, 1
        %v1630 = vpop.permute.xlu0 %1629
        %vm1631 = vcmp.lt.s32.totalorder %v307, 1
        %v1632 = vsel %vm1631, %v1628, %v1630
        %v1633 = vsel %vm1631, %v1626, %v1628
        %v1634 = vsel %vm1631, %v1624, %v1626
        %v1635 = vsel %vm1631, %v1630, %v1624
        %s1636 = scalar_lea.vmem [#allocation2], 384
        %v1637 = vld [vmem:[%s1636] sm:$0xff]
        %v1638 = vld [vmem:[%s1636 + $0x8] sm:$0xff]
        %v1639 = vld [vmem:[%s1636 + $0x10] sm:$0xff]
        %v1640 = vld [vmem:[%s1636 + $0x18] sm:$0xff]
        %v1641 = vmul.f32 %v1635, %v1637
        %v1642 = vmul.f32 %v1634, %v1638
        %v1643 = vmul.f32 %v1633, %v1639
        %v1644 = vmul.f32 %v1632, %v1640
        %s1645 = scalar_lea.vmem %s1, 96
        %v1646 = vld [vmem:[%s1645] sm:$0xff]
        %v1648 = vsel %vm346, %v1646, 0
        %1650 = vmatpush.msra.mxu0 0.0
        %1651 = vmatpush.msra.mxu0 0.0
        %1652 = vmatpush.msra.mxu0 0.0
        %1653 = vmatpush.msra.mxu0 0.0
        %1654 = vmatpush.msra.mxu0 0.0
        %1655 = vmatpush.msra.mxu0 0.0
        %1656 = vmatpush.msra.mxu0 0.0
        %1657 = vmatpush.msra.mxu0 0.0
        %1658 = vmatpush.msra.mxu0 0.0
        %1659 = vmatpush.msra.mxu0 0.0
        %1660 = vmatpush.msra.mxu0 0.0
        %1661 = vmatpush.msra.mxu0 0.0
        %1662 = vmatpush.msra.mxu0 0.0
        %1663 = vmatpush.msra.mxu0 0.0
        %1664 = vmatpush.msra.mxu0 0.0
        %1665 = vmatpush.msra.mxu0 %v1641
        %1666 = vmatmul.f32.gmra.mxu0 %v1648
        %v1667 = vpop.f32.mrf.mxu0
        %v1668 = vadd.f32 0.0, %v1667
        %1669 = vdwg.mxu0
        %1670 = vmatpush.msra.mxu0 0.0
        %1671 = vmatpush.msra.mxu0 0.0
        %1672 = vmatpush.msra.mxu0 0.0
        %1673 = vmatpush.msra.mxu0 0.0
        %1674 = vmatpush.msra.mxu0 0.0
        %1675 = vmatpush.msra.mxu0 0.0
        %1676 = vmatpush.msra.mxu0 0.0
        %1677 = vmatpush.msra.mxu0 0.0
        %1678 = vmatpush.msra.mxu0 0.0
        %1679 = vmatpush.msra.mxu0 0.0
        %1680 = vmatpush.msra.mxu0 0.0
        %1681 = vmatpush.msra.mxu0 0.0
        %1682 = vmatpush.msra.mxu0 0.0
        %1683 = vmatpush.msra.mxu0 0.0
        %1684 = vmatpush.msra.mxu0 0.0
        %1685 = vmatpush.msra.mxu0 %v1642
        %1686 = vmatmul.f32.gmra.mxu0 %v1648
        %v1687 = vpop.f32.mrf.mxu0
        %v1688 = vadd.f32 0.0, %v1687
        %1689 = vdwg.mxu0
        %1690 = vmatpush.msra.mxu0 0.0
        %1691 = vmatpush.msra.mxu0 0.0
        %1692 = vmatpush.msra.mxu0 0.0
        %1693 = vmatpush.msra.mxu0 0.0
        %1694 = vmatpush.msra.mxu0 0.0
        %1695 = vmatpush.msra.mxu0 0.0
        %1696 = vmatpush.msra.mxu0 0.0
        %1697 = vmatpush.msra.mxu0 0.0
        %1698 = vmatpush.msra.mxu0 0.0
        %1699 = vmatpush.msra.mxu0 0.0
        %1700 = vmatpush.msra.mxu0 0.0
        %1701 = vmatpush.msra.mxu0 0.0
        %1702 = vmatpush.msra.mxu0 0.0
        %1703 = vmatpush.msra.mxu0 0.0
        %1704 = vmatpush.msra.mxu0 0.0
        %1705 = vmatpush.msra.mxu0 %v1643
        %1706 = vmatmul.f32.gmra.mxu0 %v1648
        %v1707 = vpop.f32.mrf.mxu0
        %v1708 = vadd.f32 0.0, %v1707
        %1709 = vdwg.mxu0
        %1710 = vmatpush.msra.mxu0 0.0
        %1711 = vmatpush.msra.mxu0 0.0
        %1712 = vmatpush.msra.mxu0 0.0
        %1713 = vmatpush.msra.mxu0 0.0
        %1714 = vmatpush.msra.mxu0 0.0
        %1715 = vmatpush.msra.mxu0 0.0
        %1716 = vmatpush.msra.mxu0 0.0
        %1717 = vmatpush.msra.mxu0 0.0
        %1718 = vmatpush.msra.mxu0 0.0
        %1719 = vmatpush.msra.mxu0 0.0
        %1720 = vmatpush.msra.mxu0 0.0
        %1721 = vmatpush.msra.mxu0 0.0
        %1722 = vmatpush.msra.mxu0 0.0
        %1723 = vmatpush.msra.mxu0 0.0
        %1724 = vmatpush.msra.mxu0 0.0
        %1725 = vmatpush.msra.mxu0 %v1644
        %1726 = vmatmul.f32.gmra.mxu0 %v1648
        %v1727 = vpop.f32.mrf.mxu0
        %v1728 = vadd.f32 0.0, %v1727
        %1729 = vdwg.mxu0
        %v1730 = vadd.f32 %v1619, %v1668
        %v1731 = vadd.f32 %v1620, %v1688
        %v1732 = vadd.f32 %v1621, %v1708
        %v1733 = vadd.f32 %v1622, %v1728
        %s1734 = scalar_lea.vmem [#allocation2], 416
        %v1735 = vld [vmem:[%s1734] sm:$0xff]
        %v1736 = vld [vmem:[%s1734 + $0x8] sm:$0xff]
        %v1737 = vld [vmem:[%s1734 + $0x10] sm:$0xff]
        %v1738 = vld [vmem:[%s1734 + $0x18] sm:$0xff]
        %v1739 = vmul.f32 %v294, %v1735
        %v1740 = vmul.f32 %v295, %v1736
        %v1741 = vmul.f32 %v296, %v1737
        %v1742 = vmul.f32 %v297, %v1738
        %s1743 = scalar_lea.vmem %s1, 104
        %v1744 = vld [vmem:[%s1743] sm:$0xff]
        %v1746 = vsel %vm346, %v1744, 0
        %1748 = vmatpush.msra.mxu0 0.0
        %1749 = vmatpush.msra.mxu0 0.0
        %1750 = vmatpush.msra.mxu0 0.0
        %1751 = vmatpush.msra.mxu0 0.0
        %1752 = vmatpush.msra.mxu0 0.0
        %1753 = vmatpush.msra.mxu0 0.0
        %1754 = vmatpush.msra.mxu0 0.0
        %1755 = vmatpush.msra.mxu0 0.0
        %1756 = vmatpush.msra.mxu0 0.0
        %1757 = vmatpush.msra.mxu0 0.0
        %1758 = vmatpush.msra.mxu0 0.0
        %1759 = vmatpush.msra.mxu0 0.0
        %1760 = vmatpush.msra.mxu0 0.0
        %1761 = vmatpush.msra.mxu0 0.0
        %1762 = vmatpush.msra.mxu0 0.0
        %1763 = vmatpush.msra.mxu0 %v1739
        %1764 = vmatmul.f32.gmra.mxu0 %v1746
        %v1765 = vpop.f32.mrf.mxu0
        %v1766 = vadd.f32 0.0, %v1765
        %1767 = vdwg.mxu0
        %1768 = vmatpush.msra.mxu0 0.0
        %1769 = vmatpush.msra.mxu0 0.0
        %1770 = vmatpush.msra.mxu0 0.0
        %1771 = vmatpush.msra.mxu0 0.0
        %1772 = vmatpush.msra.mxu0 0.0
        %1773 = vmatpush.msra.mxu0 0.0
        %1774 = vmatpush.msra.mxu0 0.0
        %1775 = vmatpush.msra.mxu0 0.0
        %1776 = vmatpush.msra.mxu0 0.0
        %1777 = vmatpush.msra.mxu0 0.0
        %1778 = vmatpush.msra.mxu0 0.0
        %1779 = vmatpush.msra.mxu0 0.0
        %1780 = vmatpush.msra.mxu0 0.0
        %1781 = vmatpush.msra.mxu0 0.0
        %1782 = vmatpush.msra.mxu0 0.0
        %1783 = vmatpush.msra.mxu0 %v1740
        %1784 = vmatmul.f32.gmra.mxu0 %v1746
        %v1785 = vpop.f32.mrf.mxu0
        %v1786 = vadd.f32 0.0, %v1785
        %1787 = vdwg.mxu0
        %1788 = vmatpush.msra.mxu0 0.0
        %1789 = vmatpush.msra.mxu0 0.0
        %1790 = vmatpush.msra.mxu0 0.0
        %1791 = vmatpush.msra.mxu0 0.0
        %1792 = vmatpush.msra.mxu0 0.0
        %1793 = vmatpush.msra.mxu0 0.0
        %1794 = vmatpush.msra.mxu0 0.0
        %1795 = vmatpush.msra.mxu0 0.0
        %1796 = vmatpush.msra.mxu0 0.0
        %1797 = vmatpush.msra.mxu0 0.0
        %1798 = vmatpush.msra.mxu0 0.0
        %1799 = vmatpush.msra.mxu0 0.0
        %1800 = vmatpush.msra.mxu0 0.0
        %1801 = vmatpush.msra.mxu0 0.0
        %1802 = vmatpush.msra.mxu0 0.0
        %1803 = vmatpush.msra.mxu0 %v1741
        %1804 = vmatmul.f32.gmra.mxu0 %v1746
        %v1805 = vpop.f32.mrf.mxu0
        %v1806 = vadd.f32 0.0, %v1805
        %1807 = vdwg.mxu0
        %1808 = vmatpush.msra.mxu0 0.0
        %1809 = vmatpush.msra.mxu0 0.0
        %1810 = vmatpush.msra.mxu0 0.0
        %1811 = vmatpush.msra.mxu0 0.0
        %1812 = vmatpush.msra.mxu0 0.0
        %1813 = vmatpush.msra.mxu0 0.0
        %1814 = vmatpush.msra.mxu0 0.0
        %1815 = vmatpush.msra.mxu0 0.0
        %1816 = vmatpush.msra.mxu0 0.0
        %1817 = vmatpush.msra.mxu0 0.0
        %1818 = vmatpush.msra.mxu0 0.0
        %1819 = vmatpush.msra.mxu0 0.0
        %1820 = vmatpush.msra.mxu0 0.0
        %1821 = vmatpush.msra.mxu0 0.0
        %1822 = vmatpush.msra.mxu0 0.0
        %1823 = vmatpush.msra.mxu0 %v1742
        %1824 = vmatmul.f32.gmra.mxu0 %v1746
        %v1825 = vpop.f32.mrf.mxu0
        %v1826 = vadd.f32 0.0, %v1825
        %1827 = vdwg.mxu0
        %v1828 = vadd.f32 %v1730, %v1766
        %v1829 = vadd.f32 %v1731, %v1786
        %v1830 = vadd.f32 %v1732, %v1806
        %v1831 = vadd.f32 %v1733, %v1826
        %1832 = vrot.lane.b32.xlu0 %v294, 127
        %v1833 = vpop.permute.xlu0 %1832
        %1834 = vrot.lane.b32.xlu0 %v295, 127
        %v1835 = vpop.permute.xlu0 %1834
        %1836 = vrot.lane.b32.xlu0 %v296, 127
        %v1837 = vpop.permute.xlu0 %1836
        %1838 = vrot.lane.b32.xlu0 %v297, 127
        %v1839 = vpop.permute.xlu0 %1838
        %vm1840 = vcmp.lt.s32.totalorder %v307, 127
        %v1841 = vsel %vm1840, %v1837, %v1839
        %v1842 = vsel %vm1840, %v1835, %v1837
        %v1843 = vsel %vm1840, %v1833, %v1835
        %v1844 = vsel %vm1840, %v1839, %v1833
        %s1845 = scalar_lea.vmem [#allocation2], 448
        %v1846 = vld [vmem:[%s1845] sm:$0xff]
        %v1847 = vld [vmem:[%s1845 + $0x8] sm:$0xff]
        %v1848 = vld [vmem:[%s1845 + $0x10] sm:$0xff]
        %v1849 = vld [vmem:[%s1845 + $0x18] sm:$0xff]
        %v1850 = vmul.f32 %v1843, %v1846
        %v1851 = vmul.f32 %v1842, %v1847
        %v1852 = vmul.f32 %v1841, %v1848
        %v1853 = vmul.f32 %v1844, %v1849
        %s1854 = scalar_lea.vmem %s1, 112
        %v1855 = vld [vmem:[%s1854] sm:$0xff]
        %v1857 = vsel %vm346, %v1855, 0
        %1859 = vmatpush.msra.mxu0 0.0
        %1860 = vmatpush.msra.mxu0 0.0
        %1861 = vmatpush.msra.mxu0 0.0
        %1862 = vmatpush.msra.mxu0 0.0
        %1863 = vmatpush.msra.mxu0 0.0
        %1864 = vmatpush.msra.mxu0 0.0
        %1865 = vmatpush.msra.mxu0 0.0
        %1866 = vmatpush.msra.mxu0 0.0
        %1867 = vmatpush.msra.mxu0 0.0
        %1868 = vmatpush.msra.mxu0 0.0
        %1869 = vmatpush.msra.mxu0 0.0
        %1870 = vmatpush.msra.mxu0 0.0
        %1871 = vmatpush.msra.mxu0 0.0
        %1872 = vmatpush.msra.mxu0 0.0
        %1873 = vmatpush.msra.mxu0 0.0
        %1874 = vmatpush.msra.mxu0 %v1850
        %1875 = vmatmul.f32.gmra.mxu0 %v1857
        %v1876 = vpop.f32.mrf.mxu0
        %v1877 = vadd.f32 0.0, %v1876
        %1878 = vdwg.mxu0
        %1879 = vmatpush.msra.mxu0 0.0
        %1880 = vmatpush.msra.mxu0 0.0
        %1881 = vmatpush.msra.mxu0 0.0
        %1882 = vmatpush.msra.mxu0 0.0
        %1883 = vmatpush.msra.mxu0 0.0
        %1884 = vmatpush.msra.mxu0 0.0
        %1885 = vmatpush.msra.mxu0 0.0
        %1886 = vmatpush.msra.mxu0 0.0
        %1887 = vmatpush.msra.mxu0 0.0
        %1888 = vmatpush.msra.mxu0 0.0
        %1889 = vmatpush.msra.mxu0 0.0
        %1890 = vmatpush.msra.mxu0 0.0
        %1891 = vmatpush.msra.mxu0 0.0
        %1892 = vmatpush.msra.mxu0 0.0
        %1893 = vmatpush.msra.mxu0 0.0
        %1894 = vmatpush.msra.mxu0 %v1851
        %1895 = vmatmul.f32.gmra.mxu0 %v1857
        %v1896 = vpop.f32.mrf.mxu0
        %v1897 = vadd.f32 0.0, %v1896
        %1898 = vdwg.mxu0
        %1899 = vmatpush.msra.mxu0 0.0
        %1900 = vmatpush.msra.mxu0 0.0
        %1901 = vmatpush.msra.mxu0 0.0
        %1902 = vmatpush.msra.mxu0 0.0
        %1903 = vmatpush.msra.mxu0 0.0
        %1904 = vmatpush.msra.mxu0 0.0
        %1905 = vmatpush.msra.mxu0 0.0
        %1906 = vmatpush.msra.mxu0 0.0
        %1907 = vmatpush.msra.mxu0 0.0
        %1908 = vmatpush.msra.mxu0 0.0
        %1909 = vmatpush.msra.mxu0 0.0
        %1910 = vmatpush.msra.mxu0 0.0
        %1911 = vmatpush.msra.mxu0 0.0
        %1912 = vmatpush.msra.mxu0 0.0
        %1913 = vmatpush.msra.mxu0 0.0
        %1914 = vmatpush.msra.mxu0 %v1852
        %1915 = vmatmul.f32.gmra.mxu0 %v1857
        %v1916 = vpop.f32.mrf.mxu0
        %v1917 = vadd.f32 0.0, %v1916
        %1918 = vdwg.mxu0
        %1919 = vmatpush.msra.mxu0 0.0
        %1920 = vmatpush.msra.mxu0 0.0
        %1921 = vmatpush.msra.mxu0 0.0
        %1922 = vmatpush.msra.mxu0 0.0
        %1923 = vmatpush.msra.mxu0 0.0
        %1924 = vmatpush.msra.mxu0 0.0
        %1925 = vmatpush.msra.mxu0 0.0
        %1926 = vmatpush.msra.mxu0 0.0
        %1927 = vmatpush.msra.mxu0 0.0
        %1928 = vmatpush.msra.mxu0 0.0
        %1929 = vmatpush.msra.mxu0 0.0
        %1930 = vmatpush.msra.mxu0 0.0
        %1931 = vmatpush.msra.mxu0 0.0
        %1932 = vmatpush.msra.mxu0 0.0
        %1933 = vmatpush.msra.mxu0 0.0
        %1934 = vmatpush.msra.mxu0 %v1853
        %1935 = vmatmul.f32.gmra.mxu0 %v1857
        %v1936 = vpop.f32.mrf.mxu0
        %v1937 = vadd.f32 0.0, %v1936
        %1938 = vdwg.mxu0
        %v1939 = vadd.f32 %v1828, %v1877
        %v1940 = vadd.f32 %v1829, %v1897
        %v1941 = vadd.f32 %v1830, %v1917
        %v1942 = vadd.f32 %v1831, %v1937
        %1943 = vrot.lane.b32.xlu0 %v294, 121
        %v1944 = vpop.permute.xlu0 %1943
        %1945 = vrot.lane.b32.xlu0 %v295, 121
        %v1946 = vpop.permute.xlu0 %1945
        %1947 = vrot.lane.b32.xlu0 %v296, 121
        %v1948 = vpop.permute.xlu0 %1947
        %1949 = vrot.lane.b32.xlu0 %v297, 121
        %v1950 = vpop.permute.xlu0 %1949
        %vm1951 = vcmp.lt.s32.totalorder %v307, 121
        %v1952 = vsel %vm1951, %v1948, %v1950
        %v1953 = vsel %vm1951, %v1946, %v1948
        %v1954 = vsel %vm1951, %v1944, %v1946
        %v1955 = vsel %vm1951, %v1950, %v1944
        %s1956 = scalar_lea.vmem [#allocation2], 480
        %v1957 = vld [vmem:[%s1956] sm:$0xff]
        %v1958 = vld [vmem:[%s1956 + $0x8] sm:$0xff]
        %v1959 = vld [vmem:[%s1956 + $0x10] sm:$0xff]
        %v1960 = vld [vmem:[%s1956 + $0x18] sm:$0xff]
        %v1961 = vmul.f32 %v1954, %v1957
        %v1962 = vmul.f32 %v1953, %v1958
        %v1963 = vmul.f32 %v1952, %v1959
        %v1964 = vmul.f32 %v1955, %v1960
        %s1965 = scalar_lea.vmem %s1, 120
        %v1966 = vld [vmem:[%s1965] sm:$0xff]
        %v1968 = vsel %vm346, %v1966, 0
        %1970 = vmatpush.msra.mxu0 0.0
        %1971 = vmatpush.msra.mxu0 0.0
        %1972 = vmatpush.msra.mxu0 0.0
        %1973 = vmatpush.msra.mxu0 0.0
        %1974 = vmatpush.msra.mxu0 0.0
        %1975 = vmatpush.msra.mxu0 0.0
        %1976 = vmatpush.msra.mxu0 0.0
        %1977 = vmatpush.msra.mxu0 0.0
        %1978 = vmatpush.msra.mxu0 0.0
        %1979 = vmatpush.msra.mxu0 0.0
        %1980 = vmatpush.msra.mxu0 0.0
        %1981 = vmatpush.msra.mxu0 0.0
        %1982 = vmatpush.msra.mxu0 0.0
        %1983 = vmatpush.msra.mxu0 0.0
        %1984 = vmatpush.msra.mxu0 0.0
        %1985 = vmatpush.msra.mxu0 %v1961
        %1986 = vmatmul.f32.gmra.mxu0 %v1968
        %v1987 = vpop.f32.mrf.mxu0
        %v1988 = vadd.f32 0.0, %v1987
        %1989 = vdwg.mxu0
        %1990 = vmatpush.msra.mxu0 0.0
        %1991 = vmatpush.msra.mxu0 0.0
        %1992 = vmatpush.msra.mxu0 0.0
        %1993 = vmatpush.msra.mxu0 0.0
        %1994 = vmatpush.msra.mxu0 0.0
        %1995 = vmatpush.msra.mxu0 0.0
        %1996 = vmatpush.msra.mxu0 0.0
        %1997 = vmatpush.msra.mxu0 0.0
        %1998 = vmatpush.msra.mxu0 0.0
        %1999 = vmatpush.msra.mxu0 0.0
        %2000 = vmatpush.msra.mxu0 0.0
        %2001 = vmatpush.msra.mxu0 0.0
        %2002 = vmatpush.msra.mxu0 0.0
        %2003 = vmatpush.msra.mxu0 0.0
        %2004 = vmatpush.msra.mxu0 0.0
        %2005 = vmatpush.msra.mxu0 %v1962
        %2006 = vmatmul.f32.gmra.mxu0 %v1968
        %v2007 = vpop.f32.mrf.mxu0
        %v2008 = vadd.f32 0.0, %v2007
        %2009 = vdwg.mxu0
        %2010 = vmatpush.msra.mxu0 0.0
        %2011 = vmatpush.msra.mxu0 0.0
        %2012 = vmatpush.msra.mxu0 0.0
        %2013 = vmatpush.msra.mxu0 0.0
        %2014 = vmatpush.msra.mxu0 0.0
        %2015 = vmatpush.msra.mxu0 0.0
        %2016 = vmatpush.msra.mxu0 0.0
        %2017 = vmatpush.msra.mxu0 0.0
        %2018 = vmatpush.msra.mxu0 0.0
        %2019 = vmatpush.msra.mxu0 0.0
        %2020 = vmatpush.msra.mxu0 0.0
        %2021 = vmatpush.msra.mxu0 0.0
        %2022 = vmatpush.msra.mxu0 0.0
        %2023 = vmatpush.msra.mxu0 0.0
        %2024 = vmatpush.msra.mxu0 0.0
        %2025 = vmatpush.msra.mxu0 %v1963
        %2026 = vmatmul.f32.gmra.mxu0 %v1968
        %v2027 = vpop.f32.mrf.mxu0
        %v2028 = vadd.f32 0.0, %v2027
        %2029 = vdwg.mxu0
        %2030 = vmatpush.msra.mxu0 0.0
        %2031 = vmatpush.msra.mxu0 0.0
        %2032 = vmatpush.msra.mxu0 0.0
        %2033 = vmatpush.msra.mxu0 0.0
        %2034 = vmatpush.msra.mxu0 0.0
        %2035 = vmatpush.msra.mxu0 0.0
        %2036 = vmatpush.msra.mxu0 0.0
        %2037 = vmatpush.msra.mxu0 0.0
        %2038 = vmatpush.msra.mxu0 0.0
        %2039 = vmatpush.msra.mxu0 0.0
        %2040 = vmatpush.msra.mxu0 0.0
        %2041 = vmatpush.msra.mxu0 0.0
        %2042 = vmatpush.msra.mxu0 0.0
        %2043 = vmatpush.msra.mxu0 0.0
        %2044 = vmatpush.msra.mxu0 0.0
        %2045 = vmatpush.msra.mxu0 %v1964
        %2046 = vmatmul.f32.gmra.mxu0 %v1968
        %v2047 = vpop.f32.mrf.mxu0
        %v2048 = vadd.f32 0.0, %v2047
        %2049 = vdwg.mxu0
        %v2050 = vadd.f32 %v1939, %v1988
        %v2051 = vadd.f32 %v1940, %v2008
        %v2052 = vadd.f32 %v1941, %v2028
        %v2053 = vadd.f32 %v1942, %v2048
        %2054 = vrot.lane.b32.xlu0 %v294, 120
        %v2055 = vpop.permute.xlu0 %2054
        %2056 = vrot.lane.b32.xlu0 %v295, 120
        %v2057 = vpop.permute.xlu0 %2056
        %2058 = vrot.lane.b32.xlu0 %v296, 120
        %v2059 = vpop.permute.xlu0 %2058
        %2060 = vrot.lane.b32.xlu0 %v297, 120
        %v2061 = vpop.permute.xlu0 %2060
        %vm2062 = vcmp.lt.s32.totalorder %v307, 120
        %v2063 = vsel %vm2062, %v2059, %v2061
        %v2064 = vsel %vm2062, %v2057, %v2059
        %v2065 = vsel %vm2062, %v2055, %v2057
        %v2066 = vsel %vm2062, %v2061, %v2055
        %s2067 = scalar_lea.vmem [#allocation2], 512
        %v2068 = vld [vmem:[%s2067] sm:$0xff]
        %v2069 = vld [vmem:[%s2067 + $0x8] sm:$0xff]
        %v2070 = vld [vmem:[%s2067 + $0x10] sm:$0xff]
        %v2071 = vld [vmem:[%s2067 + $0x18] sm:$0xff]
        %v2072 = vmul.f32 %v2065, %v2068
        %v2073 = vmul.f32 %v2064, %v2069
        %v2074 = vmul.f32 %v2063, %v2070
        %v2075 = vmul.f32 %v2066, %v2071
        %s2076 = scalar_lea.vmem %s1, 128
        %v2077 = vld [vmem:[%s2076] sm:$0xff]
        %v2079 = vsel %vm346, %v2077, 0
        %2081 = vmatpush.msra.mxu0 0.0
        %2082 = vmatpush.msra.mxu0 0.0
        %2083 = vmatpush.msra.mxu0 0.0
        %2084 = vmatpush.msra.mxu0 0.0
        %2085 = vmatpush.msra.mxu0 0.0
        %2086 = vmatpush.msra.mxu0 0.0
        %2087 = vmatpush.msra.mxu0 0.0
        %2088 = vmatpush.msra.mxu0 0.0
        %2089 = vmatpush.msra.mxu0 0.0
        %2090 = vmatpush.msra.mxu0 0.0
        %2091 = vmatpush.msra.mxu0 0.0
        %2092 = vmatpush.msra.mxu0 0.0
        %2093 = vmatpush.msra.mxu0 0.0
        %2094 = vmatpush.msra.mxu0 0.0
        %2095 = vmatpush.msra.mxu0 0.0
        %2096 = vmatpush.msra.mxu0 %v2072
        %2097 = vmatmul.f32.gmra.mxu0 %v2079
        %v2098 = vpop.f32.mrf.mxu0
        %v2099 = vadd.f32 0.0, %v2098
        %2100 = vdwg.mxu0
        %2101 = vmatpush.msra.mxu0 0.0
        %2102 = vmatpush.msra.mxu0 0.0
        %2103 = vmatpush.msra.mxu0 0.0
        %2104 = vmatpush.msra.mxu0 0.0
        %2105 = vmatpush.msra.mxu0 0.0
        %2106 = vmatpush.msra.mxu0 0.0
        %2107 = vmatpush.msra.mxu0 0.0
        %2108 = vmatpush.msra.mxu0 0.0
        %2109 = vmatpush.msra.mxu0 0.0
        %2110 = vmatpush.msra.mxu0 0.0
        %2111 = vmatpush.msra.mxu0 0.0
        %2112 = vmatpush.msra.mxu0 0.0
        %2113 = vmatpush.msra.mxu0 0.0
        %2114 = vmatpush.msra.mxu0 0.0
        %2115 = vmatpush.msra.mxu0 0.0
        %2116 = vmatpush.msra.mxu0 %v2073
        %2117 = vmatmul.f32.gmra.mxu0 %v2079
        %v2118 = vpop.f32.mrf.mxu0
        %v2119 = vadd.f32 0.0, %v2118
        %2120 = vdwg.mxu0
        %2121 = vmatpush.msra.mxu0 0.0
        %2122 = vmatpush.msra.mxu0 0.0
        %2123 = vmatpush.msra.mxu0 0.0
        %2124 = vmatpush.msra.mxu0 0.0
        %2125 = vmatpush.msra.mxu0 0.0
        %2126 = vmatpush.msra.mxu0 0.0
        %2127 = vmatpush.msra.mxu0 0.0
        %2128 = vmatpush.msra.mxu0 0.0
        %2129 = vmatpush.msra.mxu0 0.0
        %2130 = vmatpush.msra.mxu0 0.0
        %2131 = vmatpush.msra.mxu0 0.0
        %2132 = vmatpush.msra.mxu0 0.0
        %2133 = vmatpush.msra.mxu0 0.0
        %2134 = vmatpush.msra.mxu0 0.0
        %2135 = vmatpush.msra.mxu0 0.0
        %2136 = vmatpush.msra.mxu0 %v2074
        %2137 = vmatmul.f32.gmra.mxu0 %v2079
        %v2138 = vpop.f32.mrf.mxu0
        %v2139 = vadd.f32 0.0, %v2138
        %2140 = vdwg.mxu0
        %2141 = vmatpush.msra.mxu0 0.0
        %2142 = vmatpush.msra.mxu0 0.0
        %2143 = vmatpush.msra.mxu0 0.0
        %2144 = vmatpush.msra.mxu0 0.0
        %2145 = vmatpush.msra.mxu0 0.0
        %2146 = vmatpush.msra.mxu0 0.0
        %2147 = vmatpush.msra.mxu0 0.0
        %2148 = vmatpush.msra.mxu0 0.0
        %2149 = vmatpush.msra.mxu0 0.0
        %2150 = vmatpush.msra.mxu0 0.0
        %2151 = vmatpush.msra.mxu0 0.0
        %2152 = vmatpush.msra.mxu0 0.0
        %2153 = vmatpush.msra.mxu0 0.0
        %2154 = vmatpush.msra.mxu0 0.0
        %2155 = vmatpush.msra.mxu0 0.0
        %2156 = vmatpush.msra.mxu0 %v2075
        %2157 = vmatmul.f32.gmra.mxu0 %v2079
        %v2158 = vpop.f32.mrf.mxu0
        %v2159 = vadd.f32 0.0, %v2158
        %2160 = vdwg.mxu0
        %v2161 = vadd.f32 %v2050, %v2099
        %v2162 = vadd.f32 %v2051, %v2119
        %v2163 = vadd.f32 %v2052, %v2139
        %v2164 = vadd.f32 %v2053, %v2159
        %2165 = vrot.lane.b32.xlu0 %v294, 119
        %v2166 = vpop.permute.xlu0 %2165
        %2167 = vrot.lane.b32.xlu0 %v295, 119
        %v2168 = vpop.permute.xlu0 %2167
        %2169 = vrot.lane.b32.xlu0 %v296, 119
        %v2170 = vpop.permute.xlu0 %2169
        %2171 = vrot.lane.b32.xlu0 %v297, 119
        %v2172 = vpop.permute.xlu0 %2171
        %vm2173 = vcmp.lt.s32.totalorder %v307, 119
        %v2174 = vsel %vm2173, %v2170, %v2172
        %v2175 = vsel %vm2173, %v2168, %v2170
        %v2176 = vsel %vm2173, %v2166, %v2168
        %v2177 = vsel %vm2173, %v2172, %v2166
        %s2178 = scalar_lea.vmem [#allocation2], 544
        %v2179 = vld [vmem:[%s2178] sm:$0xff]
        %v2180 = vld [vmem:[%s2178 + $0x8] sm:$0xff]
        %v2181 = vld [vmem:[%s2178 + $0x10] sm:$0xff]
        %v2182 = vld [vmem:[%s2178 + $0x18] sm:$0xff]
        %v2183 = vmul.f32 %v2176, %v2179
        %v2184 = vmul.f32 %v2175, %v2180
        %v2185 = vmul.f32 %v2174, %v2181
        %v2186 = vmul.f32 %v2177, %v2182
        %s2187 = scalar_lea.vmem %s1, 136
        %v2188 = vld [vmem:[%s2187] sm:$0xff]
        %v2190 = vsel %vm346, %v2188, 0
        %2192 = vmatpush.msra.mxu0 0.0
        %2193 = vmatpush.msra.mxu0 0.0
        %2194 = vmatpush.msra.mxu0 0.0
        %2195 = vmatpush.msra.mxu0 0.0
        %2196 = vmatpush.msra.mxu0 0.0
        %2197 = vmatpush.msra.mxu0 0.0
        %2198 = vmatpush.msra.mxu0 0.0
        %2199 = vmatpush.msra.mxu0 0.0
        %2200 = vmatpush.msra.mxu0 0.0
        %2201 = vmatpush.msra.mxu0 0.0
        %2202 = vmatpush.msra.mxu0 0.0
        %2203 = vmatpush.msra.mxu0 0.0
        %2204 = vmatpush.msra.mxu0 0.0
        %2205 = vmatpush.msra.mxu0 0.0
        %2206 = vmatpush.msra.mxu0 0.0
        %2207 = vmatpush.msra.mxu0 %v2183
        %2208 = vmatmul.f32.gmra.mxu0 %v2190
        %v2209 = vpop.f32.mrf.mxu0
        %v2210 = vadd.f32 0.0, %v2209
        %2211 = vdwg.mxu0
        %2212 = vmatpush.msra.mxu0 0.0
        %2213 = vmatpush.msra.mxu0 0.0
        %2214 = vmatpush.msra.mxu0 0.0
        %2215 = vmatpush.msra.mxu0 0.0
        %2216 = vmatpush.msra.mxu0 0.0
        %2217 = vmatpush.msra.mxu0 0.0
        %2218 = vmatpush.msra.mxu0 0.0
        %2219 = vmatpush.msra.mxu0 0.0
        %2220 = vmatpush.msra.mxu0 0.0
        %2221 = vmatpush.msra.mxu0 0.0
        %2222 = vmatpush.msra.mxu0 0.0
        %2223 = vmatpush.msra.mxu0 0.0
        %2224 = vmatpush.msra.mxu0 0.0
        %2225 = vmatpush.msra.mxu0 0.0
        %2226 = vmatpush.msra.mxu0 0.0
        %2227 = vmatpush.msra.mxu0 %v2184
        %2228 = vmatmul.f32.gmra.mxu0 %v2190
        %v2229 = vpop.f32.mrf.mxu0
        %v2230 = vadd.f32 0.0, %v2229
        %2231 = vdwg.mxu0
        %2232 = vmatpush.msra.mxu0 0.0
        %2233 = vmatpush.msra.mxu0 0.0
        %2234 = vmatpush.msra.mxu0 0.0
        %2235 = vmatpush.msra.mxu0 0.0
        %2236 = vmatpush.msra.mxu0 0.0
        %2237 = vmatpush.msra.mxu0 0.0
        %2238 = vmatpush.msra.mxu0 0.0
        %2239 = vmatpush.msra.mxu0 0.0
        %2240 = vmatpush.msra.mxu0 0.0
        %2241 = vmatpush.msra.mxu0 0.0
        %2242 = vmatpush.msra.mxu0 0.0
        %2243 = vmatpush.msra.mxu0 0.0
        %2244 = vmatpush.msra.mxu0 0.0
        %2245 = vmatpush.msra.mxu0 0.0
        %2246 = vmatpush.msra.mxu0 0.0
        %2247 = vmatpush.msra.mxu0 %v2185
        %2248 = vmatmul.f32.gmra.mxu0 %v2190
        %v2249 = vpop.f32.mrf.mxu0
        %v2250 = vadd.f32 0.0, %v2249
        %2251 = vdwg.mxu0
        %2252 = vmatpush.msra.mxu0 0.0
        %2253 = vmatpush.msra.mxu0 0.0
        %2254 = vmatpush.msra.mxu0 0.0
        %2255 = vmatpush.msra.mxu0 0.0
        %2256 = vmatpush.msra.mxu0 0.0
        %2257 = vmatpush.msra.mxu0 0.0
        %2258 = vmatpush.msra.mxu0 0.0
        %2259 = vmatpush.msra.mxu0 0.0
        %2260 = vmatpush.msra.mxu0 0.0
        %2261 = vmatpush.msra.mxu0 0.0
        %2262 = vmatpush.msra.mxu0 0.0
        %2263 = vmatpush.msra.mxu0 0.0
        %2264 = vmatpush.msra.mxu0 0.0
        %2265 = vmatpush.msra.mxu0 0.0
        %2266 = vmatpush.msra.mxu0 0.0
        %2267 = vmatpush.msra.mxu0 %v2186
        %2268 = vmatmul.f32.gmra.mxu0 %v2190
        %v2269 = vpop.f32.mrf.mxu0
        %v2270 = vadd.f32 0.0, %v2269
        %2271 = vdwg.mxu0
        %v2272 = vadd.f32 %v2161, %v2210
        %v2273 = vadd.f32 %v2162, %v2230
        %v2274 = vadd.f32 %v2163, %v2250
        %v2275 = vadd.f32 %v2164, %v2270
        %s2276 = scalar_lea.vmem [#allocation2], 576
        %v2277 = vld [vmem:[%s2276] sm:$0xff]
        %v2278 = vld [vmem:[%s2276 + $0x8] sm:$0xff]
        %v2279 = vld [vmem:[%s2276 + $0x10] sm:$0xff]
        %v2280 = vld [vmem:[%s2276 + $0x18] sm:$0xff]
        %v2281 = vmul.f32 %v311, %v2277
        %v2282 = vmul.f32 %v310, %v2278
        %v2283 = vmul.f32 %v309, %v2279
        %v2284 = vmul.f32 %v312, %v2280
        %s2285 = scalar_lea.vmem %s1, 144
        %v2286 = vld [vmem:[%s2285] sm:$0xff]
        %v2288 = vsel %vm346, %v2286, 0
        %2290 = vmatpush.msra.mxu0 0.0
        %2291 = vmatpush.msra.mxu0 0.0
        %2292 = vmatpush.msra.mxu0 0.0
        %2293 = vmatpush.msra.mxu0 0.0
        %2294 = vmatpush.msra.mxu0 0.0
        %2295 = vmatpush.msra.mxu0 0.0
        %2296 = vmatpush.msra.mxu0 0.0
        %2297 = vmatpush.msra.mxu0 0.0
        %2298 = vmatpush.msra.mxu0 0.0
        %2299 = vmatpush.msra.mxu0 0.0
        %2300 = vmatpush.msra.mxu0 0.0
        %2301 = vmatpush.msra.mxu0 0.0
        %2302 = vmatpush.msra.mxu0 0.0
        %2303 = vmatpush.msra.mxu0 0.0
        %2304 = vmatpush.msra.mxu0 0.0
        %2305 = vmatpush.msra.mxu0 %v2281
        %2306 = vmatmul.f32.gmra.mxu0 %v2288
        %v2307 = vpop.f32.mrf.mxu0
        %v2308 = vadd.f32 0.0, %v2307
        %2309 = vdwg.mxu0
        %2310 = vmatpush.msra.mxu0 0.0
        %2311 = vmatpush.msra.mxu0 0.0
        %2312 = vmatpush.msra.mxu0 0.0
        %2313 = vmatpush.msra.mxu0 0.0
        %2314 = vmatpush.msra.mxu0 0.0
        %2315 = vmatpush.msra.mxu0 0.0
        %2316 = vmatpush.msra.mxu0 0.0
        %2317 = vmatpush.msra.mxu0 0.0
        %2318 = vmatpush.msra.mxu0 0.0
        %2319 = vmatpush.msra.mxu0 0.0
        %2320 = vmatpush.msra.mxu0 0.0
        %2321 = vmatpush.msra.mxu0 0.0
        %2322 = vmatpush.msra.mxu0 0.0
        %2323 = vmatpush.msra.mxu0 0.0
        %2324 = vmatpush.msra.mxu0 0.0
        %2325 = vmatpush.msra.mxu0 %v2282
        %2326 = vmatmul.f32.gmra.mxu0 %v2288
        %v2327 = vpop.f32.mrf.mxu0
        %v2328 = vadd.f32 0.0, %v2327
        %2329 = vdwg.mxu0
        %2330 = vmatpush.msra.mxu0 0.0
        %2331 = vmatpush.msra.mxu0 0.0
        %2332 = vmatpush.msra.mxu0 0.0
        %2333 = vmatpush.msra.mxu0 0.0
        %2334 = vmatpush.msra.mxu0 0.0
        %2335 = vmatpush.msra.mxu0 0.0
        %2336 = vmatpush.msra.mxu0 0.0
        %2337 = vmatpush.msra.mxu0 0.0
        %2338 = vmatpush.msra.mxu0 0.0
        %2339 = vmatpush.msra.mxu0 0.0
        %2340 = vmatpush.msra.mxu0 0.0
        %2341 = vmatpush.msra.mxu0 0.0
        %2342 = vmatpush.msra.mxu0 0.0
        %2343 = vmatpush.msra.mxu0 0.0
        %2344 = vmatpush.msra.mxu0 0.0
        %2345 = vmatpush.msra.mxu0 %v2283
        %2346 = vmatmul.f32.gmra.mxu0 %v2288
        %v2347 = vpop.f32.mrf.mxu0
        %v2348 = vadd.f32 0.0, %v2347
        %2349 = vdwg.mxu0
        %2350 = vmatpush.msra.mxu0 0.0
        %2351 = vmatpush.msra.mxu0 0.0
        %2352 = vmatpush.msra.mxu0 0.0
        %2353 = vmatpush.msra.mxu0 0.0
        %2354 = vmatpush.msra.mxu0 0.0
        %2355 = vmatpush.msra.mxu0 0.0
        %2356 = vmatpush.msra.mxu0 0.0
        %2357 = vmatpush.msra.mxu0 0.0
        %2358 = vmatpush.msra.mxu0 0.0
        %2359 = vmatpush.msra.mxu0 0.0
        %2360 = vmatpush.msra.mxu0 0.0
        %2361 = vmatpush.msra.mxu0 0.0
        %2362 = vmatpush.msra.mxu0 0.0
        %2363 = vmatpush.msra.mxu0 0.0
        %2364 = vmatpush.msra.mxu0 0.0
        %2365 = vmatpush.msra.mxu0 %v2284
        %2366 = vmatmul.f32.gmra.mxu0 %v2288
        %v2367 = vpop.f32.mrf.mxu0
        %v2368 = vadd.f32 0.0, %v2367
        %2369 = vdwg.mxu0
        %v2370 = vadd.f32 %v2272, %v2308
        %v2371 = vadd.f32 %v2273, %v2328
        %v2372 = vadd.f32 %v2274, %v2348
        %v2373 = vadd.f32 %v2275, %v2368
        %s2374 = scalar_lea.vmem [#allocation2], 608
        %v2375 = vld [vmem:[%s2374] sm:$0xff]
        %v2376 = vld [vmem:[%s2374 + $0x8] sm:$0xff]
        %v2377 = vld [vmem:[%s2374 + $0x10] sm:$0xff]
        %v2378 = vld [vmem:[%s2374 + $0x18] sm:$0xff]
        %v2379 = vmul.f32 %v333, %v2375
        %v2380 = vmul.f32 %v332, %v2376
        %v2381 = vmul.f32 %v331, %v2377
        %v2382 = vmul.f32 %v334, %v2378
        %s2383 = scalar_lea.vmem %s1, 152
        %v2384 = vld [vmem:[%s2383] sm:$0xff]
        %v2386 = vsel %vm346, %v2384, 0
        %2388 = vmatpush.msra.mxu0 0.0
        %2389 = vmatpush.msra.mxu0 0.0
        %2390 = vmatpush.msra.mxu0 0.0
        %2391 = vmatpush.msra.mxu0 0.0
        %2392 = vmatpush.msra.mxu0 0.0
        %2393 = vmatpush.msra.mxu0 0.0
        %2394 = vmatpush.msra.mxu0 0.0
        %2395 = vmatpush.msra.mxu0 0.0
        %2396 = vmatpush.msra.mxu0 0.0
        %2397 = vmatpush.msra.mxu0 0.0
        %2398 = vmatpush.msra.mxu0 0.0
        %2399 = vmatpush.msra.mxu0 0.0
        %2400 = vmatpush.msra.mxu0 0.0
        %2401 = vmatpush.msra.mxu0 0.0
        %2402 = vmatpush.msra.mxu0 0.0
        %2403 = vmatpush.msra.mxu0 %v2379
        %2404 = vmatmul.f32.gmra.mxu0 %v2386
        %v2405 = vpop.f32.mrf.mxu0
        %v2406 = vadd.f32 0.0, %v2405
        %2407 = vdwg.mxu0
        %2408 = vmatpush.msra.mxu0 0.0
        %2409 = vmatpush.msra.mxu0 0.0
        %2410 = vmatpush.msra.mxu0 0.0
        %2411 = vmatpush.msra.mxu0 0.0
        %2412 = vmatpush.msra.mxu0 0.0
        %2413 = vmatpush.msra.mxu0 0.0
        %2414 = vmatpush.msra.mxu0 0.0
        %2415 = vmatpush.msra.mxu0 0.0
        %2416 = vmatpush.msra.mxu0 0.0
        %2417 = vmatpush.msra.mxu0 0.0
        %2418 = vmatpush.msra.mxu0 0.0
        %2419 = vmatpush.msra.mxu0 0.0
        %2420 = vmatpush.msra.mxu0 0.0
        %2421 = vmatpush.msra.mxu0 0.0
        %2422 = vmatpush.msra.mxu0 0.0
        %2423 = vmatpush.msra.mxu0 %v2380
        %2424 = vmatmul.f32.gmra.mxu0 %v2386
        %v2425 = vpop.f32.mrf.mxu0
        %v2426 = vadd.f32 0.0, %v2425
        %2427 = vdwg.mxu0
        %2428 = vmatpush.msra.mxu0 0.0
        %2429 = vmatpush.msra.mxu0 0.0
        %2430 = vmatpush.msra.mxu0 0.0
        %2431 = vmatpush.msra.mxu0 0.0
        %2432 = vmatpush.msra.mxu0 0.0
        %2433 = vmatpush.msra.mxu0 0.0
        %2434 = vmatpush.msra.mxu0 0.0
        %2435 = vmatpush.msra.mxu0 0.0
        %2436 = vmatpush.msra.mxu0 0.0
        %2437 = vmatpush.msra.mxu0 0.0
        %2438 = vmatpush.msra.mxu0 0.0
        %2439 = vmatpush.msra.mxu0 0.0
        %2440 = vmatpush.msra.mxu0 0.0
        %2441 = vmatpush.msra.mxu0 0.0
        %2442 = vmatpush.msra.mxu0 0.0
        %2443 = vmatpush.msra.mxu0 %v2381
        %2444 = vmatmul.f32.gmra.mxu0 %v2386
        %v2445 = vpop.f32.mrf.mxu0
        %v2446 = vadd.f32 0.0, %v2445
        %2447 = vdwg.mxu0
        %2448 = vmatpush.msra.mxu0 0.0
        %2449 = vmatpush.msra.mxu0 0.0
        %2450 = vmatpush.msra.mxu0 0.0
        %2451 = vmatpush.msra.mxu0 0.0
        %2452 = vmatpush.msra.mxu0 0.0
        %2453 = vmatpush.msra.mxu0 0.0
        %2454 = vmatpush.msra.mxu0 0.0
        %2455 = vmatpush.msra.mxu0 0.0
        %2456 = vmatpush.msra.mxu0 0.0
        %2457 = vmatpush.msra.mxu0 0.0
        %2458 = vmatpush.msra.mxu0 0.0
        %2459 = vmatpush.msra.mxu0 0.0
        %2460 = vmatpush.msra.mxu0 0.0
        %2461 = vmatpush.msra.mxu0 0.0
        %2462 = vmatpush.msra.mxu0 0.0
        %2463 = vmatpush.msra.mxu0 %v2382
        %2464 = vmatmul.f32.gmra.mxu0 %v2386
        %v2465 = vpop.f32.mrf.mxu0
        %v2466 = vadd.f32 0.0, %v2465
        %2467 = vdwg.mxu0
        %v2468 = vadd.f32 %v2370, %v2406
        %v2469 = vadd.f32 %v2371, %v2426
        %v2470 = vadd.f32 %v2372, %v2446
        %v2471 = vadd.f32 %v2373, %v2466
        %s2472 = scalar_lea.vmem [#allocation2], 640
        %v2473 = vld [vmem:[%s2472] sm:$0xff]
        %v2474 = vld [vmem:[%s2472 + $0x8] sm:$0xff]
        %v2475 = vld [vmem:[%s2472 + $0x10] sm:$0xff]
        %v2476 = vld [vmem:[%s2472 + $0x18] sm:$0xff]
        %v2477 = vmul.f32 %v524, %v2473
        %v2478 = vmul.f32 %v523, %v2474
        %v2479 = vmul.f32 %v522, %v2475
        %v2480 = vmul.f32 %v525, %v2476
        %s2481 = scalar_lea.vmem %s1, 160
        %v2482 = vld [vmem:[%s2481] sm:$0xff]
        %v2484 = vsel %vm346, %v2482, 0
        %2486 = vmatpush.msra.mxu0 0.0
        %2487 = vmatpush.msra.mxu0 0.0
        %2488 = vmatpush.msra.mxu0 0.0
        %2489 = vmatpush.msra.mxu0 0.0
        %2490 = vmatpush.msra.mxu0 0.0
        %2491 = vmatpush.msra.mxu0 0.0
        %2492 = vmatpush.msra.mxu0 0.0
        %2493 = vmatpush.msra.mxu0 0.0
        %2494 = vmatpush.msra.mxu0 0.0
        %2495 = vmatpush.msra.mxu0 0.0
        %2496 = vmatpush.msra.mxu0 0.0
        %2497 = vmatpush.msra.mxu0 0.0
        %2498 = vmatpush.msra.mxu0 0.0
        %2499 = vmatpush.msra.mxu0 0.0
        %2500 = vmatpush.msra.mxu0 0.0
        %2501 = vmatpush.msra.mxu0 %v2477
        %2502 = vmatmul.f32.gmra.mxu0 %v2484
        %v2503 = vpop.f32.mrf.mxu0
        %v2504 = vadd.f32 0.0, %v2503
        %2505 = vdwg.mxu0
        %2506 = vmatpush.msra.mxu0 0.0
        %2507 = vmatpush.msra.mxu0 0.0
        %2508 = vmatpush.msra.mxu0 0.0
        %2509 = vmatpush.msra.mxu0 0.0
        %2510 = vmatpush.msra.mxu0 0.0
        %2511 = vmatpush.msra.mxu0 0.0
        %2512 = vmatpush.msra.mxu0 0.0
        %2513 = vmatpush.msra.mxu0 0.0
        %2514 = vmatpush.msra.mxu0 0.0
        %2515 = vmatpush.msra.mxu0 0.0
        %2516 = vmatpush.msra.mxu0 0.0
        %2517 = vmatpush.msra.mxu0 0.0
        %2518 = vmatpush.msra.mxu0 0.0
        %2519 = vmatpush.msra.mxu0 0.0
        %2520 = vmatpush.msra.mxu0 0.0
        %2521 = vmatpush.msra.mxu0 %v2478
        %2522 = vmatmul.f32.gmra.mxu0 %v2484
        %v2523 = vpop.f32.mrf.mxu0
        %v2524 = vadd.f32 0.0, %v2523
        %2525 = vdwg.mxu0
        %2526 = vmatpush.msra.mxu0 0.0
        %2527 = vmatpush.msra.mxu0 0.0
        %2528 = vmatpush.msra.mxu0 0.0
        %2529 = vmatpush.msra.mxu0 0.0
        %2530 = vmatpush.msra.mxu0 0.0
        %2531 = vmatpush.msra.mxu0 0.0
        %2532 = vmatpush.msra.mxu0 0.0
        %2533 = vmatpush.msra.mxu0 0.0
        %2534 = vmatpush.msra.mxu0 0.0
        %2535 = vmatpush.msra.mxu0 0.0
        %2536 = vmatpush.msra.mxu0 0.0
        %2537 = vmatpush.msra.mxu0 0.0
        %2538 = vmatpush.msra.mxu0 0.0
        %2539 = vmatpush.msra.mxu0 0.0
        %2540 = vmatpush.msra.mxu0 0.0
        %2541 = vmatpush.msra.mxu0 %v2479
        %2542 = vmatmul.f32.gmra.mxu0 %v2484
        %v2543 = vpop.f32.mrf.mxu0
        %v2544 = vadd.f32 0.0, %v2543
        %2545 = vdwg.mxu0
        %2546 = vmatpush.msra.mxu0 0.0
        %2547 = vmatpush.msra.mxu0 0.0
        %2548 = vmatpush.msra.mxu0 0.0
        %2549 = vmatpush.msra.mxu0 0.0
        %2550 = vmatpush.msra.mxu0 0.0
        %2551 = vmatpush.msra.mxu0 0.0
        %2552 = vmatpush.msra.mxu0 0.0
        %2553 = vmatpush.msra.mxu0 0.0
        %2554 = vmatpush.msra.mxu0 0.0
        %2555 = vmatpush.msra.mxu0 0.0
        %2556 = vmatpush.msra.mxu0 0.0
        %2557 = vmatpush.msra.mxu0 0.0
        %2558 = vmatpush.msra.mxu0 0.0
        %2559 = vmatpush.msra.mxu0 0.0
        %2560 = vmatpush.msra.mxu0 0.0
        %2561 = vmatpush.msra.mxu0 %v2480
        %2562 = vmatmul.f32.gmra.mxu0 %v2484
        %v2563 = vpop.f32.mrf.mxu0
        %v2564 = vadd.f32 0.0, %v2563
        %2565 = vdwg.mxu0
        %v2566 = vadd.f32 %v2468, %v2504
        %v2567 = vadd.f32 %v2469, %v2524
        %v2568 = vadd.f32 %v2470, %v2544
        %v2569 = vadd.f32 %v2471, %v2564
        %s2570 = scalar_lea.vmem [#allocation2], 672
        %v2571 = vld [vmem:[%s2570] sm:$0xff]
        %v2572 = vld [vmem:[%s2570 + $0x8] sm:$0xff]
        %v2573 = vld [vmem:[%s2570 + $0x10] sm:$0xff]
        %v2574 = vld [vmem:[%s2570 + $0x18] sm:$0xff]
        %v2575 = vmul.f32 %v635, %v2571
        %v2576 = vmul.f32 %v634, %v2572
        %v2577 = vmul.f32 %v633, %v2573
        %v2578 = vmul.f32 %v636, %v2574
        %s2579 = scalar_lea.vmem %s1, 168
        %v2580 = vld [vmem:[%s2579] sm:$0xff]
        %v2582 = vsel %vm346, %v2580, 0
        %2584 = vmatpush.msra.mxu0 0.0
        %2585 = vmatpush.msra.mxu0 0.0
        %2586 = vmatpush.msra.mxu0 0.0
        %2587 = vmatpush.msra.mxu0 0.0
        %2588 = vmatpush.msra.mxu0 0.0
        %2589 = vmatpush.msra.mxu0 0.0
        %2590 = vmatpush.msra.mxu0 0.0
        %2591 = vmatpush.msra.mxu0 0.0
        %2592 = vmatpush.msra.mxu0 0.0
        %2593 = vmatpush.msra.mxu0 0.0
        %2594 = vmatpush.msra.mxu0 0.0
        %2595 = vmatpush.msra.mxu0 0.0
        %2596 = vmatpush.msra.mxu0 0.0
        %2597 = vmatpush.msra.mxu0 0.0
        %2598 = vmatpush.msra.mxu0 0.0
        %2599 = vmatpush.msra.mxu0 %v2575
        %2600 = vmatmul.f32.gmra.mxu0 %v2582
        %v2601 = vpop.f32.mrf.mxu0
        %v2602 = vadd.f32 0.0, %v2601
        %2603 = vdwg.mxu0
        %2604 = vmatpush.msra.mxu0 0.0
        %2605 = vmatpush.msra.mxu0 0.0
        %2606 = vmatpush.msra.mxu0 0.0
        %2607 = vmatpush.msra.mxu0 0.0
        %2608 = vmatpush.msra.mxu0 0.0
        %2609 = vmatpush.msra.mxu0 0.0
        %2610 = vmatpush.msra.mxu0 0.0
        %2611 = vmatpush.msra.mxu0 0.0
        %2612 = vmatpush.msra.mxu0 0.0
        %2613 = vmatpush.msra.mxu0 0.0
        %2614 = vmatpush.msra.mxu0 0.0
        %2615 = vmatpush.msra.mxu0 0.0
        %2616 = vmatpush.msra.mxu0 0.0
        %2617 = vmatpush.msra.mxu0 0.0
        %2618 = vmatpush.msra.mxu0 0.0
        %2619 = vmatpush.msra.mxu0 %v2576
        %2620 = vmatmul.f32.gmra.mxu0 %v2582
        %v2621 = vpop.f32.mrf.mxu0
        %v2622 = vadd.f32 0.0, %v2621
        %2623 = vdwg.mxu0
        %2624 = vmatpush.msra.mxu0 0.0
        %2625 = vmatpush.msra.mxu0 0.0
        %2626 = vmatpush.msra.mxu0 0.0
        %2627 = vmatpush.msra.mxu0 0.0
        %2628 = vmatpush.msra.mxu0 0.0
        %2629 = vmatpush.msra.mxu0 0.0
        %2630 = vmatpush.msra.mxu0 0.0
        %2631 = vmatpush.msra.mxu0 0.0
        %2632 = vmatpush.msra.mxu0 0.0
        %2633 = vmatpush.msra.mxu0 0.0
        %2634 = vmatpush.msra.mxu0 0.0
        %2635 = vmatpush.msra.mxu0 0.0
        %2636 = vmatpush.msra.mxu0 0.0
        %2637 = vmatpush.msra.mxu0 0.0
        %2638 = vmatpush.msra.mxu0 0.0
        %2639 = vmatpush.msra.mxu0 %v2577
        %2640 = vmatmul.f32.gmra.mxu0 %v2582
        %v2641 = vpop.f32.mrf.mxu0
        %v2642 = vadd.f32 0.0, %v2641
        %2643 = vdwg.mxu0
        %2644 = vmatpush.msra.mxu0 0.0
        %2645 = vmatpush.msra.mxu0 0.0
        %2646 = vmatpush.msra.mxu0 0.0
        %2647 = vmatpush.msra.mxu0 0.0
        %2648 = vmatpush.msra.mxu0 0.0
        %2649 = vmatpush.msra.mxu0 0.0
        %2650 = vmatpush.msra.mxu0 0.0
        %2651 = vmatpush.msra.mxu0 0.0
        %2652 = vmatpush.msra.mxu0 0.0
        %2653 = vmatpush.msra.mxu0 0.0
        %2654 = vmatpush.msra.mxu0 0.0
        %2655 = vmatpush.msra.mxu0 0.0
        %2656 = vmatpush.msra.mxu0 0.0
        %2657 = vmatpush.msra.mxu0 0.0
        %2658 = vmatpush.msra.mxu0 0.0
        %2659 = vmatpush.msra.mxu0 %v2578
        %2660 = vmatmul.f32.gmra.mxu0 %v2582
        %v2661 = vpop.f32.mrf.mxu0
        %v2662 = vadd.f32 0.0, %v2661
        %2663 = vdwg.mxu0
        %v2664 = vadd.f32 %v2566, %v2602
        %v2665 = vadd.f32 %v2567, %v2622
        %v2666 = vadd.f32 %v2568, %v2642
        %v2667 = vadd.f32 %v2569, %v2662
        %s2668 = scalar_lea.vmem [#allocation2], 704
        %v2669 = vld [vmem:[%s2668] sm:$0xff]
        %v2670 = vld [vmem:[%s2668 + $0x8] sm:$0xff]
        %v2671 = vld [vmem:[%s2668 + $0x10] sm:$0xff]
        %v2672 = vld [vmem:[%s2668 + $0x18] sm:$0xff]
        %v2673 = vmul.f32 %v746, %v2669
        %v2674 = vmul.f32 %v745, %v2670
        %v2675 = vmul.f32 %v744, %v2671
        %v2676 = vmul.f32 %v747, %v2672
        %s2677 = scalar_lea.vmem %s1, 176
        %v2678 = vld [vmem:[%s2677] sm:$0xff]
        %v2680 = vsel %vm346, %v2678, 0
        %2682 = vmatpush.msra.mxu0 0.0
        %2683 = vmatpush.msra.mxu0 0.0
        %2684 = vmatpush.msra.mxu0 0.0
        %2685 = vmatpush.msra.mxu0 0.0
        %2686 = vmatpush.msra.mxu0 0.0
        %2687 = vmatpush.msra.mxu0 0.0
        %2688 = vmatpush.msra.mxu0 0.0
        %2689 = vmatpush.msra.mxu0 0.0
        %2690 = vmatpush.msra.mxu0 0.0
        %2691 = vmatpush.msra.mxu0 0.0
        %2692 = vmatpush.msra.mxu0 0.0
        %2693 = vmatpush.msra.mxu0 0.0
        %2694 = vmatpush.msra.mxu0 0.0
        %2695 = vmatpush.msra.mxu0 0.0
        %2696 = vmatpush.msra.mxu0 0.0
        %2697 = vmatpush.msra.mxu0 %v2673
        %2698 = vmatmul.f32.gmra.mxu0 %v2680
        %v2699 = vpop.f32.mrf.mxu0
        %v2700 = vadd.f32 0.0, %v2699
        %2701 = vdwg.mxu0
        %2702 = vmatpush.msra.mxu0 0.0
        %2703 = vmatpush.msra.mxu0 0.0
        %2704 = vmatpush.msra.mxu0 0.0
        %2705 = vmatpush.msra.mxu0 0.0
        %2706 = vmatpush.msra.mxu0 0.0
        %2707 = vmatpush.msra.mxu0 0.0
        %2708 = vmatpush.msra.mxu0 0.0
        %2709 = vmatpush.msra.mxu0 0.0
        %2710 = vmatpush.msra.mxu0 0.0
        %2711 = vmatpush.msra.mxu0 0.0
        %2712 = vmatpush.msra.mxu0 0.0
        %2713 = vmatpush.msra.mxu0 0.0
        %2714 = vmatpush.msra.mxu0 0.0
        %2715 = vmatpush.msra.mxu0 0.0
        %2716 = vmatpush.msra.mxu0 0.0
        %2717 = vmatpush.msra.mxu0 %v2674
        %2718 = vmatmul.f32.gmra.mxu0 %v2680
        %v2719 = vpop.f32.mrf.mxu0
        %v2720 = vadd.f32 0.0, %v2719
        %2721 = vdwg.mxu0
        %2722 = vmatpush.msra.mxu0 0.0
        %2723 = vmatpush.msra.mxu0 0.0
        %2724 = vmatpush.msra.mxu0 0.0
        %2725 = vmatpush.msra.mxu0 0.0
        %2726 = vmatpush.msra.mxu0 0.0
        %2727 = vmatpush.msra.mxu0 0.0
        %2728 = vmatpush.msra.mxu0 0.0
        %2729 = vmatpush.msra.mxu0 0.0
        %2730 = vmatpush.msra.mxu0 0.0
        %2731 = vmatpush.msra.mxu0 0.0
        %2732 = vmatpush.msra.mxu0 0.0
        %2733 = vmatpush.msra.mxu0 0.0
        %2734 = vmatpush.msra.mxu0 0.0
        %2735 = vmatpush.msra.mxu0 0.0
        %2736 = vmatpush.msra.mxu0 0.0
        %2737 = vmatpush.msra.mxu0 %v2675
        %2738 = vmatmul.f32.gmra.mxu0 %v2680
        %v2739 = vpop.f32.mrf.mxu0
        %v2740 = vadd.f32 0.0, %v2739
        %2741 = vdwg.mxu0
        %2742 = vmatpush.msra.mxu0 0.0
        %2743 = vmatpush.msra.mxu0 0.0
        %2744 = vmatpush.msra.mxu0 0.0
        %2745 = vmatpush.msra.mxu0 0.0
        %2746 = vmatpush.msra.mxu0 0.0
        %2747 = vmatpush.msra.mxu0 0.0
        %2748 = vmatpush.msra.mxu0 0.0
        %2749 = vmatpush.msra.mxu0 0.0
        %2750 = vmatpush.msra.mxu0 0.0
        %2751 = vmatpush.msra.mxu0 0.0
        %2752 = vmatpush.msra.mxu0 0.0
        %2753 = vmatpush.msra.mxu0 0.0
        %2754 = vmatpush.msra.mxu0 0.0
        %2755 = vmatpush.msra.mxu0 0.0
        %2756 = vmatpush.msra.mxu0 0.0
        %2757 = vmatpush.msra.mxu0 %v2676
        %2758 = vmatmul.f32.gmra.mxu0 %v2680
        %v2759 = vpop.f32.mrf.mxu0
        %v2760 = vadd.f32 0.0, %v2759
        %2761 = vdwg.mxu0
        %v2762 = vadd.f32 %v2664, %v2700
        %v2763 = vadd.f32 %v2665, %v2720
        %v2764 = vadd.f32 %v2666, %v2740
        %v2765 = vadd.f32 %v2667, %v2760
        %s2766 = scalar_lea.vmem [#allocation2], 736
        %v2767 = vld [vmem:[%s2766] sm:$0xff]
        %v2768 = vld [vmem:[%s2766 + $0x8] sm:$0xff]
        %v2769 = vld [vmem:[%s2766 + $0x10] sm:$0xff]
        %v2770 = vld [vmem:[%s2766 + $0x18] sm:$0xff]
        %v2771 = vmul.f32 %v857, %v2767
        %v2772 = vmul.f32 %v856, %v2768
        %v2773 = vmul.f32 %v855, %v2769
        %v2774 = vmul.f32 %v858, %v2770
        %s2775 = scalar_lea.vmem %s1, 184
        %v2776 = vld [vmem:[%s2775] sm:$0xff]
        %v2778 = vsel %vm346, %v2776, 0
        %2780 = vmatpush.msra.mxu0 0.0
        %2781 = vmatpush.msra.mxu0 0.0
        %2782 = vmatpush.msra.mxu0 0.0
        %2783 = vmatpush.msra.mxu0 0.0
        %2784 = vmatpush.msra.mxu0 0.0
        %2785 = vmatpush.msra.mxu0 0.0
        %2786 = vmatpush.msra.mxu0 0.0
        %2787 = vmatpush.msra.mxu0 0.0
        %2788 = vmatpush.msra.mxu0 0.0
        %2789 = vmatpush.msra.mxu0 0.0
        %2790 = vmatpush.msra.mxu0 0.0
        %2791 = vmatpush.msra.mxu0 0.0
        %2792 = vmatpush.msra.mxu0 0.0
        %2793 = vmatpush.msra.mxu0 0.0
        %2794 = vmatpush.msra.mxu0 0.0
        %2795 = vmatpush.msra.mxu0 %v2771
        %2796 = vmatmul.f32.gmra.mxu0 %v2778
        %v2797 = vpop.f32.mrf.mxu0
        %v2798 = vadd.f32 0.0, %v2797
        %2799 = vdwg.mxu0
        %2800 = vmatpush.msra.mxu0 0.0
        %2801 = vmatpush.msra.mxu0 0.0
        %2802 = vmatpush.msra.mxu0 0.0
        %2803 = vmatpush.msra.mxu0 0.0
        %2804 = vmatpush.msra.mxu0 0.0
        %2805 = vmatpush.msra.mxu0 0.0
        %2806 = vmatpush.msra.mxu0 0.0
        %2807 = vmatpush.msra.mxu0 0.0
        %2808 = vmatpush.msra.mxu0 0.0
        %2809 = vmatpush.msra.mxu0 0.0
        %2810 = vmatpush.msra.mxu0 0.0
        %2811 = vmatpush.msra.mxu0 0.0
        %2812 = vmatpush.msra.mxu0 0.0
        %2813 = vmatpush.msra.mxu0 0.0
        %2814 = vmatpush.msra.mxu0 0.0
        %2815 = vmatpush.msra.mxu0 %v2772
        %2816 = vmatmul.f32.gmra.mxu0 %v2778
        %v2817 = vpop.f32.mrf.mxu0
        %v2818 = vadd.f32 0.0, %v2817
        %2819 = vdwg.mxu0
        %2820 = vmatpush.msra.mxu0 0.0
        %2821 = vmatpush.msra.mxu0 0.0
        %2822 = vmatpush.msra.mxu0 0.0
        %2823 = vmatpush.msra.mxu0 0.0
        %2824 = vmatpush.msra.mxu0 0.0
        %2825 = vmatpush.msra.mxu0 0.0
        %2826 = vmatpush.msra.mxu0 0.0
        %2827 = vmatpush.msra.mxu0 0.0
        %2828 = vmatpush.msra.mxu0 0.0
        %2829 = vmatpush.msra.mxu0 0.0
        %2830 = vmatpush.msra.mxu0 0.0
        %2831 = vmatpush.msra.mxu0 0.0
        %2832 = vmatpush.msra.mxu0 0.0
        %2833 = vmatpush.msra.mxu0 0.0
        %2834 = vmatpush.msra.mxu0 0.0
        %2835 = vmatpush.msra.mxu0 %v2773
        %2836 = vmatmul.f32.gmra.mxu0 %v2778
        %v2837 = vpop.f32.mrf.mxu0
        %v2838 = vadd.f32 0.0, %v2837
        %2839 = vdwg.mxu0
        %2840 = vmatpush.msra.mxu0 0.0
        %2841 = vmatpush.msra.mxu0 0.0
        %2842 = vmatpush.msra.mxu0 0.0
        %2843 = vmatpush.msra.mxu0 0.0
        %2844 = vmatpush.msra.mxu0 0.0
        %2845 = vmatpush.msra.mxu0 0.0
        %2846 = vmatpush.msra.mxu0 0.0
        %2847 = vmatpush.msra.mxu0 0.0
        %2848 = vmatpush.msra.mxu0 0.0
        %2849 = vmatpush.msra.mxu0 0.0
        %2850 = vmatpush.msra.mxu0 0.0
        %2851 = vmatpush.msra.mxu0 0.0
        %2852 = vmatpush.msra.mxu0 0.0
        %2853 = vmatpush.msra.mxu0 0.0
        %2854 = vmatpush.msra.mxu0 0.0
        %2855 = vmatpush.msra.mxu0 %v2774
        %2856 = vmatmul.f32.gmra.mxu0 %v2778
        %v2857 = vpop.f32.mrf.mxu0
        %v2858 = vadd.f32 0.0, %v2857
        %2859 = vdwg.mxu0
        %v2860 = vadd.f32 %v2762, %v2798
        %v2861 = vadd.f32 %v2763, %v2818
        %v2862 = vadd.f32 %v2764, %v2838
        %v2863 = vadd.f32 %v2765, %v2858
        %s2864 = scalar_lea.vmem [#allocation2], 768
        %v2865 = vld [vmem:[%s2864] sm:$0xff]
        %v2866 = vld [vmem:[%s2864 + $0x8] sm:$0xff]
        %v2867 = vld [vmem:[%s2864 + $0x10] sm:$0xff]
        %v2868 = vld [vmem:[%s2864 + $0x18] sm:$0xff]
        %v2869 = vmul.f32 %v968, %v2865
        %v2870 = vmul.f32 %v967, %v2866
        %v2871 = vmul.f32 %v966, %v2867
        %v2872 = vmul.f32 %v969, %v2868
        %s2873 = scalar_lea.vmem %s1, 192
        %v2874 = vld [vmem:[%s2873] sm:$0xff]
        %v2876 = vsel %vm346, %v2874, 0
        %2878 = vmatpush.msra.mxu0 0.0
        %2879 = vmatpush.msra.mxu0 0.0
        %2880 = vmatpush.msra.mxu0 0.0
        %2881 = vmatpush.msra.mxu0 0.0
        %2882 = vmatpush.msra.mxu0 0.0
        %2883 = vmatpush.msra.mxu0 0.0
        %2884 = vmatpush.msra.mxu0 0.0
        %2885 = vmatpush.msra.mxu0 0.0
        %2886 = vmatpush.msra.mxu0 0.0
        %2887 = vmatpush.msra.mxu0 0.0
        %2888 = vmatpush.msra.mxu0 0.0
        %2889 = vmatpush.msra.mxu0 0.0
        %2890 = vmatpush.msra.mxu0 0.0
        %2891 = vmatpush.msra.mxu0 0.0
        %2892 = vmatpush.msra.mxu0 0.0
        %2893 = vmatpush.msra.mxu0 %v2869
        %2894 = vmatmul.f32.gmra.mxu0 %v2876
        %v2895 = vpop.f32.mrf.mxu0
        %v2896 = vadd.f32 0.0, %v2895
        %2897 = vdwg.mxu0
        %2898 = vmatpush.msra.mxu0 0.0
        %2899 = vmatpush.msra.mxu0 0.0
        %2900 = vmatpush.msra.mxu0 0.0
        %2901 = vmatpush.msra.mxu0 0.0
        %2902 = vmatpush.msra.mxu0 0.0
        %2903 = vmatpush.msra.mxu0 0.0
        %2904 = vmatpush.msra.mxu0 0.0
        %2905 = vmatpush.msra.mxu0 0.0
        %2906 = vmatpush.msra.mxu0 0.0
        %2907 = vmatpush.msra.mxu0 0.0
        %2908 = vmatpush.msra.mxu0 0.0
        %2909 = vmatpush.msra.mxu0 0.0
        %2910 = vmatpush.msra.mxu0 0.0
        %2911 = vmatpush.msra.mxu0 0.0
        %2912 = vmatpush.msra.mxu0 0.0
        %2913 = vmatpush.msra.mxu0 %v2870
        %2914 = vmatmul.f32.gmra.mxu0 %v2876
        %v2915 = vpop.f32.mrf.mxu0
        %v2916 = vadd.f32 0.0, %v2915
        %2917 = vdwg.mxu0
        %2918 = vmatpush.msra.mxu0 0.0
        %2919 = vmatpush.msra.mxu0 0.0
        %2920 = vmatpush.msra.mxu0 0.0
        %2921 = vmatpush.msra.mxu0 0.0
        %2922 = vmatpush.msra.mxu0 0.0
        %2923 = vmatpush.msra.mxu0 0.0
        %2924 = vmatpush.msra.mxu0 0.0
        %2925 = vmatpush.msra.mxu0 0.0
        %2926 = vmatpush.msra.mxu0 0.0
        %2927 = vmatpush.msra.mxu0 0.0
        %2928 = vmatpush.msra.mxu0 0.0
        %2929 = vmatpush.msra.mxu0 0.0
        %2930 = vmatpush.msra.mxu0 0.0
        %2931 = vmatpush.msra.mxu0 0.0
        %2932 = vmatpush.msra.mxu0 0.0
        %2933 = vmatpush.msra.mxu0 %v2871
        %2934 = vmatmul.f32.gmra.mxu0 %v2876
        %v2935 = vpop.f32.mrf.mxu0
        %v2936 = vadd.f32 0.0, %v2935
        %2937 = vdwg.mxu0
        %2938 = vmatpush.msra.mxu0 0.0
        %2939 = vmatpush.msra.mxu0 0.0
        %2940 = vmatpush.msra.mxu0 0.0
        %2941 = vmatpush.msra.mxu0 0.0
        %2942 = vmatpush.msra.mxu0 0.0
        %2943 = vmatpush.msra.mxu0 0.0
        %2944 = vmatpush.msra.mxu0 0.0
        %2945 = vmatpush.msra.mxu0 0.0
        %2946 = vmatpush.msra.mxu0 0.0
        %2947 = vmatpush.msra.mxu0 0.0
        %2948 = vmatpush.msra.mxu0 0.0
        %2949 = vmatpush.msra.mxu0 0.0
        %2950 = vmatpush.msra.mxu0 0.0
        %2951 = vmatpush.msra.mxu0 0.0
        %2952 = vmatpush.msra.mxu0 0.0
        %2953 = vmatpush.msra.mxu0 %v2872
        %2954 = vmatmul.f32.gmra.mxu0 %v2876
        %v2955 = vpop.f32.mrf.mxu0
        %v2956 = vadd.f32 0.0, %v2955
        %2957 = vdwg.mxu0
        %v2958 = vadd.f32 %v2860, %v2896
        %v2959 = vadd.f32 %v2861, %v2916
        %v2960 = vadd.f32 %v2862, %v2936
        %v2961 = vadd.f32 %v2863, %v2956
        %s2962 = scalar_lea.vmem [#allocation2], 800
        %v2963 = vld [vmem:[%s2962] sm:$0xff]
        %v2964 = vld [vmem:[%s2962 + $0x8] sm:$0xff]
        %v2965 = vld [vmem:[%s2962 + $0x10] sm:$0xff]
        %v2966 = vld [vmem:[%s2962 + $0x18] sm:$0xff]
        %v2967 = vmul.f32 %v1079, %v2963
        %v2968 = vmul.f32 %v1078, %v2964
        %v2969 = vmul.f32 %v1077, %v2965
        %v2970 = vmul.f32 %v1080, %v2966
        %s2971 = scalar_lea.vmem %s1, 200
        %v2972 = vld [vmem:[%s2971] sm:$0xff]
        %v2974 = vsel %vm346, %v2972, 0
        %2976 = vmatpush.msra.mxu0 0.0
        %2977 = vmatpush.msra.mxu0 0.0
        %2978 = vmatpush.msra.mxu0 0.0
        %2979 = vmatpush.msra.mxu0 0.0
        %2980 = vmatpush.msra.mxu0 0.0
        %2981 = vmatpush.msra.mxu0 0.0
        %2982 = vmatpush.msra.mxu0 0.0
        %2983 = vmatpush.msra.mxu0 0.0
        %2984 = vmatpush.msra.mxu0 0.0
        %2985 = vmatpush.msra.mxu0 0.0
        %2986 = vmatpush.msra.mxu0 0.0
        %2987 = vmatpush.msra.mxu0 0.0
        %2988 = vmatpush.msra.mxu0 0.0
        %2989 = vmatpush.msra.mxu0 0.0
        %2990 = vmatpush.msra.mxu0 0.0
        %2991 = vmatpush.msra.mxu0 %v2967
        %2992 = vmatmul.f32.gmra.mxu0 %v2974
        %v2993 = vpop.f32.mrf.mxu0
        %v2994 = vadd.f32 0.0, %v2993
        %2995 = vdwg.mxu0
        %2996 = vmatpush.msra.mxu0 0.0
        %2997 = vmatpush.msra.mxu0 0.0
        %2998 = vmatpush.msra.mxu0 0.0
        %2999 = vmatpush.msra.mxu0 0.0
        %3000 = vmatpush.msra.mxu0 0.0
        %3001 = vmatpush.msra.mxu0 0.0
        %3002 = vmatpush.msra.mxu0 0.0
        %3003 = vmatpush.msra.mxu0 0.0
        %3004 = vmatpush.msra.mxu0 0.0
        %3005 = vmatpush.msra.mxu0 0.0
        %3006 = vmatpush.msra.mxu0 0.0
        %3007 = vmatpush.msra.mxu0 0.0
        %3008 = vmatpush.msra.mxu0 0.0
        %3009 = vmatpush.msra.mxu0 0.0
        %3010 = vmatpush.msra.mxu0 0.0
        %3011 = vmatpush.msra.mxu0 %v2968
        %3012 = vmatmul.f32.gmra.mxu0 %v2974
        %v3013 = vpop.f32.mrf.mxu0
        %v3014 = vadd.f32 0.0, %v3013
        %3015 = vdwg.mxu0
        %3016 = vmatpush.msra.mxu0 0.0
        %3017 = vmatpush.msra.mxu0 0.0
        %3018 = vmatpush.msra.mxu0 0.0
        %3019 = vmatpush.msra.mxu0 0.0
        %3020 = vmatpush.msra.mxu0 0.0
        %3021 = vmatpush.msra.mxu0 0.0
        %3022 = vmatpush.msra.mxu0 0.0
        %3023 = vmatpush.msra.mxu0 0.0
        %3024 = vmatpush.msra.mxu0 0.0
        %3025 = vmatpush.msra.mxu0 0.0
        %3026 = vmatpush.msra.mxu0 0.0
        %3027 = vmatpush.msra.mxu0 0.0
        %3028 = vmatpush.msra.mxu0 0.0
        %3029 = vmatpush.msra.mxu0 0.0
        %3030 = vmatpush.msra.mxu0 0.0
        %3031 = vmatpush.msra.mxu0 %v2969
        %3032 = vmatmul.f32.gmra.mxu0 %v2974
        %v3033 = vpop.f32.mrf.mxu0
        %v3034 = vadd.f32 0.0, %v3033
        %3035 = vdwg.mxu0
        %3036 = vmatpush.msra.mxu0 0.0
        %3037 = vmatpush.msra.mxu0 0.0
        %3038 = vmatpush.msra.mxu0 0.0
        %3039 = vmatpush.msra.mxu0 0.0
        %3040 = vmatpush.msra.mxu0 0.0
        %3041 = vmatpush.msra.mxu0 0.0
        %3042 = vmatpush.msra.mxu0 0.0
        %3043 = vmatpush.msra.mxu0 0.0
        %3044 = vmatpush.msra.mxu0 0.0
        %3045 = vmatpush.msra.mxu0 0.0
        %3046 = vmatpush.msra.mxu0 0.0
        %3047 = vmatpush.msra.mxu0 0.0
        %3048 = vmatpush.msra.mxu0 0.0
        %3049 = vmatpush.msra.mxu0 0.0
        %3050 = vmatpush.msra.mxu0 0.0
        %3051 = vmatpush.msra.mxu0 %v2970
        %3052 = vmatmul.f32.gmra.mxu0 %v2974
        %v3053 = vpop.f32.mrf.mxu0
        %v3054 = vadd.f32 0.0, %v3053
        %3055 = vdwg.mxu0
        %v3056 = vadd.f32 %v2958, %v2994
        %v3057 = vadd.f32 %v2959, %v3014
        %v3058 = vadd.f32 %v2960, %v3034
        %v3059 = vadd.f32 %v2961, %v3054
        %s3060 = scalar_lea.vmem [#allocation2], 832
        %v3061 = vld [vmem:[%s3060] sm:$0xff]
        %v3062 = vld [vmem:[%s3060 + $0x8] sm:$0xff]
        %v3063 = vld [vmem:[%s3060 + $0x10] sm:$0xff]
        %v3064 = vld [vmem:[%s3060 + $0x18] sm:$0xff]
        %v3065 = vmul.f32 %v1190, %v3061
        %v3066 = vmul.f32 %v1189, %v3062
        %v3067 = vmul.f32 %v1188, %v3063
        %v3068 = vmul.f32 %v1191, %v3064
        %s3069 = scalar_lea.vmem %s1, 208
        %v3070 = vld [vmem:[%s3069] sm:$0xff]
        %v3072 = vsel %vm346, %v3070, 0
        %3074 = vmatpush.msra.mxu0 0.0
        %3075 = vmatpush.msra.mxu0 0.0
        %3076 = vmatpush.msra.mxu0 0.0
        %3077 = vmatpush.msra.mxu0 0.0
        %3078 = vmatpush.msra.mxu0 0.0
        %3079 = vmatpush.msra.mxu0 0.0
        %3080 = vmatpush.msra.mxu0 0.0
        %3081 = vmatpush.msra.mxu0 0.0
        %3082 = vmatpush.msra.mxu0 0.0
        %3083 = vmatpush.msra.mxu0 0.0
        %3084 = vmatpush.msra.mxu0 0.0
        %3085 = vmatpush.msra.mxu0 0.0
        %3086 = vmatpush.msra.mxu0 0.0
        %3087 = vmatpush.msra.mxu0 0.0
        %3088 = vmatpush.msra.mxu0 0.0
        %3089 = vmatpush.msra.mxu0 %v3065
        %3090 = vmatmul.f32.gmra.mxu0 %v3072
        %v3091 = vpop.f32.mrf.mxu0
        %v3092 = vadd.f32 0.0, %v3091
        %3093 = vdwg.mxu0
        %3094 = vmatpush.msra.mxu0 0.0
        %3095 = vmatpush.msra.mxu0 0.0
        %3096 = vmatpush.msra.mxu0 0.0
        %3097 = vmatpush.msra.mxu0 0.0
        %3098 = vmatpush.msra.mxu0 0.0
        %3099 = vmatpush.msra.mxu0 0.0
        %3100 = vmatpush.msra.mxu0 0.0
        %3101 = vmatpush.msra.mxu0 0.0
        %3102 = vmatpush.msra.mxu0 0.0
        %3103 = vmatpush.msra.mxu0 0.0
        %3104 = vmatpush.msra.mxu0 0.0
        %3105 = vmatpush.msra.mxu0 0.0
        %3106 = vmatpush.msra.mxu0 0.0
        %3107 = vmatpush.msra.mxu0 0.0
        %3108 = vmatpush.msra.mxu0 0.0
        %3109 = vmatpush.msra.mxu0 %v3066
        %3110 = vmatmul.f32.gmra.mxu0 %v3072
        %v3111 = vpop.f32.mrf.mxu0
        %v3112 = vadd.f32 0.0, %v3111
        %3113 = vdwg.mxu0
        %3114 = vmatpush.msra.mxu0 0.0
        %3115 = vmatpush.msra.mxu0 0.0
        %3116 = vmatpush.msra.mxu0 0.0
        %3117 = vmatpush.msra.mxu0 0.0
        %3118 = vmatpush.msra.mxu0 0.0
        %3119 = vmatpush.msra.mxu0 0.0
        %3120 = vmatpush.msra.mxu0 0.0
        %3121 = vmatpush.msra.mxu0 0.0
        %3122 = vmatpush.msra.mxu0 0.0
        %3123 = vmatpush.msra.mxu0 0.0
        %3124 = vmatpush.msra.mxu0 0.0
        %3125 = vmatpush.msra.mxu0 0.0
        %3126 = vmatpush.msra.mxu0 0.0
        %3127 = vmatpush.msra.mxu0 0.0
        %3128 = vmatpush.msra.mxu0 0.0
        %3129 = vmatpush.msra.mxu0 %v3067
        %3130 = vmatmul.f32.gmra.mxu0 %v3072
        %v3131 = vpop.f32.mrf.mxu0
        %v3132 = vadd.f32 0.0, %v3131
        %3133 = vdwg.mxu0
        %3134 = vmatpush.msra.mxu0 0.0
        %3135 = vmatpush.msra.mxu0 0.0
        %3136 = vmatpush.msra.mxu0 0.0
        %3137 = vmatpush.msra.mxu0 0.0
        %3138 = vmatpush.msra.mxu0 0.0
        %3139 = vmatpush.msra.mxu0 0.0
        %3140 = vmatpush.msra.mxu0 0.0
        %3141 = vmatpush.msra.mxu0 0.0
        %3142 = vmatpush.msra.mxu0 0.0
        %3143 = vmatpush.msra.mxu0 0.0
        %3144 = vmatpush.msra.mxu0 0.0
        %3145 = vmatpush.msra.mxu0 0.0
        %3146 = vmatpush.msra.mxu0 0.0
        %3147 = vmatpush.msra.mxu0 0.0
        %3148 = vmatpush.msra.mxu0 0.0
        %3149 = vmatpush.msra.mxu0 %v3068
        %3150 = vmatmul.f32.gmra.mxu0 %v3072
        %v3151 = vpop.f32.mrf.mxu0
        %v3152 = vadd.f32 0.0, %v3151
        %3153 = vdwg.mxu0
        %v3154 = vadd.f32 %v3056, %v3092
        %v3155 = vadd.f32 %v3057, %v3112
        %v3156 = vadd.f32 %v3058, %v3132
        %v3157 = vadd.f32 %v3059, %v3152
        %v3158 = vld [vmem:[%s3] sm:$0xff]
        %3160 = vset.pattern.permute.xlu0 0
        %3161 = vperm.xlu0 %3160, %v3158
        %v3162 = vpop.permute.xlu0 %3161
        %v3164 = vadd.f32 %v3154, %v3162
        %v3165 = vadd.f32 %v3155, %v3162
        %v3166 = vadd.f32 %v3156, %v3162
        %v3167 = vadd.f32 %v3157, %v3162
        %v3168 = vadd.f32 %v3164, %v3165
        %v3169 = vadd.f32 %v3168, %v3166
        %v3170 = vadd.f32 %v3169, %v3167
        %3171 = vadd.xlane.f32.xlu0 %v3170
        %v3172 = vpop.xlane.xlu0 %3171
        %v3173 = vld [vmem:[%s6] sm:$0xff]
        %v3175 = vsel %vm346, %v3173, 0
        %3177 = vmatpush.msra.mxu0 0.0
        %3178 = vmatpush.msra.mxu0 0.0
        %3179 = vmatpush.msra.mxu0 0.0
        %3180 = vmatpush.msra.mxu0 0.0
        %3181 = vmatpush.msra.mxu0 0.0
        %3182 = vmatpush.msra.mxu0 0.0
        %3183 = vmatpush.msra.mxu0 0.0
        %3184 = vmatpush.msra.mxu0 0.0
        %3185 = vmatpush.msra.mxu0 0.0
        %3186 = vmatpush.msra.mxu0 0.0
        %3187 = vmatpush.msra.mxu0 0.0
        %3188 = vmatpush.msra.mxu0 0.0
        %3189 = vmatpush.msra.mxu0 0.0
        %3190 = vmatpush.msra.mxu0 0.0
        %3191 = vmatpush.msra.mxu0 0.0
        %3192 = vmatpush.msra.mxu0 %v3172
        %3193 = vmatmul.f32.gmra.mxu0 %v3175
        %v3194 = vpop.f32.mrf.mxu0
        %v3195 = vadd.f32 0.0, %v3194
        %3196 = vdwg.mxu0
        %v3197 = vmul.f32 %v3195, 0.001953125
        %3199 = vset.pattern.permute.xlu0 0
        %3200 = vperm.xlu0 %3199, %v3197
        %v3201 = vpop.permute.xlu0 %3200
        %v3203 = vsub.f32 %v3164, %v3201
        %v3204 = vsub.f32 %v3165, %v3201
        %v3205 = vsub.f32 %v3166, %v3201
        %v3206 = vsub.f32 %v3167, %v3201
        %v3207 = vmul.f32 %v3203, %v3203
        %v3208 = vmul.f32 %v3204, %v3204
        %v3209 = vmul.f32 %v3205, %v3205
        %v3210 = vmul.f32 %v3206, %v3206
        %v3211 = vadd.f32 %v3207, %v3208
        %v3212 = vadd.f32 %v3211, %v3209
        %v3213 = vadd.f32 %v3212, %v3210
        %3214 = vadd.xlane.f32.xlu0 %v3213
        %v3215 = vpop.xlane.xlu0 %3214
        %3216 = vmatpush.msra.mxu0 0.0
        %3217 = vmatpush.msra.mxu0 0.0
        %3218 = vmatpush.msra.mxu0 0.0
        %3219 = vmatpush.msra.mxu0 0.0
        %3220 = vmatpush.msra.mxu0 0.0
        %3221 = vmatpush.msra.mxu0 0.0
        %3222 = vmatpush.msra.mxu0 0.0
        %3223 = vmatpush.msra.mxu0 0.0
        %3224 = vmatpush.msra.mxu0 0.0
        %3225 = vmatpush.msra.mxu0 0.0
        %3226 = vmatpush.msra.mxu0 0.0
        %3227 = vmatpush.msra.mxu0 0.0
        %3228 = vmatpush.msra.mxu0 0.0
        %3229 = vmatpush.msra.mxu0 0.0
        %3230 = vmatpush.msra.mxu0 0.0
        %3231 = vmatpush.msra.mxu0 %v3215
        %3232 = vmatmul.f32.gmra.mxu0 %v3175
        %v3233 = vpop.f32.mrf.mxu0
        %v3234 = vadd.f32 0.0, %v3233
        %3235 = vdwg.mxu0
        %v3236 = vmul.f32 %v3234, 0.001953125
        %v3237 = vadd.f32 %v3236, 1e-05
        %v3238 = vrsqrt.pop %v3237
        %v3239 = vmul.f32 %v3238, %v3237
        %v3240 = vmul.f32 %v3239, %v3238
        %v3241 = vmul.f32 0.5, %v3240
        %v3242 = vsub.f32 1.5, %v3241
        %v3243 = vmul.f32 %v3238, %v3242
        %vm3244 = vweird.f32 %v3237
        %vm3245 = vweird.f32 %v3238
        %vm3246 = vmor %vm3244, %vm3245
        %v3247 = vsel %vm3246, %v3238, %v3243
        %3248 = vrot.lane.b32.xlu0 %v3158, 127
        %v3249 = vpop.permute.xlu0 %3248
        %v3251 = vmul.f32 %v3247, %v3249
        %3253 = vset.pattern.permute.xlu0 0
        %3254 = vperm.xlu0 %3253, %v3251
        %v3255 = vpop.permute.xlu0 %3254
        %v3257 = vmul.f32 %v3203, %v3255
        %v3258 = vmul.f32 %v3204, %v3255
        %v3259 = vmul.f32 %v3205, %v3255
        %v3260 = vmul.f32 %v3206, %v3255
        %3261 = vset.pattern.permute.xlu0 2
        %3262 = vperm.xlu0 %3261, %v3158
        %v3263 = vpop.permute.xlu0 %3262
        %v3265 = vadd.f32 %v3257, %v3263
        %v3266 = vadd.f32 %v3258, %v3263
        %v3267 = vadd.f32 %v3259, %v3263
        %v3268 = vadd.f32 %v3260, %v3263
        %v3269 = vmax.f32 %v3265, 0.0
        %v3270 = vmax.f32 %v3266, 0.0
        %v3271 = vmax.f32 %v3267, 0.0
        %v3272 = vmax.f32 %v3268, 0.0
        %3273 = vrot.lane.b32.xlu0 %v3269, 73
        %v3274 = vpop.permute.xlu0 %3273
        %3275 = vrot.lane.b32.xlu0 %v3270, 73
        %v3276 = vpop.permute.xlu0 %3275
        %3277 = vrot.lane.b32.xlu0 %v3271, 73
        %v3278 = vpop.permute.xlu0 %3277
        %3279 = vrot.lane.b32.xlu0 %v3272, 73
        %v3280 = vpop.permute.xlu0 %3279
        %v3281 = vsel %vm308, %v3278, %v3280
        %v3282 = vsel %vm308, %v3276, %v3278
        %v3283 = vsel %vm308, %v3274, %v3276
        %v3284 = vsel %vm308, %v3280, %v3274
        %v3285 = vmul.f32 %v3284, %v313
        %v3286 = vmul.f32 %v3283, %v314
        %v3287 = vmul.f32 %v3282, %v315
        %v3288 = vmul.f32 %v3281, %v316
        %v3289 = vld [vmem:[%s2] sm:$0xff]
        %3290 = vrot.lane.b32.xlu0 %v3269, 72
        %v3291 = vpop.permute.xlu0 %3290
        %3292 = vrot.lane.b32.xlu0 %v3270, 72
        %v3293 = vpop.permute.xlu0 %3292
        %3294 = vrot.lane.b32.xlu0 %v3271, 72
        %v3295 = vpop.permute.xlu0 %3294
        %3296 = vrot.lane.b32.xlu0 %v3272, 72
        %v3297 = vpop.permute.xlu0 %3296
        %v3298 = vsel %vm330, %v3295, %v3297
        %v3299 = vsel %vm330, %v3293, %v3295
        %v3300 = vsel %vm330, %v3291, %v3293
        %v3301 = vsel %vm330, %v3297, %v3291
        %v3302 = vmul.f32 %v3301, %v336
        %v3303 = vmul.f32 %v3300, %v337
        %v3304 = vmul.f32 %v3299, %v338
        %v3305 = vmul.f32 %v3298, %v339
        %s3306 = scalar_lea.vmem %s2, 8
        %v3307 = vld [vmem:[%s3306] sm:$0xff]
        %v3309 = vsel %vm346, %v3307, 0
        %3311 = vmatpush.msra.mxu0 0.0
        %3312 = vmatpush.msra.mxu0 0.0
        %3313 = vmatpush.msra.mxu0 0.0
        %3314 = vmatpush.msra.mxu0 0.0
        %3315 = vmatpush.msra.mxu0 0.0
        %3316 = vmatpush.msra.mxu0 0.0
        %3317 = vmatpush.msra.mxu0 0.0
        %3318 = vmatpush.msra.mxu0 0.0
        %3319 = vmatpush.msra.mxu0 0.0
        %3320 = vmatpush.msra.mxu0 0.0
        %3321 = vmatpush.msra.mxu0 0.0
        %3322 = vmatpush.msra.mxu0 0.0
        %3323 = vmatpush.msra.mxu0 0.0
        %3324 = vmatpush.msra.mxu0 0.0
        %3325 = vmatpush.msra.mxu0 0.0
        %3326 = vmatpush.msra.mxu0 %v3302
        %3327 = vmatmul.f32.gmra.mxu0 %v3309
        %v3328 = vpop.f32.mrf.mxu0
        %v3329 = vadd.f32 0.0, %v3328
        %3330 = vdwg.mxu0
        %3331 = vmatpush.msra.mxu0 0.0
        %3332 = vmatpush.msra.mxu0 0.0
        %3333 = vmatpush.msra.mxu0 0.0
        %3334 = vmatpush.msra.mxu0 0.0
        %3335 = vmatpush.msra.mxu0 0.0
        %3336 = vmatpush.msra.mxu0 0.0
        %3337 = vmatpush.msra.mxu0 0.0
        %3338 = vmatpush.msra.mxu0 0.0
        %3339 = vmatpush.msra.mxu0 0.0
        %3340 = vmatpush.msra.mxu0 0.0
        %3341 = vmatpush.msra.mxu0 0.0
        %3342 = vmatpush.msra.mxu0 0.0
        %3343 = vmatpush.msra.mxu0 0.0
        %3344 = vmatpush.msra.mxu0 0.0
        %3345 = vmatpush.msra.mxu0 0.0
        %3346 = vmatpush.msra.mxu0 %v3303
        %3347 = vmatmul.f32.gmra.mxu0 %v3309
        %v3348 = vpop.f32.mrf.mxu0
        %v3349 = vadd.f32 0.0, %v3348
        %3350 = vdwg.mxu0
        %3351 = vmatpush.msra.mxu0 0.0
        %3352 = vmatpush.msra.mxu0 0.0
        %3353 = vmatpush.msra.mxu0 0.0
        %3354 = vmatpush.msra.mxu0 0.0
        %3355 = vmatpush.msra.mxu0 0.0
        %3356 = vmatpush.msra.mxu0 0.0
        %3357 = vmatpush.msra.mxu0 0.0
        %3358 = vmatpush.msra.mxu0 0.0
        %3359 = vmatpush.msra.mxu0 0.0
        %3360 = vmatpush.msra.mxu0 0.0
        %3361 = vmatpush.msra.mxu0 0.0
        %3362 = vmatpush.msra.mxu0 0.0
        %3363 = vmatpush.msra.mxu0 0.0
        %3364 = vmatpush.msra.mxu0 0.0
        %3365 = vmatpush.msra.mxu0 0.0
        %3366 = vmatpush.msra.mxu0 %v3304
        %3367 = vmatmul.f32.gmra.mxu0 %v3309
        %v3368 = vpop.f32.mrf.mxu0
        %v3369 = vadd.f32 0.0, %v3368
        %3370 = vdwg.mxu0
        %3371 = vmatpush.msra.mxu0 0.0
        %3372 = vmatpush.msra.mxu0 0.0
        %3373 = vmatpush.msra.mxu0 0.0
        %3374 = vmatpush.msra.mxu0 0.0
        %3375 = vmatpush.msra.mxu0 0.0
        %3376 = vmatpush.msra.mxu0 0.0
        %3377 = vmatpush.msra.mxu0 0.0
        %3378 = vmatpush.msra.mxu0 0.0
        %3379 = vmatpush.msra.mxu0 0.0
        %3380 = vmatpush.msra.mxu0 0.0
        %3381 = vmatpush.msra.mxu0 0.0
        %3382 = vmatpush.msra.mxu0 0.0
        %3383 = vmatpush.msra.mxu0 0.0
        %3384 = vmatpush.msra.mxu0 0.0
        %3385 = vmatpush.msra.mxu0 0.0
        %3386 = vmatpush.msra.mxu0 %v3305
        %3387 = vmatmul.f32.gmra.mxu0 %v3309
        %v3388 = vpop.f32.mrf.mxu0
        %v3389 = vadd.f32 0.0, %v3388
        %3390 = vdwg.mxu0
        %v3392 = vsel %vm346, %v3289, 0
        %3394 = vmatpush.msra.mxu0 0.0
        %3395 = vmatpush.msra.mxu0 0.0
        %3396 = vmatpush.msra.mxu0 0.0
        %3397 = vmatpush.msra.mxu0 0.0
        %3398 = vmatpush.msra.mxu0 0.0
        %3399 = vmatpush.msra.mxu0 0.0
        %3400 = vmatpush.msra.mxu0 0.0
        %3401 = vmatpush.msra.mxu0 0.0
        %3402 = vmatpush.msra.mxu0 0.0
        %3403 = vmatpush.msra.mxu0 0.0
        %3404 = vmatpush.msra.mxu0 0.0
        %3405 = vmatpush.msra.mxu0 0.0
        %3406 = vmatpush.msra.mxu0 0.0
        %3407 = vmatpush.msra.mxu0 0.0
        %3408 = vmatpush.msra.mxu0 0.0
        %3409 = vmatpush.msra.mxu0 %v3285
        %3410 = vmatmul.f32.gmra.mxu0 %v3392
        %v3411 = vpop.f32.mrf.mxu0
        %v3412 = vadd.f32 %v3329, %v3411
        %3413 = vdwg.mxu0
        %3414 = vmatpush.msra.mxu0 0.0
        %3415 = vmatpush.msra.mxu0 0.0
        %3416 = vmatpush.msra.mxu0 0.0
        %3417 = vmatpush.msra.mxu0 0.0
        %3418 = vmatpush.msra.mxu0 0.0
        %3419 = vmatpush.msra.mxu0 0.0
        %3420 = vmatpush.msra.mxu0 0.0
        %3421 = vmatpush.msra.mxu0 0.0
        %3422 = vmatpush.msra.mxu0 0.0
        %3423 = vmatpush.msra.mxu0 0.0
        %3424 = vmatpush.msra.mxu0 0.0
        %3425 = vmatpush.msra.mxu0 0.0
        %3426 = vmatpush.msra.mxu0 0.0
        %3427 = vmatpush.msra.mxu0 0.0
        %3428 = vmatpush.msra.mxu0 0.0
        %3429 = vmatpush.msra.mxu0 %v3286
        %3430 = vmatmul.f32.gmra.mxu0 %v3392
        %v3431 = vpop.f32.mrf.mxu0
        %v3432 = vadd.f32 %v3349, %v3431
        %3433 = vdwg.mxu0
        %3434 = vmatpush.msra.mxu0 0.0
        %3435 = vmatpush.msra.mxu0 0.0
        %3436 = vmatpush.msra.mxu0 0.0
        %3437 = vmatpush.msra.mxu0 0.0
        %3438 = vmatpush.msra.mxu0 0.0
        %3439 = vmatpush.msra.mxu0 0.0
        %3440 = vmatpush.msra.mxu0 0.0
        %3441 = vmatpush.msra.mxu0 0.0
        %3442 = vmatpush.msra.mxu0 0.0
        %3443 = vmatpush.msra.mxu0 0.0
        %3444 = vmatpush.msra.mxu0 0.0
        %3445 = vmatpush.msra.mxu0 0.0
        %3446 = vmatpush.msra.mxu0 0.0
        %3447 = vmatpush.msra.mxu0 0.0
        %3448 = vmatpush.msra.mxu0 0.0
        %3449 = vmatpush.msra.mxu0 %v3287
        %3450 = vmatmul.f32.gmra.mxu0 %v3392
        %v3451 = vpop.f32.mrf.mxu0
        %v3452 = vadd.f32 %v3369, %v3451
        %3453 = vdwg.mxu0
        %3454 = vmatpush.msra.mxu0 0.0
        %3455 = vmatpush.msra.mxu0 0.0
        %3456 = vmatpush.msra.mxu0 0.0
        %3457 = vmatpush.msra.mxu0 0.0
        %3458 = vmatpush.msra.mxu0 0.0
        %3459 = vmatpush.msra.mxu0 0.0
        %3460 = vmatpush.msra.mxu0 0.0
        %3461 = vmatpush.msra.mxu0 0.0
        %3462 = vmatpush.msra.mxu0 0.0
        %3463 = vmatpush.msra.mxu0 0.0
        %3464 = vmatpush.msra.mxu0 0.0
        %3465 = vmatpush.msra.mxu0 0.0
        %3466 = vmatpush.msra.mxu0 0.0
        %3467 = vmatpush.msra.mxu0 0.0
        %3468 = vmatpush.msra.mxu0 0.0
        %3469 = vmatpush.msra.mxu0 %v3288
        %3470 = vmatmul.f32.gmra.mxu0 %v3392
        %v3471 = vpop.f32.mrf.mxu0
        %v3472 = vadd.f32 %v3389, %v3471
        %3473 = vdwg.mxu0
        %3474 = vrot.lane.b32.xlu0 %v3269, 71
        %v3475 = vpop.permute.xlu0 %3474
        %3476 = vrot.lane.b32.xlu0 %v3270, 71
        %v3477 = vpop.permute.xlu0 %3476
        %3478 = vrot.lane.b32.xlu0 %v3271, 71
        %v3479 = vpop.permute.xlu0 %3478
        %3480 = vrot.lane.b32.xlu0 %v3272, 71
        %v3481 = vpop.permute.xlu0 %3480
        %v3482 = vsel %vm521, %v3479, %v3481
        %v3483 = vsel %vm521, %v3477, %v3479
        %v3484 = vsel %vm521, %v3475, %v3477
        %v3485 = vsel %vm521, %v3481, %v3475
        %v3486 = vmul.f32 %v3485, %v527
        %v3487 = vmul.f32 %v3484, %v528
        %v3488 = vmul.f32 %v3483, %v529
        %v3489 = vmul.f32 %v3482, %v530
        %s3490 = scalar_lea.vmem %s2, 16
        %v3491 = vld [vmem:[%s3490] sm:$0xff]
        %v3493 = vsel %vm346, %v3491, 0
        %3495 = vmatpush.msra.mxu0 0.0
        %3496 = vmatpush.msra.mxu0 0.0
        %3497 = vmatpush.msra.mxu0 0.0
        %3498 = vmatpush.msra.mxu0 0.0
        %3499 = vmatpush.msra.mxu0 0.0
        %3500 = vmatpush.msra.mxu0 0.0
        %3501 = vmatpush.msra.mxu0 0.0
        %3502 = vmatpush.msra.mxu0 0.0
        %3503 = vmatpush.msra.mxu0 0.0
        %3504 = vmatpush.msra.mxu0 0.0
        %3505 = vmatpush.msra.mxu0 0.0
        %3506 = vmatpush.msra.mxu0 0.0
        %3507 = vmatpush.msra.mxu0 0.0
        %3508 = vmatpush.msra.mxu0 0.0
        %3509 = vmatpush.msra.mxu0 0.0
        %3510 = vmatpush.msra.mxu0 %v3486
        %3511 = vmatmul.f32.gmra.mxu0 %v3493
        %v3512 = vpop.f32.mrf.mxu0
        %v3513 = vadd.f32 0.0, %v3512
        %3514 = vdwg.mxu0
        %3515 = vmatpush.msra.mxu0 0.0
        %3516 = vmatpush.msra.mxu0 0.0
        %3517 = vmatpush.msra.mxu0 0.0
        %3518 = vmatpush.msra.mxu0 0.0
        %3519 = vmatpush.msra.mxu0 0.0
        %3520 = vmatpush.msra.mxu0 0.0
        %3521 = vmatpush.msra.mxu0 0.0
        %3522 = vmatpush.msra.mxu0 0.0
        %3523 = vmatpush.msra.mxu0 0.0
        %3524 = vmatpush.msra.mxu0 0.0
        %3525 = vmatpush.msra.mxu0 0.0
        %3526 = vmatpush.msra.mxu0 0.0
        %3527 = vmatpush.msra.mxu0 0.0
        %3528 = vmatpush.msra.mxu0 0.0
        %3529 = vmatpush.msra.mxu0 0.0
        %3530 = vmatpush.msra.mxu0 %v3487
        %3531 = vmatmul.f32.gmra.mxu0 %v3493
        %v3532 = vpop.f32.mrf.mxu0
        %v3533 = vadd.f32 0.0, %v3532
        %3534 = vdwg.mxu0
        %3535 = vmatpush.msra.mxu0 0.0
        %3536 = vmatpush.msra.mxu0 0.0
        %3537 = vmatpush.msra.mxu0 0.0
        %3538 = vmatpush.msra.mxu0 0.0
        %3539 = vmatpush.msra.mxu0 0.0
        %3540 = vmatpush.msra.mxu0 0.0
        %3541 = vmatpush.msra.mxu0 0.0
        %3542 = vmatpush.msra.mxu0 0.0
        %3543 = vmatpush.msra.mxu0 0.0
        %3544 = vmatpush.msra.mxu0 0.0
        %3545 = vmatpush.msra.mxu0 0.0
        %3546 = vmatpush.msra.mxu0 0.0
        %3547 = vmatpush.msra.mxu0 0.0
        %3548 = vmatpush.msra.mxu0 0.0
        %3549 = vmatpush.msra.mxu0 0.0
        %3550 = vmatpush.msra.mxu0 %v3488
        %3551 = vmatmul.f32.gmra.mxu0 %v3493
        %v3552 = vpop.f32.mrf.mxu0
        %v3553 = vadd.f32 0.0, %v3552
        %3554 = vdwg.mxu0
        %3555 = vmatpush.msra.mxu0 0.0
        %3556 = vmatpush.msra.mxu0 0.0
        %3557 = vmatpush.msra.mxu0 0.0
        %3558 = vmatpush.msra.mxu0 0.0
        %3559 = vmatpush.msra.mxu0 0.0
        %3560 = vmatpush.msra.mxu0 0.0
        %3561 = vmatpush.msra.mxu0 0.0
        %3562 = vmatpush.msra.mxu0 0.0
        %3563 = vmatpush.msra.mxu0 0.0
        %3564 = vmatpush.msra.mxu0 0.0
        %3565 = vmatpush.msra.mxu0 0.0
        %3566 = vmatpush.msra.mxu0 0.0
        %3567 = vmatpush.msra.mxu0 0.0
        %3568 = vmatpush.msra.mxu0 0.0
        %3569 = vmatpush.msra.mxu0 0.0
        %3570 = vmatpush.msra.mxu0 %v3489
        %3571 = vmatmul.f32.gmra.mxu0 %v3493
        %v3572 = vpop.f32.mrf.mxu0
        %v3573 = vadd.f32 0.0, %v3572
        %3574 = vdwg.mxu0
        %v3575 = vadd.f32 %v3412, %v3513
        %v3576 = vadd.f32 %v3432, %v3533
        %v3577 = vadd.f32 %v3452, %v3553
        %v3578 = vadd.f32 %v3472, %v3573
        %3579 = vrot.lane.b32.xlu0 %v3269, 65
        %v3580 = vpop.permute.xlu0 %3579
        %3581 = vrot.lane.b32.xlu0 %v3270, 65
        %v3582 = vpop.permute.xlu0 %3581
        %3583 = vrot.lane.b32.xlu0 %v3271, 65
        %v3584 = vpop.permute.xlu0 %3583
        %3585 = vrot.lane.b32.xlu0 %v3272, 65
        %v3586 = vpop.permute.xlu0 %3585
        %v3587 = vsel %vm632, %v3584, %v3586
        %v3588 = vsel %vm632, %v3582, %v3584
        %v3589 = vsel %vm632, %v3580, %v3582
        %v3590 = vsel %vm632, %v3586, %v3580
        %v3591 = vmul.f32 %v3590, %v638
        %v3592 = vmul.f32 %v3589, %v639
        %v3593 = vmul.f32 %v3588, %v640
        %v3594 = vmul.f32 %v3587, %v641
        %s3595 = scalar_lea.vmem %s2, 24
        %v3596 = vld [vmem:[%s3595] sm:$0xff]
        %v3598 = vsel %vm346, %v3596, 0
        %3600 = vmatpush.msra.mxu0 0.0
        %3601 = vmatpush.msra.mxu0 0.0
        %3602 = vmatpush.msra.mxu0 0.0
        %3603 = vmatpush.msra.mxu0 0.0
        %3604 = vmatpush.msra.mxu0 0.0
        %3605 = vmatpush.msra.mxu0 0.0
        %3606 = vmatpush.msra.mxu0 0.0
        %3607 = vmatpush.msra.mxu0 0.0
        %3608 = vmatpush.msra.mxu0 0.0
        %3609 = vmatpush.msra.mxu0 0.0
        %3610 = vmatpush.msra.mxu0 0.0
        %3611 = vmatpush.msra.mxu0 0.0
        %3612 = vmatpush.msra.mxu0 0.0
        %3613 = vmatpush.msra.mxu0 0.0
        %3614 = vmatpush.msra.mxu0 0.0
        %3615 = vmatpush.msra.mxu0 %v3591
        %3616 = vmatmul.f32.gmra.mxu0 %v3598
        %v3617 = vpop.f32.mrf.mxu0
        %v3618 = vadd.f32 0.0, %v3617
        %3619 = vdwg.mxu0
        %3620 = vmatpush.msra.mxu0 0.0
        %3621 = vmatpush.msra.mxu0 0.0
        %3622 = vmatpush.msra.mxu0 0.0
        %3623 = vmatpush.msra.mxu0 0.0
        %3624 = vmatpush.msra.mxu0 0.0
        %3625 = vmatpush.msra.mxu0 0.0
        %3626 = vmatpush.msra.mxu0 0.0
        %3627 = vmatpush.msra.mxu0 0.0
        %3628 = vmatpush.msra.mxu0 0.0
        %3629 = vmatpush.msra.mxu0 0.0
        %3630 = vmatpush.msra.mxu0 0.0
        %3631 = vmatpush.msra.mxu0 0.0
        %3632 = vmatpush.msra.mxu0 0.0
        %3633 = vmatpush.msra.mxu0 0.0
        %3634 = vmatpush.msra.mxu0 0.0
        %3635 = vmatpush.msra.mxu0 %v3592
        %3636 = vmatmul.f32.gmra.mxu0 %v3598
        %v3637 = vpop.f32.mrf.mxu0
        %v3638 = vadd.f32 0.0, %v3637
        %3639 = vdwg.mxu0
        %3640 = vmatpush.msra.mxu0 0.0
        %3641 = vmatpush.msra.mxu0 0.0
        %3642 = vmatpush.msra.mxu0 0.0
        %3643 = vmatpush.msra.mxu0 0.0
        %3644 = vmatpush.msra.mxu0 0.0
        %3645 = vmatpush.msra.mxu0 0.0
        %3646 = vmatpush.msra.mxu0 0.0
        %3647 = vmatpush.msra.mxu0 0.0
        %3648 = vmatpush.msra.mxu0 0.0
        %3649 = vmatpush.msra.mxu0 0.0
        %3650 = vmatpush.msra.mxu0 0.0
        %3651 = vmatpush.msra.mxu0 0.0
        %3652 = vmatpush.msra.mxu0 0.0
        %3653 = vmatpush.msra.mxu0 0.0
        %3654 = vmatpush.msra.mxu0 0.0
        %3655 = vmatpush.msra.mxu0 %v3593
        %3656 = vmatmul.f32.gmra.mxu0 %v3598
        %v3657 = vpop.f32.mrf.mxu0
        %v3658 = vadd.f32 0.0, %v3657
        %3659 = vdwg.mxu0
        %3660 = vmatpush.msra.mxu0 0.0
        %3661 = vmatpush.msra.mxu0 0.0
        %3662 = vmatpush.msra.mxu0 0.0
        %3663 = vmatpush.msra.mxu0 0.0
        %3664 = vmatpush.msra.mxu0 0.0
        %3665 = vmatpush.msra.mxu0 0.0
        %3666 = vmatpush.msra.mxu0 0.0
        %3667 = vmatpush.msra.mxu0 0.0
        %3668 = vmatpush.msra.mxu0 0.0
        %3669 = vmatpush.msra.mxu0 0.0
        %3670 = vmatpush.msra.mxu0 0.0
        %3671 = vmatpush.msra.mxu0 0.0
        %3672 = vmatpush.msra.mxu0 0.0
        %3673 = vmatpush.msra.mxu0 0.0
        %3674 = vmatpush.msra.mxu0 0.0
        %3675 = vmatpush.msra.mxu0 %v3594
        %3676 = vmatmul.f32.gmra.mxu0 %v3598
        %v3677 = vpop.f32.mrf.mxu0
        %v3678 = vadd.f32 0.0, %v3677
        %3679 = vdwg.mxu0
        %v3680 = vadd.f32 %v3575, %v3618
        %v3681 = vadd.f32 %v3576, %v3638
        %v3682 = vadd.f32 %v3577, %v3658
        %v3683 = vadd.f32 %v3578, %v3678
        %3684 = vrot.lane.b32.xlu0 %v3269, 64
        %v3685 = vpop.permute.xlu0 %3684
        %3686 = vrot.lane.b32.xlu0 %v3270, 64
        %v3687 = vpop.permute.xlu0 %3686
        %3688 = vrot.lane.b32.xlu0 %v3271, 64
        %v3689 = vpop.permute.xlu0 %3688
        %3690 = vrot.lane.b32.xlu0 %v3272, 64
        %v3691 = vpop.permute.xlu0 %3690
        %v3692 = vsel %vm743, %v3689, %v3691
        %v3693 = vsel %vm743, %v3687, %v3689
        %v3694 = vsel %vm743, %v3685, %v3687
        %v3695 = vsel %vm743, %v3691, %v3685
        %v3696 = vmul.f32 %v3695, %v749
        %v3697 = vmul.f32 %v3694, %v750
        %v3698 = vmul.f32 %v3693, %v751
        %v3699 = vmul.f32 %v3692, %v752
        %s3700 = scalar_lea.vmem %s2, 32
        %v3701 = vld [vmem:[%s3700] sm:$0xff]
        %v3703 = vsel %vm346, %v3701, 0
        %3705 = vmatpush.msra.mxu0 0.0
        %3706 = vmatpush.msra.mxu0 0.0
        %3707 = vmatpush.msra.mxu0 0.0
        %3708 = vmatpush.msra.mxu0 0.0
        %3709 = vmatpush.msra.mxu0 0.0
        %3710 = vmatpush.msra.mxu0 0.0
        %3711 = vmatpush.msra.mxu0 0.0
        %3712 = vmatpush.msra.mxu0 0.0
        %3713 = vmatpush.msra.mxu0 0.0
        %3714 = vmatpush.msra.mxu0 0.0
        %3715 = vmatpush.msra.mxu0 0.0
        %3716 = vmatpush.msra.mxu0 0.0
        %3717 = vmatpush.msra.mxu0 0.0
        %3718 = vmatpush.msra.mxu0 0.0
        %3719 = vmatpush.msra.mxu0 0.0
        %3720 = vmatpush.msra.mxu0 %v3696
        %3721 = vmatmul.f32.gmra.mxu0 %v3703
        %v3722 = vpop.f32.mrf.mxu0
        %v3723 = vadd.f32 0.0, %v3722
        %3724 = vdwg.mxu0
        %3725 = vmatpush.msra.mxu0 0.0
        %3726 = vmatpush.msra.mxu0 0.0
        %3727 = vmatpush.msra.mxu0 0.0
        %3728 = vmatpush.msra.mxu0 0.0
        %3729 = vmatpush.msra.mxu0 0.0
        %3730 = vmatpush.msra.mxu0 0.0
        %3731 = vmatpush.msra.mxu0 0.0
        %3732 = vmatpush.msra.mxu0 0.0
        %3733 = vmatpush.msra.mxu0 0.0
        %3734 = vmatpush.msra.mxu0 0.0
        %3735 = vmatpush.msra.mxu0 0.0
        %3736 = vmatpush.msra.mxu0 0.0
        %3737 = vmatpush.msra.mxu0 0.0
        %3738 = vmatpush.msra.mxu0 0.0
        %3739 = vmatpush.msra.mxu0 0.0
        %3740 = vmatpush.msra.mxu0 %v3697
        %3741 = vmatmul.f32.gmra.mxu0 %v3703
        %v3742 = vpop.f32.mrf.mxu0
        %v3743 = vadd.f32 0.0, %v3742
        %3744 = vdwg.mxu0
        %3745 = vmatpush.msra.mxu0 0.0
        %3746 = vmatpush.msra.mxu0 0.0
        %3747 = vmatpush.msra.mxu0 0.0
        %3748 = vmatpush.msra.mxu0 0.0
        %3749 = vmatpush.msra.mxu0 0.0
        %3750 = vmatpush.msra.mxu0 0.0
        %3751 = vmatpush.msra.mxu0 0.0
        %3752 = vmatpush.msra.mxu0 0.0
        %3753 = vmatpush.msra.mxu0 0.0
        %3754 = vmatpush.msra.mxu0 0.0
        %3755 = vmatpush.msra.mxu0 0.0
        %3756 = vmatpush.msra.mxu0 0.0
        %3757 = vmatpush.msra.mxu0 0.0
        %3758 = vmatpush.msra.mxu0 0.0
        %3759 = vmatpush.msra.mxu0 0.0
        %3760 = vmatpush.msra.mxu0 %v3698
        %3761 = vmatmul.f32.gmra.mxu0 %v3703
        %v3762 = vpop.f32.mrf.mxu0
        %v3763 = vadd.f32 0.0, %v3762
        %3764 = vdwg.mxu0
        %3765 = vmatpush.msra.mxu0 0.0
        %3766 = vmatpush.msra.mxu0 0.0
        %3767 = vmatpush.msra.mxu0 0.0
        %3768 = vmatpush.msra.mxu0 0.0
        %3769 = vmatpush.msra.mxu0 0.0
        %3770 = vmatpush.msra.mxu0 0.0
        %3771 = vmatpush.msra.mxu0 0.0
        %3772 = vmatpush.msra.mxu0 0.0
        %3773 = vmatpush.msra.mxu0 0.0
        %3774 = vmatpush.msra.mxu0 0.0
        %3775 = vmatpush.msra.mxu0 0.0
        %3776 = vmatpush.msra.mxu0 0.0
        %3777 = vmatpush.msra.mxu0 0.0
        %3778 = vmatpush.msra.mxu0 0.0
        %3779 = vmatpush.msra.mxu0 0.0
        %3780 = vmatpush.msra.mxu0 %v3699
        %3781 = vmatmul.f32.gmra.mxu0 %v3703
        %v3782 = vpop.f32.mrf.mxu0
        %v3783 = vadd.f32 0.0, %v3782
        %3784 = vdwg.mxu0
        %v3785 = vadd.f32 %v3680, %v3723
        %v3786 = vadd.f32 %v3681, %v3743
        %v3787 = vadd.f32 %v3682, %v3763
        %v3788 = vadd.f32 %v3683, %v3783
        %3789 = vrot.lane.b32.xlu0 %v3269, 63
        %v3790 = vpop.permute.xlu0 %3789
        %3791 = vrot.lane.b32.xlu0 %v3270, 63
        %v3792 = vpop.permute.xlu0 %3791
        %3793 = vrot.lane.b32.xlu0 %v3271, 63
        %v3794 = vpop.permute.xlu0 %3793
        %3795 = vrot.lane.b32.xlu0 %v3272, 63
        %v3796 = vpop.permute.xlu0 %3795
        %v3797 = vsel %vm854, %v3794, %v3796
        %v3798 = vsel %vm854, %v3792, %v3794
        %v3799 = vsel %vm854, %v3790, %v3792
        %v3800 = vsel %vm854, %v3796, %v3790
        %v3801 = vmul.f32 %v3800, %v860
        %v3802 = vmul.f32 %v3799, %v861
        %v3803 = vmul.f32 %v3798, %v862
        %v3804 = vmul.f32 %v3797, %v863
        %s3805 = scalar_lea.vmem %s2, 40
        %v3806 = vld [vmem:[%s3805] sm:$0xff]
        %v3808 = vsel %vm346, %v3806, 0
        %3810 = vmatpush.msra.mxu0 0.0
        %3811 = vmatpush.msra.mxu0 0.0
        %3812 = vmatpush.msra.mxu0 0.0
        %3813 = vmatpush.msra.mxu0 0.0
        %3814 = vmatpush.msra.mxu0 0.0
        %3815 = vmatpush.msra.mxu0 0.0
        %3816 = vmatpush.msra.mxu0 0.0
        %3817 = vmatpush.msra.mxu0 0.0
        %3818 = vmatpush.msra.mxu0 0.0
        %3819 = vmatpush.msra.mxu0 0.0
        %3820 = vmatpush.msra.mxu0 0.0
        %3821 = vmatpush.msra.mxu0 0.0
        %3822 = vmatpush.msra.mxu0 0.0
        %3823 = vmatpush.msra.mxu0 0.0
        %3824 = vmatpush.msra.mxu0 0.0
        %3825 = vmatpush.msra.mxu0 %v3801
        %3826 = vmatmul.f32.gmra.mxu0 %v3808
        %v3827 = vpop.f32.mrf.mxu0
        %v3828 = vadd.f32 0.0, %v3827
        %3829 = vdwg.mxu0
        %3830 = vmatpush.msra.mxu0 0.0
        %3831 = vmatpush.msra.mxu0 0.0
        %3832 = vmatpush.msra.mxu0 0.0
        %3833 = vmatpush.msra.mxu0 0.0
        %3834 = vmatpush.msra.mxu0 0.0
        %3835 = vmatpush.msra.mxu0 0.0
        %3836 = vmatpush.msra.mxu0 0.0
        %3837 = vmatpush.msra.mxu0 0.0
        %3838 = vmatpush.msra.mxu0 0.0
        %3839 = vmatpush.msra.mxu0 0.0
        %3840 = vmatpush.msra.mxu0 0.0
        %3841 = vmatpush.msra.mxu0 0.0
        %3842 = vmatpush.msra.mxu0 0.0
        %3843 = vmatpush.msra.mxu0 0.0
        %3844 = vmatpush.msra.mxu0 0.0
        %3845 = vmatpush.msra.mxu0 %v3802
        %3846 = vmatmul.f32.gmra.mxu0 %v3808
        %v3847 = vpop.f32.mrf.mxu0
        %v3848 = vadd.f32 0.0, %v3847
        %3849 = vdwg.mxu0
        %3850 = vmatpush.msra.mxu0 0.0
        %3851 = vmatpush.msra.mxu0 0.0
        %3852 = vmatpush.msra.mxu0 0.0
        %3853 = vmatpush.msra.mxu0 0.0
        %3854 = vmatpush.msra.mxu0 0.0
        %3855 = vmatpush.msra.mxu0 0.0
        %3856 = vmatpush.msra.mxu0 0.0
        %3857 = vmatpush.msra.mxu0 0.0
        %3858 = vmatpush.msra.mxu0 0.0
        %3859 = vmatpush.msra.mxu0 0.0
        %3860 = vmatpush.msra.mxu0 0.0
        %3861 = vmatpush.msra.mxu0 0.0
        %3862 = vmatpush.msra.mxu0 0.0
        %3863 = vmatpush.msra.mxu0 0.0
        %3864 = vmatpush.msra.mxu0 0.0
        %3865 = vmatpush.msra.mxu0 %v3803
        %3866 = vmatmul.f32.gmra.mxu0 %v3808
        %v3867 = vpop.f32.mrf.mxu0
        %v3868 = vadd.f32 0.0, %v3867
        %3869 = vdwg.mxu0
        %3870 = vmatpush.msra.mxu0 0.0
        %3871 = vmatpush.msra.mxu0 0.0
        %3872 = vmatpush.msra.mxu0 0.0
        %3873 = vmatpush.msra.mxu0 0.0
        %3874 = vmatpush.msra.mxu0 0.0
        %3875 = vmatpush.msra.mxu0 0.0
        %3876 = vmatpush.msra.mxu0 0.0
        %3877 = vmatpush.msra.mxu0 0.0
        %3878 = vmatpush.msra.mxu0 0.0
        %3879 = vmatpush.msra.mxu0 0.0
        %3880 = vmatpush.msra.mxu0 0.0
        %3881 = vmatpush.msra.mxu0 0.0
        %3882 = vmatpush.msra.mxu0 0.0
        %3883 = vmatpush.msra.mxu0 0.0
        %3884 = vmatpush.msra.mxu0 0.0
        %3885 = vmatpush.msra.mxu0 %v3804
        %3886 = vmatmul.f32.gmra.mxu0 %v3808
        %v3887 = vpop.f32.mrf.mxu0
        %v3888 = vadd.f32 0.0, %v3887
        %3889 = vdwg.mxu0
        %v3890 = vadd.f32 %v3785, %v3828
        %v3891 = vadd.f32 %v3786, %v3848
        %v3892 = vadd.f32 %v3787, %v3868
        %v3893 = vadd.f32 %v3788, %v3888
        %3894 = vrot.lane.b32.xlu0 %v3269, 57
        %v3895 = vpop.permute.xlu0 %3894
        %3896 = vrot.lane.b32.xlu0 %v3270, 57
        %v3897 = vpop.permute.xlu0 %3896
        %3898 = vrot.lane.b32.xlu0 %v3271, 57
        %v3899 = vpop.permute.xlu0 %3898
        %3900 = vrot.lane.b32.xlu0 %v3272, 57
        %v3901 = vpop.permute.xlu0 %3900
        %v3902 = vsel %vm965, %v3899, %v3901
        %v3903 = vsel %vm965, %v3897, %v3899
        %v3904 = vsel %vm965, %v3895, %v3897
        %v3905 = vsel %vm965, %v3901, %v3895
        %v3906 = vmul.f32 %v3905, %v971
        %v3907 = vmul.f32 %v3904, %v972
        %v3908 = vmul.f32 %v3903, %v973
        %v3909 = vmul.f32 %v3902, %v974
        %s3910 = scalar_lea.vmem %s2, 48
        %v3911 = vld [vmem:[%s3910] sm:$0xff]
        %v3913 = vsel %vm346, %v3911, 0
        %3915 = vmatpush.msra.mxu0 0.0
        %3916 = vmatpush.msra.mxu0 0.0
        %3917 = vmatpush.msra.mxu0 0.0
        %3918 = vmatpush.msra.mxu0 0.0
        %3919 = vmatpush.msra.mxu0 0.0
        %3920 = vmatpush.msra.mxu0 0.0
        %3921 = vmatpush.msra.mxu0 0.0
        %3922 = vmatpush.msra.mxu0 0.0
        %3923 = vmatpush.msra.mxu0 0.0
        %3924 = vmatpush.msra.mxu0 0.0
        %3925 = vmatpush.msra.mxu0 0.0
        %3926 = vmatpush.msra.mxu0 0.0
        %3927 = vmatpush.msra.mxu0 0.0
        %3928 = vmatpush.msra.mxu0 0.0
        %3929 = vmatpush.msra.mxu0 0.0
        %3930 = vmatpush.msra.mxu0 %v3906
        %3931 = vmatmul.f32.gmra.mxu0 %v3913
        %v3932 = vpop.f32.mrf.mxu0
        %v3933 = vadd.f32 0.0, %v3932
        %3934 = vdwg.mxu0
        %3935 = vmatpush.msra.mxu0 0.0
        %3936 = vmatpush.msra.mxu0 0.0
        %3937 = vmatpush.msra.mxu0 0.0
        %3938 = vmatpush.msra.mxu0 0.0
        %3939 = vmatpush.msra.mxu0 0.0
        %3940 = vmatpush.msra.mxu0 0.0
        %3941 = vmatpush.msra.mxu0 0.0
        %3942 = vmatpush.msra.mxu0 0.0
        %3943 = vmatpush.msra.mxu0 0.0
        %3944 = vmatpush.msra.mxu0 0.0
        %3945 = vmatpush.msra.mxu0 0.0
        %3946 = vmatpush.msra.mxu0 0.0
        %3947 = vmatpush.msra.mxu0 0.0
        %3948 = vmatpush.msra.mxu0 0.0
        %3949 = vmatpush.msra.mxu0 0.0
        %3950 = vmatpush.msra.mxu0 %v3907
        %3951 = vmatmul.f32.gmra.mxu0 %v3913
        %v3952 = vpop.f32.mrf.mxu0
        %v3953 = vadd.f32 0.0, %v3952
        %3954 = vdwg.mxu0
        %3955 = vmatpush.msra.mxu0 0.0
        %3956 = vmatpush.msra.mxu0 0.0
        %3957 = vmatpush.msra.mxu0 0.0
        %3958 = vmatpush.msra.mxu0 0.0
        %3959 = vmatpush.msra.mxu0 0.0
        %3960 = vmatpush.msra.mxu0 0.0
        %3961 = vmatpush.msra.mxu0 0.0
        %3962 = vmatpush.msra.mxu0 0.0
        %3963 = vmatpush.msra.mxu0 0.0
        %3964 = vmatpush.msra.mxu0 0.0
        %3965 = vmatpush.msra.mxu0 0.0
        %3966 = vmatpush.msra.mxu0 0.0
        %3967 = vmatpush.msra.mxu0 0.0
        %3968 = vmatpush.msra.mxu0 0.0
        %3969 = vmatpush.msra.mxu0 0.0
        %3970 = vmatpush.msra.mxu0 %v3908
        %3971 = vmatmul.f32.gmra.mxu0 %v3913
        %v3972 = vpop.f32.mrf.mxu0
        %v3973 = vadd.f32 0.0, %v3972
        %3974 = vdwg.mxu0
        %3975 = vmatpush.msra.mxu0 0.0
        %3976 = vmatpush.msra.mxu0 0.0
        %3977 = vmatpush.msra.mxu0 0.0
        %3978 = vmatpush.msra.mxu0 0.0
        %3979 = vmatpush.msra.mxu0 0.0
        %3980 = vmatpush.msra.mxu0 0.0
        %3981 = vmatpush.msra.mxu0 0.0
        %3982 = vmatpush.msra.mxu0 0.0
        %3983 = vmatpush.msra.mxu0 0.0
        %3984 = vmatpush.msra.mxu0 0.0
        %3985 = vmatpush.msra.mxu0 0.0
        %3986 = vmatpush.msra.mxu0 0.0
        %3987 = vmatpush.msra.mxu0 0.0
        %3988 = vmatpush.msra.mxu0 0.0
        %3989 = vmatpush.msra.mxu0 0.0
        %3990 = vmatpush.msra.mxu0 %v3909
        %3991 = vmatmul.f32.gmra.mxu0 %v3913
        %v3992 = vpop.f32.mrf.mxu0
        %v3993 = vadd.f32 0.0, %v3992
        %3994 = vdwg.mxu0
        %v3995 = vadd.f32 %v3890, %v3933
        %v3996 = vadd.f32 %v3891, %v3953
        %v3997 = vadd.f32 %v3892, %v3973
        %v3998 = vadd.f32 %v3893, %v3993
        %3999 = vrot.lane.b32.xlu0 %v3269, 56
        %v4000 = vpop.permute.xlu0 %3999
        %4001 = vrot.lane.b32.xlu0 %v3270, 56
        %v4002 = vpop.permute.xlu0 %4001
        %4003 = vrot.lane.b32.xlu0 %v3271, 56
        %v4004 = vpop.permute.xlu0 %4003
        %4005 = vrot.lane.b32.xlu0 %v3272, 56
        %v4006 = vpop.permute.xlu0 %4005
        %v4007 = vsel %vm1076, %v4004, %v4006
        %v4008 = vsel %vm1076, %v4002, %v4004
        %v4009 = vsel %vm1076, %v4000, %v4002
        %v4010 = vsel %vm1076, %v4006, %v4000
        %v4011 = vmul.f32 %v4010, %v1082
        %v4012 = vmul.f32 %v4009, %v1083
        %v4013 = vmul.f32 %v4008, %v1084
        %v4014 = vmul.f32 %v4007, %v1085
        %s4015 = scalar_lea.vmem %s2, 56
        %v4016 = vld [vmem:[%s4015] sm:$0xff]
        %v4018 = vsel %vm346, %v4016, 0
        %4020 = vmatpush.msra.mxu0 0.0
        %4021 = vmatpush.msra.mxu0 0.0
        %4022 = vmatpush.msra.mxu0 0.0
        %4023 = vmatpush.msra.mxu0 0.0
        %4024 = vmatpush.msra.mxu0 0.0
        %4025 = vmatpush.msra.mxu0 0.0
        %4026 = vmatpush.msra.mxu0 0.0
        %4027 = vmatpush.msra.mxu0 0.0
        %4028 = vmatpush.msra.mxu0 0.0
        %4029 = vmatpush.msra.mxu0 0.0
        %4030 = vmatpush.msra.mxu0 0.0
        %4031 = vmatpush.msra.mxu0 0.0
        %4032 = vmatpush.msra.mxu0 0.0
        %4033 = vmatpush.msra.mxu0 0.0
        %4034 = vmatpush.msra.mxu0 0.0
        %4035 = vmatpush.msra.mxu0 %v4011
        %4036 = vmatmul.f32.gmra.mxu0 %v4018
        %v4037 = vpop.f32.mrf.mxu0
        %v4038 = vadd.f32 0.0, %v4037
        %4039 = vdwg.mxu0
        %4040 = vmatpush.msra.mxu0 0.0
        %4041 = vmatpush.msra.mxu0 0.0
        %4042 = vmatpush.msra.mxu0 0.0
        %4043 = vmatpush.msra.mxu0 0.0
        %4044 = vmatpush.msra.mxu0 0.0
        %4045 = vmatpush.msra.mxu0 0.0
        %4046 = vmatpush.msra.mxu0 0.0
        %4047 = vmatpush.msra.mxu0 0.0
        %4048 = vmatpush.msra.mxu0 0.0
        %4049 = vmatpush.msra.mxu0 0.0
        %4050 = vmatpush.msra.mxu0 0.0
        %4051 = vmatpush.msra.mxu0 0.0
        %4052 = vmatpush.msra.mxu0 0.0
        %4053 = vmatpush.msra.mxu0 0.0
        %4054 = vmatpush.msra.mxu0 0.0
        %4055 = vmatpush.msra.mxu0 %v4012
        %4056 = vmatmul.f32.gmra.mxu0 %v4018
        %v4057 = vpop.f32.mrf.mxu0
        %v4058 = vadd.f32 0.0, %v4057
        %4059 = vdwg.mxu0
        %4060 = vmatpush.msra.mxu0 0.0
        %4061 = vmatpush.msra.mxu0 0.0
        %4062 = vmatpush.msra.mxu0 0.0
        %4063 = vmatpush.msra.mxu0 0.0
        %4064 = vmatpush.msra.mxu0 0.0
        %4065 = vmatpush.msra.mxu0 0.0
        %4066 = vmatpush.msra.mxu0 0.0
        %4067 = vmatpush.msra.mxu0 0.0
        %4068 = vmatpush.msra.mxu0 0.0
        %4069 = vmatpush.msra.mxu0 0.0
        %4070 = vmatpush.msra.mxu0 0.0
        %4071 = vmatpush.msra.mxu0 0.0
        %4072 = vmatpush.msra.mxu0 0.0
        %4073 = vmatpush.msra.mxu0 0.0
        %4074 = vmatpush.msra.mxu0 0.0
        %4075 = vmatpush.msra.mxu0 %v4013
        %4076 = vmatmul.f32.gmra.mxu0 %v4018
        %v4077 = vpop.f32.mrf.mxu0
        %v4078 = vadd.f32 0.0, %v4077
        %4079 = vdwg.mxu0
        %4080 = vmatpush.msra.mxu0 0.0
        %4081 = vmatpush.msra.mxu0 0.0
        %4082 = vmatpush.msra.mxu0 0.0
        %4083 = vmatpush.msra.mxu0 0.0
        %4084 = vmatpush.msra.mxu0 0.0
        %4085 = vmatpush.msra.mxu0 0.0
        %4086 = vmatpush.msra.mxu0 0.0
        %4087 = vmatpush.msra.mxu0 0.0
        %4088 = vmatpush.msra.mxu0 0.0
        %4089 = vmatpush.msra.mxu0 0.0
        %4090 = vmatpush.msra.mxu0 0.0
        %4091 = vmatpush.msra.mxu0 0.0
        %4092 = vmatpush.msra.mxu0 0.0
        %4093 = vmatpush.msra.mxu0 0.0
        %4094 = vmatpush.msra.mxu0 0.0
        %4095 = vmatpush.msra.mxu0 %v4014
        %4096 = vmatmul.f32.gmra.mxu0 %v4018
        %v4097 = vpop.f32.mrf.mxu0
        %v4098 = vadd.f32 0.0, %v4097
        %4099 = vdwg.mxu0
        %v4100 = vadd.f32 %v3995, %v4038
        %v4101 = vadd.f32 %v3996, %v4058
        %v4102 = vadd.f32 %v3997, %v4078
        %v4103 = vadd.f32 %v3998, %v4098
        %4104 = vrot.lane.b32.xlu0 %v3269, 55
        %v4105 = vpop.permute.xlu0 %4104
        %4106 = vrot.lane.b32.xlu0 %v3270, 55
        %v4107 = vpop.permute.xlu0 %4106
        %4108 = vrot.lane.b32.xlu0 %v3271, 55
        %v4109 = vpop.permute.xlu0 %4108
        %4110 = vrot.lane.b32.xlu0 %v3272, 55
        %v4111 = vpop.permute.xlu0 %4110
        %v4112 = vsel %vm1187, %v4109, %v4111
        %v4113 = vsel %vm1187, %v4107, %v4109
        %v4114 = vsel %vm1187, %v4105, %v4107
        %v4115 = vsel %vm1187, %v4111, %v4105
        %v4116 = vmul.f32 %v4115, %v1193
        %v4117 = vmul.f32 %v4114, %v1194
        %v4118 = vmul.f32 %v4113, %v1195
        %v4119 = vmul.f32 %v4112, %v1196
        %s4120 = scalar_lea.vmem %s2, 64
        %v4121 = vld [vmem:[%s4120] sm:$0xff]
        %v4123 = vsel %vm346, %v4121, 0
        %4125 = vmatpush.msra.mxu0 0.0
        %4126 = vmatpush.msra.mxu0 0.0
        %4127 = vmatpush.msra.mxu0 0.0
        %4128 = vmatpush.msra.mxu0 0.0
        %4129 = vmatpush.msra.mxu0 0.0
        %4130 = vmatpush.msra.mxu0 0.0
        %4131 = vmatpush.msra.mxu0 0.0
        %4132 = vmatpush.msra.mxu0 0.0
        %4133 = vmatpush.msra.mxu0 0.0
        %4134 = vmatpush.msra.mxu0 0.0
        %4135 = vmatpush.msra.mxu0 0.0
        %4136 = vmatpush.msra.mxu0 0.0
        %4137 = vmatpush.msra.mxu0 0.0
        %4138 = vmatpush.msra.mxu0 0.0
        %4139 = vmatpush.msra.mxu0 0.0
        %4140 = vmatpush.msra.mxu0 %v4116
        %4141 = vmatmul.f32.gmra.mxu0 %v4123
        %v4142 = vpop.f32.mrf.mxu0
        %v4143 = vadd.f32 0.0, %v4142
        %4144 = vdwg.mxu0
        %4145 = vmatpush.msra.mxu0 0.0
        %4146 = vmatpush.msra.mxu0 0.0
        %4147 = vmatpush.msra.mxu0 0.0
        %4148 = vmatpush.msra.mxu0 0.0
        %4149 = vmatpush.msra.mxu0 0.0
        %4150 = vmatpush.msra.mxu0 0.0
        %4151 = vmatpush.msra.mxu0 0.0
        %4152 = vmatpush.msra.mxu0 0.0
        %4153 = vmatpush.msra.mxu0 0.0
        %4154 = vmatpush.msra.mxu0 0.0
        %4155 = vmatpush.msra.mxu0 0.0
        %4156 = vmatpush.msra.mxu0 0.0
        %4157 = vmatpush.msra.mxu0 0.0
        %4158 = vmatpush.msra.mxu0 0.0
        %4159 = vmatpush.msra.mxu0 0.0
        %4160 = vmatpush.msra.mxu0 %v4117
        %4161 = vmatmul.f32.gmra.mxu0 %v4123
        %v4162 = vpop.f32.mrf.mxu0
        %v4163 = vadd.f32 0.0, %v4162
        %4164 = vdwg.mxu0
        %4165 = vmatpush.msra.mxu0 0.0
        %4166 = vmatpush.msra.mxu0 0.0
        %4167 = vmatpush.msra.mxu0 0.0
        %4168 = vmatpush.msra.mxu0 0.0
        %4169 = vmatpush.msra.mxu0 0.0
        %4170 = vmatpush.msra.mxu0 0.0
        %4171 = vmatpush.msra.mxu0 0.0
        %4172 = vmatpush.msra.mxu0 0.0
        %4173 = vmatpush.msra.mxu0 0.0
        %4174 = vmatpush.msra.mxu0 0.0
        %4175 = vmatpush.msra.mxu0 0.0
        %4176 = vmatpush.msra.mxu0 0.0
        %4177 = vmatpush.msra.mxu0 0.0
        %4178 = vmatpush.msra.mxu0 0.0
        %4179 = vmatpush.msra.mxu0 0.0
        %4180 = vmatpush.msra.mxu0 %v4118
        %4181 = vmatmul.f32.gmra.mxu0 %v4123
        %v4182 = vpop.f32.mrf.mxu0
        %v4183 = vadd.f32 0.0, %v4182
        %4184 = vdwg.mxu0
        %4185 = vmatpush.msra.mxu0 0.0
        %4186 = vmatpush.msra.mxu0 0.0
        %4187 = vmatpush.msra.mxu0 0.0
        %4188 = vmatpush.msra.mxu0 0.0
        %4189 = vmatpush.msra.mxu0 0.0
        %4190 = vmatpush.msra.mxu0 0.0
        %4191 = vmatpush.msra.mxu0 0.0
        %4192 = vmatpush.msra.mxu0 0.0
        %4193 = vmatpush.msra.mxu0 0.0
        %4194 = vmatpush.msra.mxu0 0.0
        %4195 = vmatpush.msra.mxu0 0.0
        %4196 = vmatpush.msra.mxu0 0.0
        %4197 = vmatpush.msra.mxu0 0.0
        %4198 = vmatpush.msra.mxu0 0.0
        %4199 = vmatpush.msra.mxu0 0.0
        %4200 = vmatpush.msra.mxu0 %v4119
        %4201 = vmatmul.f32.gmra.mxu0 %v4123
        %v4202 = vpop.f32.mrf.mxu0
        %v4203 = vadd.f32 0.0, %v4202
        %4204 = vdwg.mxu0
        %v4205 = vadd.f32 %v4100, %v4143
        %v4206 = vadd.f32 %v4101, %v4163
        %v4207 = vadd.f32 %v4102, %v4183
        %v4208 = vadd.f32 %v4103, %v4203
        %4209 = vrot.lane.b32.xlu0 %v3269, 9
        %v4210 = vpop.permute.xlu0 %4209
        %4211 = vrot.lane.b32.xlu0 %v3270, 9
        %v4212 = vpop.permute.xlu0 %4211
        %4213 = vrot.lane.b32.xlu0 %v3271, 9
        %v4214 = vpop.permute.xlu0 %4213
        %4215 = vrot.lane.b32.xlu0 %v3272, 9
        %v4216 = vpop.permute.xlu0 %4215
        %v4217 = vsel %vm1298, %v4214, %v4216
        %v4218 = vsel %vm1298, %v4212, %v4214
        %v4219 = vsel %vm1298, %v4210, %v4212
        %v4220 = vsel %vm1298, %v4216, %v4210
        %v4221 = vmul.f32 %v4220, %v1304
        %v4222 = vmul.f32 %v4219, %v1305
        %v4223 = vmul.f32 %v4218, %v1306
        %v4224 = vmul.f32 %v4217, %v1307
        %s4225 = scalar_lea.vmem %s2, 72
        %v4226 = vld [vmem:[%s4225] sm:$0xff]
        %v4228 = vsel %vm346, %v4226, 0
        %4230 = vmatpush.msra.mxu0 0.0
        %4231 = vmatpush.msra.mxu0 0.0
        %4232 = vmatpush.msra.mxu0 0.0
        %4233 = vmatpush.msra.mxu0 0.0
        %4234 = vmatpush.msra.mxu0 0.0
        %4235 = vmatpush.msra.mxu0 0.0
        %4236 = vmatpush.msra.mxu0 0.0
        %4237 = vmatpush.msra.mxu0 0.0
        %4238 = vmatpush.msra.mxu0 0.0
        %4239 = vmatpush.msra.mxu0 0.0
        %4240 = vmatpush.msra.mxu0 0.0
        %4241 = vmatpush.msra.mxu0 0.0
        %4242 = vmatpush.msra.mxu0 0.0
        %4243 = vmatpush.msra.mxu0 0.0
        %4244 = vmatpush.msra.mxu0 0.0
        %4245 = vmatpush.msra.mxu0 %v4221
        %4246 = vmatmul.f32.gmra.mxu0 %v4228
        %v4247 = vpop.f32.mrf.mxu0
        %v4248 = vadd.f32 0.0, %v4247
        %4249 = vdwg.mxu0
        %4250 = vmatpush.msra.mxu0 0.0
        %4251 = vmatpush.msra.mxu0 0.0
        %4252 = vmatpush.msra.mxu0 0.0
        %4253 = vmatpush.msra.mxu0 0.0
        %4254 = vmatpush.msra.mxu0 0.0
        %4255 = vmatpush.msra.mxu0 0.0
        %4256 = vmatpush.msra.mxu0 0.0
        %4257 = vmatpush.msra.mxu0 0.0
        %4258 = vmatpush.msra.mxu0 0.0
        %4259 = vmatpush.msra.mxu0 0.0
        %4260 = vmatpush.msra.mxu0 0.0
        %4261 = vmatpush.msra.mxu0 0.0
        %4262 = vmatpush.msra.mxu0 0.0
        %4263 = vmatpush.msra.mxu0 0.0
        %4264 = vmatpush.msra.mxu0 0.0
        %4265 = vmatpush.msra.mxu0 %v4222
        %4266 = vmatmul.f32.gmra.mxu0 %v4228
        %v4267 = vpop.f32.mrf.mxu0
        %v4268 = vadd.f32 0.0, %v4267
        %4269 = vdwg.mxu0
        %4270 = vmatpush.msra.mxu0 0.0
        %4271 = vmatpush.msra.mxu0 0.0
        %4272 = vmatpush.msra.mxu0 0.0
        %4273 = vmatpush.msra.mxu0 0.0
        %4274 = vmatpush.msra.mxu0 0.0
        %4275 = vmatpush.msra.mxu0 0.0
        %4276 = vmatpush.msra.mxu0 0.0
        %4277 = vmatpush.msra.mxu0 0.0
        %4278 = vmatpush.msra.mxu0 0.0
        %4279 = vmatpush.msra.mxu0 0.0
        %4280 = vmatpush.msra.mxu0 0.0
        %4281 = vmatpush.msra.mxu0 0.0
        %4282 = vmatpush.msra.mxu0 0.0
        %4283 = vmatpush.msra.mxu0 0.0
        %4284 = vmatpush.msra.mxu0 0.0
        %4285 = vmatpush.msra.mxu0 %v4223
        %4286 = vmatmul.f32.gmra.mxu0 %v4228
        %v4287 = vpop.f32.mrf.mxu0
        %v4288 = vadd.f32 0.0, %v4287
        %4289 = vdwg.mxu0
        %4290 = vmatpush.msra.mxu0 0.0
        %4291 = vmatpush.msra.mxu0 0.0
        %4292 = vmatpush.msra.mxu0 0.0
        %4293 = vmatpush.msra.mxu0 0.0
        %4294 = vmatpush.msra.mxu0 0.0
        %4295 = vmatpush.msra.mxu0 0.0
        %4296 = vmatpush.msra.mxu0 0.0
        %4297 = vmatpush.msra.mxu0 0.0
        %4298 = vmatpush.msra.mxu0 0.0
        %4299 = vmatpush.msra.mxu0 0.0
        %4300 = vmatpush.msra.mxu0 0.0
        %4301 = vmatpush.msra.mxu0 0.0
        %4302 = vmatpush.msra.mxu0 0.0
        %4303 = vmatpush.msra.mxu0 0.0
        %4304 = vmatpush.msra.mxu0 0.0
        %4305 = vmatpush.msra.mxu0 %v4224
        %4306 = vmatmul.f32.gmra.mxu0 %v4228
        %v4307 = vpop.f32.mrf.mxu0
        %v4308 = vadd.f32 0.0, %v4307
        %4309 = vdwg.mxu0
        %v4310 = vadd.f32 %v4205, %v4248
        %v4311 = vadd.f32 %v4206, %v4268
        %v4312 = vadd.f32 %v4207, %v4288
        %v4313 = vadd.f32 %v4208, %v4308
        %4314 = vrot.lane.b32.xlu0 %v3269, 8
        %v4315 = vpop.permute.xlu0 %4314
        %4316 = vrot.lane.b32.xlu0 %v3270, 8
        %v4317 = vpop.permute.xlu0 %4316
        %4318 = vrot.lane.b32.xlu0 %v3271, 8
        %v4319 = vpop.permute.xlu0 %4318
        %4320 = vrot.lane.b32.xlu0 %v3272, 8
        %v4321 = vpop.permute.xlu0 %4320
        %v4322 = vsel %vm1409, %v4319, %v4321
        %v4323 = vsel %vm1409, %v4317, %v4319
        %v4324 = vsel %vm1409, %v4315, %v4317
        %v4325 = vsel %vm1409, %v4321, %v4315
        %v4326 = vmul.f32 %v4325, %v1415
        %v4327 = vmul.f32 %v4324, %v1416
        %v4328 = vmul.f32 %v4323, %v1417
        %v4329 = vmul.f32 %v4322, %v1418
        %s4330 = scalar_lea.vmem %s2, 80
        %v4331 = vld [vmem:[%s4330] sm:$0xff]
        %v4333 = vsel %vm346, %v4331, 0
        %4335 = vmatpush.msra.mxu0 0.0
        %4336 = vmatpush.msra.mxu0 0.0
        %4337 = vmatpush.msra.mxu0 0.0
        %4338 = vmatpush.msra.mxu0 0.0
        %4339 = vmatpush.msra.mxu0 0.0
        %4340 = vmatpush.msra.mxu0 0.0
        %4341 = vmatpush.msra.mxu0 0.0
        %4342 = vmatpush.msra.mxu0 0.0
        %4343 = vmatpush.msra.mxu0 0.0
        %4344 = vmatpush.msra.mxu0 0.0
        %4345 = vmatpush.msra.mxu0 0.0
        %4346 = vmatpush.msra.mxu0 0.0
        %4347 = vmatpush.msra.mxu0 0.0
        %4348 = vmatpush.msra.mxu0 0.0
        %4349 = vmatpush.msra.mxu0 0.0
        %4350 = vmatpush.msra.mxu0 %v4326
        %4351 = vmatmul.f32.gmra.mxu0 %v4333
        %v4352 = vpop.f32.mrf.mxu0
        %v4353 = vadd.f32 0.0, %v4352
        %4354 = vdwg.mxu0
        %4355 = vmatpush.msra.mxu0 0.0
        %4356 = vmatpush.msra.mxu0 0.0
        %4357 = vmatpush.msra.mxu0 0.0
        %4358 = vmatpush.msra.mxu0 0.0
        %4359 = vmatpush.msra.mxu0 0.0
        %4360 = vmatpush.msra.mxu0 0.0
        %4361 = vmatpush.msra.mxu0 0.0
        %4362 = vmatpush.msra.mxu0 0.0
        %4363 = vmatpush.msra.mxu0 0.0
        %4364 = vmatpush.msra.mxu0 0.0
        %4365 = vmatpush.msra.mxu0 0.0
        %4366 = vmatpush.msra.mxu0 0.0
        %4367 = vmatpush.msra.mxu0 0.0
        %4368 = vmatpush.msra.mxu0 0.0
        %4369 = vmatpush.msra.mxu0 0.0
        %4370 = vmatpush.msra.mxu0 %v4327
        %4371 = vmatmul.f32.gmra.mxu0 %v4333
        %v4372 = vpop.f32.mrf.mxu0
        %v4373 = vadd.f32 0.0, %v4372
        %4374 = vdwg.mxu0
        %4375 = vmatpush.msra.mxu0 0.0
        %4376 = vmatpush.msra.mxu0 0.0
        %4377 = vmatpush.msra.mxu0 0.0
        %4378 = vmatpush.msra.mxu0 0.0
        %4379 = vmatpush.msra.mxu0 0.0
        %4380 = vmatpush.msra.mxu0 0.0
        %4381 = vmatpush.msra.mxu0 0.0
        %4382 = vmatpush.msra.mxu0 0.0
        %4383 = vmatpush.msra.mxu0 0.0
        %4384 = vmatpush.msra.mxu0 0.0
        %4385 = vmatpush.msra.mxu0 0.0
        %4386 = vmatpush.msra.mxu0 0.0
        %4387 = vmatpush.msra.mxu0 0.0
        %4388 = vmatpush.msra.mxu0 0.0
        %4389 = vmatpush.msra.mxu0 0.0
        %4390 = vmatpush.msra.mxu0 %v4328
        %4391 = vmatmul.f32.gmra.mxu0 %v4333
        %v4392 = vpop.f32.mrf.mxu0
        %v4393 = vadd.f32 0.0, %v4392
        %4394 = vdwg.mxu0
        %4395 = vmatpush.msra.mxu0 0.0
        %4396 = vmatpush.msra.mxu0 0.0
        %4397 = vmatpush.msra.mxu0 0.0
        %4398 = vmatpush.msra.mxu0 0.0
        %4399 = vmatpush.msra.mxu0 0.0
        %4400 = vmatpush.msra.mxu0 0.0
        %4401 = vmatpush.msra.mxu0 0.0
        %4402 = vmatpush.msra.mxu0 0.0
        %4403 = vmatpush.msra.mxu0 0.0
        %4404 = vmatpush.msra.mxu0 0.0
        %4405 = vmatpush.msra.mxu0 0.0
        %4406 = vmatpush.msra.mxu0 0.0
        %4407 = vmatpush.msra.mxu0 0.0
        %4408 = vmatpush.msra.mxu0 0.0
        %4409 = vmatpush.msra.mxu0 0.0
        %4410 = vmatpush.msra.mxu0 %v4329
        %4411 = vmatmul.f32.gmra.mxu0 %v4333
        %v4412 = vpop.f32.mrf.mxu0
        %v4413 = vadd.f32 0.0, %v4412
        %4414 = vdwg.mxu0
        %v4415 = vadd.f32 %v4310, %v4353
        %v4416 = vadd.f32 %v4311, %v4373
        %v4417 = vadd.f32 %v4312, %v4393
        %v4418 = vadd.f32 %v4313, %v4413
        %4419 = vrot.lane.b32.xlu0 %v3269, 7
        %v4420 = vpop.permute.xlu0 %4419
        %4421 = vrot.lane.b32.xlu0 %v3270, 7
        %v4422 = vpop.permute.xlu0 %4421
        %4423 = vrot.lane.b32.xlu0 %v3271, 7
        %v4424 = vpop.permute.xlu0 %4423
        %4425 = vrot.lane.b32.xlu0 %v3272, 7
        %v4426 = vpop.permute.xlu0 %4425
        %v4427 = vsel %vm1520, %v4424, %v4426
        %v4428 = vsel %vm1520, %v4422, %v4424
        %v4429 = vsel %vm1520, %v4420, %v4422
        %v4430 = vsel %vm1520, %v4426, %v4420
        %v4431 = vmul.f32 %v4430, %v1526
        %v4432 = vmul.f32 %v4429, %v1527
        %v4433 = vmul.f32 %v4428, %v1528
        %v4434 = vmul.f32 %v4427, %v1529
        %s4435 = scalar_lea.vmem %s2, 88
        %v4436 = vld [vmem:[%s4435] sm:$0xff]
        %v4438 = vsel %vm346, %v4436, 0
        %4440 = vmatpush.msra.mxu0 0.0
        %4441 = vmatpush.msra.mxu0 0.0
        %4442 = vmatpush.msra.mxu0 0.0
        %4443 = vmatpush.msra.mxu0 0.0
        %4444 = vmatpush.msra.mxu0 0.0
        %4445 = vmatpush.msra.mxu0 0.0
        %4446 = vmatpush.msra.mxu0 0.0
        %4447 = vmatpush.msra.mxu0 0.0
        %4448 = vmatpush.msra.mxu0 0.0
        %4449 = vmatpush.msra.mxu0 0.0
        %4450 = vmatpush.msra.mxu0 0.0
        %4451 = vmatpush.msra.mxu0 0.0
        %4452 = vmatpush.msra.mxu0 0.0
        %4453 = vmatpush.msra.mxu0 0.0
        %4454 = vmatpush.msra.mxu0 0.0
        %4455 = vmatpush.msra.mxu0 %v4431
        %4456 = vmatmul.f32.gmra.mxu0 %v4438
        %v4457 = vpop.f32.mrf.mxu0
        %v4458 = vadd.f32 0.0, %v4457
        %4459 = vdwg.mxu0
        %4460 = vmatpush.msra.mxu0 0.0
        %4461 = vmatpush.msra.mxu0 0.0
        %4462 = vmatpush.msra.mxu0 0.0
        %4463 = vmatpush.msra.mxu0 0.0
        %4464 = vmatpush.msra.mxu0 0.0
        %4465 = vmatpush.msra.mxu0 0.0
        %4466 = vmatpush.msra.mxu0 0.0
        %4467 = vmatpush.msra.mxu0 0.0
        %4468 = vmatpush.msra.mxu0 0.0
        %4469 = vmatpush.msra.mxu0 0.0
        %4470 = vmatpush.msra.mxu0 0.0
        %4471 = vmatpush.msra.mxu0 0.0
        %4472 = vmatpush.msra.mxu0 0.0
        %4473 = vmatpush.msra.mxu0 0.0
        %4474 = vmatpush.msra.mxu0 0.0
        %4475 = vmatpush.msra.mxu0 %v4432
        %4476 = vmatmul.f32.gmra.mxu0 %v4438
        %v4477 = vpop.f32.mrf.mxu0
        %v4478 = vadd.f32 0.0, %v4477
        %4479 = vdwg.mxu0
        %4480 = vmatpush.msra.mxu0 0.0
        %4481 = vmatpush.msra.mxu0 0.0
        %4482 = vmatpush.msra.mxu0 0.0
        %4483 = vmatpush.msra.mxu0 0.0
        %4484 = vmatpush.msra.mxu0 0.0
        %4485 = vmatpush.msra.mxu0 0.0
        %4486 = vmatpush.msra.mxu0 0.0
        %4487 = vmatpush.msra.mxu0 0.0
        %4488 = vmatpush.msra.mxu0 0.0
        %4489 = vmatpush.msra.mxu0 0.0
        %4490 = vmatpush.msra.mxu0 0.0
        %4491 = vmatpush.msra.mxu0 0.0
        %4492 = vmatpush.msra.mxu0 0.0
        %4493 = vmatpush.msra.mxu0 0.0
        %4494 = vmatpush.msra.mxu0 0.0
        %4495 = vmatpush.msra.mxu0 %v4433
        %4496 = vmatmul.f32.gmra.mxu0 %v4438
        %v4497 = vpop.f32.mrf.mxu0
        %v4498 = vadd.f32 0.0, %v4497
        %4499 = vdwg.mxu0
        %4500 = vmatpush.msra.mxu0 0.0
        %4501 = vmatpush.msra.mxu0 0.0
        %4502 = vmatpush.msra.mxu0 0.0
        %4503 = vmatpush.msra.mxu0 0.0
        %4504 = vmatpush.msra.mxu0 0.0
        %4505 = vmatpush.msra.mxu0 0.0
        %4506 = vmatpush.msra.mxu0 0.0
        %4507 = vmatpush.msra.mxu0 0.0
        %4508 = vmatpush.msra.mxu0 0.0
        %4509 = vmatpush.msra.mxu0 0.0
        %4510 = vmatpush.msra.mxu0 0.0
        %4511 = vmatpush.msra.mxu0 0.0
        %4512 = vmatpush.msra.mxu0 0.0
        %4513 = vmatpush.msra.mxu0 0.0
        %4514 = vmatpush.msra.mxu0 0.0
        %4515 = vmatpush.msra.mxu0 %v4434
        %4516 = vmatmul.f32.gmra.mxu0 %v4438
        %v4517 = vpop.f32.mrf.mxu0
        %v4518 = vadd.f32 0.0, %v4517
        %4519 = vdwg.mxu0
        %v4520 = vadd.f32 %v4415, %v4458
        %v4521 = vadd.f32 %v4416, %v4478
        %v4522 = vadd.f32 %v4417, %v4498
        %v4523 = vadd.f32 %v4418, %v4518
        %4524 = vrot.lane.b32.xlu0 %v3269, 1
        %v4525 = vpop.permute.xlu0 %4524
        %4526 = vrot.lane.b32.xlu0 %v3270, 1
        %v4527 = vpop.permute.xlu0 %4526
        %4528 = vrot.lane.b32.xlu0 %v3271, 1
        %v4529 = vpop.permute.xlu0 %4528
        %4530 = vrot.lane.b32.xlu0 %v3272, 1
        %v4531 = vpop.permute.xlu0 %4530
        %v4532 = vsel %vm1631, %v4529, %v4531
        %v4533 = vsel %vm1631, %v4527, %v4529
        %v4534 = vsel %vm1631, %v4525, %v4527
        %v4535 = vsel %vm1631, %v4531, %v4525
        %v4536 = vmul.f32 %v4535, %v1637
        %v4537 = vmul.f32 %v4534, %v1638
        %v4538 = vmul.f32 %v4533, %v1639
        %v4539 = vmul.f32 %v4532, %v1640
        %s4540 = scalar_lea.vmem %s2, 96
        %v4541 = vld [vmem:[%s4540] sm:$0xff]
        %v4543 = vsel %vm346, %v4541, 0
        %4545 = vmatpush.msra.mxu0 0.0
        %4546 = vmatpush.msra.mxu0 0.0
        %4547 = vmatpush.msra.mxu0 0.0
        %4548 = vmatpush.msra.mxu0 0.0
        %4549 = vmatpush.msra.mxu0 0.0
        %4550 = vmatpush.msra.mxu0 0.0
        %4551 = vmatpush.msra.mxu0 0.0
        %4552 = vmatpush.msra.mxu0 0.0
        %4553 = vmatpush.msra.mxu0 0.0
        %4554 = vmatpush.msra.mxu0 0.0
        %4555 = vmatpush.msra.mxu0 0.0
        %4556 = vmatpush.msra.mxu0 0.0
        %4557 = vmatpush.msra.mxu0 0.0
        %4558 = vmatpush.msra.mxu0 0.0
        %4559 = vmatpush.msra.mxu0 0.0
        %4560 = vmatpush.msra.mxu0 %v4536
        %4561 = vmatmul.f32.gmra.mxu0 %v4543
        %v4562 = vpop.f32.mrf.mxu0
        %v4563 = vadd.f32 0.0, %v4562
        %4564 = vdwg.mxu0
        %4565 = vmatpush.msra.mxu0 0.0
        %4566 = vmatpush.msra.mxu0 0.0
        %4567 = vmatpush.msra.mxu0 0.0
        %4568 = vmatpush.msra.mxu0 0.0
        %4569 = vmatpush.msra.mxu0 0.0
        %4570 = vmatpush.msra.mxu0 0.0
        %4571 = vmatpush.msra.mxu0 0.0
        %4572 = vmatpush.msra.mxu0 0.0
        %4573 = vmatpush.msra.mxu0 0.0
        %4574 = vmatpush.msra.mxu0 0.0
        %4575 = vmatpush.msra.mxu0 0.0
        %4576 = vmatpush.msra.mxu0 0.0
        %4577 = vmatpush.msra.mxu0 0.0
        %4578 = vmatpush.msra.mxu0 0.0
        %4579 = vmatpush.msra.mxu0 0.0
        %4580 = vmatpush.msra.mxu0 %v4537
        %4581 = vmatmul.f32.gmra.mxu0 %v4543
        %v4582 = vpop.f32.mrf.mxu0
        %v4583 = vadd.f32 0.0, %v4582
        %4584 = vdwg.mxu0
        %4585 = vmatpush.msra.mxu0 0.0
        %4586 = vmatpush.msra.mxu0 0.0
        %4587 = vmatpush.msra.mxu0 0.0
        %4588 = vmatpush.msra.mxu0 0.0
        %4589 = vmatpush.msra.mxu0 0.0
        %4590 = vmatpush.msra.mxu0 0.0
        %4591 = vmatpush.msra.mxu0 0.0
        %4592 = vmatpush.msra.mxu0 0.0
        %4593 = vmatpush.msra.mxu0 0.0
        %4594 = vmatpush.msra.mxu0 0.0
        %4595 = vmatpush.msra.mxu0 0.0
        %4596 = vmatpush.msra.mxu0 0.0
        %4597 = vmatpush.msra.mxu0 0.0
        %4598 = vmatpush.msra.mxu0 0.0
        %4599 = vmatpush.msra.mxu0 0.0
        %4600 = vmatpush.msra.mxu0 %v4538
        %4601 = vmatmul.f32.gmra.mxu0 %v4543
        %v4602 = vpop.f32.mrf.mxu0
        %v4603 = vadd.f32 0.0, %v4602
        %4604 = vdwg.mxu0
        %4605 = vmatpush.msra.mxu0 0.0
        %4606 = vmatpush.msra.mxu0 0.0
        %4607 = vmatpush.msra.mxu0 0.0
        %4608 = vmatpush.msra.mxu0 0.0
        %4609 = vmatpush.msra.mxu0 0.0
        %4610 = vmatpush.msra.mxu0 0.0
        %4611 = vmatpush.msra.mxu0 0.0
        %4612 = vmatpush.msra.mxu0 0.0
        %4613 = vmatpush.msra.mxu0 0.0
        %4614 = vmatpush.msra.mxu0 0.0
        %4615 = vmatpush.msra.mxu0 0.0
        %4616 = vmatpush.msra.mxu0 0.0
        %4617 = vmatpush.msra.mxu0 0.0
        %4618 = vmatpush.msra.mxu0 0.0
        %4619 = vmatpush.msra.mxu0 0.0
        %4620 = vmatpush.msra.mxu0 %v4539
        %4621 = vmatmul.f32.gmra.mxu0 %v4543
        %v4622 = vpop.f32.mrf.mxu0
        %v4623 = vadd.f32 0.0, %v4622
        %4624 = vdwg.mxu0
        %v4625 = vadd.f32 %v4520, %v4563
        %v4626 = vadd.f32 %v4521, %v4583
        %v4627 = vadd.f32 %v4522, %v4603
        %v4628 = vadd.f32 %v4523, %v4623
        %v4629 = vmul.f32 %v3269, %v1735
        %v4630 = vmul.f32 %v3270, %v1736
        %v4631 = vmul.f32 %v3271, %v1737
        %v4632 = vmul.f32 %v3272, %v1738
        %s4633 = scalar_lea.vmem %s2, 104
        %v4634 = vld [vmem:[%s4633] sm:$0xff]
        %v4636 = vsel %vm346, %v4634, 0
        %4638 = vmatpush.msra.mxu0 0.0
        %4639 = vmatpush.msra.mxu0 0.0
        %4640 = vmatpush.msra.mxu0 0.0
        %4641 = vmatpush.msra.mxu0 0.0
        %4642 = vmatpush.msra.mxu0 0.0
        %4643 = vmatpush.msra.mxu0 0.0
        %4644 = vmatpush.msra.mxu0 0.0
        %4645 = vmatpush.msra.mxu0 0.0
        %4646 = vmatpush.msra.mxu0 0.0
        %4647 = vmatpush.msra.mxu0 0.0
        %4648 = vmatpush.msra.mxu0 0.0
        %4649 = vmatpush.msra.mxu0 0.0
        %4650 = vmatpush.msra.mxu0 0.0
        %4651 = vmatpush.msra.mxu0 0.0
        %4652 = vmatpush.msra.mxu0 0.0
        %4653 = vmatpush.msra.mxu0 %v4629
        %4654 = vmatmul.f32.gmra.mxu0 %v4636
        %v4655 = vpop.f32.mrf.mxu0
        %v4656 = vadd.f32 0.0, %v4655
        %4657 = vdwg.mxu0
        %4658 = vmatpush.msra.mxu0 0.0
        %4659 = vmatpush.msra.mxu0 0.0
        %4660 = vmatpush.msra.mxu0 0.0
        %4661 = vmatpush.msra.mxu0 0.0
        %4662 = vmatpush.msra.mxu0 0.0
        %4663 = vmatpush.msra.mxu0 0.0
        %4664 = vmatpush.msra.mxu0 0.0
        %4665 = vmatpush.msra.mxu0 0.0
        %4666 = vmatpush.msra.mxu0 0.0
        %4667 = vmatpush.msra.mxu0 0.0
        %4668 = vmatpush.msra.mxu0 0.0
        %4669 = vmatpush.msra.mxu0 0.0
        %4670 = vmatpush.msra.mxu0 0.0
        %4671 = vmatpush.msra.mxu0 0.0
        %4672 = vmatpush.msra.mxu0 0.0
        %4673 = vmatpush.msra.mxu0 %v4630
        %4674 = vmatmul.f32.gmra.mxu0 %v4636
        %v4675 = vpop.f32.mrf.mxu0
        %v4676 = vadd.f32 0.0, %v4675
        %4677 = vdwg.mxu0
        %4678 = vmatpush.msra.mxu0 0.0
        %4679 = vmatpush.msra.mxu0 0.0
        %4680 = vmatpush.msra.mxu0 0.0
        %4681 = vmatpush.msra.mxu0 0.0
        %4682 = vmatpush.msra.mxu0 0.0
        %4683 = vmatpush.msra.mxu0 0.0
        %4684 = vmatpush.msra.mxu0 0.0
        %4685 = vmatpush.msra.mxu0 0.0
        %4686 = vmatpush.msra.mxu0 0.0
        %4687 = vmatpush.msra.mxu0 0.0
        %4688 = vmatpush.msra.mxu0 0.0
        %4689 = vmatpush.msra.mxu0 0.0
        %4690 = vmatpush.msra.mxu0 0.0
        %4691 = vmatpush.msra.mxu0 0.0
        %4692 = vmatpush.msra.mxu0 0.0
        %4693 = vmatpush.msra.mxu0 %v4631
        %4694 = vmatmul.f32.gmra.mxu0 %v4636
        %v4695 = vpop.f32.mrf.mxu0
        %v4696 = vadd.f32 0.0, %v4695
        %4697 = vdwg.mxu0
        %4698 = vmatpush.msra.mxu0 0.0
        %4699 = vmatpush.msra.mxu0 0.0
        %4700 = vmatpush.msra.mxu0 0.0
        %4701 = vmatpush.msra.mxu0 0.0
        %4702 = vmatpush.msra.mxu0 0.0
        %4703 = vmatpush.msra.mxu0 0.0
        %4704 = vmatpush.msra.mxu0 0.0
        %4705 = vmatpush.msra.mxu0 0.0
        %4706 = vmatpush.msra.mxu0 0.0
        %4707 = vmatpush.msra.mxu0 0.0
        %4708 = vmatpush.msra.mxu0 0.0
        %4709 = vmatpush.msra.mxu0 0.0
        %4710 = vmatpush.msra.mxu0 0.0
        %4711 = vmatpush.msra.mxu0 0.0
        %4712 = vmatpush.msra.mxu0 0.0
        %4713 = vmatpush.msra.mxu0 %v4632
        %4714 = vmatmul.f32.gmra.mxu0 %v4636
        %v4715 = vpop.f32.mrf.mxu0
        %v4716 = vadd.f32 0.0, %v4715
        %4717 = vdwg.mxu0
        %v4718 = vadd.f32 %v4625, %v4656
        %v4719 = vadd.f32 %v4626, %v4676
        %v4720 = vadd.f32 %v4627, %v4696
        %v4721 = vadd.f32 %v4628, %v4716
        %4722 = vrot.lane.b32.xlu0 %v3269, 127
        %v4723 = vpop.permute.xlu0 %4722
        %4724 = vrot.lane.b32.xlu0 %v3270, 127
        %v4725 = vpop.permute.xlu0 %4724
        %4726 = vrot.lane.b32.xlu0 %v3271, 127
        %v4727 = vpop.permute.xlu0 %4726
        %4728 = vrot.lane.b32.xlu0 %v3272, 127
        %v4729 = vpop.permute.xlu0 %4728
        %v4730 = vsel %vm1840, %v4727, %v4729
        %v4731 = vsel %vm1840, %v4725, %v4727
        %v4732 = vsel %vm1840, %v4723, %v4725
        %v4733 = vsel %vm1840, %v4729, %v4723
        %v4734 = vmul.f32 %v4732, %v1846
        %v4735 = vmul.f32 %v4731, %v1847
        %v4736 = vmul.f32 %v4730, %v1848
        %v4737 = vmul.f32 %v4733, %v1849
        %s4738 = scalar_lea.vmem %s2, 112
        %v4739 = vld [vmem:[%s4738] sm:$0xff]
        %v4741 = vsel %vm346, %v4739, 0
        %4743 = vmatpush.msra.mxu0 0.0
        %4744 = vmatpush.msra.mxu0 0.0
        %4745 = vmatpush.msra.mxu0 0.0
        %4746 = vmatpush.msra.mxu0 0.0
        %4747 = vmatpush.msra.mxu0 0.0
        %4748 = vmatpush.msra.mxu0 0.0
        %4749 = vmatpush.msra.mxu0 0.0
        %4750 = vmatpush.msra.mxu0 0.0
        %4751 = vmatpush.msra.mxu0 0.0
        %4752 = vmatpush.msra.mxu0 0.0
        %4753 = vmatpush.msra.mxu0 0.0
        %4754 = vmatpush.msra.mxu0 0.0
        %4755 = vmatpush.msra.mxu0 0.0
        %4756 = vmatpush.msra.mxu0 0.0
        %4757 = vmatpush.msra.mxu0 0.0
        %4758 = vmatpush.msra.mxu0 %v4734
        %4759 = vmatmul.f32.gmra.mxu0 %v4741
        %v4760 = vpop.f32.mrf.mxu0
        %v4761 = vadd.f32 0.0, %v4760
        %4762 = vdwg.mxu0
        %4763 = vmatpush.msra.mxu0 0.0
        %4764 = vmatpush.msra.mxu0 0.0
        %4765 = vmatpush.msra.mxu0 0.0
        %4766 = vmatpush.msra.mxu0 0.0
        %4767 = vmatpush.msra.mxu0 0.0
        %4768 = vmatpush.msra.mxu0 0.0
        %4769 = vmatpush.msra.mxu0 0.0
        %4770 = vmatpush.msra.mxu0 0.0
        %4771 = vmatpush.msra.mxu0 0.0
        %4772 = vmatpush.msra.mxu0 0.0
        %4773 = vmatpush.msra.mxu0 0.0
        %4774 = vmatpush.msra.mxu0 0.0
        %4775 = vmatpush.msra.mxu0 0.0
        %4776 = vmatpush.msra.mxu0 0.0
        %4777 = vmatpush.msra.mxu0 0.0
        %4778 = vmatpush.msra.mxu0 %v4735
        %4779 = vmatmul.f32.gmra.mxu0 %v4741
        %v4780 = vpop.f32.mrf.mxu0
        %v4781 = vadd.f32 0.0, %v4780
        %4782 = vdwg.mxu0
        %4783 = vmatpush.msra.mxu0 0.0
        %4784 = vmatpush.msra.mxu0 0.0
        %4785 = vmatpush.msra.mxu0 0.0
        %4786 = vmatpush.msra.mxu0 0.0
        %4787 = vmatpush.msra.mxu0 0.0
        %4788 = vmatpush.msra.mxu0 0.0
        %4789 = vmatpush.msra.mxu0 0.0
        %4790 = vmatpush.msra.mxu0 0.0
        %4791 = vmatpush.msra.mxu0 0.0
        %4792 = vmatpush.msra.mxu0 0.0
        %4793 = vmatpush.msra.mxu0 0.0
        %4794 = vmatpush.msra.mxu0 0.0
        %4795 = vmatpush.msra.mxu0 0.0
        %4796 = vmatpush.msra.mxu0 0.0
        %4797 = vmatpush.msra.mxu0 0.0
        %4798 = vmatpush.msra.mxu0 %v4736
        %4799 = vmatmul.f32.gmra.mxu0 %v4741
        %v4800 = vpop.f32.mrf.mxu0
        %v4801 = vadd.f32 0.0, %v4800
        %4802 = vdwg.mxu0
        %4803 = vmatpush.msra.mxu0 0.0
        %4804 = vmatpush.msra.mxu0 0.0
        %4805 = vmatpush.msra.mxu0 0.0
        %4806 = vmatpush.msra.mxu0 0.0
        %4807 = vmatpush.msra.mxu0 0.0
        %4808 = vmatpush.msra.mxu0 0.0
        %4809 = vmatpush.msra.mxu0 0.0
        %4810 = vmatpush.msra.mxu0 0.0
        %4811 = vmatpush.msra.mxu0 0.0
        %4812 = vmatpush.msra.mxu0 0.0
        %4813 = vmatpush.msra.mxu0 0.0
        %4814 = vmatpush.msra.mxu0 0.0
        %4815 = vmatpush.msra.mxu0 0.0
        %4816 = vmatpush.msra.mxu0 0.0
        %4817 = vmatpush.msra.mxu0 0.0
        %4818 = vmatpush.msra.mxu0 %v4737
        %4819 = vmatmul.f32.gmra.mxu0 %v4741
        %v4820 = vpop.f32.mrf.mxu0
        %v4821 = vadd.f32 0.0, %v4820
        %4822 = vdwg.mxu0
        %v4823 = vadd.f32 %v4718, %v4761
        %v4824 = vadd.f32 %v4719, %v4781
        %v4825 = vadd.f32 %v4720, %v4801
        %v4826 = vadd.f32 %v4721, %v4821
        %4827 = vrot.lane.b32.xlu0 %v3269, 121
        %v4828 = vpop.permute.xlu0 %4827
        %4829 = vrot.lane.b32.xlu0 %v3270, 121
        %v4830 = vpop.permute.xlu0 %4829
        %4831 = vrot.lane.b32.xlu0 %v3271, 121
        %v4832 = vpop.permute.xlu0 %4831
        %4833 = vrot.lane.b32.xlu0 %v3272, 121
        %v4834 = vpop.permute.xlu0 %4833
        %v4835 = vsel %vm1951, %v4832, %v4834
        %v4836 = vsel %vm1951, %v4830, %v4832
        %v4837 = vsel %vm1951, %v4828, %v4830
        %v4838 = vsel %vm1951, %v4834, %v4828
        %v4839 = vmul.f32 %v4837, %v1957
        %v4840 = vmul.f32 %v4836, %v1958
        %v4841 = vmul.f32 %v4835, %v1959
        %v4842 = vmul.f32 %v4838, %v1960
        %s4843 = scalar_lea.vmem %s2, 120
        %v4844 = vld [vmem:[%s4843] sm:$0xff]
        %v4846 = vsel %vm346, %v4844, 0
        %4848 = vmatpush.msra.mxu0 0.0
        %4849 = vmatpush.msra.mxu0 0.0
        %4850 = vmatpush.msra.mxu0 0.0
        %4851 = vmatpush.msra.mxu0 0.0
        %4852 = vmatpush.msra.mxu0 0.0
        %4853 = vmatpush.msra.mxu0 0.0
        %4854 = vmatpush.msra.mxu0 0.0
        %4855 = vmatpush.msra.mxu0 0.0
        %4856 = vmatpush.msra.mxu0 0.0
        %4857 = vmatpush.msra.mxu0 0.0
        %4858 = vmatpush.msra.mxu0 0.0
        %4859 = vmatpush.msra.mxu0 0.0
        %4860 = vmatpush.msra.mxu0 0.0
        %4861 = vmatpush.msra.mxu0 0.0
        %4862 = vmatpush.msra.mxu0 0.0
        %4863 = vmatpush.msra.mxu0 %v4839
        %4864 = vmatmul.f32.gmra.mxu0 %v4846
        %v4865 = vpop.f32.mrf.mxu0
        %v4866 = vadd.f32 0.0, %v4865
        %4867 = vdwg.mxu0
        %4868 = vmatpush.msra.mxu0 0.0
        %4869 = vmatpush.msra.mxu0 0.0
        %4870 = vmatpush.msra.mxu0 0.0
        %4871 = vmatpush.msra.mxu0 0.0
        %4872 = vmatpush.msra.mxu0 0.0
        %4873 = vmatpush.msra.mxu0 0.0
        %4874 = vmatpush.msra.mxu0 0.0
        %4875 = vmatpush.msra.mxu0 0.0
        %4876 = vmatpush.msra.mxu0 0.0
        %4877 = vmatpush.msra.mxu0 0.0
        %4878 = vmatpush.msra.mxu0 0.0
        %4879 = vmatpush.msra.mxu0 0.0
        %4880 = vmatpush.msra.mxu0 0.0
        %4881 = vmatpush.msra.mxu0 0.0
        %4882 = vmatpush.msra.mxu0 0.0
        %4883 = vmatpush.msra.mxu0 %v4840
        %4884 = vmatmul.f32.gmra.mxu0 %v4846
        %v4885 = vpop.f32.mrf.mxu0
        %v4886 = vadd.f32 0.0, %v4885
        %4887 = vdwg.mxu0
        %4888 = vmatpush.msra.mxu0 0.0
        %4889 = vmatpush.msra.mxu0 0.0
        %4890 = vmatpush.msra.mxu0 0.0
        %4891 = vmatpush.msra.mxu0 0.0
        %4892 = vmatpush.msra.mxu0 0.0
        %4893 = vmatpush.msra.mxu0 0.0
        %4894 = vmatpush.msra.mxu0 0.0
        %4895 = vmatpush.msra.mxu0 0.0
        %4896 = vmatpush.msra.mxu0 0.0
        %4897 = vmatpush.msra.mxu0 0.0
        %4898 = vmatpush.msra.mxu0 0.0
        %4899 = vmatpush.msra.mxu0 0.0
        %4900 = vmatpush.msra.mxu0 0.0
        %4901 = vmatpush.msra.mxu0 0.0
        %4902 = vmatpush.msra.mxu0 0.0
        %4903 = vmatpush.msra.mxu0 %v4841
        %4904 = vmatmul.f32.gmra.mxu0 %v4846
        %v4905 = vpop.f32.mrf.mxu0
        %v4906 = vadd.f32 0.0, %v4905
        %4907 = vdwg.mxu0
        %4908 = vmatpush.msra.mxu0 0.0
        %4909 = vmatpush.msra.mxu0 0.0
        %4910 = vmatpush.msra.mxu0 0.0
        %4911 = vmatpush.msra.mxu0 0.0
        %4912 = vmatpush.msra.mxu0 0.0
        %4913 = vmatpush.msra.mxu0 0.0
        %4914 = vmatpush.msra.mxu0 0.0
        %4915 = vmatpush.msra.mxu0 0.0
        %4916 = vmatpush.msra.mxu0 0.0
        %4917 = vmatpush.msra.mxu0 0.0
        %4918 = vmatpush.msra.mxu0 0.0
        %4919 = vmatpush.msra.mxu0 0.0
        %4920 = vmatpush.msra.mxu0 0.0
        %4921 = vmatpush.msra.mxu0 0.0
        %4922 = vmatpush.msra.mxu0 0.0
        %4923 = vmatpush.msra.mxu0 %v4842
        %4924 = vmatmul.f32.gmra.mxu0 %v4846
        %v4925 = vpop.f32.mrf.mxu0
        %v4926 = vadd.f32 0.0, %v4925
        %4927 = vdwg.mxu0
        %v4928 = vadd.f32 %v4823, %v4866
        %v4929 = vadd.f32 %v4824, %v4886
        %v4930 = vadd.f32 %v4825, %v4906
        %v4931 = vadd.f32 %v4826, %v4926
        %4932 = vrot.lane.b32.xlu0 %v3269, 120
        %v4933 = vpop.permute.xlu0 %4932
        %4934 = vrot.lane.b32.xlu0 %v3270, 120
        %v4935 = vpop.permute.xlu0 %4934
        %4936 = vrot.lane.b32.xlu0 %v3271, 120
        %v4937 = vpop.permute.xlu0 %4936
        %4938 = vrot.lane.b32.xlu0 %v3272, 120
        %v4939 = vpop.permute.xlu0 %4938
        %v4940 = vsel %vm2062, %v4937, %v4939
        %v4941 = vsel %vm2062, %v4935, %v4937
        %v4942 = vsel %vm2062, %v4933, %v4935
        %v4943 = vsel %vm2062, %v4939, %v4933
        %v4944 = vmul.f32 %v4942, %v2068
        %v4945 = vmul.f32 %v4941, %v2069
        %v4946 = vmul.f32 %v4940, %v2070
        %v4947 = vmul.f32 %v4943, %v2071
        %s4948 = scalar_lea.vmem %s2, 128
        %v4949 = vld [vmem:[%s4948] sm:$0xff]
        %v4951 = vsel %vm346, %v4949, 0
        %4953 = vmatpush.msra.mxu0 0.0
        %4954 = vmatpush.msra.mxu0 0.0
        %4955 = vmatpush.msra.mxu0 0.0
        %4956 = vmatpush.msra.mxu0 0.0
        %4957 = vmatpush.msra.mxu0 0.0
        %4958 = vmatpush.msra.mxu0 0.0
        %4959 = vmatpush.msra.mxu0 0.0
        %4960 = vmatpush.msra.mxu0 0.0
        %4961 = vmatpush.msra.mxu0 0.0
        %4962 = vmatpush.msra.mxu0 0.0
        %4963 = vmatpush.msra.mxu0 0.0
        %4964 = vmatpush.msra.mxu0 0.0
        %4965 = vmatpush.msra.mxu0 0.0
        %4966 = vmatpush.msra.mxu0 0.0
        %4967 = vmatpush.msra.mxu0 0.0
        %4968 = vmatpush.msra.mxu0 %v4944
        %4969 = vmatmul.f32.gmra.mxu0 %v4951
        %v4970 = vpop.f32.mrf.mxu0
        %v4971 = vadd.f32 0.0, %v4970
        %4972 = vdwg.mxu0
        %4973 = vmatpush.msra.mxu0 0.0
        %4974 = vmatpush.msra.mxu0 0.0
        %4975 = vmatpush.msra.mxu0 0.0
        %4976 = vmatpush.msra.mxu0 0.0
        %4977 = vmatpush.msra.mxu0 0.0
        %4978 = vmatpush.msra.mxu0 0.0
        %4979 = vmatpush.msra.mxu0 0.0
        %4980 = vmatpush.msra.mxu0 0.0
        %4981 = vmatpush.msra.mxu0 0.0
        %4982 = vmatpush.msra.mxu0 0.0
        %4983 = vmatpush.msra.mxu0 0.0
        %4984 = vmatpush.msra.mxu0 0.0
        %4985 = vmatpush.msra.mxu0 0.0
        %4986 = vmatpush.msra.mxu0 0.0
        %4987 = vmatpush.msra.mxu0 0.0
        %4988 = vmatpush.msra.mxu0 %v4945
        %4989 = vmatmul.f32.gmra.mxu0 %v4951
        %v4990 = vpop.f32.mrf.mxu0
        %v4991 = vadd.f32 0.0, %v4990
        %4992 = vdwg.mxu0
        %4993 = vmatpush.msra.mxu0 0.0
        %4994 = vmatpush.msra.mxu0 0.0
        %4995 = vmatpush.msra.mxu0 0.0
        %4996 = vmatpush.msra.mxu0 0.0
        %4997 = vmatpush.msra.mxu0 0.0
        %4998 = vmatpush.msra.mxu0 0.0
        %4999 = vmatpush.msra.mxu0 0.0
        %5000 = vmatpush.msra.mxu0 0.0
        %5001 = vmatpush.msra.mxu0 0.0
        %5002 = vmatpush.msra.mxu0 0.0
        %5003 = vmatpush.msra.mxu0 0.0
        %5004 = vmatpush.msra.mxu0 0.0
        %5005 = vmatpush.msra.mxu0 0.0
        %5006 = vmatpush.msra.mxu0 0.0
        %5007 = vmatpush.msra.mxu0 0.0
        %5008 = vmatpush.msra.mxu0 %v4946
        %5009 = vmatmul.f32.gmra.mxu0 %v4951
        %v5010 = vpop.f32.mrf.mxu0
        %v5011 = vadd.f32 0.0, %v5010
        %5012 = vdwg.mxu0
        %5013 = vmatpush.msra.mxu0 0.0
        %5014 = vmatpush.msra.mxu0 0.0
        %5015 = vmatpush.msra.mxu0 0.0
        %5016 = vmatpush.msra.mxu0 0.0
        %5017 = vmatpush.msra.mxu0 0.0
        %5018 = vmatpush.msra.mxu0 0.0
        %5019 = vmatpush.msra.mxu0 0.0
        %5020 = vmatpush.msra.mxu0 0.0
        %5021 = vmatpush.msra.mxu0 0.0
        %5022 = vmatpush.msra.mxu0 0.0
        %5023 = vmatpush.msra.mxu0 0.0
        %5024 = vmatpush.msra.mxu0 0.0
        %5025 = vmatpush.msra.mxu0 0.0
        %5026 = vmatpush.msra.mxu0 0.0
        %5027 = vmatpush.msra.mxu0 0.0
        %5028 = vmatpush.msra.mxu0 %v4947
        %5029 = vmatmul.f32.gmra.mxu0 %v4951
        %v5030 = vpop.f32.mrf.mxu0
        %v5031 = vadd.f32 0.0, %v5030
        %5032 = vdwg.mxu0
        %v5033 = vadd.f32 %v4928, %v4971
        %v5034 = vadd.f32 %v4929, %v4991
        %v5035 = vadd.f32 %v4930, %v5011
        %v5036 = vadd.f32 %v4931, %v5031
        %5037 = vrot.lane.b32.xlu0 %v3269, 119
        %v5038 = vpop.permute.xlu0 %5037
        %5039 = vrot.lane.b32.xlu0 %v3270, 119
        %v5040 = vpop.permute.xlu0 %5039
        %5041 = vrot.lane.b32.xlu0 %v3271, 119
        %v5042 = vpop.permute.xlu0 %5041
        %5043 = vrot.lane.b32.xlu0 %v3272, 119
        %v5044 = vpop.permute.xlu0 %5043
        %v5045 = vsel %vm2173, %v5042, %v5044
        %v5046 = vsel %vm2173, %v5040, %v5042
        %v5047 = vsel %vm2173, %v5038, %v5040
        %v5048 = vsel %vm2173, %v5044, %v5038
        %v5049 = vmul.f32 %v5047, %v2179
        %v5050 = vmul.f32 %v5046, %v2180
        %v5051 = vmul.f32 %v5045, %v2181
        %v5052 = vmul.f32 %v5048, %v2182
        %s5053 = scalar_lea.vmem %s2, 136
        %v5054 = vld [vmem:[%s5053] sm:$0xff]
        %v5056 = vsel %vm346, %v5054, 0
        %5058 = vmatpush.msra.mxu0 0.0
        %5059 = vmatpush.msra.mxu0 0.0
        %5060 = vmatpush.msra.mxu0 0.0
        %5061 = vmatpush.msra.mxu0 0.0
        %5062 = vmatpush.msra.mxu0 0.0
        %5063 = vmatpush.msra.mxu0 0.0
        %5064 = vmatpush.msra.mxu0 0.0
        %5065 = vmatpush.msra.mxu0 0.0
        %5066 = vmatpush.msra.mxu0 0.0
        %5067 = vmatpush.msra.mxu0 0.0
        %5068 = vmatpush.msra.mxu0 0.0
        %5069 = vmatpush.msra.mxu0 0.0
        %5070 = vmatpush.msra.mxu0 0.0
        %5071 = vmatpush.msra.mxu0 0.0
        %5072 = vmatpush.msra.mxu0 0.0
        %5073 = vmatpush.msra.mxu0 %v5049
        %5074 = vmatmul.f32.gmra.mxu0 %v5056
        %v5075 = vpop.f32.mrf.mxu0
        %v5076 = vadd.f32 0.0, %v5075
        %5077 = vdwg.mxu0
        %5078 = vmatpush.msra.mxu0 0.0
        %5079 = vmatpush.msra.mxu0 0.0
        %5080 = vmatpush.msra.mxu0 0.0
        %5081 = vmatpush.msra.mxu0 0.0
        %5082 = vmatpush.msra.mxu0 0.0
        %5083 = vmatpush.msra.mxu0 0.0
        %5084 = vmatpush.msra.mxu0 0.0
        %5085 = vmatpush.msra.mxu0 0.0
        %5086 = vmatpush.msra.mxu0 0.0
        %5087 = vmatpush.msra.mxu0 0.0
        %5088 = vmatpush.msra.mxu0 0.0
        %5089 = vmatpush.msra.mxu0 0.0
        %5090 = vmatpush.msra.mxu0 0.0
        %5091 = vmatpush.msra.mxu0 0.0
        %5092 = vmatpush.msra.mxu0 0.0
        %5093 = vmatpush.msra.mxu0 %v5050
        %5094 = vmatmul.f32.gmra.mxu0 %v5056
        %v5095 = vpop.f32.mrf.mxu0
        %v5096 = vadd.f32 0.0, %v5095
        %5097 = vdwg.mxu0
        %5098 = vmatpush.msra.mxu0 0.0
        %5099 = vmatpush.msra.mxu0 0.0
        %5100 = vmatpush.msra.mxu0 0.0
        %5101 = vmatpush.msra.mxu0 0.0
        %5102 = vmatpush.msra.mxu0 0.0
        %5103 = vmatpush.msra.mxu0 0.0
        %5104 = vmatpush.msra.mxu0 0.0
        %5105 = vmatpush.msra.mxu0 0.0
        %5106 = vmatpush.msra.mxu0 0.0
        %5107 = vmatpush.msra.mxu0 0.0
        %5108 = vmatpush.msra.mxu0 0.0
        %5109 = vmatpush.msra.mxu0 0.0
        %5110 = vmatpush.msra.mxu0 0.0
        %5111 = vmatpush.msra.mxu0 0.0
        %5112 = vmatpush.msra.mxu0 0.0
        %5113 = vmatpush.msra.mxu0 %v5051
        %5114 = vmatmul.f32.gmra.mxu0 %v5056
        %v5115 = vpop.f32.mrf.mxu0
        %v5116 = vadd.f32 0.0, %v5115
        %5117 = vdwg.mxu0
        %5118 = vmatpush.msra.mxu0 0.0
        %5119 = vmatpush.msra.mxu0 0.0
        %5120 = vmatpush.msra.mxu0 0.0
        %5121 = vmatpush.msra.mxu0 0.0
        %5122 = vmatpush.msra.mxu0 0.0
        %5123 = vmatpush.msra.mxu0 0.0
        %5124 = vmatpush.msra.mxu0 0.0
        %5125 = vmatpush.msra.mxu0 0.0
        %5126 = vmatpush.msra.mxu0 0.0
        %5127 = vmatpush.msra.mxu0 0.0
        %5128 = vmatpush.msra.mxu0 0.0
        %5129 = vmatpush.msra.mxu0 0.0
        %5130 = vmatpush.msra.mxu0 0.0
        %5131 = vmatpush.msra.mxu0 0.0
        %5132 = vmatpush.msra.mxu0 0.0
        %5133 = vmatpush.msra.mxu0 %v5052
        %5134 = vmatmul.f32.gmra.mxu0 %v5056
        %v5135 = vpop.f32.mrf.mxu0
        %v5136 = vadd.f32 0.0, %v5135
        %5137 = vdwg.mxu0
        %v5138 = vadd.f32 %v5033, %v5076
        %v5139 = vadd.f32 %v5034, %v5096
        %v5140 = vadd.f32 %v5035, %v5116
        %v5141 = vadd.f32 %v5036, %v5136
        %v5142 = vmul.f32 %v3283, %v2277
        %v5143 = vmul.f32 %v3282, %v2278
        %v5144 = vmul.f32 %v3281, %v2279
        %v5145 = vmul.f32 %v3284, %v2280
        %s5146 = scalar_lea.vmem %s2, 144
        %v5147 = vld [vmem:[%s5146] sm:$0xff]
        %v5149 = vsel %vm346, %v5147, 0
        %5151 = vmatpush.msra.mxu0 0.0
        %5152 = vmatpush.msra.mxu0 0.0
        %5153 = vmatpush.msra.mxu0 0.0
        %5154 = vmatpush.msra.mxu0 0.0
        %5155 = vmatpush.msra.mxu0 0.0
        %5156 = vmatpush.msra.mxu0 0.0
        %5157 = vmatpush.msra.mxu0 0.0
        %5158 = vmatpush.msra.mxu0 0.0
        %5159 = vmatpush.msra.mxu0 0.0
        %5160 = vmatpush.msra.mxu0 0.0
        %5161 = vmatpush.msra.mxu0 0.0
        %5162 = vmatpush.msra.mxu0 0.0
        %5163 = vmatpush.msra.mxu0 0.0
        %5164 = vmatpush.msra.mxu0 0.0
        %5165 = vmatpush.msra.mxu0 0.0
        %5166 = vmatpush.msra.mxu0 %v5142
        %5167 = vmatmul.f32.gmra.mxu0 %v5149
        %v5168 = vpop.f32.mrf.mxu0
        %v5169 = vadd.f32 0.0, %v5168
        %5170 = vdwg.mxu0
        %5171 = vmatpush.msra.mxu0 0.0
        %5172 = vmatpush.msra.mxu0 0.0
        %5173 = vmatpush.msra.mxu0 0.0
        %5174 = vmatpush.msra.mxu0 0.0
        %5175 = vmatpush.msra.mxu0 0.0
        %5176 = vmatpush.msra.mxu0 0.0
        %5177 = vmatpush.msra.mxu0 0.0
        %5178 = vmatpush.msra.mxu0 0.0
        %5179 = vmatpush.msra.mxu0 0.0
        %5180 = vmatpush.msra.mxu0 0.0
        %5181 = vmatpush.msra.mxu0 0.0
        %5182 = vmatpush.msra.mxu0 0.0
        %5183 = vmatpush.msra.mxu0 0.0
        %5184 = vmatpush.msra.mxu0 0.0
        %5185 = vmatpush.msra.mxu0 0.0
        %5186 = vmatpush.msra.mxu0 %v5143
        %5187 = vmatmul.f32.gmra.mxu0 %v5149
        %v5188 = vpop.f32.mrf.mxu0
        %v5189 = vadd.f32 0.0, %v5188
        %5190 = vdwg.mxu0
        %5191 = vmatpush.msra.mxu0 0.0
        %5192 = vmatpush.msra.mxu0 0.0
        %5193 = vmatpush.msra.mxu0 0.0
        %5194 = vmatpush.msra.mxu0 0.0
        %5195 = vmatpush.msra.mxu0 0.0
        %5196 = vmatpush.msra.mxu0 0.0
        %5197 = vmatpush.msra.mxu0 0.0
        %5198 = vmatpush.msra.mxu0 0.0
        %5199 = vmatpush.msra.mxu0 0.0
        %5200 = vmatpush.msra.mxu0 0.0
        %5201 = vmatpush.msra.mxu0 0.0
        %5202 = vmatpush.msra.mxu0 0.0
        %5203 = vmatpush.msra.mxu0 0.0
        %5204 = vmatpush.msra.mxu0 0.0
        %5205 = vmatpush.msra.mxu0 0.0
        %5206 = vmatpush.msra.mxu0 %v5144
        %5207 = vmatmul.f32.gmra.mxu0 %v5149
        %v5208 = vpop.f32.mrf.mxu0
        %v5209 = vadd.f32 0.0, %v5208
        %5210 = vdwg.mxu0
        %5211 = vmatpush.msra.mxu0 0.0
        %5212 = vmatpush.msra.mxu0 0.0
        %5213 = vmatpush.msra.mxu0 0.0
        %5214 = vmatpush.msra.mxu0 0.0
        %5215 = vmatpush.msra.mxu0 0.0
        %5216 = vmatpush.msra.mxu0 0.0
        %5217 = vmatpush.msra.mxu0 0.0
        %5218 = vmatpush.msra.mxu0 0.0
        %5219 = vmatpush.msra.mxu0 0.0
        %5220 = vmatpush.msra.mxu0 0.0
        %5221 = vmatpush.msra.mxu0 0.0
        %5222 = vmatpush.msra.mxu0 0.0
        %5223 = vmatpush.msra.mxu0 0.0
        %5224 = vmatpush.msra.mxu0 0.0
        %5225 = vmatpush.msra.mxu0 0.0
        %5226 = vmatpush.msra.mxu0 %v5145
        %5227 = vmatmul.f32.gmra.mxu0 %v5149
        %v5228 = vpop.f32.mrf.mxu0
        %v5229 = vadd.f32 0.0, %v5228
        %5230 = vdwg.mxu0
        %v5231 = vadd.f32 %v5138, %v5169
        %v5232 = vadd.f32 %v5139, %v5189
        %v5233 = vadd.f32 %v5140, %v5209
        %v5234 = vadd.f32 %v5141, %v5229
        %v5235 = vmul.f32 %v3300, %v2375
        %v5236 = vmul.f32 %v3299, %v2376
        %v5237 = vmul.f32 %v3298, %v2377
        %v5238 = vmul.f32 %v3301, %v2378
        %s5239 = scalar_lea.vmem %s2, 152
        %v5240 = vld [vmem:[%s5239] sm:$0xff]
        %v5242 = vsel %vm346, %v5240, 0
        %5244 = vmatpush.msra.mxu0 0.0
        %5245 = vmatpush.msra.mxu0 0.0
        %5246 = vmatpush.msra.mxu0 0.0
        %5247 = vmatpush.msra.mxu0 0.0
        %5248 = vmatpush.msra.mxu0 0.0
        %5249 = vmatpush.msra.mxu0 0.0
        %5250 = vmatpush.msra.mxu0 0.0
        %5251 = vmatpush.msra.mxu0 0.0
        %5252 = vmatpush.msra.mxu0 0.0
        %5253 = vmatpush.msra.mxu0 0.0
        %5254 = vmatpush.msra.mxu0 0.0
        %5255 = vmatpush.msra.mxu0 0.0
        %5256 = vmatpush.msra.mxu0 0.0
        %5257 = vmatpush.msra.mxu0 0.0
        %5258 = vmatpush.msra.mxu0 0.0
        %5259 = vmatpush.msra.mxu0 %v5235
        %5260 = vmatmul.f32.gmra.mxu0 %v5242
        %v5261 = vpop.f32.mrf.mxu0
        %v5262 = vadd.f32 0.0, %v5261
        %5263 = vdwg.mxu0
        %5264 = vmatpush.msra.mxu0 0.0
        %5265 = vmatpush.msra.mxu0 0.0
        %5266 = vmatpush.msra.mxu0 0.0
        %5267 = vmatpush.msra.mxu0 0.0
        %5268 = vmatpush.msra.mxu0 0.0
        %5269 = vmatpush.msra.mxu0 0.0
        %5270 = vmatpush.msra.mxu0 0.0
        %5271 = vmatpush.msra.mxu0 0.0
        %5272 = vmatpush.msra.mxu0 0.0
        %5273 = vmatpush.msra.mxu0 0.0
        %5274 = vmatpush.msra.mxu0 0.0
        %5275 = vmatpush.msra.mxu0 0.0
        %5276 = vmatpush.msra.mxu0 0.0
        %5277 = vmatpush.msra.mxu0 0.0
        %5278 = vmatpush.msra.mxu0 0.0
        %5279 = vmatpush.msra.mxu0 %v5236
        %5280 = vmatmul.f32.gmra.mxu0 %v5242
        %v5281 = vpop.f32.mrf.mxu0
        %v5282 = vadd.f32 0.0, %v5281
        %5283 = vdwg.mxu0
        %5284 = vmatpush.msra.mxu0 0.0
        %5285 = vmatpush.msra.mxu0 0.0
        %5286 = vmatpush.msra.mxu0 0.0
        %5287 = vmatpush.msra.mxu0 0.0
        %5288 = vmatpush.msra.mxu0 0.0
        %5289 = vmatpush.msra.mxu0 0.0
        %5290 = vmatpush.msra.mxu0 0.0
        %5291 = vmatpush.msra.mxu0 0.0
        %5292 = vmatpush.msra.mxu0 0.0
        %5293 = vmatpush.msra.mxu0 0.0
        %5294 = vmatpush.msra.mxu0 0.0
        %5295 = vmatpush.msra.mxu0 0.0
        %5296 = vmatpush.msra.mxu0 0.0
        %5297 = vmatpush.msra.mxu0 0.0
        %5298 = vmatpush.msra.mxu0 0.0
        %5299 = vmatpush.msra.mxu0 %v5237
        %5300 = vmatmul.f32.gmra.mxu0 %v5242
        %v5301 = vpop.f32.mrf.mxu0
        %v5302 = vadd.f32 0.0, %v5301
        %5303 = vdwg.mxu0
        %5304 = vmatpush.msra.mxu0 0.0
        %5305 = vmatpush.msra.mxu0 0.0
        %5306 = vmatpush.msra.mxu0 0.0
        %5307 = vmatpush.msra.mxu0 0.0
        %5308 = vmatpush.msra.mxu0 0.0
        %5309 = vmatpush.msra.mxu0 0.0
        %5310 = vmatpush.msra.mxu0 0.0
        %5311 = vmatpush.msra.mxu0 0.0
        %5312 = vmatpush.msra.mxu0 0.0
        %5313 = vmatpush.msra.mxu0 0.0
        %5314 = vmatpush.msra.mxu0 0.0
        %5315 = vmatpush.msra.mxu0 0.0
        %5316 = vmatpush.msra.mxu0 0.0
        %5317 = vmatpush.msra.mxu0 0.0
        %5318 = vmatpush.msra.mxu0 0.0
        %5319 = vmatpush.msra.mxu0 %v5238
        %5320 = vmatmul.f32.gmra.mxu0 %v5242
        %v5321 = vpop.f32.mrf.mxu0
        %v5322 = vadd.f32 0.0, %v5321
        %5323 = vdwg.mxu0
        %v5324 = vadd.f32 %v5231, %v5262
        %v5325 = vadd.f32 %v5232, %v5282
        %v5326 = vadd.f32 %v5233, %v5302
        %v5327 = vadd.f32 %v5234, %v5322
        %v5328 = vmul.f32 %v3484, %v2473
        %v5329 = vmul.f32 %v3483, %v2474
        %v5330 = vmul.f32 %v3482, %v2475
        %v5331 = vmul.f32 %v3485, %v2476
        %s5332 = scalar_lea.vmem %s2, 160
        %v5333 = vld [vmem:[%s5332] sm:$0xff]
        %v5335 = vsel %vm346, %v5333, 0
        %5337 = vmatpush.msra.mxu0 0.0
        %5338 = vmatpush.msra.mxu0 0.0
        %5339 = vmatpush.msra.mxu0 0.0
        %5340 = vmatpush.msra.mxu0 0.0
        %5341 = vmatpush.msra.mxu0 0.0
        %5342 = vmatpush.msra.mxu0 0.0
        %5343 = vmatpush.msra.mxu0 0.0
        %5344 = vmatpush.msra.mxu0 0.0
        %5345 = vmatpush.msra.mxu0 0.0
        %5346 = vmatpush.msra.mxu0 0.0
        %5347 = vmatpush.msra.mxu0 0.0
        %5348 = vmatpush.msra.mxu0 0.0
        %5349 = vmatpush.msra.mxu0 0.0
        %5350 = vmatpush.msra.mxu0 0.0
        %5351 = vmatpush.msra.mxu0 0.0
        %5352 = vmatpush.msra.mxu0 %v5328
        %5353 = vmatmul.f32.gmra.mxu0 %v5335
        %v5354 = vpop.f32.mrf.mxu0
        %v5355 = vadd.f32 0.0, %v5354
        %5356 = vdwg.mxu0
        %5357 = vmatpush.msra.mxu0 0.0
        %5358 = vmatpush.msra.mxu0 0.0
        %5359 = vmatpush.msra.mxu0 0.0
        %5360 = vmatpush.msra.mxu0 0.0
        %5361 = vmatpush.msra.mxu0 0.0
        %5362 = vmatpush.msra.mxu0 0.0
        %5363 = vmatpush.msra.mxu0 0.0
        %5364 = vmatpush.msra.mxu0 0.0
        %5365 = vmatpush.msra.mxu0 0.0
        %5366 = vmatpush.msra.mxu0 0.0
        %5367 = vmatpush.msra.mxu0 0.0
        %5368 = vmatpush.msra.mxu0 0.0
        %5369 = vmatpush.msra.mxu0 0.0
        %5370 = vmatpush.msra.mxu0 0.0
        %5371 = vmatpush.msra.mxu0 0.0
        %5372 = vmatpush.msra.mxu0 %v5329
        %5373 = vmatmul.f32.gmra.mxu0 %v5335
        %v5374 = vpop.f32.mrf.mxu0
        %v5375 = vadd.f32 0.0, %v5374
        %5376 = vdwg.mxu0
        %5377 = vmatpush.msra.mxu0 0.0
        %5378 = vmatpush.msra.mxu0 0.0
        %5379 = vmatpush.msra.mxu0 0.0
        %5380 = vmatpush.msra.mxu0 0.0
        %5381 = vmatpush.msra.mxu0 0.0
        %5382 = vmatpush.msra.mxu0 0.0
        %5383 = vmatpush.msra.mxu0 0.0
        %5384 = vmatpush.msra.mxu0 0.0
        %5385 = vmatpush.msra.mxu0 0.0
        %5386 = vmatpush.msra.mxu0 0.0
        %5387 = vmatpush.msra.mxu0 0.0
        %5388 = vmatpush.msra.mxu0 0.0
        %5389 = vmatpush.msra.mxu0 0.0
        %5390 = vmatpush.msra.mxu0 0.0
        %5391 = vmatpush.msra.mxu0 0.0
        %5392 = vmatpush.msra.mxu0 %v5330
        %5393 = vmatmul.f32.gmra.mxu0 %v5335
        %v5394 = vpop.f32.mrf.mxu0
        %v5395 = vadd.f32 0.0, %v5394
        %5396 = vdwg.mxu0
        %5397 = vmatpush.msra.mxu0 0.0
        %5398 = vmatpush.msra.mxu0 0.0
        %5399 = vmatpush.msra.mxu0 0.0
        %5400 = vmatpush.msra.mxu0 0.0
        %5401 = vmatpush.msra.mxu0 0.0
        %5402 = vmatpush.msra.mxu0 0.0
        %5403 = vmatpush.msra.mxu0 0.0
        %5404 = vmatpush.msra.mxu0 0.0
        %5405 = vmatpush.msra.mxu0 0.0
        %5406 = vmatpush.msra.mxu0 0.0
        %5407 = vmatpush.msra.mxu0 0.0
        %5408 = vmatpush.msra.mxu0 0.0
        %5409 = vmatpush.msra.mxu0 0.0
        %5410 = vmatpush.msra.mxu0 0.0
        %5411 = vmatpush.msra.mxu0 0.0
        %5412 = vmatpush.msra.mxu0 %v5331
        %5413 = vmatmul.f32.gmra.mxu0 %v5335
        %v5414 = vpop.f32.mrf.mxu0
        %v5415 = vadd.f32 0.0, %v5414
        %5416 = vdwg.mxu0
        %v5417 = vadd.f32 %v5324, %v5355
        %v5418 = vadd.f32 %v5325, %v5375
        %v5419 = vadd.f32 %v5326, %v5395
        %v5420 = vadd.f32 %v5327, %v5415
        %v5421 = vmul.f32 %v3589, %v2571
        %v5422 = vmul.f32 %v3588, %v2572
        %v5423 = vmul.f32 %v3587, %v2573
        %v5424 = vmul.f32 %v3590, %v2574
        %s5425 = scalar_lea.vmem %s2, 168
        %v5426 = vld [vmem:[%s5425] sm:$0xff]
        %v5428 = vsel %vm346, %v5426, 0
        %5430 = vmatpush.msra.mxu0 0.0
        %5431 = vmatpush.msra.mxu0 0.0
        %5432 = vmatpush.msra.mxu0 0.0
        %5433 = vmatpush.msra.mxu0 0.0
        %5434 = vmatpush.msra.mxu0 0.0
        %5435 = vmatpush.msra.mxu0 0.0
        %5436 = vmatpush.msra.mxu0 0.0
        %5437 = vmatpush.msra.mxu0 0.0
        %5438 = vmatpush.msra.mxu0 0.0
        %5439 = vmatpush.msra.mxu0 0.0
        %5440 = vmatpush.msra.mxu0 0.0
        %5441 = vmatpush.msra.mxu0 0.0
        %5442 = vmatpush.msra.mxu0 0.0
        %5443 = vmatpush.msra.mxu0 0.0
        %5444 = vmatpush.msra.mxu0 0.0
        %5445 = vmatpush.msra.mxu0 %v5421
        %5446 = vmatmul.f32.gmra.mxu0 %v5428
        %v5447 = vpop.f32.mrf.mxu0
        %v5448 = vadd.f32 0.0, %v5447
        %5449 = vdwg.mxu0
        %5450 = vmatpush.msra.mxu0 0.0
        %5451 = vmatpush.msra.mxu0 0.0
        %5452 = vmatpush.msra.mxu0 0.0
        %5453 = vmatpush.msra.mxu0 0.0
        %5454 = vmatpush.msra.mxu0 0.0
        %5455 = vmatpush.msra.mxu0 0.0
        %5456 = vmatpush.msra.mxu0 0.0
        %5457 = vmatpush.msra.mxu0 0.0
        %5458 = vmatpush.msra.mxu0 0.0
        %5459 = vmatpush.msra.mxu0 0.0
        %5460 = vmatpush.msra.mxu0 0.0
        %5461 = vmatpush.msra.mxu0 0.0
        %5462 = vmatpush.msra.mxu0 0.0
        %5463 = vmatpush.msra.mxu0 0.0
        %5464 = vmatpush.msra.mxu0 0.0
        %5465 = vmatpush.msra.mxu0 %v5422
        %5466 = vmatmul.f32.gmra.mxu0 %v5428
        %v5467 = vpop.f32.mrf.mxu0
        %v5468 = vadd.f32 0.0, %v5467
        %5469 = vdwg.mxu0
        %5470 = vmatpush.msra.mxu0 0.0
        %5471 = vmatpush.msra.mxu0 0.0
        %5472 = vmatpush.msra.mxu0 0.0
        %5473 = vmatpush.msra.mxu0 0.0
        %5474 = vmatpush.msra.mxu0 0.0
        %5475 = vmatpush.msra.mxu0 0.0
        %5476 = vmatpush.msra.mxu0 0.0
        %5477 = vmatpush.msra.mxu0 0.0
        %5478 = vmatpush.msra.mxu0 0.0
        %5479 = vmatpush.msra.mxu0 0.0
        %5480 = vmatpush.msra.mxu0 0.0
        %5481 = vmatpush.msra.mxu0 0.0
        %5482 = vmatpush.msra.mxu0 0.0
        %5483 = vmatpush.msra.mxu0 0.0
        %5484 = vmatpush.msra.mxu0 0.0
        %5485 = vmatpush.msra.mxu0 %v5423
        %5486 = vmatmul.f32.gmra.mxu0 %v5428
        %v5487 = vpop.f32.mrf.mxu0
        %v5488 = vadd.f32 0.0, %v5487
        %5489 = vdwg.mxu0
        %5490 = vmatpush.msra.mxu0 0.0
        %5491 = vmatpush.msra.mxu0 0.0
        %5492 = vmatpush.msra.mxu0 0.0
        %5493 = vmatpush.msra.mxu0 0.0
        %5494 = vmatpush.msra.mxu0 0.0
        %5495 = vmatpush.msra.mxu0 0.0
        %5496 = vmatpush.msra.mxu0 0.0
        %5497 = vmatpush.msra.mxu0 0.0
        %5498 = vmatpush.msra.mxu0 0.0
        %5499 = vmatpush.msra.mxu0 0.0
        %5500 = vmatpush.msra.mxu0 0.0
        %5501 = vmatpush.msra.mxu0 0.0
        %5502 = vmatpush.msra.mxu0 0.0
        %5503 = vmatpush.msra.mxu0 0.0
        %5504 = vmatpush.msra.mxu0 0.0
        %5505 = vmatpush.msra.mxu0 %v5424
        %5506 = vmatmul.f32.gmra.mxu0 %v5428
        %v5507 = vpop.f32.mrf.mxu0
        %v5508 = vadd.f32 0.0, %v5507
        %5509 = vdwg.mxu0
        %v5510 = vadd.f32 %v5417, %v5448
        %v5511 = vadd.f32 %v5418, %v5468
        %v5512 = vadd.f32 %v5419, %v5488
        %v5513 = vadd.f32 %v5420, %v5508
        %v5514 = vmul.f32 %v3694, %v2669
        %v5515 = vmul.f32 %v3693, %v2670
        %v5516 = vmul.f32 %v3692, %v2671
        %v5517 = vmul.f32 %v3695, %v2672
        %s5518 = scalar_lea.vmem %s2, 176
        %v5519 = vld [vmem:[%s5518] sm:$0xff]
        %v5521 = vsel %vm346, %v5519, 0
        %5523 = vmatpush.msra.mxu0 0.0
        %5524 = vmatpush.msra.mxu0 0.0
        %5525 = vmatpush.msra.mxu0 0.0
        %5526 = vmatpush.msra.mxu0 0.0
        %5527 = vmatpush.msra.mxu0 0.0
        %5528 = vmatpush.msra.mxu0 0.0
        %5529 = vmatpush.msra.mxu0 0.0
        %5530 = vmatpush.msra.mxu0 0.0
        %5531 = vmatpush.msra.mxu0 0.0
        %5532 = vmatpush.msra.mxu0 0.0
        %5533 = vmatpush.msra.mxu0 0.0
        %5534 = vmatpush.msra.mxu0 0.0
        %5535 = vmatpush.msra.mxu0 0.0
        %5536 = vmatpush.msra.mxu0 0.0
        %5537 = vmatpush.msra.mxu0 0.0
        %5538 = vmatpush.msra.mxu0 %v5514
        %5539 = vmatmul.f32.gmra.mxu0 %v5521
        %v5540 = vpop.f32.mrf.mxu0
        %v5541 = vadd.f32 0.0, %v5540
        %5542 = vdwg.mxu0
        %5543 = vmatpush.msra.mxu0 0.0
        %5544 = vmatpush.msra.mxu0 0.0
        %5545 = vmatpush.msra.mxu0 0.0
        %5546 = vmatpush.msra.mxu0 0.0
        %5547 = vmatpush.msra.mxu0 0.0
        %5548 = vmatpush.msra.mxu0 0.0
        %5549 = vmatpush.msra.mxu0 0.0
        %5550 = vmatpush.msra.mxu0 0.0
        %5551 = vmatpush.msra.mxu0 0.0
        %5552 = vmatpush.msra.mxu0 0.0
        %5553 = vmatpush.msra.mxu0 0.0
        %5554 = vmatpush.msra.mxu0 0.0
        %5555 = vmatpush.msra.mxu0 0.0
        %5556 = vmatpush.msra.mxu0 0.0
        %5557 = vmatpush.msra.mxu0 0.0
        %5558 = vmatpush.msra.mxu0 %v5515
        %5559 = vmatmul.f32.gmra.mxu0 %v5521
        %v5560 = vpop.f32.mrf.mxu0
        %v5561 = vadd.f32 0.0, %v5560
        %5562 = vdwg.mxu0
        %5563 = vmatpush.msra.mxu0 0.0
        %5564 = vmatpush.msra.mxu0 0.0
        %5565 = vmatpush.msra.mxu0 0.0
        %5566 = vmatpush.msra.mxu0 0.0
        %5567 = vmatpush.msra.mxu0 0.0
        %5568 = vmatpush.msra.mxu0 0.0
        %5569 = vmatpush.msra.mxu0 0.0
        %5570 = vmatpush.msra.mxu0 0.0
        %5571 = vmatpush.msra.mxu0 0.0
        %5572 = vmatpush.msra.mxu0 0.0
        %5573 = vmatpush.msra.mxu0 0.0
        %5574 = vmatpush.msra.mxu0 0.0
        %5575 = vmatpush.msra.mxu0 0.0
        %5576 = vmatpush.msra.mxu0 0.0
        %5577 = vmatpush.msra.mxu0 0.0
        %5578 = vmatpush.msra.mxu0 %v5516
        %5579 = vmatmul.f32.gmra.mxu0 %v5521
        %v5580 = vpop.f32.mrf.mxu0
        %v5581 = vadd.f32 0.0, %v5580
        %5582 = vdwg.mxu0
        %5583 = vmatpush.msra.mxu0 0.0
        %5584 = vmatpush.msra.mxu0 0.0
        %5585 = vmatpush.msra.mxu0 0.0
        %5586 = vmatpush.msra.mxu0 0.0
        %5587 = vmatpush.msra.mxu0 0.0
        %5588 = vmatpush.msra.mxu0 0.0
        %5589 = vmatpush.msra.mxu0 0.0
        %5590 = vmatpush.msra.mxu0 0.0
        %5591 = vmatpush.msra.mxu0 0.0
        %5592 = vmatpush.msra.mxu0 0.0
        %5593 = vmatpush.msra.mxu0 0.0
        %5594 = vmatpush.msra.mxu0 0.0
        %5595 = vmatpush.msra.mxu0 0.0
        %5596 = vmatpush.msra.mxu0 0.0
        %5597 = vmatpush.msra.mxu0 0.0
        %5598 = vmatpush.msra.mxu0 %v5517
        %5599 = vmatmul.f32.gmra.mxu0 %v5521
        %v5600 = vpop.f32.mrf.mxu0
        %v5601 = vadd.f32 0.0, %v5600
        %5602 = vdwg.mxu0
        %v5603 = vadd.f32 %v5510, %v5541
        %v5604 = vadd.f32 %v5511, %v5561
        %v5605 = vadd.f32 %v5512, %v5581
        %v5606 = vadd.f32 %v5513, %v5601
        %v5607 = vmul.f32 %v3799, %v2767
        %v5608 = vmul.f32 %v3798, %v2768
        %v5609 = vmul.f32 %v3797, %v2769
        %v5610 = vmul.f32 %v3800, %v2770
        %s5611 = scalar_lea.vmem %s2, 184
        %v5612 = vld [vmem:[%s5611] sm:$0xff]
        %v5614 = vsel %vm346, %v5612, 0
        %5616 = vmatpush.msra.mxu0 0.0
        %5617 = vmatpush.msra.mxu0 0.0
        %5618 = vmatpush.msra.mxu0 0.0
        %5619 = vmatpush.msra.mxu0 0.0
        %5620 = vmatpush.msra.mxu0 0.0
        %5621 = vmatpush.msra.mxu0 0.0
        %5622 = vmatpush.msra.mxu0 0.0
        %5623 = vmatpush.msra.mxu0 0.0
        %5624 = vmatpush.msra.mxu0 0.0
        %5625 = vmatpush.msra.mxu0 0.0
        %5626 = vmatpush.msra.mxu0 0.0
        %5627 = vmatpush.msra.mxu0 0.0
        %5628 = vmatpush.msra.mxu0 0.0
        %5629 = vmatpush.msra.mxu0 0.0
        %5630 = vmatpush.msra.mxu0 0.0
        %5631 = vmatpush.msra.mxu0 %v5607
        %5632 = vmatmul.f32.gmra.mxu0 %v5614
        %v5633 = vpop.f32.mrf.mxu0
        %v5634 = vadd.f32 0.0, %v5633
        %5635 = vdwg.mxu0
        %5636 = vmatpush.msra.mxu0 0.0
        %5637 = vmatpush.msra.mxu0 0.0
        %5638 = vmatpush.msra.mxu0 0.0
        %5639 = vmatpush.msra.mxu0 0.0
        %5640 = vmatpush.msra.mxu0 0.0
        %5641 = vmatpush.msra.mxu0 0.0
        %5642 = vmatpush.msra.mxu0 0.0
        %5643 = vmatpush.msra.mxu0 0.0
        %5644 = vmatpush.msra.mxu0 0.0
        %5645 = vmatpush.msra.mxu0 0.0
        %5646 = vmatpush.msra.mxu0 0.0
        %5647 = vmatpush.msra.mxu0 0.0
        %5648 = vmatpush.msra.mxu0 0.0
        %5649 = vmatpush.msra.mxu0 0.0
        %5650 = vmatpush.msra.mxu0 0.0
        %5651 = vmatpush.msra.mxu0 %v5608
        %5652 = vmatmul.f32.gmra.mxu0 %v5614
        %v5653 = vpop.f32.mrf.mxu0
        %v5654 = vadd.f32 0.0, %v5653
        %5655 = vdwg.mxu0
        %5656 = vmatpush.msra.mxu0 0.0
        %5657 = vmatpush.msra.mxu0 0.0
        %5658 = vmatpush.msra.mxu0 0.0
        %5659 = vmatpush.msra.mxu0 0.0
        %5660 = vmatpush.msra.mxu0 0.0
        %5661 = vmatpush.msra.mxu0 0.0
        %5662 = vmatpush.msra.mxu0 0.0
        %5663 = vmatpush.msra.mxu0 0.0
        %5664 = vmatpush.msra.mxu0 0.0
        %5665 = vmatpush.msra.mxu0 0.0
        %5666 = vmatpush.msra.mxu0 0.0
        %5667 = vmatpush.msra.mxu0 0.0
        %5668 = vmatpush.msra.mxu0 0.0
        %5669 = vmatpush.msra.mxu0 0.0
        %5670 = vmatpush.msra.mxu0 0.0
        %5671 = vmatpush.msra.mxu0 %v5609
        %5672 = vmatmul.f32.gmra.mxu0 %v5614
        %v5673 = vpop.f32.mrf.mxu0
        %v5674 = vadd.f32 0.0, %v5673
        %5675 = vdwg.mxu0
        %5676 = vmatpush.msra.mxu0 0.0
        %5677 = vmatpush.msra.mxu0 0.0
        %5678 = vmatpush.msra.mxu0 0.0
        %5679 = vmatpush.msra.mxu0 0.0
        %5680 = vmatpush.msra.mxu0 0.0
        %5681 = vmatpush.msra.mxu0 0.0
        %5682 = vmatpush.msra.mxu0 0.0
        %5683 = vmatpush.msra.mxu0 0.0
        %5684 = vmatpush.msra.mxu0 0.0
        %5685 = vmatpush.msra.mxu0 0.0
        %5686 = vmatpush.msra.mxu0 0.0
        %5687 = vmatpush.msra.mxu0 0.0
        %5688 = vmatpush.msra.mxu0 0.0
        %5689 = vmatpush.msra.mxu0 0.0
        %5690 = vmatpush.msra.mxu0 0.0
        %5691 = vmatpush.msra.mxu0 %v5610
        %5692 = vmatmul.f32.gmra.mxu0 %v5614
        %v5693 = vpop.f32.mrf.mxu0
        %v5694 = vadd.f32 0.0, %v5693
        %5695 = vdwg.mxu0
        %v5696 = vadd.f32 %v5603, %v5634
        %v5697 = vadd.f32 %v5604, %v5654
        %v5698 = vadd.f32 %v5605, %v5674
        %v5699 = vadd.f32 %v5606, %v5694
        %v5700 = vmul.f32 %v3904, %v2865
        %v5701 = vmul.f32 %v3903, %v2866
        %v5702 = vmul.f32 %v3902, %v2867
        %v5703 = vmul.f32 %v3905, %v2868
        %s5704 = scalar_lea.vmem %s2, 192
        %v5705 = vld [vmem:[%s5704] sm:$0xff]
        %v5707 = vsel %vm346, %v5705, 0
        %5709 = vmatpush.msra.mxu0 0.0
        %5710 = vmatpush.msra.mxu0 0.0
        %5711 = vmatpush.msra.mxu0 0.0
        %5712 = vmatpush.msra.mxu0 0.0
        %5713 = vmatpush.msra.mxu0 0.0
        %5714 = vmatpush.msra.mxu0 0.0
        %5715 = vmatpush.msra.mxu0 0.0
        %5716 = vmatpush.msra.mxu0 0.0
        %5717 = vmatpush.msra.mxu0 0.0
        %5718 = vmatpush.msra.mxu0 0.0
        %5719 = vmatpush.msra.mxu0 0.0
        %5720 = vmatpush.msra.mxu0 0.0
        %5721 = vmatpush.msra.mxu0 0.0
        %5722 = vmatpush.msra.mxu0 0.0
        %5723 = vmatpush.msra.mxu0 0.0
        %5724 = vmatpush.msra.mxu0 %v5700
        %5725 = vmatmul.f32.gmra.mxu0 %v5707
        %v5726 = vpop.f32.mrf.mxu0
        %v5727 = vadd.f32 0.0, %v5726
        %5728 = vdwg.mxu0
        %5729 = vmatpush.msra.mxu0 0.0
        %5730 = vmatpush.msra.mxu0 0.0
        %5731 = vmatpush.msra.mxu0 0.0
        %5732 = vmatpush.msra.mxu0 0.0
        %5733 = vmatpush.msra.mxu0 0.0
        %5734 = vmatpush.msra.mxu0 0.0
        %5735 = vmatpush.msra.mxu0 0.0
        %5736 = vmatpush.msra.mxu0 0.0
        %5737 = vmatpush.msra.mxu0 0.0
        %5738 = vmatpush.msra.mxu0 0.0
        %5739 = vmatpush.msra.mxu0 0.0
        %5740 = vmatpush.msra.mxu0 0.0
        %5741 = vmatpush.msra.mxu0 0.0
        %5742 = vmatpush.msra.mxu0 0.0
        %5743 = vmatpush.msra.mxu0 0.0
        %5744 = vmatpush.msra.mxu0 %v5701
        %5745 = vmatmul.f32.gmra.mxu0 %v5707
        %v5746 = vpop.f32.mrf.mxu0
        %v5747 = vadd.f32 0.0, %v5746
        %5748 = vdwg.mxu0
        %5749 = vmatpush.msra.mxu0 0.0
        %5750 = vmatpush.msra.mxu0 0.0
        %5751 = vmatpush.msra.mxu0 0.0
        %5752 = vmatpush.msra.mxu0 0.0
        %5753 = vmatpush.msra.mxu0 0.0
        %5754 = vmatpush.msra.mxu0 0.0
        %5755 = vmatpush.msra.mxu0 0.0
        %5756 = vmatpush.msra.mxu0 0.0
        %5757 = vmatpush.msra.mxu0 0.0
        %5758 = vmatpush.msra.mxu0 0.0
        %5759 = vmatpush.msra.mxu0 0.0
        %5760 = vmatpush.msra.mxu0 0.0
        %5761 = vmatpush.msra.mxu0 0.0
        %5762 = vmatpush.msra.mxu0 0.0
        %5763 = vmatpush.msra.mxu0 0.0
        %5764 = vmatpush.msra.mxu0 %v5702
        %5765 = vmatmul.f32.gmra.mxu0 %v5707
        %v5766 = vpop.f32.mrf.mxu0
        %v5767 = vadd.f32 0.0, %v5766
        %5768 = vdwg.mxu0
        %5769 = vmatpush.msra.mxu0 0.0
        %5770 = vmatpush.msra.mxu0 0.0
        %5771 = vmatpush.msra.mxu0 0.0
        %5772 = vmatpush.msra.mxu0 0.0
        %5773 = vmatpush.msra.mxu0 0.0
        %5774 = vmatpush.msra.mxu0 0.0
        %5775 = vmatpush.msra.mxu0 0.0
        %5776 = vmatpush.msra.mxu0 0.0
        %5777 = vmatpush.msra.mxu0 0.0
        %5778 = vmatpush.msra.mxu0 0.0
        %5779 = vmatpush.msra.mxu0 0.0
        %5780 = vmatpush.msra.mxu0 0.0
        %5781 = vmatpush.msra.mxu0 0.0
        %5782 = vmatpush.msra.mxu0 0.0
        %5783 = vmatpush.msra.mxu0 0.0
        %5784 = vmatpush.msra.mxu0 %v5703
        %5785 = vmatmul.f32.gmra.mxu0 %v5707
        %v5786 = vpop.f32.mrf.mxu0
        %v5787 = vadd.f32 0.0, %v5786
        %5788 = vdwg.mxu0
        %v5789 = vadd.f32 %v5696, %v5727
        %v5790 = vadd.f32 %v5697, %v5747
        %v5791 = vadd.f32 %v5698, %v5767
        %v5792 = vadd.f32 %v5699, %v5787
        %v5793 = vmul.f32 %v4009, %v2963
        %v5794 = vmul.f32 %v4008, %v2964
        %v5795 = vmul.f32 %v4007, %v2965
        %v5796 = vmul.f32 %v4010, %v2966
        %s5797 = scalar_lea.vmem %s2, 200
        %v5798 = vld [vmem:[%s5797] sm:$0xff]
        %v5800 = vsel %vm346, %v5798, 0
        %5802 = vmatpush.msra.mxu0 0.0
        %5803 = vmatpush.msra.mxu0 0.0
        %5804 = vmatpush.msra.mxu0 0.0
        %5805 = vmatpush.msra.mxu0 0.0
        %5806 = vmatpush.msra.mxu0 0.0
        %5807 = vmatpush.msra.mxu0 0.0
        %5808 = vmatpush.msra.mxu0 0.0
        %5809 = vmatpush.msra.mxu0 0.0
        %5810 = vmatpush.msra.mxu0 0.0
        %5811 = vmatpush.msra.mxu0 0.0
        %5812 = vmatpush.msra.mxu0 0.0
        %5813 = vmatpush.msra.mxu0 0.0
        %5814 = vmatpush.msra.mxu0 0.0
        %5815 = vmatpush.msra.mxu0 0.0
        %5816 = vmatpush.msra.mxu0 0.0
        %5817 = vmatpush.msra.mxu0 %v5793
        %5818 = vmatmul.f32.gmra.mxu0 %v5800
        %v5819 = vpop.f32.mrf.mxu0
        %v5820 = vadd.f32 0.0, %v5819
        %5821 = vdwg.mxu0
        %5822 = vmatpush.msra.mxu0 0.0
        %5823 = vmatpush.msra.mxu0 0.0
        %5824 = vmatpush.msra.mxu0 0.0
        %5825 = vmatpush.msra.mxu0 0.0
        %5826 = vmatpush.msra.mxu0 0.0
        %5827 = vmatpush.msra.mxu0 0.0
        %5828 = vmatpush.msra.mxu0 0.0
        %5829 = vmatpush.msra.mxu0 0.0
        %5830 = vmatpush.msra.mxu0 0.0
        %5831 = vmatpush.msra.mxu0 0.0
        %5832 = vmatpush.msra.mxu0 0.0
        %5833 = vmatpush.msra.mxu0 0.0
        %5834 = vmatpush.msra.mxu0 0.0
        %5835 = vmatpush.msra.mxu0 0.0
        %5836 = vmatpush.msra.mxu0 0.0
        %5837 = vmatpush.msra.mxu0 %v5794
        %5838 = vmatmul.f32.gmra.mxu0 %v5800
        %v5839 = vpop.f32.mrf.mxu0
        %v5840 = vadd.f32 0.0, %v5839
        %5841 = vdwg.mxu0
        %5842 = vmatpush.msra.mxu0 0.0
        %5843 = vmatpush.msra.mxu0 0.0
        %5844 = vmatpush.msra.mxu0 0.0
        %5845 = vmatpush.msra.mxu0 0.0
        %5846 = vmatpush.msra.mxu0 0.0
        %5847 = vmatpush.msra.mxu0 0.0
        %5848 = vmatpush.msra.mxu0 0.0
        %5849 = vmatpush.msra.mxu0 0.0
        %5850 = vmatpush.msra.mxu0 0.0
        %5851 = vmatpush.msra.mxu0 0.0
        %5852 = vmatpush.msra.mxu0 0.0
        %5853 = vmatpush.msra.mxu0 0.0
        %5854 = vmatpush.msra.mxu0 0.0
        %5855 = vmatpush.msra.mxu0 0.0
        %5856 = vmatpush.msra.mxu0 0.0
        %5857 = vmatpush.msra.mxu0 %v5795
        %5858 = vmatmul.f32.gmra.mxu0 %v5800
        %v5859 = vpop.f32.mrf.mxu0
        %v5860 = vadd.f32 0.0, %v5859
        %5861 = vdwg.mxu0
        %5862 = vmatpush.msra.mxu0 0.0
        %5863 = vmatpush.msra.mxu0 0.0
        %5864 = vmatpush.msra.mxu0 0.0
        %5865 = vmatpush.msra.mxu0 0.0
        %5866 = vmatpush.msra.mxu0 0.0
        %5867 = vmatpush.msra.mxu0 0.0
        %5868 = vmatpush.msra.mxu0 0.0
        %5869 = vmatpush.msra.mxu0 0.0
        %5870 = vmatpush.msra.mxu0 0.0
        %5871 = vmatpush.msra.mxu0 0.0
        %5872 = vmatpush.msra.mxu0 0.0
        %5873 = vmatpush.msra.mxu0 0.0
        %5874 = vmatpush.msra.mxu0 0.0
        %5875 = vmatpush.msra.mxu0 0.0
        %5876 = vmatpush.msra.mxu0 0.0
        %5877 = vmatpush.msra.mxu0 %v5796
        %5878 = vmatmul.f32.gmra.mxu0 %v5800
        %v5879 = vpop.f32.mrf.mxu0
        %v5880 = vadd.f32 0.0, %v5879
        %5881 = vdwg.mxu0
        %v5882 = vadd.f32 %v5789, %v5820
        %v5883 = vadd.f32 %v5790, %v5840
        %v5884 = vadd.f32 %v5791, %v5860
        %v5885 = vadd.f32 %v5792, %v5880
        %v5886 = vmul.f32 %v4114, %v3061
        %v5887 = vmul.f32 %v4113, %v3062
        %v5888 = vmul.f32 %v4112, %v3063
        %v5889 = vmul.f32 %v4115, %v3064
        %s5890 = scalar_lea.vmem %s2, 208
        %v5891 = vld [vmem:[%s5890] sm:$0xff]
        %v5893 = vsel %vm346, %v5891, 0
        %5895 = vmatpush.msra.mxu0 0.0
        %5896 = vmatpush.msra.mxu0 0.0
        %5897 = vmatpush.msra.mxu0 0.0
        %5898 = vmatpush.msra.mxu0 0.0
        %5899 = vmatpush.msra.mxu0 0.0
        %5900 = vmatpush.msra.mxu0 0.0
        %5901 = vmatpush.msra.mxu0 0.0
        %5902 = vmatpush.msra.mxu0 0.0
        %5903 = vmatpush.msra.mxu0 0.0
        %5904 = vmatpush.msra.mxu0 0.0
        %5905 = vmatpush.msra.mxu0 0.0
        %5906 = vmatpush.msra.mxu0 0.0
        %5907 = vmatpush.msra.mxu0 0.0
        %5908 = vmatpush.msra.mxu0 0.0
        %5909 = vmatpush.msra.mxu0 0.0
        %5910 = vmatpush.msra.mxu0 %v5886
        %5911 = vmatmul.f32.gmra.mxu0 %v5893
        %v5912 = vpop.f32.mrf.mxu0
        %v5913 = vadd.f32 0.0, %v5912
        %5914 = vdwg.mxu0
        %5915 = vmatpush.msra.mxu0 0.0
        %5916 = vmatpush.msra.mxu0 0.0
        %5917 = vmatpush.msra.mxu0 0.0
        %5918 = vmatpush.msra.mxu0 0.0
        %5919 = vmatpush.msra.mxu0 0.0
        %5920 = vmatpush.msra.mxu0 0.0
        %5921 = vmatpush.msra.mxu0 0.0
        %5922 = vmatpush.msra.mxu0 0.0
        %5923 = vmatpush.msra.mxu0 0.0
        %5924 = vmatpush.msra.mxu0 0.0
        %5925 = vmatpush.msra.mxu0 0.0
        %5926 = vmatpush.msra.mxu0 0.0
        %5927 = vmatpush.msra.mxu0 0.0
        %5928 = vmatpush.msra.mxu0 0.0
        %5929 = vmatpush.msra.mxu0 0.0
        %5930 = vmatpush.msra.mxu0 %v5887
        %5931 = vmatmul.f32.gmra.mxu0 %v5893
        %v5932 = vpop.f32.mrf.mxu0
        %v5933 = vadd.f32 0.0, %v5932
        %5934 = vdwg.mxu0
        %5935 = vmatpush.msra.mxu0 0.0
        %5936 = vmatpush.msra.mxu0 0.0
        %5937 = vmatpush.msra.mxu0 0.0
        %5938 = vmatpush.msra.mxu0 0.0
        %5939 = vmatpush.msra.mxu0 0.0
        %5940 = vmatpush.msra.mxu0 0.0
        %5941 = vmatpush.msra.mxu0 0.0
        %5942 = vmatpush.msra.mxu0 0.0
        %5943 = vmatpush.msra.mxu0 0.0
        %5944 = vmatpush.msra.mxu0 0.0
        %5945 = vmatpush.msra.mxu0 0.0
        %5946 = vmatpush.msra.mxu0 0.0
        %5947 = vmatpush.msra.mxu0 0.0
        %5948 = vmatpush.msra.mxu0 0.0
        %5949 = vmatpush.msra.mxu0 0.0
        %5950 = vmatpush.msra.mxu0 %v5888
        %5951 = vmatmul.f32.gmra.mxu0 %v5893
        %v5952 = vpop.f32.mrf.mxu0
        %v5953 = vadd.f32 0.0, %v5952
        %5954 = vdwg.mxu0
        %5955 = vmatpush.msra.mxu0 0.0
        %5956 = vmatpush.msra.mxu0 0.0
        %5957 = vmatpush.msra.mxu0 0.0
        %5958 = vmatpush.msra.mxu0 0.0
        %5959 = vmatpush.msra.mxu0 0.0
        %5960 = vmatpush.msra.mxu0 0.0
        %5961 = vmatpush.msra.mxu0 0.0
        %5962 = vmatpush.msra.mxu0 0.0
        %5963 = vmatpush.msra.mxu0 0.0
        %5964 = vmatpush.msra.mxu0 0.0
        %5965 = vmatpush.msra.mxu0 0.0
        %5966 = vmatpush.msra.mxu0 0.0
        %5967 = vmatpush.msra.mxu0 0.0
        %5968 = vmatpush.msra.mxu0 0.0
        %5969 = vmatpush.msra.mxu0 0.0
        %5970 = vmatpush.msra.mxu0 %v5889
        %5971 = vmatmul.f32.gmra.mxu0 %v5893
        %v5972 = vpop.f32.mrf.mxu0
        %v5973 = vadd.f32 0.0, %v5972
        %5974 = vdwg.mxu0
        %v5975 = vadd.f32 %v5882, %v5913
        %v5976 = vadd.f32 %v5883, %v5933
        %v5977 = vadd.f32 %v5884, %v5953
        %v5978 = vadd.f32 %v5885, %v5973
        %v5979 = vld [vmem:[%s4] sm:$0xff]
        %5981 = vset.pattern.permute.xlu0 0
        %5982 = vperm.xlu0 %5981, %v5979
        %v5983 = vpop.permute.xlu0 %5982
        %v5985 = vadd.f32 %v5975, %v5983
        %v5986 = vadd.f32 %v5976, %v5983
        %v5987 = vadd.f32 %v5977, %v5983
        %v5988 = vadd.f32 %v5978, %v5983
        %v5989 = vadd.f32 %v5985, %v5986
        %v5990 = vadd.f32 %v5989, %v5987
        %v5991 = vadd.f32 %v5990, %v5988
        %5992 = vadd.xlane.f32.xlu0 %v5991
        %v5993 = vpop.xlane.xlu0 %5992
        %5994 = vmatpush.msra.mxu0 0.0
        %5995 = vmatpush.msra.mxu0 0.0
        %5996 = vmatpush.msra.mxu0 0.0
        %5997 = vmatpush.msra.mxu0 0.0
        %5998 = vmatpush.msra.mxu0 0.0
        %5999 = vmatpush.msra.mxu0 0.0
        %6000 = vmatpush.msra.mxu0 0.0
        %6001 = vmatpush.msra.mxu0 0.0
        %6002 = vmatpush.msra.mxu0 0.0
        %6003 = vmatpush.msra.mxu0 0.0
        %6004 = vmatpush.msra.mxu0 0.0
        %6005 = vmatpush.msra.mxu0 0.0
        %6006 = vmatpush.msra.mxu0 0.0
        %6007 = vmatpush.msra.mxu0 0.0
        %6008 = vmatpush.msra.mxu0 0.0
        %6009 = vmatpush.msra.mxu0 %v5993
        %6010 = vmatmul.f32.gmra.mxu0 %v3175
        %v6011 = vpop.f32.mrf.mxu0
        %v6012 = vadd.f32 0.0, %v6011
        %6013 = vdwg.mxu0
        %v6014 = vmul.f32 %v6012, 0.001953125
        %6016 = vset.pattern.permute.xlu0 0
        %6017 = vperm.xlu0 %6016, %v6014
        %v6018 = vpop.permute.xlu0 %6017
        %v6020 = vsub.f32 %v5985, %v6018
        %v6021 = vsub.f32 %v5986, %v6018
        %v6022 = vsub.f32 %v5987, %v6018
        %v6023 = vsub.f32 %v5988, %v6018
        %v6024 = vmul.f32 %v6020, %v6020
        %v6025 = vmul.f32 %v6021, %v6021
        %v6026 = vmul.f32 %v6022, %v6022
        %v6027 = vmul.f32 %v6023, %v6023
        %v6028 = vadd.f32 %v6024, %v6025
        %v6029 = vadd.f32 %v6028, %v6026
        %v6030 = vadd.f32 %v6029, %v6027
        %6031 = vadd.xlane.f32.xlu0 %v6030
        %v6032 = vpop.xlane.xlu0 %6031
        %6033 = vmatpush.msra.mxu0 0.0
        %6034 = vmatpush.msra.mxu0 0.0
        %6035 = vmatpush.msra.mxu0 0.0
        %6036 = vmatpush.msra.mxu0 0.0
        %6037 = vmatpush.msra.mxu0 0.0
        %6038 = vmatpush.msra.mxu0 0.0
        %6039 = vmatpush.msra.mxu0 0.0
        %6040 = vmatpush.msra.mxu0 0.0
        %6041 = vmatpush.msra.mxu0 0.0
        %6042 = vmatpush.msra.mxu0 0.0
        %6043 = vmatpush.msra.mxu0 0.0
        %6044 = vmatpush.msra.mxu0 0.0
        %6045 = vmatpush.msra.mxu0 0.0
        %6046 = vmatpush.msra.mxu0 0.0
        %6047 = vmatpush.msra.mxu0 0.0
        %6048 = vmatpush.msra.mxu0 %v6032
        %6049 = vmatmul.f32.gmra.mxu0 %v3175
        %v6050 = vpop.f32.mrf.mxu0
        %v6051 = vadd.f32 0.0, %v6050
        %6052 = vdwg.mxu0
        %v6053 = vmul.f32 %v6051, 0.001953125
        %v6054 = vadd.f32 %v6053, 1e-05
        %v6055 = vrsqrt.pop %v6054
        %v6056 = vmul.f32 %v6055, %v6054
        %v6057 = vmul.f32 %v6056, %v6055
        %v6058 = vmul.f32 0.5, %v6057
        %v6059 = vsub.f32 1.5, %v6058
        %v6060 = vmul.f32 %v6055, %v6059
        %vm6061 = vweird.f32 %v6054
        %vm6062 = vweird.f32 %v6055
        %vm6063 = vmor %vm6061, %vm6062
        %v6064 = vsel %vm6063, %v6055, %v6060
        %6065 = vrot.lane.b32.xlu0 %v5979, 127
        %v6066 = vpop.permute.xlu0 %6065
        %v6068 = vmul.f32 %v6064, %v6066
        %6070 = vset.pattern.permute.xlu0 0
        %6071 = vperm.xlu0 %6070, %v6068
        %v6072 = vpop.permute.xlu0 %6071
        %v6074 = vmul.f32 %v6020, %v6072
        %v6075 = vmul.f32 %v6021, %v6072
        %v6076 = vmul.f32 %v6022, %v6072
        %v6077 = vmul.f32 %v6023, %v6072
        %6078 = vset.pattern.permute.xlu0 2
        %6079 = vperm.xlu0 %6078, %v5979
        %v6080 = vpop.permute.xlu0 %6079
        %v6082 = vadd.f32 %v6074, %v6080
        %v6083 = vadd.f32 %v6075, %v6080
        %v6084 = vadd.f32 %v6076, %v6080
        %v6085 = vadd.f32 %v6077, %v6080
        %v6086 = vmax.f32 %v6082, 0.0
        %v6087 = vmax.f32 %v6083, 0.0
        %v6088 = vmax.f32 %v6084, 0.0
        %v6089 = vmax.f32 %v6085, 0.0
        %6090 = vst [vmem:[%s288] sm:$0xff] %v6086
        %6091 = vst [vmem:[%s288 + $0x8] sm:$0xff] %v6087
        %6092 = vst [vmem:[%s288 + $0x10] sm:$0xff] %v6088
        %6093 = vst [vmem:[%s288 + $0x18] sm:$0xff] %v6089
        %s6094 = sand.u32 %s182, 1
        %s6095 = scalar_lea.sflag [#allocation4], %s6094
        %s6096 = sand.u32 %s182, 1
        %s6097 = smul.addr %s6096, 32
        %s6098 = scalar_lea.vmem [#allocation5], %s6097
        // Predicated region
        $region53: #{tpu_custom_call.1} parent=47 // pred_check
          %p6099 = pneg %p192
        $region54: #{tpu_custom_call.1} parent=47 // pred_check_branch
          %6101 = sbr.rel (%p6099) target = $region56
        $region55: #{tpu_custom_call.1} parent=47 // pred_region
          %6103 = vsyncadd %s6095, 0
          %s6104 = smul.addr %s22, 4
          %s6105 = smul.addr %s6104, 8
          %s6106 = scalar_lea.hbm %s7, %s6105
          %s6108 = sshll.u32 %s6098, 4
          %s6109 = int_to_ptr.vmem [resolvable:$true] %s6108
          %s6110 = sshll.u32 %s6106, 4
          %s6111 = int_to_ptr.hbm [resolvable:$true] %s6110
          %6113 = dma.vmem_to_hbm [thread:$0]  %s6109, 512, %s6111, %s6095
        $region56: #{tpu_custom_call.1} parent=47 // pred_fallthru
          _
      $region48: #{tpu_custom_call.1} parent=5 // pred_fallthru
        _
      %p6114 = scmp.le.s32.totalorder 2, %s17
      // Predicated region
      $region57: #{tpu_custom_call.1} parent=5 // pred_check
        %p6115 = pneg %p6114
      $region58: #{tpu_custom_call.1} parent=5 // pred_check_branch
        %6117 = sbr.rel (%p6115) target = $region60
      $region59: #{tpu_custom_call.1} parent=5 // pred_region
        %s6118 = ssub.s32 %s17, 2
        // Predicated region
        $region61: #{tpu_custom_call.1} parent=59 // pred_check
          %p6119 = pneg %p198
        $region62: #{tpu_custom_call.1} parent=59 // pred_check_branch
          %6121 = sbr.rel (%p6119) target = $region64
        $region63: #{tpu_custom_call.1} parent=59 // pred_region
          %s6122 = sand.u32 %s183, 1
          %s6123 = scalar_lea.sflag [#allocation4], %s6122
          %s6124 = sand.u32 %s183, 1
          %s6125 = smul.addr %s6124, 32
          %s6126 = scalar_lea.vmem [#allocation5], %s6125
          %6128 = dma.done %s6123, 512
        $region64: #{tpu_custom_call.1} parent=59 // pred_fallthru
          _
      $region60: #{tpu_custom_call.1} parent=5 // pred_fallthru
        _
    $region6: #{tpu_custom_call.1} parent=1 // loop_footer
      %s21 = sadd.s32 1, %s17
    $region7: #{tpu_custom_call.1} parent=1 // loop_footer_branch
      %16 = sbr.rel target = $region3
    $region8: #{tpu_custom_call.1} parent=1 // loop_exit
      _
    %6129 = vsyncpa [#allocation3], 1
    %s6130 = scalar_lea.sflag [#allocation3], 1
    %6131 = vsyncpa %s6130, 1
    %6132 = vsyncpa [#allocation4], 1
    %s6133 = scalar_lea.sflag [#allocation4], 1
    %6134 = vsyncpa %s6133, 1

</llo_original>
